<compile_context>
chip_gen: v6e
topology: v6e:2x2x1
jax: 0.10.0
libtpu: 0.0.40
codegen_flags: <defaults>
</compile_context>

<pallas_src>
import jax
import jax.numpy as jnp
from jax import lax
from jax.experimental import pallas as pl
from jax.experimental.pallas import tpu as pltpu


def ibasic_block_kernel(x_ref, vec_ref, w1_ref, w2_ref, o_ref, slab1, slab2):
    Nb, H, W, Cp = x_ref.shape          # one batch-block; Cp = padded lane dim
    C3 = 3 * Cp

    # Per-channel BN / PReLU vectors, kept in f32 and applied in-kernel.
    s1 = vec_ref[0:1, :]
    b1 = vec_ref[1:2, :]
    s2 = vec_ref[2:3, :]
    b2 = vec_ref[3:4, :]
    alpha = vec_ref[4:5, :]
    s3 = vec_ref[5:6, :]
    b3 = vec_ref[6:7, :]

    # Row-chunk size: largest divisor of H giving at most ~256 matmul rows,
    # so accumulators / patches stay within the vector-register budget.
    CH = 1
    for cand in range(H, 0, -1):
        if H % cand == 0 and Nb * cand * W <= 256:
            CH = cand
            break
    M = Nb * CH * W

    def store_shifted(slab_ref, r0, z4):
        """Write one row-chunk of a conv input into its 3-group slab.

        z4 : (Nb, CH, W, Cp) float32 (already bn/activation-ed input).
        Lane group g holds the input shifted by (g-1) along W:
            slab[:, r, j, g*Cp:(g+1)*Cp] = input[:, r-1, j+g-1, :]  (0 if OOB)
        so each 3x3 conv becomes 3 matmuls (one per ky) with K = 3*Cp.
        All stores below are full-width and lane-aligned; exactly one
        f32->bf16 cast per group.
        """
        rs = slice(1 + r0, 1 + r0 + CH)                 # +1: top halo row
        zcol = jnp.zeros((Nb, CH, 1, Cp), jnp.float32)
        left = jnp.concatenate([zcol, z4[:, :, :W - 1, :]], axis=2)
        right = jnp.concatenate([z4[:, :, 1:, :], zcol], axis=2)
        slab_ref[:, rs, :, 0 * Cp:1 * Cp] = left.astype(jnp.bfloat16)
        slab_ref[:, rs, :, 1 * Cp:2 * Cp] = z4.astype(jnp.bfloat16)
        slab_ref[:, rs, :, 2 * Cp:3 * Cp] = right.astype(jnp.bfloat16)

    def conv_chunk(slab_ref, w_ref, r0):
        """3x3 conv for output rows [r0, r0+CH): 3 bf16 matmuls, K = 3*Cp."""
        acc = None
        for dy in range(3):
            band = slab_ref[:, r0 + dy:r0 + dy + CH, :, :]
            band = band.reshape(M, C3)       # free relabel when W % 8 == 0
            part = jnp.dot(band, w_ref[dy],
                           preferred_element_type=jnp.float32)
            acc = part if acc is None else acc + part
        return acc                           # (M, Cp) float32

    # ---- zero only the halo rows of both slabs (interiors are fully
    # overwritten below).  Done every step so megacore sharding stays safe. ----
    zrow = jnp.zeros((Nb, 1, W, C3), jnp.bfloat16)
    for slab in (slab1, slab2):
        slab[:, 0:1, :, :] = zrow
        slab[:, H + 1:H + 2, :, :] = zrow

    # ---- phase A: bn1 (s1*x + b1 in f32) -> slab1 ----
    for r0 in range(0, H, CH):
        xc = x_ref[:, r0:r0 + CH, :, :].reshape(M, Cp)
        z1 = xc * s1 + b1
        store_shifted(slab1, r0, z1.reshape(Nb, CH, W, Cp))

    # ---- phase B: conv1 -> bn2 -> PReLU -> slab2 ----
    for r0 in range(0, H, CH):
        acc1 = conv_chunk(slab1, w1_ref, r0)
        z2 = acc1 * s2 + b2
        z2 = jnp.where(z2 >= 0, z2, alpha * z2)
        store_shifted(slab2, r0, z2.reshape(Nb, CH, W, Cp))

    # ---- phase C: conv2 -> bn3 -> + identity (pre-bn1 input) ----
    for r0 in range(0, H, CH):
        acc2 = conv_chunk(slab2, w2_ref, r0)
        out = acc2 * s3 + b3 + x_ref[:, r0:r0 + CH, :, :].reshape(M, Cp)
        o_ref[:, r0:r0 + CH, :, :] = out.reshape(Nb, CH, W, Cp)


def _round_up(v, m):
    return (v + m - 1) // m * m


def _prepare_params(params, C, Cp):
    """Pad channels to Cp lanes; pack the kx taps along the weight K axis.

    Padded channels get zero scale/bias/alpha/weights, so they stay exactly 0
    through the whole block (and the padded residual input is also 0).
    """
    s1, b1, w1, s2, b2, alpha, w2, s3, b3 = [jnp.asarray(p, jnp.float32)
                                             for p in params]
    pc = Cp - C
    vecs = [jnp.pad(v.reshape(C), (0, pc))
            for v in (s1, b1, s2, b2, alpha, s3, b3)]
    vecs.append(jnp.zeros((Cp,), jnp.float32))            # pad table to 8 rows
    vec_tab = jnp.stack(vecs)                              # (8, Cp) float32

    def pack_w(w):
        wp = jnp.pad(w, ((0, 0), (0, 0), (0, pc), (0, pc)))   # (3,3,Cp,Cp) HWIO
        # (ky, kx, i, o) -> (ky, kx*Cp + i, o): rows match the slab lane groups.
        return wp.reshape(3, 3 * Cp, Cp).astype(jnp.bfloat16)

    return vec_tab, pack_w(w1), pack_w(w2)


def _vmem_limit_bytes():
    """Chip-aware VMEM budget: ~96 MiB on v5e/v6e, ~48 MiB on v7x."""
    try:
        cap = int(pltpu.get_tpu_info().vmem_capacity_bytes)
    except Exception:
        cap = 64 * 1024 * 1024
    return max(32 * 1024 * 1024, min(3 * cap // 4, 96 * 1024 * 1024))


def ibasic_block(x_nhwc, params):
    """params = (s1, b1, w1, s2, b2, alpha, w2, s3, b3); x is NHWC float32."""
    N, H, W, C = x_nhwc.shape
    Cp = _round_up(C, 128)                                 # lane-dense channels
    vec_tab, w1p, w2p = _prepare_params(params, C, Cp)
    x = jnp.pad(x_nhwc.astype(jnp.float32), ((0, 0),) * 3 + ((0, Cp - C),))

    vmem_limit = _vmem_limit_bytes()

    # Images per grid step: amortize per-step overhead, bounded by VMEM budget.
    def step_bytes(nb):
        blocks = 2 * 2 * nb * H * W * Cp * 4               # x + out, dbl-buffered
        slabs = 2 * nb * (H + 2) * W * 3 * Cp * 2          # bf16 scratch slabs
        wgts = 2 * 2 * 3 * 3 * Cp * Cp * 2                 # bf16 weights, dbl-buf
        return blocks + slabs + wgts

    Nb = min(N, 8)
    while Nb > 1 and step_bytes(Nb) > vmem_limit // 2:
        Nb //= 2
    grid_n = pl.cdiv(N, Nb)
    Npad = grid_n * Nb
    if Npad != N:
        x = jnp.pad(x, ((0, Npad - N), (0, 0), (0, 0), (0, 0)))

    img_spec = pl.BlockSpec((Nb, H, W, Cp), lambda n: (n, 0, 0, 0))
    vec_spec = pl.BlockSpec((8, Cp), lambda n: (0, 0))
    wgt_spec = pl.BlockSpec((3, 3 * Cp, Cp), lambda n: (0, 0, 0))

    flops = Npad * 2 * 18 * H * W * Cp * Cp                # 2 convs, 9 taps, MACs*2
    bytes_accessed = (2 * Npad * H * W * Cp * 4            # x in + out (f32)
                      + 2 * 3 * 3 * Cp * Cp * 2            # bf16 weights
                      + 8 * Cp * 4)

    fn = pl.pallas_call(
        ibasic_block_kernel,
        out_shape=jax.ShapeDtypeStruct((Npad, H, W, Cp), jnp.float32),
        grid_spec=pltpu.PrefetchScalarGridSpec(
            num_scalar_prefetch=0,
            grid=(grid_n,),
            in_specs=[img_spec, vec_spec, wgt_spec, wgt_spec],
            out_specs=img_spec,
            scratch_shapes=[
                pltpu.VMEM((Nb, H + 2, W, 3 * Cp), jnp.bfloat16),
                pltpu.VMEM((Nb, H + 2, W, 3 * Cp), jnp.bfloat16),
            ]),
        compiler_params=pltpu.CompilerParams(
            dimension_semantics=("parallel",),
            vmem_limit_bytes=vmem_limit),
        cost_estimate=pl.CostEstimate(flops=flops, transcendentals=0,
                                      bytes_accessed=bytes_accessed),
    )
    out = fn(x, vec_tab, w1p, w2p)
    return out[:N, :, :, :C]


def ibasic_block_reference(x, params):
    """Pure-JAX f32 reference (NHWC / HWIO), matching the PyTorch forward."""
    s1, b1, w1, s2, b2, alpha, w2, s3, b3 = params
    dn = ('NHWC', 'HWIO', 'NHWC')
    c = lambda v: v.reshape(1, 1, 1, -1)
    y = x * c(s1) + c(b1)
    y = lax.conv_general_dilated(y, w1, (1, 1), ((1, 1), (1, 1)),
                                 dimension_numbers=dn)
    y = y * c(s2) + c(b2)
    y = jnp.where(y >= 0, y, c(alpha) * y)
    y = lax.conv_general_dilated(y, w2, (1, 1), ((1, 1), (1, 1)),
                                 dimension_numbers=dn)
    y = y * c(s3) + c(b3)
    return y + x


def _folded_bn(k1, k2, k3, k4, c, eps=1e-5):
    gamma = 1.0 + 0.1 * jax.random.normal(k1, (c,), jnp.float32)
    beta = 0.1 * jax.random.normal(k2, (c,), jnp.float32)
    mean = 0.1 * jax.random.normal(k3, (c,), jnp.float32)
    var = jax.random.uniform(k4, (c,), jnp.float32, minval=0.5, maxval=1.5)
    s = gamma / jnp.sqrt(var + eps)
    b = beta - mean * s
    return s.reshape(1, c), b.reshape(1, c)


if __name__ == "__main__":
    # inplanes == planes == 8, stride = 1; input is the NHWC transpose of the
    # PyTorch module's NCHW (2, 8, 16, 16) input.
    N, H, W, C = 2, 16, 16, 8
    keys = jax.random.split(jax.random.PRNGKey(0), 16)

    x = jax.random.normal(keys[0], (N, H, W, C), jnp.float32)

    s1, b1 = _folded_bn(keys[1], keys[2], keys[3], keys[4], C)         # bn1
    w1 = 0.1 * jax.random.normal(keys[5], (3, 3, C, C), jnp.float32)   # conv1 HWIO
    s2, b2 = _folded_bn(keys[6], keys[7], keys[8], keys[9], C)         # bn2
    alpha = (0.25 + 0.05 * jax.random.normal(keys[10], (C,), jnp.float32)
             ).reshape(1, C)                                           # PReLU
    w2 = 0.1 * jax.random.normal(keys[11], (3, 3, C, C), jnp.float32)  # conv2 HWIO
    s3, b3 = _folded_bn(keys[12], keys[13], keys[14], keys[15], C)     # bn3

    params = (s1, b1, w1, s2, b2, alpha, w2, s3, b3)

    out = jax.block_until_ready(ibasic_block(x, params))
    ref = ibasic_block_reference(x, params)
    assert out.shape == (N, H, W, C)
    # bf16 MXU inputs (f32 accumulation, f32 BN scale/bias/residual) vs the
    # all-f32 reference => loosened tolerance.
    assert jnp.allclose(out, ref, atol=5e-2, rtol=5e-2), "mismatch vs reference"
    print("KERNEL_OK")
</pallas_src>

<mosaic_0001>
module attributes {stable_mosaic.version = 11 : i64} {
  func.func @ibasic_block_kernel(%arg0: i32, %arg1: memref<2x16x16x128xf32, #tpu.memory_space<vmem>>, %arg2: memref<8x128xf32, #tpu.memory_space<vmem>>, %arg3: memref<3x384x128xbf16, #tpu.memory_space<vmem>>, %arg4: memref<3x384x128xbf16, #tpu.memory_space<vmem>>, %arg5: memref<2x16x16x128xf32, #tpu.memory_space<vmem>>, %arg6: memref<2x18x16x384xbf16, #tpu.memory_space<vmem>>, %arg7: memref<2x18x16x384xbf16, #tpu.memory_space<vmem>>) attributes {dimension_semantics = [#tpu.dimension_semantics<parallel>], iteration_bounds = array<i64: 1>, scalar_prefetch = 0 : i64, scratch_operands = 2 : i64, tpu.core_type = #tpu.core_type<tc>, window_params = [{transform_indices = @transform_0, window_bounds = array<i64: 2, 16, 16, 128>}, {pipeline_mode = #tpu.pipeline_mode<synchronous>, transform_indices = @transform_1, window_bounds = array<i64: 8, 128>}, {pipeline_mode = #tpu.pipeline_mode<synchronous>, transform_indices = @transform_2, window_bounds = array<i64: 3, 384, 128>}, {pipeline_mode = #tpu.pipeline_mode<synchronous>, transform_indices = @transform_3, window_bounds = array<i64: 3, 384, 128>}, {transform_indices = @transform_4, window_bounds = array<i64: 2, 16, 16, 128>}]} {
    %c0 = arith.constant 0 : index
    %c0_0 = arith.constant 0 : index
    %0 = vector.load %arg2[%c0, %c0_0] : memref<8x128xf32, #tpu.memory_space<vmem>>, vector<1x128xf32>
    %c1 = arith.constant 1 : index
    %c0_1 = arith.constant 0 : index
    %1 = vector.load %arg2[%c1, %c0_1] : memref<8x128xf32, #tpu.memory_space<vmem>>, vector<1x128xf32>
    %c2 = arith.constant 2 : index
    %c0_2 = arith.constant 0 : index
    %2 = vector.load %arg2[%c2, %c0_2] : memref<8x128xf32, #tpu.memory_space<vmem>>, vector<1x128xf32>
    %c3 = arith.constant 3 : index
    %c0_3 = arith.constant 0 : index
    %3 = vector.load %arg2[%c3, %c0_3] : memref<8x128xf32, #tpu.memory_space<vmem>>, vector<1x128xf32>
    %c4 = arith.constant 4 : index
    %c0_4 = arith.constant 0 : index
    %4 = vector.load %arg2[%c4, %c0_4] : memref<8x128xf32, #tpu.memory_space<vmem>>, vector<1x128xf32>
    %c5 = arith.constant 5 : index
    %c0_5 = arith.constant 0 : index
    %5 = vector.load %arg2[%c5, %c0_5] : memref<8x128xf32, #tpu.memory_space<vmem>>, vector<1x128xf32>
    %c6 = arith.constant 6 : index
    %c0_6 = arith.constant 0 : index
    %6 = vector.load %arg2[%c6, %c0_6] : memref<8x128xf32, #tpu.memory_space<vmem>>, vector<1x128xf32>
    %cst = arith.constant 0.000000e+00 : bf16
    %7 = vector.broadcast %cst : bf16 to vector<2x1x16x384xbf16>
    %c0_7 = arith.constant 0 : index
    %c0_8 = arith.constant 0 : index
    %c0_9 = arith.constant 0 : index
    %c0_10 = arith.constant 0 : index
    %8 = vector.load %arg6[%c0_7, %c0_8, %c0_9, %c0_10] : memref<2x18x16x384xbf16, #tpu.memory_space<vmem>>, vector<2x1x16x384xbf16>
    tpu.vector_store %arg6[%c0_7, %c0_8, %c0_9, %c0_10], %7 {strides = array<i32>} : memref<2x18x16x384xbf16, #tpu.memory_space<vmem>>, vector<2x1x16x384xbf16>,
    %c0_11 = arith.constant 0 : index
    %c17 = arith.constant 17 : index
    %c0_12 = arith.constant 0 : index
    %c0_13 = arith.constant 0 : index
    %9 = vector.load %arg6[%c0_11, %c17, %c0_12, %c0_13] : memref<2x18x16x384xbf16, #tpu.memory_space<vmem>>, vector<2x1x16x384xbf16>
    tpu.vector_store %arg6[%c0_11, %c17, %c0_12, %c0_13], %7 {strides = array<i32>} : memref<2x18x16x384xbf16, #tpu.memory_space<vmem>>, vector<2x1x16x384xbf16>,
    %c0_14 = arith.constant 0 : index
    %c0_15 = arith.constant 0 : index
    %c0_16 = arith.constant 0 : index
    %c0_17 = arith.constant 0 : index
    %10 = vector.load %arg7[%c0_14, %c0_15, %c0_16, %c0_17] : memref<2x18x16x384xbf16, #tpu.memory_space<vmem>>, vector<2x1x16x384xbf16>
    tpu.vector_store %arg7[%c0_14, %c0_15, %c0_16, %c0_17], %7 {strides = array<i32>} : memref<2x18x16x384xbf16, #tpu.memory_space<vmem>>, vector<2x1x16x384xbf16>,
    %c0_18 = arith.constant 0 : index
    %c17_19 = arith.constant 17 : index
    %c0_20 = arith.constant 0 : index
    %c0_21 = arith.constant 0 : index
    %11 = vector.load %arg7[%c0_18, %c17_19, %c0_20, %c0_21] : memref<2x18x16x384xbf16, #tpu.memory_space<vmem>>, vector<2x1x16x384xbf16>
    tpu.vector_store %arg7[%c0_18, %c17_19, %c0_20, %c0_21], %7 {strides = array<i32>} : memref<2x18x16x384xbf16, #tpu.memory_space<vmem>>, vector<2x1x16x384xbf16>,
    %c0_22 = arith.constant 0 : index
    %c0_23 = arith.constant 0 : index
    %c0_24 = arith.constant 0 : index
    %c0_25 = arith.constant 0 : index
    %12 = vector.load %arg1[%c0_22, %c0_23, %c0_24, %c0_25] : memref<2x16x16x128xf32, #tpu.memory_space<vmem>>, vector<2x8x16x128xf32>
    %13 = vector.shape_cast %12 : vector<2x8x16x128xf32> to vector<256x128xf32>
    %14 = vector.broadcast %0 : vector<1x128xf32> to vector<256x128xf32>
    %15 = arith.mulf %13, %14 : vector<256x128xf32>
    %16 = vector.broadcast %1 : vector<1x128xf32> to vector<256x128xf32>
    %17 = arith.addf %15, %16 : vector<256x128xf32>
    %18 = vector.shape_cast %17 : vector<256x128xf32> to vector<2x8x16x128xf32>
    %cst_26 = arith.constant 0.000000e+00 : f32
    %19 = vector.broadcast %cst_26 : f32 to vector<2x8x1x128xf32>
    %20 = vector.extract_strided_slice %18 {offsets = [0, 0, 0, 0], sizes = [2, 8, 15, 128], strides = [1, 1, 1, 1]} : vector<2x8x16x128xf32> to vector<2x8x15x128xf32>
    %21 = tpu.concatenate %19, %20 in 2 : vector<2x8x1x128xf32>, vector<2x8x15x128xf32> -> vector<2x8x16x128xf32>
    %22 = vector.extract_strided_slice %18 {offsets = [0, 0, 1, 0], sizes = [2, 8, 15, 128], strides = [1, 1, 1, 1]} : vector<2x8x16x128xf32> to vector<2x8x15x128xf32>
    %23 = tpu.concatenate %22, %19 in 2 : vector<2x8x15x128xf32>, vector<2x8x1x128xf32> -> vector<2x8x16x128xf32>
    %24 = arith.truncf %21 : vector<2x8x16x128xf32> to vector<2x8x16x128xbf16>
    %c0_27 = arith.constant 0 : index
    %c1_28 = arith.constant 1 : index
    %c0_29 = arith.constant 0 : index
    %c0_30 = arith.constant 0 : index
    %25 = vector.load %arg6[%c0_27, %c1_28, %c0_29, %c0_30] : memref<2x18x16x384xbf16, #tpu.memory_space<vmem>>, vector<2x8x16x128xbf16>
    tpu.vector_store %arg6[%c0_27, %c1_28, %c0_29, %c0_30], %24 {strides = array<i32>} : memref<2x18x16x384xbf16, #tpu.memory_space<vmem>>, vector<2x8x16x128xbf16>,
    %26 = arith.truncf %18 : vector<2x8x16x128xf32> to vector<2x8x16x128xbf16>
    %c0_31 = arith.constant 0 : index
    %c1_32 = arith.constant 1 : index
    %c0_33 = arith.constant 0 : index
    %c128 = arith.constant 128 : index
    %27 = vector.load %arg6[%c0_31, %c1_32, %c0_33, %c128] : memref<2x18x16x384xbf16, #tpu.memory_space<vmem>>, vector<2x8x16x128xbf16>
    tpu.vector_store %arg6[%c0_31, %c1_32, %c0_33, %c128], %26 {strides = array<i32>} : memref<2x18x16x384xbf16, #tpu.memory_space<vmem>>, vector<2x8x16x128xbf16>,
    %28 = arith.truncf %23 : vector<2x8x16x128xf32> to vector<2x8x16x128xbf16>
    %c0_34 = arith.constant 0 : index
    %c1_35 = arith.constant 1 : index
    %c0_36 = arith.constant 0 : index
    %c256 = arith.constant 256 : index
    %29 = vector.load %arg6[%c0_34, %c1_35, %c0_36, %c256] : memref<2x18x16x384xbf16, #tpu.memory_space<vmem>>, vector<2x8x16x128xbf16>
    tpu.vector_store %arg6[%c0_34, %c1_35, %c0_36, %c256], %28 {strides = array<i32>} : memref<2x18x16x384xbf16, #tpu.memory_space<vmem>>, vector<2x8x16x128xbf16>,
    %c0_37 = arith.constant 0 : index
    %c8 = arith.constant 8 : index
    %c0_38 = arith.constant 0 : index
    %c0_39 = arith.constant 0 : index
    %30 = vector.load %arg1[%c0_37, %c8, %c0_38, %c0_39] : memref<2x16x16x128xf32, #tpu.memory_space<vmem>>, vector<2x8x16x128xf32>
    %31 = vector.shape_cast %30 : vector<2x8x16x128xf32> to vector<256x128xf32>
    %32 = vector.broadcast %0 : vector<1x128xf32> to vector<256x128xf32>
    %33 = arith.mulf %31, %32 : vector<256x128xf32>
    %34 = vector.broadcast %1 : vector<1x128xf32> to vector<256x128xf32>
    %35 = arith.addf %33, %34 : vector<256x128xf32>
    %36 = vector.shape_cast %35 : vector<256x128xf32> to vector<2x8x16x128xf32>
    %cst_40 = arith.constant 0.000000e+00 : f32
    %37 = vector.broadcast %cst_40 : f32 to vector<2x8x1x128xf32>
    %38 = vector.extract_strided_slice %36 {offsets = [0, 0, 0, 0], sizes = [2, 8, 15, 128], strides = [1, 1, 1, 1]} : vector<2x8x16x128xf32> to vector<2x8x15x128xf32>
    %39 = tpu.concatenate %37, %38 in 2 : vector<2x8x1x128xf32>, vector<2x8x15x128xf32> -> vector<2x8x16x128xf32>
    %40 = vector.extract_strided_slice %36 {offsets = [0, 0, 1, 0], sizes = [2, 8, 15, 128], strides = [1, 1, 1, 1]} : vector<2x8x16x128xf32> to vector<2x8x15x128xf32>
    %41 = tpu.concatenate %40, %37 in 2 : vector<2x8x15x128xf32>, vector<2x8x1x128xf32> -> vector<2x8x16x128xf32>
    %42 = arith.truncf %39 : vector<2x8x16x128xf32> to vector<2x8x16x128xbf16>
    %c0_41 = arith.constant 0 : index
    %c9 = arith.constant 9 : index
    %c0_42 = arith.constant 0 : index
    %c0_43 = arith.constant 0 : index
    %43 = vector.load %arg6[%c0_41, %c9, %c0_42, %c0_43] : memref<2x18x16x384xbf16, #tpu.memory_space<vmem>>, vector<2x8x16x128xbf16>
    tpu.vector_store %arg6[%c0_41, %c9, %c0_42, %c0_43], %42 {strides = array<i32>} : memref<2x18x16x384xbf16, #tpu.memory_space<vmem>>, vector<2x8x16x128xbf16>,
    %44 = arith.truncf %36 : vector<2x8x16x128xf32> to vector<2x8x16x128xbf16>
    %c0_44 = arith.constant 0 : index
    %c9_45 = arith.constant 9 : index
    %c0_46 = arith.constant 0 : index
    %c128_47 = arith.constant 128 : index
    %45 = vector.load %arg6[%c0_44, %c9_45, %c0_46, %c128_47] : memref<2x18x16x384xbf16, #tpu.memory_space<vmem>>, vector<2x8x16x128xbf16>
    tpu.vector_store %arg6[%c0_44, %c9_45, %c0_46, %c128_47], %44 {strides = array<i32>} : memref<2x18x16x384xbf16, #tpu.memory_space<vmem>>, vector<2x8x16x128xbf16>,
    %46 = arith.truncf %41 : vector<2x8x16x128xf32> to vector<2x8x16x128xbf16>
    %c0_48 = arith.constant 0 : index
    %c9_49 = arith.constant 9 : index
    %c0_50 = arith.constant 0 : index
    %c256_51 = arith.constant 256 : index
    %47 = vector.load %arg6[%c0_48, %c9_49, %c0_50, %c256_51] : memref<2x18x16x384xbf16, #tpu.memory_space<vmem>>, vector<2x8x16x128xbf16>
    tpu.vector_store %arg6[%c0_48, %c9_49, %c0_50, %c256_51], %46 {strides = array<i32>} : memref<2x18x16x384xbf16, #tpu.memory_space<vmem>>, vector<2x8x16x128xbf16>,
    %c0_52 = arith.constant 0 : index
    %c0_53 = arith.constant 0 : index
    %c0_54 = arith.constant 0 : index
    %c0_55 = arith.constant 0 : index
    %48 = vector.load %arg6[%c0_52, %c0_53, %c0_54, %c0_55] : memref<2x18x16x384xbf16, #tpu.memory_space<vmem>>, vector<2x8x16x384xbf16>
    %49 = vector.shape_cast %48 : vector<2x8x16x384xbf16> to vector<256x384xbf16>
    %c0_56 = arith.constant 0 : index
    %c0_57 = arith.constant 0 : index
    %c0_58 = arith.constant 0 : index
    %50 = vector.load %arg3[%c0_56, %c0_57, %c0_58] : memref<3x384x128xbf16, #tpu.memory_space<vmem>>, vector<1x384x128xbf16>
    %51 = vector.shape_cast %50 : vector<1x384x128xbf16> to vector<384x128xbf16>
    %cst_59 = arith.constant dense<0.000000e+00> : vector<256x128xf32>
    %52 = tpu.matmul %49, %51, %cst_59 {dimension_numbers = #tpu.dot_dimension_numbers<[1], [0], [0], [1], [0, 0, 1, 1], [], []>} : vector<256x384xbf16>, vector<384x128xbf16>, vector<256x128xf32> -> vector<256x128xf32>
    %c0_60 = arith.constant 0 : index
    %c1_61 = arith.constant 1 : index
    %c0_62 = arith.constant 0 : index
    %c0_63 = arith.constant 0 : index
    %53 = vector.load %arg6[%c0_60, %c1_61, %c0_62, %c0_63] : memref<2x18x16x384xbf16, #tpu.memory_space<vmem>>, vector<2x8x16x384xbf16>
    %54 = vector.shape_cast %53 : vector<2x8x16x384xbf16> to vector<256x384xbf16>
    %c1_64 = arith.constant 1 : index
    %c0_65 = arith.constant 0 : index
    %c0_66 = arith.constant 0 : index
    %55 = vector.load %arg3[%c1_64, %c0_65, %c0_66] : memref<3x384x128xbf16, #tpu.memory_space<vmem>>, vector<1x384x128xbf16>
    %56 = vector.shape_cast %55 : vector<1x384x128xbf16> to vector<384x128xbf16>
    %cst_67 = arith.constant dense<0.000000e+00> : vector<256x128xf32>
    %57 = tpu.matmul %54, %56, %cst_67 {dimension_numbers = #tpu.dot_dimension_numbers<[1], [0], [0], [1], [0, 0, 1, 1], [], []>} : vector<256x384xbf16>, vector<384x128xbf16>, vector<256x128xf32> -> vector<256x128xf32>
    %58 = arith.addf %52, %57 : vector<256x128xf32>
    %c0_68 = arith.constant 0 : index
    %c2_69 = arith.constant 2 : index
    %c0_70 = arith.constant 0 : index
    %c0_71 = arith.constant 0 : index
    %59 = vector.load %arg6[%c0_68, %c2_69, %c0_70, %c0_71] : memref<2x18x16x384xbf16, #tpu.memory_space<vmem>>, vector<2x8x16x384xbf16>
    %60 = vector.shape_cast %59 : vector<2x8x16x384xbf16> to vector<256x384xbf16>
    %c2_72 = arith.constant 2 : index
    %c0_73 = arith.constant 0 : index
    %c0_74 = arith.constant 0 : index
    %61 = vector.load %arg3[%c2_72, %c0_73, %c0_74] : memref<3x384x128xbf16, #tpu.memory_space<vmem>>, vector<1x384x128xbf16>
    %62 = vector.shape_cast %61 : vector<1x384x128xbf16> to vector<384x128xbf16>
    %cst_75 = arith.constant dense<0.000000e+00> : vector<256x128xf32>
    %63 = tpu.matmul %60, %62, %cst_75 {dimension_numbers = #tpu.dot_dimension_numbers<[1], [0], [0], [1], [0, 0, 1, 1], [], []>} : vector<256x384xbf16>, vector<384x128xbf16>, vector<256x128xf32> -> vector<256x128xf32>
    %64 = arith.addf %58, %63 : vector<256x128xf32>
    %65 = vector.broadcast %2 : vector<1x128xf32> to vector<256x128xf32>
    %66 = arith.mulf %64, %65 : vector<256x128xf32>
    %67 = vector.broadcast %3 : vector<1x128xf32> to vector<256x128xf32>
    %68 = arith.addf %66, %67 : vector<256x128xf32>
    %cst_76 = arith.constant 0.000000e+00 : f32
    %69 = vector.broadcast %cst_76 : f32 to vector<256x128xf32>
    %70 = arith.cmpf oge, %68, %69 : vector<256x128xf32>
    %71 = vector.broadcast %4 : vector<1x128xf32> to vector<256x128xf32>
    %72 = arith.mulf %71, %68 : vector<256x128xf32>
    %73 = arith.select %70, %68, %72 : vector<256x128xi1>, vector<256x128xf32>
    %74 = vector.shape_cast %73 : vector<256x128xf32> to vector<2x8x16x128xf32>
    %cst_77 = arith.constant 0.000000e+00 : f32
    %75 = vector.broadcast %cst_77 : f32 to vector<2x8x1x128xf32>
    %76 = vector.extract_strided_slice %74 {offsets = [0, 0, 0, 0], sizes = [2, 8, 15, 128], strides = [1, 1, 1, 1]} : vector<2x8x16x128xf32> to vector<2x8x15x128xf32>
    %77 = tpu.concatenate %75, %76 in 2 : vector<2x8x1x128xf32>, vector<2x8x15x128xf32> -> vector<2x8x16x128xf32>
    %78 = vector.extract_strided_slice %74 {offsets = [0, 0, 1, 0], sizes = [2, 8, 15, 128], strides = [1, 1, 1, 1]} : vector<2x8x16x128xf32> to vector<2x8x15x128xf32>
    %79 = tpu.concatenate %78, %75 in 2 : vector<2x8x15x128xf32>, vector<2x8x1x128xf32> -> vector<2x8x16x128xf32>
    %80 = arith.truncf %77 : vector<2x8x16x128xf32> to vector<2x8x16x128xbf16>
    %c0_78 = arith.constant 0 : index
    %c1_79 = arith.constant 1 : index
    %c0_80 = arith.constant 0 : index
    %c0_81 = arith.constant 0 : index
    %81 = vector.load %arg7[%c0_78, %c1_79, %c0_80, %c0_81] : memref<2x18x16x384xbf16, #tpu.memory_space<vmem>>, vector<2x8x16x128xbf16>
    tpu.vector_store %arg7[%c0_78, %c1_79, %c0_80, %c0_81], %80 {strides = array<i32>} : memref<2x18x16x384xbf16, #tpu.memory_space<vmem>>, vector<2x8x16x128xbf16>,
    %82 = arith.truncf %74 : vector<2x8x16x128xf32> to vector<2x8x16x128xbf16>
    %c0_82 = arith.constant 0 : index
    %c1_83 = arith.constant 1 : index
    %c0_84 = arith.constant 0 : index
    %c128_85 = arith.constant 128 : index
    %83 = vector.load %arg7[%c0_82, %c1_83, %c0_84, %c128_85] : memref<2x18x16x384xbf16, #tpu.memory_space<vmem>>, vector<2x8x16x128xbf16>
    tpu.vector_store %arg7[%c0_82, %c1_83, %c0_84, %c128_85], %82 {strides = array<i32>} : memref<2x18x16x384xbf16, #tpu.memory_space<vmem>>, vector<2x8x16x128xbf16>,
    %84 = arith.truncf %79 : vector<2x8x16x128xf32> to vector<2x8x16x128xbf16>
    %c0_86 = arith.constant 0 : index
    %c1_87 = arith.constant 1 : index
    %c0_88 = arith.constant 0 : index
    %c256_89 = arith.constant 256 : index
    %85 = vector.load %arg7[%c0_86, %c1_87, %c0_88, %c256_89] : memref<2x18x16x384xbf16, #tpu.memory_space<vmem>>, vector<2x8x16x128xbf16>
    tpu.vector_store %arg7[%c0_86, %c1_87, %c0_88, %c256_89], %84 {strides = array<i32>} : memref<2x18x16x384xbf16, #tpu.memory_space<vmem>>, vector<2x8x16x128xbf16>,
    %c0_90 = arith.constant 0 : index
    %c8_91 = arith.constant 8 : index
    %c0_92 = arith.constant 0 : index
    %c0_93 = arith.constant 0 : index
    %86 = vector.load %arg6[%c0_90, %c8_91, %c0_92, %c0_93] : memref<2x18x16x384xbf16, #tpu.memory_space<vmem>>, vector<2x8x16x384xbf16>
    %87 = vector.shape_cast %86 : vector<2x8x16x384xbf16> to vector<256x384xbf16>
    %c0_94 = arith.constant 0 : index
    %c0_95 = arith.constant 0 : index
    %c0_96 = arith.constant 0 : index
    %88 = vector.load %arg3[%c0_94, %c0_95, %c0_96] : memref<3x384x128xbf16, #tpu.memory_space<vmem>>, vector<1x384x128xbf16>
    %89 = vector.shape_cast %88 : vector<1x384x128xbf16> to vector<384x128xbf16>
    %cst_97 = arith.constant dense<0.000000e+00> : vector<256x128xf32>
    %90 = tpu.matmul %87, %89, %cst_97 {dimension_numbers = #tpu.dot_dimension_numbers<[1], [0], [0], [1], [0, 0, 1, 1], [], []>} : vector<256x384xbf16>, vector<384x128xbf16>, vector<256x128xf32> -> vector<256x128xf32>
    %c0_98 = arith.constant 0 : index
    %c9_99 = arith.constant 9 : index
    %c0_100 = arith.constant 0 : index
    %c0_101 = arith.constant 0 : index
    %91 = vector.load %arg6[%c0_98, %c9_99, %c0_100, %c0_101] : memref<2x18x16x384xbf16, #tpu.memory_space<vmem>>, vector<2x8x16x384xbf16>
    %92 = vector.shape_cast %91 : vector<2x8x16x384xbf16> to vector<256x384xbf16>
    %c1_102 = arith.constant 1 : index
    %c0_103 = arith.constant 0 : index
    %c0_104 = arith.constant 0 : index
    %93 = vector.load %arg3[%c1_102, %c0_103, %c0_104] : memref<3x384x128xbf16, #tpu.memory_space<vmem>>, vector<1x384x128xbf16>
    %94 = vector.shape_cast %93 : vector<1x384x128xbf16> to vector<384x128xbf16>
    %cst_105 = arith.constant dense<0.000000e+00> : vector<256x128xf32>
    %95 = tpu.matmul %92, %94, %cst_105 {dimension_numbers = #tpu.dot_dimension_numbers<[1], [0], [0], [1], [0, 0, 1, 1], [], []>} : vector<256x384xbf16>, vector<384x128xbf16>, vector<256x128xf32> -> vector<256x128xf32>
    %96 = arith.addf %90, %95 : vector<256x128xf32>
    %c0_106 = arith.constant 0 : index
    %c10 = arith.constant 10 : index
    %c0_107 = arith.constant 0 : index
    %c0_108 = arith.constant 0 : index
    %97 = vector.load %arg6[%c0_106, %c10, %c0_107, %c0_108] : memref<2x18x16x384xbf16, #tpu.memory_space<vmem>>, vector<2x8x16x384xbf16>
    %98 = vector.shape_cast %97 : vector<2x8x16x384xbf16> to vector<256x384xbf16>
    %c2_109 = arith.constant 2 : index
    %c0_110 = arith.constant 0 : index
    %c0_111 = arith.constant 0 : index
    %99 = vector.load %arg3[%c2_109, %c0_110, %c0_111] : memref<3x384x128xbf16, #tpu.memory_space<vmem>>, vector<1x384x128xbf16>
    %100 = vector.shape_cast %99 : vector<1x384x128xbf16> to vector<384x128xbf16>
    %cst_112 = arith.constant dense<0.000000e+00> : vector<256x128xf32>
    %101 = tpu.matmul %98, %100, %cst_112 {dimension_numbers = #tpu.dot_dimension_numbers<[1], [0], [0], [1], [0, 0, 1, 1], [], []>} : vector<256x384xbf16>, vector<384x128xbf16>, vector<256x128xf32> -> vector<256x128xf32>
    %102 = arith.addf %96, %101 : vector<256x128xf32>
    %103 = vector.broadcast %2 : vector<1x128xf32> to vector<256x128xf32>
    %104 = arith.mulf %102, %103 : vector<256x128xf32>
    %105 = vector.broadcast %3 : vector<1x128xf32> to vector<256x128xf32>
    %106 = arith.addf %104, %105 : vector<256x128xf32>
    %cst_113 = arith.constant 0.000000e+00 : f32
    %107 = vector.broadcast %cst_113 : f32 to vector<256x128xf32>
    %108 = arith.cmpf oge, %106, %107 : vector<256x128xf32>
    %109 = vector.broadcast %4 : vector<1x128xf32> to vector<256x128xf32>
    %110 = arith.mulf %109, %106 : vector<256x128xf32>
    %111 = arith.select %108, %106, %110 : vector<256x128xi1>, vector<256x128xf32>
    %112 = vector.shape_cast %111 : vector<256x128xf32> to vector<2x8x16x128xf32>
    %cst_114 = arith.constant 0.000000e+00 : f32
    %113 = vector.broadcast %cst_114 : f32 to vector<2x8x1x128xf32>
    %114 = vector.extract_strided_slice %112 {offsets = [0, 0, 0, 0], sizes = [2, 8, 15, 128], strides = [1, 1, 1, 1]} : vector<2x8x16x128xf32> to vector<2x8x15x128xf32>
    %115 = tpu.concatenate %113, %114 in 2 : vector<2x8x1x128xf32>, vector<2x8x15x128xf32> -> vector<2x8x16x128xf32>
    %116 = vector.extract_strided_slice %112 {offsets = [0, 0, 1, 0], sizes = [2, 8, 15, 128], strides = [1, 1, 1, 1]} : vector<2x8x16x128xf32> to vector<2x8x15x128xf32>
    %117 = tpu.concatenate %116, %113 in 2 : vector<2x8x15x128xf32>, vector<2x8x1x128xf32> -> vector<2x8x16x128xf32>
    %118 = arith.truncf %115 : vector<2x8x16x128xf32> to vector<2x8x16x128xbf16>
    %c0_115 = arith.constant 0 : index
    %c9_116 = arith.constant 9 : index
    %c0_117 = arith.constant 0 : index
    %c0_118 = arith.constant 0 : index
    %119 = vector.load %arg7[%c0_115, %c9_116, %c0_117, %c0_118] : memref<2x18x16x384xbf16, #tpu.memory_space<vmem>>, vector<2x8x16x128xbf16>
    tpu.vector_store %arg7[%c0_115, %c9_116, %c0_117, %c0_118], %118 {strides = array<i32>} : memref<2x18x16x384xbf16, #tpu.memory_space<vmem>>, vector<2x8x16x128xbf16>,
    %120 = arith.truncf %112 : vector<2x8x16x128xf32> to vector<2x8x16x128xbf16>
    %c0_119 = arith.constant 0 : index
    %c9_120 = arith.constant 9 : index
    %c0_121 = arith.constant 0 : index
    %c128_122 = arith.constant 128 : index
    %121 = vector.load %arg7[%c0_119, %c9_120, %c0_121, %c128_122] : memref<2x18x16x384xbf16, #tpu.memory_space<vmem>>, vector<2x8x16x128xbf16>
    tpu.vector_store %arg7[%c0_119, %c9_120, %c0_121, %c128_122], %120 {strides = array<i32>} : memref<2x18x16x384xbf16, #tpu.memory_space<vmem>>, vector<2x8x16x128xbf16>,
    %122 = arith.truncf %117 : vector<2x8x16x128xf32> to vector<2x8x16x128xbf16>
    %c0_123 = arith.constant 0 : index
    %c9_124 = arith.constant 9 : index
    %c0_125 = arith.constant 0 : index
    %c256_126 = arith.constant 256 : index
    %123 = vector.load %arg7[%c0_123, %c9_124, %c0_125, %c256_126] : memref<2x18x16x384xbf16, #tpu.memory_space<vmem>>, vector<2x8x16x128xbf16>
    tpu.vector_store %arg7[%c0_123, %c9_124, %c0_125, %c256_126], %122 {strides = array<i32>} : memref<2x18x16x384xbf16, #tpu.memory_space<vmem>>, vector<2x8x16x128xbf16>,
    %c0_127 = arith.constant 0 : index
    %c0_128 = arith.constant 0 : index
    %c0_129 = arith.constant 0 : index
    %c0_130 = arith.constant 0 : index
    %124 = vector.load %arg7[%c0_127, %c0_128, %c0_129, %c0_130] : memref<2x18x16x384xbf16, #tpu.memory_space<vmem>>, vector<2x8x16x384xbf16>
    %125 = vector.shape_cast %124 : vector<2x8x16x384xbf16> to vector<256x384xbf16>
    %c0_131 = arith.constant 0 : index
    %c0_132 = arith.constant 0 : index
    %c0_133 = arith.constant 0 : index
    %126 = vector.load %arg4[%c0_131, %c0_132, %c0_133] : memref<3x384x128xbf16, #tpu.memory_space<vmem>>, vector<1x384x128xbf16>
    %127 = vector.shape_cast %126 : vector<1x384x128xbf16> to vector<384x128xbf16>
    %cst_134 = arith.constant dense<0.000000e+00> : vector<256x128xf32>
    %128 = tpu.matmul %125, %127, %cst_134 {dimension_numbers = #tpu.dot_dimension_numbers<[1], [0], [0], [1], [0, 0, 1, 1], [], []>} : vector<256x384xbf16>, vector<384x128xbf16>, vector<256x128xf32> -> vector<256x128xf32>
    %c0_135 = arith.constant 0 : index
    %c1_136 = arith.constant 1 : index
    %c0_137 = arith.constant 0 : index
    %c0_138 = arith.constant 0 : index
    %129 = vector.load %arg7[%c0_135, %c1_136, %c0_137, %c0_138] : memref<2x18x16x384xbf16, #tpu.memory_space<vmem>>, vector<2x8x16x384xbf16>
    %130 = vector.shape_cast %129 : vector<2x8x16x384xbf16> to vector<256x384xbf16>
    %c1_139 = arith.constant 1 : index
    %c0_140 = arith.constant 0 : index
    %c0_141 = arith.constant 0 : index
    %131 = vector.load %arg4[%c1_139, %c0_140, %c0_141] : memref<3x384x128xbf16, #tpu.memory_space<vmem>>, vector<1x384x128xbf16>
    %132 = vector.shape_cast %131 : vector<1x384x128xbf16> to vector<384x128xbf16>
    %cst_142 = arith.constant dense<0.000000e+00> : vector<256x128xf32>
    %133 = tpu.matmul %130, %132, %cst_142 {dimension_numbers = #tpu.dot_dimension_numbers<[1], [0], [0], [1], [0, 0, 1, 1], [], []>} : vector<256x384xbf16>, vector<384x128xbf16>, vector<256x128xf32> -> vector<256x128xf32>
    %134 = arith.addf %128, %133 : vector<256x128xf32>
    %c0_143 = arith.constant 0 : index
    %c2_144 = arith.constant 2 : index
    %c0_145 = arith.constant 0 : index
    %c0_146 = arith.constant 0 : index
    %135 = vector.load %arg7[%c0_143, %c2_144, %c0_145, %c0_146] : memref<2x18x16x384xbf16, #tpu.memory_space<vmem>>, vector<2x8x16x384xbf16>
    %136 = vector.shape_cast %135 : vector<2x8x16x384xbf16> to vector<256x384xbf16>
    %c2_147 = arith.constant 2 : index
    %c0_148 = arith.constant 0 : index
    %c0_149 = arith.constant 0 : index
    %137 = vector.load %arg4[%c2_147, %c0_148, %c0_149] : memref<3x384x128xbf16, #tpu.memory_space<vmem>>, vector<1x384x128xbf16>
    %138 = vector.shape_cast %137 : vector<1x384x128xbf16> to vector<384x128xbf16>
    %cst_150 = arith.constant dense<0.000000e+00> : vector<256x128xf32>
    %139 = tpu.matmul %136, %138, %cst_150 {dimension_numbers = #tpu.dot_dimension_numbers<[1], [0], [0], [1], [0, 0, 1, 1], [], []>} : vector<256x384xbf16>, vector<384x128xbf16>, vector<256x128xf32> -> vector<256x128xf32>
    %140 = arith.addf %134, %139 : vector<256x128xf32>
    %141 = vector.broadcast %5 : vector<1x128xf32> to vector<256x128xf32>
    %142 = arith.mulf %140, %141 : vector<256x128xf32>
    %143 = vector.broadcast %6 : vector<1x128xf32> to vector<256x128xf32>
    %144 = arith.addf %142, %143 : vector<256x128xf32>
    %c0_151 = arith.constant 0 : index
    %c0_152 = arith.constant 0 : index
    %c0_153 = arith.constant 0 : index
    %c0_154 = arith.constant 0 : index
    %145 = vector.load %arg1[%c0_151, %c0_152, %c0_153, %c0_154] : memref<2x16x16x128xf32, #tpu.memory_space<vmem>>, vector<2x8x16x128xf32>
    %146 = vector.shape_cast %145 : vector<2x8x16x128xf32> to vector<256x128xf32>
    %147 = arith.addf %144, %146 : vector<256x128xf32>
    %148 = vector.shape_cast %147 : vector<256x128xf32> to vector<2x8x16x128xf32>
    %c0_155 = arith.constant 0 : index
    %c0_156 = arith.constant 0 : index
    %c0_157 = arith.constant 0 : index
    %c0_158 = arith.constant 0 : index
    %149 = vector.load %arg5[%c0_155, %c0_156, %c0_157, %c0_158] : memref<2x16x16x128xf32, #tpu.memory_space<vmem>>, vector<2x8x16x128xf32>
    tpu.vector_store %arg5[%c0_155, %c0_156, %c0_157, %c0_158], %148 {strides = array<i32>} : memref<2x16x16x128xf32, #tpu.memory_space<vmem>>, vector<2x8x16x128xf32>,
    %c0_159 = arith.constant 0 : index
    %c8_160 = arith.constant 8 : index
    %c0_161 = arith.constant 0 : index
    %c0_162 = arith.constant 0 : index
    %150 = vector.load %arg7[%c0_159, %c8_160, %c0_161, %c0_162] : memref<2x18x16x384xbf16, #tpu.memory_space<vmem>>, vector<2x8x16x384xbf16>
    %151 = vector.shape_cast %150 : vector<2x8x16x384xbf16> to vector<256x384xbf16>
    %c0_163 = arith.constant 0 : index
    %c0_164 = arith.constant 0 : index
    %c0_165 = arith.constant 0 : index
    %152 = vector.load %arg4[%c0_163, %c0_164, %c0_165] : memref<3x384x128xbf16, #tpu.memory_space<vmem>>, vector<1x384x128xbf16>
    %153 = vector.shape_cast %152 : vector<1x384x128xbf16> to vector<384x128xbf16>
    %cst_166 = arith.constant dense<0.000000e+00> : vector<256x128xf32>
    %154 = tpu.matmul %151, %153, %cst_166 {dimension_numbers = #tpu.dot_dimension_numbers<[1], [0], [0], [1], [0, 0, 1, 1], [], []>} : vector<256x384xbf16>, vector<384x128xbf16>, vector<256x128xf32> -> vector<256x128xf32>
    %c0_167 = arith.constant 0 : index
    %c9_168 = arith.constant 9 : index
    %c0_169 = arith.constant 0 : index
    %c0_170 = arith.constant 0 : index
    %155 = vector.load %arg7[%c0_167, %c9_168, %c0_169, %c0_170] : memref<2x18x16x384xbf16, #tpu.memory_space<vmem>>, vector<2x8x16x384xbf16>
    %156 = vector.shape_cast %155 : vector<2x8x16x384xbf16> to vector<256x384xbf16>
    %c1_171 = arith.constant 1 : index
    %c0_172 = arith.constant 0 : index
    %c0_173 = arith.constant 0 : index
    %157 = vector.load %arg4[%c1_171, %c0_172, %c0_173] : memref<3x384x128xbf16, #tpu.memory_space<vmem>>, vector<1x384x128xbf16>
    %158 = vector.shape_cast %157 : vector<1x384x128xbf16> to vector<384x128xbf16>
    %cst_174 = arith.constant dense<0.000000e+00> : vector<256x128xf32>
    %159 = tpu.matmul %156, %158, %cst_174 {dimension_numbers = #tpu.dot_dimension_numbers<[1], [0], [0], [1], [0, 0, 1, 1], [], []>} : vector<256x384xbf16>, vector<384x128xbf16>, vector<256x128xf32> -> vector<256x128xf32>
    %160 = arith.addf %154, %159 : vector<256x128xf32>
    %c0_175 = arith.constant 0 : index
    %c10_176 = arith.constant 10 : index
    %c0_177 = arith.constant 0 : index
    %c0_178 = arith.constant 0 : index
    %161 = vector.load %arg7[%c0_175, %c10_176, %c0_177, %c0_178] : memref<2x18x16x384xbf16, #tpu.memory_space<vmem>>, vector<2x8x16x384xbf16>
    %162 = vector.shape_cast %161 : vector<2x8x16x384xbf16> to vector<256x384xbf16>
    %c2_179 = arith.constant 2 : index
    %c0_180 = arith.constant 0 : index
    %c0_181 = arith.constant 0 : index
    %163 = vector.load %arg4[%c2_179, %c0_180, %c0_181] : memref<3x384x128xbf16, #tpu.memory_space<vmem>>, vector<1x384x128xbf16>
    %164 = vector.shape_cast %163 : vector<1x384x128xbf16> to vector<384x128xbf16>
    %cst_182 = arith.constant dense<0.000000e+00> : vector<256x128xf32>
    %165 = tpu.matmul %162, %164, %cst_182 {dimension_numbers = #tpu.dot_dimension_numbers<[1], [0], [0], [1], [0, 0, 1, 1], [], []>} : vector<256x384xbf16>, vector<384x128xbf16>, vector<256x128xf32> -> vector<256x128xf32>
    %166 = arith.addf %160, %165 : vector<256x128xf32>
    %167 = vector.broadcast %5 : vector<1x128xf32> to vector<256x128xf32>
    %168 = arith.mulf %166, %167 : vector<256x128xf32>
    %169 = vector.broadcast %6 : vector<1x128xf32> to vector<256x128xf32>
    %170 = arith.addf %168, %169 : vector<256x128xf32>
    %c0_183 = arith.constant 0 : index
    %c8_184 = arith.constant 8 : index
    %c0_185 = arith.constant 0 : index
    %c0_186 = arith.constant 0 : index
    %171 = vector.load %arg1[%c0_183, %c8_184, %c0_185, %c0_186] : memref<2x16x16x128xf32, #tpu.memory_space<vmem>>, vector<2x8x16x128xf32>
    %172 = vector.shape_cast %171 : vector<2x8x16x128xf32> to vector<256x128xf32>
    %173 = arith.addf %170, %172 : vector<256x128xf32>
    %174 = vector.shape_cast %173 : vector<256x128xf32> to vector<2x8x16x128xf32>
    %c0_187 = arith.constant 0 : index
    %c8_188 = arith.constant 8 : index
    %c0_189 = arith.constant 0 : index
    %c0_190 = arith.constant 0 : index
    %175 = vector.load %arg5[%c0_187, %c8_188, %c0_189, %c0_190] : memref<2x16x16x128xf32, #tpu.memory_space<vmem>>, vector<2x8x16x128xf32>
    tpu.vector_store %arg5[%c0_187, %c8_188, %c0_189, %c0_190], %174 {strides = array<i32>} : memref<2x16x16x128xf32, #tpu.memory_space<vmem>>, vector<2x8x16x128xf32>,
    return
  }
  func.func @transform_0(%arg0: i32) -> (i32, i32, i32, i32) {
    %c0_i32 = arith.constant 0 : i32
    %c0_i32_0 = arith.constant 0 : i32
    %c0_i32_1 = arith.constant 0 : i32
    %c0_i32_2 = arith.constant 0 : i32
    return %arg0, %c0_i32, %c0_i32_0, %c0_i32_1 : i32, i32, i32, i32
  }
  func.func @transform_1(%arg0: i32) -> (i32, i32) {
    %c0_i32 = arith.constant 0 : i32
    %c0_i32_0 = arith.constant 0 : i32
    %c0_i32_1 = arith.constant 0 : i32
    return %c0_i32, %c0_i32_0 : i32, i32
  }
  func.func @transform_2(%arg0: i32) -> (i32, i32, i32) {
    %c0_i32 = arith.constant 0 : i32
    %c0_i32_0 = arith.constant 0 : i32
    %c0_i32_1 = arith.constant 0 : i32
    %c0_i32_2 = arith.constant 0 : i32
    return %c0_i32, %c0_i32_0, %c0_i32_1 : i32, i32, i32
  }
  func.func @transform_3(%arg0: i32) -> (i32, i32, i32) {
    %c0_i32 = arith.constant 0 : i32
    %c0_i32_0 = arith.constant 0 : i32
    %c0_i32_1 = arith.constant 0 : i32
    %c0_i32_2 = arith.constant 0 : i32
    return %c0_i32, %c0_i32_0, %c0_i32_1 : i32, i32, i32
  }
  func.func @transform_4(%arg0: i32) -> (i32, i32, i32, i32) {
    %c0_i32 = arith.constant 0 : i32
    %c0_i32_0 = arith.constant 0 : i32
    %c0_i32_1 = arith.constant 0 : i32
    %c0_i32_2 = arith.constant 0 : i32
    return %arg0, %c0_i32, %c0_i32_0, %c0_i32_1 : i32, i32, i32, i32
  }
}

</mosaic_0001>

<llo_original>
// kernel: tpu_custom_call.1
$region0: #{tpu_custom_call.1}
  #allocation0 [shape = 'u32[]', space=smem, size = 0x4, offset = 0x4, fixed_abs, tag = 'smem constant byte address 0x4 - core index']
  #allocation1 [shape = 'u32[144,128]{1,0:T(1,128)}', space=vmem, size = 0x12000, scoped, tag = 'internal scratch']
  #allocation2 [shape = 'bf16[2,18,16,384]{3,2,1,0:T(8,128)(2,1)}', space=vmem, size = 0x6c000, scoped, tag = 'scratch operand']
  #allocation3 [shape = 'bf16[2,18,16,384]{3,2,1,0:T(8,128)(2,1)}', space=vmem, size = 0x6c000, scoped, tag = 'scratch operand']
  %s0 = inlined_call_operand.hbm [shape: f32[2,16,16,128], index: 0, kind: input, shape index: {}]
  %s1 = inlined_call_operand.hbm [shape: f32[8,128], index: 1, kind: input, shape index: {}]
  %s2 = inlined_call_operand.hbm [shape: bf16[3,384,128], index: 2, kind: input, shape index: {}]
  %s3 = inlined_call_operand.hbm [shape: bf16[3,384,128], index: 3, kind: input, shape index: {}]
  %s4 = inlined_call_operand.hbm [shape: f32[2,16,16,128], index: 4, kind: output, shape index: {}]
  %s5 = sld [smem:[#allocation0]]
  $region42: #{tpu_custom_call.1} parent=0
    _
  %s7 = ssub.s32 1, %s5
  %s8 = scalar_select 0, %s7, %s5
  $region1: #{tpu_custom_call.1} parent=0
    #allocation4 [shape = 'u8[262144]{0}', space=vmem, size = 0x40000, scoped, tag = 'input window, operand 0, single buffered']
    #allocation5 [shape = 's32[1]{0}', space=sflag, size = 0x4, scoped, tag = 'scoped memory for tpu_custom_call.1']
    #allocation6 [shape = 's32[1]{0}', space=sflag, size = 0x4, scoped, tag = 'scoped memory for tpu_custom_call.1']
    #allocation7 [shape = 'u8[4096]{0}', space=vmem, size = 0x1000, scoped, tag = 'input window, operand 1, single buffered']
    #allocation8 [shape = 's32[1]{0}', space=sflag, size = 0x4, scoped, tag = 'scoped memory for tpu_custom_call.1']
    #allocation9 [shape = 'u8[294912]{0}', space=vmem, size = 0x48000, scoped, tag = 'input window, operand 2, single buffered']
    #allocation10 [shape = 'u8[294912]{0}', space=vmem, size = 0x48000, scoped, tag = 'input window, operand 3, single buffered']
    #allocation11 [shape = 's32[1]{0}', space=sflag, size = 0x4, scoped, tag = 'scoped memory for tpu_custom_call.1']
    #allocation12 [shape = 'u8[262144]{0}', space=vmem, size = 0x40000, scoped, tag = 'output window, operand 0, single buffered']
    %9 = vsyncpa [#allocation5], 0
    %10 = vsyncpa [#allocation8], 0
    %11 = vsyncpa [#allocation11], 0
    %12 = vsyncpa [#allocation6], 0
    // Predicated region
    $region2: #{tpu_custom_call.1} parent=1 // pred_check
      _
    $region3: #{tpu_custom_call.1} parent=1 // pred_check_branch
      %14 = sbr.rel (0) target = $region5
    $region4: #{tpu_custom_call.1} parent=1 // pred_region
      %s16 = ssub.s32 8192, 8192
      %17 = vsyncadd [#allocation5], %s16
      %s18 = sshll.u32 [#allocation4], 4
      %s19 = int_to_ptr.vmem [resolvable:$true] %s18
      %24 = dma.hbm_to_vmem [thread:$0]  %s0, 8192, %s19, [#allocation5], 128, 128, 8
    $region5: #{tpu_custom_call.1} parent=1 // pred_fallthru
      _
    // Predicated region
    $region6: #{tpu_custom_call.1} parent=1 // pred_check
      _
    $region7: #{tpu_custom_call.1} parent=1 // pred_check_branch
      %26 = sbr.rel (0) target = $region9
    $region8: #{tpu_custom_call.1} parent=1 // pred_region
      %s28 = ssub.s32 128, 128
      %29 = vsyncadd [#allocation8], %s28
      %s31 = sshll.u32 [#allocation7], 4
      %s32 = int_to_ptr.vmem [resolvable:$true] %s31
      %34 = dma.hbm_to_vmem [thread:$0]  %s1, 128, %s32, [#allocation8]
    $region9: #{tpu_custom_call.1} parent=1 // pred_fallthru
      _
    // Predicated region
    $region10: #{tpu_custom_call.1} parent=1 // pred_check
      _
    $region11: #{tpu_custom_call.1} parent=1 // pred_check_branch
      %36 = sbr.rel (0) target = $region13
    $region12: #{tpu_custom_call.1} parent=1 // pred_region
      %s38 = ssub.s32 9216, 9216
      %39 = vsyncadd [#allocation8], %s38
      %s40 = sshll.u32 [#allocation9], 4
      %s41 = int_to_ptr.vmem [resolvable:$true] %s40
      %46 = dma.hbm_to_vmem [thread:$0]  %s2, 9216, %s41, [#allocation8], 64, 64, 4
    $region13: #{tpu_custom_call.1} parent=1 // pred_fallthru
      _
    // Predicated region
    $region14: #{tpu_custom_call.1} parent=1 // pred_check
      _
    $region15: #{tpu_custom_call.1} parent=1 // pred_check_branch
      %48 = sbr.rel (0) target = $region17
    $region16: #{tpu_custom_call.1} parent=1 // pred_region
      %s50 = ssub.s32 9216, 9216
      %51 = vsyncadd [#allocation11], %s50
      %s52 = sshll.u32 [#allocation10], 4
      %s53 = int_to_ptr.vmem [resolvable:$true] %s52
      %58 = dma.hbm_to_vmem [thread:$0]  %s3, 9216, %s53, [#allocation11], 64, 64, 4
    $region17: #{tpu_custom_call.1} parent=1 // pred_fallthru
      _
    // Predicated region
    $region18: #{tpu_custom_call.1} parent=1 // pred_check
      _
    $region19: #{tpu_custom_call.1} parent=1 // pred_check_branch
      %60 = sbr.rel (0) target = $region21
    $region20: #{tpu_custom_call.1} parent=1 // pred_region
      %61 = dma.done [#allocation5], 8192
    $region21: #{tpu_custom_call.1} parent=1 // pred_fallthru
      _
    // Predicated region
    $region22: #{tpu_custom_call.1} parent=1 // pred_check
      _
    $region23: #{tpu_custom_call.1} parent=1 // pred_check_branch
      %63 = sbr.rel (0) target = $region25
    $region24: #{tpu_custom_call.1} parent=1 // pred_region
      %64 = dma.done [#allocation8], 128
    $region25: #{tpu_custom_call.1} parent=1 // pred_fallthru
      _
    // Predicated region
    $region26: #{tpu_custom_call.1} parent=1 // pred_check
      _
    $region27: #{tpu_custom_call.1} parent=1 // pred_check_branch
      %66 = sbr.rel (0) target = $region29
    $region28: #{tpu_custom_call.1} parent=1 // pred_region
      %67 = dma.done [#allocation8], 9216
    $region29: #{tpu_custom_call.1} parent=1 // pred_fallthru
      _
    // Predicated region
    $region30: #{tpu_custom_call.1} parent=1 // pred_check
      _
    $region31: #{tpu_custom_call.1} parent=1 // pred_check_branch
      %69 = sbr.rel (0) target = $region33
    $region32: #{tpu_custom_call.1} parent=1 // pred_region
      %70 = dma.done [#allocation11], 9216
    $region33: #{tpu_custom_call.1} parent=1 // pred_fallthru
      _
    %v72 = vld [vmem:[#allocation7] sm:$0x1]
    %v73 = vld [vmem:[#allocation7 + $0x1] sm:$0x1]
    %v74 = vld [vmem:[#allocation7 + $0x2] sm:$0x1]
    %v75 = vld [vmem:[#allocation7 + $0x3] sm:$0x1]
    %v76 = vld [vmem:[#allocation7 + $0x4] sm:$0x1]
    %v77 = vld [vmem:[#allocation7 + $0x5] sm:$0x1]
    %v78 = vld [vmem:[#allocation7 + $0x6] sm:$0x1]
    %79 = vst [vmem:[#allocation2] sm:$0xff] 0
    %80 = vst [vmem:[#allocation2 + $0x8] sm:$0xf] 0
    %81 = vst [vmem:[#allocation2 + $0xc] sm:$0xff] 0
    %82 = vst [vmem:[#allocation2 + $0x14] sm:$0xf] 0
    %83 = vst [vmem:[#allocation2 + $0x1b0] sm:$0xff] 0
    %84 = vst [vmem:[#allocation2 + $0x1b8] sm:$0xf] 0
    %85 = vst [vmem:[#allocation2 + $0x1bc] sm:$0xff] 0
    %86 = vst [vmem:[#allocation2 + $0x1c4] sm:$0xf] 0
    %s87 = scalar_lea.vmem [#allocation2], 408
    %88 = vst [vmem:[%s87] sm:$0xff] 0
    %89 = vst [vmem:[%s87 + $0x8] sm:$0xf] 0
    %90 = vst [vmem:[%s87 + $0xc] sm:$0xff] 0
    %91 = vst [vmem:[%s87 + $0x14] sm:$0xf] 0
    %92 = vst [vmem:[%s87 + $0x1b0] sm:$0xff] 0
    %93 = vst [vmem:[%s87 + $0x1b8] sm:$0xf] 0
    %94 = vst [vmem:[%s87 + $0x1bc] sm:$0xff] 0
    %95 = vst [vmem:[%s87 + $0x1c4] sm:$0xf] 0
    %96 = vst [vmem:[#allocation3] sm:$0xff] 0
    %97 = vst [vmem:[#allocation3 + $0x8] sm:$0xf] 0
    %98 = vst [vmem:[#allocation3 + $0xc] sm:$0xff] 0
    %99 = vst [vmem:[#allocation3 + $0x14] sm:$0xf] 0
    %100 = vst [vmem:[#allocation3 + $0x1b0] sm:$0xff] 0
    %101 = vst [vmem:[#allocation3 + $0x1b8] sm:$0xf] 0
    %102 = vst [vmem:[#allocation3 + $0x1bc] sm:$0xff] 0
    %103 = vst [vmem:[#allocation3 + $0x1c4] sm:$0xf] 0
    %s104 = scalar_lea.vmem [#allocation3], 408
    %105 = vst [vmem:[%s104] sm:$0xff] 0
    %106 = vst [vmem:[%s104 + $0x8] sm:$0xf] 0
    %107 = vst [vmem:[%s104 + $0xc] sm:$0xff] 0
    %108 = vst [vmem:[%s104 + $0x14] sm:$0xf] 0
    %109 = vst [vmem:[%s104 + $0x1b0] sm:$0xff] 0
    %110 = vst [vmem:[%s104 + $0x1b8] sm:$0xf] 0
    %111 = vst [vmem:[%s104 + $0x1bc] sm:$0xff] 0
    %112 = vst [vmem:[%s104 + $0x1c4] sm:$0xf] 0
    %v113 = vld [vmem:[#allocation4] sm:$0xff]
    %v114 = vld [vmem:[#allocation4 + $0x8] sm:$0xff]
    %v115 = vld [vmem:[#allocation4 + $0x10] sm:$0xff]
    %v116 = vld [vmem:[#allocation4 + $0x18] sm:$0xff]
    %v117 = vld [vmem:[#allocation4 + $0x20] sm:$0xff]
    %v118 = vld [vmem:[#allocation4 + $0x28] sm:$0xff]
    %v119 = vld [vmem:[#allocation4 + $0x30] sm:$0xff]
    %v120 = vld [vmem:[#allocation4 + $0x38] sm:$0xff]
    %v121 = vld [vmem:[#allocation4 + $0x40] sm:$0xff]
    %v122 = vld [vmem:[#allocation4 + $0x48] sm:$0xff]
    %v123 = vld [vmem:[#allocation4 + $0x50] sm:$0xff]
    %v124 = vld [vmem:[#allocation4 + $0x58] sm:$0xff]
    %v125 = vld [vmem:[#allocation4 + $0x60] sm:$0xff]
    %v126 = vld [vmem:[#allocation4 + $0x68] sm:$0xff]
    %v127 = vld [vmem:[#allocation4 + $0x70] sm:$0xff]
    %v128 = vld [vmem:[#allocation4 + $0x78] sm:$0xff]
    %v129 = vld [vmem:[#allocation4 + $0x100] sm:$0xff]
    %v130 = vld [vmem:[#allocation4 + $0x108] sm:$0xff]
    %v131 = vld [vmem:[#allocation4 + $0x110] sm:$0xff]
    %v132 = vld [vmem:[#allocation4 + $0x118] sm:$0xff]
    %v133 = vld [vmem:[#allocation4 + $0x120] sm:$0xff]
    %v134 = vld [vmem:[#allocation4 + $0x128] sm:$0xff]
    %v135 = vld [vmem:[#allocation4 + $0x130] sm:$0xff]
    %v136 = vld [vmem:[#allocation4 + $0x138] sm:$0xff]
    %v137 = vld [vmem:[#allocation4 + $0x140] sm:$0xff]
    %v138 = vld [vmem:[#allocation4 + $0x148] sm:$0xff]
    %v139 = vld [vmem:[#allocation4 + $0x150] sm:$0xff]
    %v140 = vld [vmem:[#allocation4 + $0x158] sm:$0xff]
    %v141 = vld [vmem:[#allocation4 + $0x160] sm:$0xff]
    %v142 = vld [vmem:[#allocation4 + $0x168] sm:$0xff]
    %v143 = vld [vmem:[#allocation4 + $0x170] sm:$0xff]
    %v144 = vld [vmem:[#allocation4 + $0x178] sm:$0xff]
    %v145 = vlaneseq
    %v146 = vshrl.u32 %v145, 7
    %v147 = vsub.s32 0, %v146
    %v148 = vrot.slane %v72, %v147
    %v149 = vmul.f32 %v113, %v148
    %v150 = vmul.f32 %v114, %v148
    %v151 = vmul.f32 %v115, %v148
    %v152 = vmul.f32 %v116, %v148
    %v153 = vmul.f32 %v117, %v148
    %v154 = vmul.f32 %v118, %v148
    %v155 = vmul.f32 %v119, %v148
    %v156 = vmul.f32 %v120, %v148
    %v157 = vmul.f32 %v121, %v148
    %v158 = vmul.f32 %v122, %v148
    %v159 = vmul.f32 %v123, %v148
    %v160 = vmul.f32 %v124, %v148
    %v161 = vmul.f32 %v125, %v148
    %v162 = vmul.f32 %v126, %v148
    %v163 = vmul.f32 %v127, %v148
    %v164 = vmul.f32 %v128, %v148
    %v165 = vmul.f32 %v129, %v148
    %v166 = vmul.f32 %v130, %v148
    %v167 = vmul.f32 %v131, %v148
    %v168 = vmul.f32 %v132, %v148
    %v169 = vmul.f32 %v133, %v148
    %v170 = vmul.f32 %v134, %v148
    %v171 = vmul.f32 %v135, %v148
    %v172 = vmul.f32 %v136, %v148
    %v173 = vmul.f32 %v137, %v148
    %v174 = vmul.f32 %v138, %v148
    %v175 = vmul.f32 %v139, %v148
    %v176 = vmul.f32 %v140, %v148
    %v177 = vmul.f32 %v141, %v148
    %v178 = vmul.f32 %v142, %v148
    %v179 = vmul.f32 %v143, %v148
    %v180 = vmul.f32 %v144, %v148
    %v181 = vlaneseq
    %v182 = vshrl.u32 %v181, 7
    %v183 = vsub.s32 0, %v182
    %v184 = vrot.slane %v73, %v183
    %v185 = vadd.f32 %v149, %v184
    %v186 = vadd.f32 %v150, %v184
    %v187 = vadd.f32 %v151, %v184
    %v188 = vadd.f32 %v152, %v184
    %v189 = vadd.f32 %v153, %v184
    %v190 = vadd.f32 %v154, %v184
    %v191 = vadd.f32 %v155, %v184
    %v192 = vadd.f32 %v156, %v184
    %v193 = vadd.f32 %v157, %v184
    %v194 = vadd.f32 %v158, %v184
    %v195 = vadd.f32 %v159, %v184
    %v196 = vadd.f32 %v160, %v184
    %v197 = vadd.f32 %v161, %v184
    %v198 = vadd.f32 %v162, %v184
    %v199 = vadd.f32 %v163, %v184
    %v200 = vadd.f32 %v164, %v184
    %v201 = vadd.f32 %v165, %v184
    %v202 = vadd.f32 %v166, %v184
    %v203 = vadd.f32 %v167, %v184
    %v204 = vadd.f32 %v168, %v184
    %v205 = vadd.f32 %v169, %v184
    %v206 = vadd.f32 %v170, %v184
    %v207 = vadd.f32 %v171, %v184
    %v208 = vadd.f32 %v172, %v184
    %v209 = vadd.f32 %v173, %v184
    %v210 = vadd.f32 %v174, %v184
    %v211 = vadd.f32 %v175, %v184
    %v212 = vadd.f32 %v176, %v184
    %v213 = vadd.f32 %v177, %v184
    %v214 = vadd.f32 %v178, %v184
    %v215 = vadd.f32 %v179, %v184
    %v216 = vadd.f32 %v180, %v184
    %vm249 = vcmask 1040384
    %v250 = vrot.slane %v185, 7
    %v251 = vrot.slane %v186, 7
    %v252 = vsel %vm249, %v250, %v251
    %v253 = vrot.slane %v187, 7
    %v254 = vrot.slane %v188, 7
    %v255 = vsel %vm249, %v253, %v254
    %v256 = vrot.slane %v189, 7
    %v257 = vrot.slane %v190, 7
    %v258 = vsel %vm249, %v256, %v257
    %v259 = vrot.slane %v191, 7
    %v260 = vrot.slane %v192, 7
    %v261 = vsel %vm249, %v259, %v260
    %v262 = vrot.slane %v193, 7
    %v263 = vrot.slane %v194, 7
    %v264 = vsel %vm249, %v262, %v263
    %v265 = vrot.slane %v195, 7
    %v266 = vrot.slane %v196, 7
    %v267 = vsel %vm249, %v265, %v266
    %v268 = vrot.slane %v197, 7
    %v269 = vrot.slane %v198, 7
    %v270 = vsel %vm249, %v268, %v269
    %v271 = vrot.slane %v199, 7
    %v272 = vrot.slane %v200, 7
    %v273 = vsel %vm249, %v271, %v272
    %v274 = vrot.slane %v201, 7
    %v275 = vrot.slane %v202, 7
    %v276 = vsel %vm249, %v274, %v275
    %v277 = vrot.slane %v203, 7
    %v278 = vrot.slane %v204, 7
    %v279 = vsel %vm249, %v277, %v278
    %v280 = vrot.slane %v205, 7
    %v281 = vrot.slane %v206, 7
    %v282 = vsel %vm249, %v280, %v281
    %v283 = vrot.slane %v207, 7
    %v284 = vrot.slane %v208, 7
    %v285 = vsel %vm249, %v283, %v284
    %v286 = vrot.slane %v209, 7
    %v287 = vrot.slane %v210, 7
    %v288 = vsel %vm249, %v286, %v287
    %v289 = vrot.slane %v211, 7
    %v290 = vrot.slane %v212, 7
    %v291 = vsel %vm249, %v289, %v290
    %v292 = vrot.slane %v213, 7
    %v293 = vrot.slane %v214, 7
    %v294 = vsel %vm249, %v292, %v293
    %v295 = vrot.slane %v215, 7
    %v296 = vrot.slane %v216, 7
    %v297 = vsel %vm249, %v295, %v296
    %v330 = vsel %vm249, 0.0, %v250
    %v331 = vsel %vm249, 0.0, %v253
    %v332 = vsel %vm249, 0.0, %v256
    %v333 = vsel %vm249, 0.0, %v259
    %v334 = vsel %vm249, 0.0, %v262
    %v335 = vsel %vm249, 0.0, %v265
    %v336 = vsel %vm249, 0.0, %v268
    %v337 = vsel %vm249, 0.0, %v271
    %v338 = vsel %vm249, 0.0, %v274
    %v339 = vsel %vm249, 0.0, %v277
    %v340 = vsel %vm249, 0.0, %v280
    %v341 = vsel %vm249, 0.0, %v283
    %v342 = vsel %vm249, 0.0, %v286
    %v343 = vsel %vm249, 0.0, %v289
    %v344 = vsel %vm249, 0.0, %v292
    %v345 = vsel %vm249, 0.0, %v295
    %vm346 = vcmask 1046528
    %v347 = vrot.slane %v185, 1
    %v348 = vrot.slane %v186, 1
    %v349 = vsel %vm346, %v347, %v348
    %v350 = vrot.slane %v187, 1
    %v351 = vrot.slane %v188, 1
    %v352 = vsel %vm346, %v350, %v351
    %v353 = vrot.slane %v189, 1
    %v354 = vrot.slane %v190, 1
    %v355 = vsel %vm346, %v353, %v354
    %v356 = vrot.slane %v191, 1
    %v357 = vrot.slane %v192, 1
    %v358 = vsel %vm346, %v356, %v357
    %v359 = vrot.slane %v193, 1
    %v360 = vrot.slane %v194, 1
    %v361 = vsel %vm346, %v359, %v360
    %v362 = vrot.slane %v195, 1
    %v363 = vrot.slane %v196, 1
    %v364 = vsel %vm346, %v362, %v363
    %v365 = vrot.slane %v197, 1
    %v366 = vrot.slane %v198, 1
    %v367 = vsel %vm346, %v365, %v366
    %v368 = vrot.slane %v199, 1
    %v369 = vrot.slane %v200, 1
    %v370 = vsel %vm346, %v368, %v369
    %v371 = vrot.slane %v201, 1
    %v372 = vrot.slane %v202, 1
    %v373 = vsel %vm346, %v371, %v372
    %v374 = vrot.slane %v203, 1
    %v375 = vrot.slane %v204, 1
    %v376 = vsel %vm346, %v374, %v375
    %v377 = vrot.slane %v205, 1
    %v378 = vrot.slane %v206, 1
    %v379 = vsel %vm346, %v377, %v378
    %v380 = vrot.slane %v207, 1
    %v381 = vrot.slane %v208, 1
    %v382 = vsel %vm346, %v380, %v381
    %v383 = vrot.slane %v209, 1
    %v384 = vrot.slane %v210, 1
    %v385 = vsel %vm346, %v383, %v384
    %v386 = vrot.slane %v211, 1
    %v387 = vrot.slane %v212, 1
    %v388 = vsel %vm346, %v386, %v387
    %v389 = vrot.slane %v213, 1
    %v390 = vrot.slane %v214, 1
    %v391 = vsel %vm346, %v389, %v390
    %v392 = vrot.slane %v215, 1
    %v393 = vrot.slane %v216, 1
    %v394 = vsel %vm346, %v392, %v393
    %v427 = vsel %vm346, %v348, 0.0
    %v428 = vsel %vm346, %v351, 0.0
    %v429 = vsel %vm346, %v354, 0.0
    %v430 = vsel %vm346, %v357, 0.0
    %v431 = vsel %vm346, %v360, 0.0
    %v432 = vsel %vm346, %v363, 0.0
    %v433 = vsel %vm346, %v366, 0.0
    %v434 = vsel %vm346, %v369, 0.0
    %v435 = vsel %vm346, %v372, 0.0
    %v436 = vsel %vm346, %v375, 0.0
    %v437 = vsel %vm346, %v378, 0.0
    %v438 = vsel %vm346, %v381, 0.0
    %v439 = vsel %vm346, %v384, 0.0
    %v440 = vsel %vm346, %v387, 0.0
    %v441 = vsel %vm346, %v390, 0.0
    %v442 = vsel %vm346, %v393, 0.0
    %v443 = vpack.c.bf16 %v252, %v330
    %v444 = vpack.c.bf16 %v255, %v331
    %v445 = vpack.c.bf16 %v258, %v332
    %v446 = vpack.c.bf16 %v261, %v333
    %v447 = vpack.c.bf16 %v264, %v334
    %v448 = vpack.c.bf16 %v267, %v335
    %v449 = vpack.c.bf16 %v270, %v336
    %v450 = vpack.c.bf16 %v273, %v337
    %v451 = vpack.c.bf16 %v276, %v338
    %v452 = vpack.c.bf16 %v279, %v339
    %v453 = vpack.c.bf16 %v282, %v340
    %v454 = vpack.c.bf16 %v285, %v341
    %v455 = vpack.c.bf16 %v288, %v342
    %v456 = vpack.c.bf16 %v291, %v343
    %v457 = vpack.c.bf16 %v294, %v344
    %v458 = vpack.c.bf16 %v297, %v345
    %v475 = vunpack.c.l.b16 %v443
    %v476 = vunpack.c.h.b16 %v443
    %v477 = vunpack.c.l.b16 %v444
    %v478 = vunpack.c.h.b16 %v444
    %v479 = vunpack.c.l.b16 %v445
    %v480 = vunpack.c.h.b16 %v445
    %v481 = vunpack.c.l.b16 %v446
    %v482 = vunpack.c.h.b16 %v446
    %v483 = vunpack.c.l.b16 %v447
    %v484 = vunpack.c.h.b16 %v447
    %v485 = vunpack.c.l.b16 %v448
    %v486 = vunpack.c.h.b16 %v448
    %v487 = vunpack.c.l.b16 %v449
    %v488 = vunpack.c.h.b16 %v449
    %v489 = vunpack.c.l.b16 %v450
    %v490 = vunpack.c.h.b16 %v450
    %v491 = vunpack.c.l.b16 %v451
    %v492 = vunpack.c.h.b16 %v451
    %v493 = vunpack.c.l.b16 %v452
    %v494 = vunpack.c.h.b16 %v452
    %v495 = vunpack.c.l.b16 %v453
    %v496 = vunpack.c.h.b16 %v453
    %v497 = vunpack.c.l.b16 %v454
    %v498 = vunpack.c.h.b16 %v454
    %v499 = vunpack.c.l.b16 %v455
    %v500 = vunpack.c.h.b16 %v455
    %v501 = vunpack.c.l.b16 %v456
    %v502 = vunpack.c.h.b16 %v456
    %v503 = vunpack.c.l.b16 %v457
    %v504 = vunpack.c.h.b16 %v457
    %v505 = vunpack.c.l.b16 %v458
    %v506 = vunpack.c.h.b16 %v458
    %v507 = vpack.c.b16 %v475, %v475
    %v508 = vpack.c.b16 %v476, %v476
    %v509 = vpack.c.b16 %v477, %v477
    %v510 = vpack.c.b16 %v478, %v478
    %v511 = vpack.c.b16 %v479, %v479
    %v512 = vpack.c.b16 %v480, %v480
    %v513 = vpack.c.b16 %v481, %v481
    %v514 = vpack.c.b16 %v482, %v482
    %v515 = vpack.c.b16 %v483, %v483
    %v516 = vpack.c.b16 %v484, %v484
    %v517 = vpack.c.b16 %v485, %v485
    %v518 = vpack.c.b16 %v486, %v486
    %v519 = vpack.c.b16 %v487, %v487
    %v520 = vpack.c.b16 %v488, %v488
    %v521 = vpack.c.b16 %v489, %v489
    %v522 = vpack.c.b16 %v490, %v490
    %v523 = vpack.c.b16 %v491, %v491
    %v524 = vpack.c.b16 %v492, %v492
    %v525 = vpack.c.b16 %v493, %v493
    %v526 = vpack.c.b16 %v494, %v494
    %v527 = vpack.c.b16 %v495, %v495
    %v528 = vpack.c.b16 %v496, %v496
    %v529 = vpack.c.b16 %v497, %v497
    %v530 = vpack.c.b16 %v498, %v498
    %v531 = vpack.c.b16 %v499, %v499
    %v532 = vpack.c.b16 %v500, %v500
    %v533 = vpack.c.b16 %v501, %v501
    %v534 = vpack.c.b16 %v502, %v502
    %v535 = vpack.c.b16 %v503, %v503
    %v536 = vpack.c.b16 %v504, %v504
    %v537 = vpack.c.b16 %v505, %v505
    %v538 = vpack.c.b16 %v506, %v506
    %s571 = scalar_lea.vmem [#allocation2], 24
    %572 = vst [vmem:[%s571] sm:$0xf] %v507
    %573 = vst [vmem:[%s571 + $0xc] sm:$0xf] %v508
    %574 = vst [vmem:[%s571 + $0x18] sm:$0xf] %v509
    %575 = vst [vmem:[%s571 + $0x24] sm:$0xf] %v510
    %576 = vst [vmem:[%s571 + $0x30] sm:$0xf] %v511
    %577 = vst [vmem:[%s571 + $0x3c] sm:$0xf] %v512
    %578 = vst [vmem:[%s571 + $0x48] sm:$0xf] %v513
    %579 = vst [vmem:[%s571 + $0x54] sm:$0xf] %v514
    %580 = vst [vmem:[%s571 + $0x60] sm:$0xf] %v515
    %581 = vst [vmem:[%s571 + $0x6c] sm:$0xf] %v516
    %582 = vst [vmem:[%s571 + $0x78] sm:$0xf] %v517
    %583 = vst [vmem:[%s571 + $0x84] sm:$0xf] %v518
    %584 = vst [vmem:[%s571 + $0x90] sm:$0xf] %v519
    %585 = vst [vmem:[%s571 + $0x9c] sm:$0xf] %v520
    %586 = vst [vmem:[%s571 + $0xa8] sm:$0xf] %v521
    %587 = vst [vmem:[%s571 + $0xb4] sm:$0xf] %v522
    %588 = vst [vmem:[%s571 + $0x1b0] sm:$0xf] %v523
    %589 = vst [vmem:[%s571 + $0x1bc] sm:$0xf] %v524
    %590 = vst [vmem:[%s571 + $0x1c8] sm:$0xf] %v525
    %591 = vst [vmem:[%s571 + $0x1d4] sm:$0xf] %v526
    %592 = vst [vmem:[%s571 + $0x1e0] sm:$0xf] %v527
    %593 = vst [vmem:[%s571 + $0x1ec] sm:$0xf] %v528
    %594 = vst [vmem:[%s571 + $0x1f8] sm:$0xf] %v529
    %595 = vst [vmem:[%s571 + $0x204] sm:$0xf] %v530
    %596 = vst [vmem:[%s571 + $0x210] sm:$0xf] %v531
    %597 = vst [vmem:[%s571 + $0x21c] sm:$0xf] %v532
    %598 = vst [vmem:[%s571 + $0x228] sm:$0xf] %v533
    %599 = vst [vmem:[%s571 + $0x234] sm:$0xf] %v534
    %600 = vst [vmem:[%s571 + $0x240] sm:$0xf] %v535
    %601 = vst [vmem:[%s571 + $0x24c] sm:$0xf] %v536
    %602 = vst [vmem:[%s571 + $0x258] sm:$0xf] %v537
    %603 = vst [vmem:[%s571 + $0x264] sm:$0xf] %v538
    %v604 = vpack.c.bf16 %v186, %v185
    %v605 = vpack.c.bf16 %v188, %v187
    %v606 = vpack.c.bf16 %v190, %v189
    %v607 = vpack.c.bf16 %v192, %v191
    %v608 = vpack.c.bf16 %v194, %v193
    %v609 = vpack.c.bf16 %v196, %v195
    %v610 = vpack.c.bf16 %v198, %v197
    %v611 = vpack.c.bf16 %v200, %v199
    %v612 = vpack.c.bf16 %v202, %v201
    %v613 = vpack.c.bf16 %v204, %v203
    %v614 = vpack.c.bf16 %v206, %v205
    %v615 = vpack.c.bf16 %v208, %v207
    %v616 = vpack.c.bf16 %v210, %v209
    %v617 = vpack.c.bf16 %v212, %v211
    %v618 = vpack.c.bf16 %v214, %v213
    %v619 = vpack.c.bf16 %v216, %v215
    %v636 = vunpack.c.l.b16 %v604
    %v637 = vunpack.c.h.b16 %v604
    %v638 = vunpack.c.l.b16 %v605
    %v639 = vunpack.c.h.b16 %v605
    %v640 = vunpack.c.l.b16 %v606
    %v641 = vunpack.c.h.b16 %v606
    %v642 = vunpack.c.l.b16 %v607
    %v643 = vunpack.c.h.b16 %v607
    %v644 = vunpack.c.l.b16 %v608
    %v645 = vunpack.c.h.b16 %v608
    %v646 = vunpack.c.l.b16 %v609
    %v647 = vunpack.c.h.b16 %v609
    %v648 = vunpack.c.l.b16 %v610
    %v649 = vunpack.c.h.b16 %v610
    %v650 = vunpack.c.l.b16 %v611
    %v651 = vunpack.c.h.b16 %v611
    %v652 = vunpack.c.l.b16 %v612
    %v653 = vunpack.c.h.b16 %v612
    %v654 = vunpack.c.l.b16 %v613
    %v655 = vunpack.c.h.b16 %v613
    %v656 = vunpack.c.l.b16 %v614
    %v657 = vunpack.c.h.b16 %v614
    %v658 = vunpack.c.l.b16 %v615
    %v659 = vunpack.c.h.b16 %v615
    %v660 = vunpack.c.l.b16 %v616
    %v661 = vunpack.c.h.b16 %v616
    %v662 = vunpack.c.l.b16 %v617
    %v663 = vunpack.c.h.b16 %v617
    %v664 = vunpack.c.l.b16 %v618
    %v665 = vunpack.c.h.b16 %v618
    %v666 = vunpack.c.l.b16 %v619
    %v667 = vunpack.c.h.b16 %v619
    %v668 = vpack.c.b16 %v636, %v636
    %v669 = vpack.c.b16 %v637, %v637
    %v670 = vpack.c.b16 %v638, %v638
    %v671 = vpack.c.b16 %v639, %v639
    %v672 = vpack.c.b16 %v640, %v640
    %v673 = vpack.c.b16 %v641, %v641
    %v674 = vpack.c.b16 %v642, %v642
    %v675 = vpack.c.b16 %v643, %v643
    %v676 = vpack.c.b16 %v644, %v644
    %v677 = vpack.c.b16 %v645, %v645
    %v678 = vpack.c.b16 %v646, %v646
    %v679 = vpack.c.b16 %v647, %v647
    %v680 = vpack.c.b16 %v648, %v648
    %v681 = vpack.c.b16 %v649, %v649
    %v682 = vpack.c.b16 %v650, %v650
    %v683 = vpack.c.b16 %v651, %v651
    %v684 = vpack.c.b16 %v652, %v652
    %v685 = vpack.c.b16 %v653, %v653
    %v686 = vpack.c.b16 %v654, %v654
    %v687 = vpack.c.b16 %v655, %v655
    %v688 = vpack.c.b16 %v656, %v656
    %v689 = vpack.c.b16 %v657, %v657
    %v690 = vpack.c.b16 %v658, %v658
    %v691 = vpack.c.b16 %v659, %v659
    %v692 = vpack.c.b16 %v660, %v660
    %v693 = vpack.c.b16 %v661, %v661
    %v694 = vpack.c.b16 %v662, %v662
    %v695 = vpack.c.b16 %v663, %v663
    %v696 = vpack.c.b16 %v664, %v664
    %v697 = vpack.c.b16 %v665, %v665
    %v698 = vpack.c.b16 %v666, %v666
    %v699 = vpack.c.b16 %v667, %v667
    %732 = vst [vmem:[%s571 + $0x4] sm:$0xf] %v668
    %733 = vst [vmem:[%s571 + $0x10] sm:$0xf] %v669
    %734 = vst [vmem:[%s571 + $0x1c] sm:$0xf] %v670
    %735 = vst [vmem:[%s571 + $0x28] sm:$0xf] %v671
    %736 = vst [vmem:[%s571 + $0x34] sm:$0xf] %v672
    %737 = vst [vmem:[%s571 + $0x40] sm:$0xf] %v673
    %738 = vst [vmem:[%s571 + $0x4c] sm:$0xf] %v674
    %739 = vst [vmem:[%s571 + $0x58] sm:$0xf] %v675
    %740 = vst [vmem:[%s571 + $0x64] sm:$0xf] %v676
    %741 = vst [vmem:[%s571 + $0x70] sm:$0xf] %v677
    %742 = vst [vmem:[%s571 + $0x7c] sm:$0xf] %v678
    %743 = vst [vmem:[%s571 + $0x88] sm:$0xf] %v679
    %744 = vst [vmem:[%s571 + $0x94] sm:$0xf] %v680
    %745 = vst [vmem:[%s571 + $0xa0] sm:$0xf] %v681
    %746 = vst [vmem:[%s571 + $0xac] sm:$0xf] %v682
    %747 = vst [vmem:[%s571 + $0xb8] sm:$0xf] %v683
    %748 = vst [vmem:[%s571 + $0x1b4] sm:$0xf] %v684
    %749 = vst [vmem:[%s571 + $0x1c0] sm:$0xf] %v685
    %750 = vst [vmem:[%s571 + $0x1cc] sm:$0xf] %v686
    %751 = vst [vmem:[%s571 + $0x1d8] sm:$0xf] %v687
    %752 = vst [vmem:[%s571 + $0x1e4] sm:$0xf] %v688
    %753 = vst [vmem:[%s571 + $0x1f0] sm:$0xf] %v689
    %754 = vst [vmem:[%s571 + $0x1fc] sm:$0xf] %v690
    %755 = vst [vmem:[%s571 + $0x208] sm:$0xf] %v691
    %756 = vst [vmem:[%s571 + $0x214] sm:$0xf] %v692
    %757 = vst [vmem:[%s571 + $0x220] sm:$0xf] %v693
    %758 = vst [vmem:[%s571 + $0x22c] sm:$0xf] %v694
    %759 = vst [vmem:[%s571 + $0x238] sm:$0xf] %v695
    %760 = vst [vmem:[%s571 + $0x244] sm:$0xf] %v696
    %761 = vst [vmem:[%s571 + $0x250] sm:$0xf] %v697
    %762 = vst [vmem:[%s571 + $0x25c] sm:$0xf] %v698
    %763 = vst [vmem:[%s571 + $0x268] sm:$0xf] %v699
    %v764 = vpack.c.bf16 %v427, %v349
    %v765 = vpack.c.bf16 %v428, %v352
    %v766 = vpack.c.bf16 %v429, %v355
    %v767 = vpack.c.bf16 %v430, %v358
    %v768 = vpack.c.bf16 %v431, %v361
    %v769 = vpack.c.bf16 %v432, %v364
    %v770 = vpack.c.bf16 %v433, %v367
    %v771 = vpack.c.bf16 %v434, %v370
    %v772 = vpack.c.bf16 %v435, %v373
    %v773 = vpack.c.bf16 %v436, %v376
    %v774 = vpack.c.bf16 %v437, %v379
    %v775 = vpack.c.bf16 %v438, %v382
    %v776 = vpack.c.bf16 %v439, %v385
    %v777 = vpack.c.bf16 %v440, %v388
    %v778 = vpack.c.bf16 %v441, %v391
    %v779 = vpack.c.bf16 %v442, %v394
    %v796 = vunpack.c.l.b16 %v764
    %v797 = vunpack.c.h.b16 %v764
    %v798 = vunpack.c.l.b16 %v765
    %v799 = vunpack.c.h.b16 %v765
    %v800 = vunpack.c.l.b16 %v766
    %v801 = vunpack.c.h.b16 %v766
    %v802 = vunpack.c.l.b16 %v767
    %v803 = vunpack.c.h.b16 %v767
    %v804 = vunpack.c.l.b16 %v768
    %v805 = vunpack.c.h.b16 %v768
    %v806 = vunpack.c.l.b16 %v769
    %v807 = vunpack.c.h.b16 %v769
    %v808 = vunpack.c.l.b16 %v770
    %v809 = vunpack.c.h.b16 %v770
    %v810 = vunpack.c.l.b16 %v771
    %v811 = vunpack.c.h.b16 %v771
    %v812 = vunpack.c.l.b16 %v772
    %v813 = vunpack.c.h.b16 %v772
    %v814 = vunpack.c.l.b16 %v773
    %v815 = vunpack.c.h.b16 %v773
    %v816 = vunpack.c.l.b16 %v774
    %v817 = vunpack.c.h.b16 %v774
    %v818 = vunpack.c.l.b16 %v775
    %v819 = vunpack.c.h.b16 %v775
    %v820 = vunpack.c.l.b16 %v776
    %v821 = vunpack.c.h.b16 %v776
    %v822 = vunpack.c.l.b16 %v777
    %v823 = vunpack.c.h.b16 %v777
    %v824 = vunpack.c.l.b16 %v778
    %v825 = vunpack.c.h.b16 %v778
    %v826 = vunpack.c.l.b16 %v779
    %v827 = vunpack.c.h.b16 %v779
    %v828 = vpack.c.b16 %v796, %v796
    %v829 = vpack.c.b16 %v797, %v797
    %v830 = vpack.c.b16 %v798, %v798
    %v831 = vpack.c.b16 %v799, %v799
    %v832 = vpack.c.b16 %v800, %v800
    %v833 = vpack.c.b16 %v801, %v801
    %v834 = vpack.c.b16 %v802, %v802
    %v835 = vpack.c.b16 %v803, %v803
    %v836 = vpack.c.b16 %v804, %v804
    %v837 = vpack.c.b16 %v805, %v805
    %v838 = vpack.c.b16 %v806, %v806
    %v839 = vpack.c.b16 %v807, %v807
    %v840 = vpack.c.b16 %v808, %v808
    %v841 = vpack.c.b16 %v809, %v809
    %v842 = vpack.c.b16 %v810, %v810
    %v843 = vpack.c.b16 %v811, %v811
    %v844 = vpack.c.b16 %v812, %v812
    %v845 = vpack.c.b16 %v813, %v813
    %v846 = vpack.c.b16 %v814, %v814
    %v847 = vpack.c.b16 %v815, %v815
    %v848 = vpack.c.b16 %v816, %v816
    %v849 = vpack.c.b16 %v817, %v817
    %v850 = vpack.c.b16 %v818, %v818
    %v851 = vpack.c.b16 %v819, %v819
    %v852 = vpack.c.b16 %v820, %v820
    %v853 = vpack.c.b16 %v821, %v821
    %v854 = vpack.c.b16 %v822, %v822
    %v855 = vpack.c.b16 %v823, %v823
    %v856 = vpack.c.b16 %v824, %v824
    %v857 = vpack.c.b16 %v825, %v825
    %v858 = vpack.c.b16 %v826, %v826
    %v859 = vpack.c.b16 %v827, %v827
    %892 = vst [vmem:[%s571 + $0x8] sm:$0xf] %v828
    %893 = vst [vmem:[%s571 + $0x14] sm:$0xf] %v829
    %894 = vst [vmem:[%s571 + $0x20] sm:$0xf] %v830
    %895 = vst [vmem:[%s571 + $0x2c] sm:$0xf] %v831
    %896 = vst [vmem:[%s571 + $0x38] sm:$0xf] %v832
    %897 = vst [vmem:[%s571 + $0x44] sm:$0xf] %v833
    %898 = vst [vmem:[%s571 + $0x50] sm:$0xf] %v834
    %899 = vst [vmem:[%s571 + $0x5c] sm:$0xf] %v835
    %900 = vst [vmem:[%s571 + $0x68] sm:$0xf] %v836
    %901 = vst [vmem:[%s571 + $0x74] sm:$0xf] %v837
    %902 = vst [vmem:[%s571 + $0x80] sm:$0xf] %v838
    %903 = vst [vmem:[%s571 + $0x8c] sm:$0xf] %v839
    %904 = vst [vmem:[%s571 + $0x98] sm:$0xf] %v840
    %905 = vst [vmem:[%s571 + $0xa4] sm:$0xf] %v841
    %906 = vst [vmem:[%s571 + $0xb0] sm:$0xf] %v842
    %907 = vst [vmem:[%s571 + $0xbc] sm:$0xf] %v843
    %908 = vst [vmem:[%s571 + $0x1b8] sm:$0xf] %v844
    %909 = vst [vmem:[%s571 + $0x1c4] sm:$0xf] %v845
    %910 = vst [vmem:[%s571 + $0x1d0] sm:$0xf] %v846
    %911 = vst [vmem:[%s571 + $0x1dc] sm:$0xf] %v847
    %912 = vst [vmem:[%s571 + $0x1e8] sm:$0xf] %v848
    %913 = vst [vmem:[%s571 + $0x1f4] sm:$0xf] %v849
    %914 = vst [vmem:[%s571 + $0x200] sm:$0xf] %v850
    %915 = vst [vmem:[%s571 + $0x20c] sm:$0xf] %v851
    %916 = vst [vmem:[%s571 + $0x218] sm:$0xf] %v852
    %917 = vst [vmem:[%s571 + $0x224] sm:$0xf] %v853
    %918 = vst [vmem:[%s571 + $0x230] sm:$0xf] %v854
    %919 = vst [vmem:[%s571 + $0x23c] sm:$0xf] %v855
    %920 = vst [vmem:[%s571 + $0x248] sm:$0xf] %v856
    %921 = vst [vmem:[%s571 + $0x254] sm:$0xf] %v857
    %922 = vst [vmem:[%s571 + $0x260] sm:$0xf] %v858
    %923 = vst [vmem:[%s571 + $0x26c] sm:$0xf] %v859
    %s924 = scalar_lea.vmem [#allocation4], 128
    %v925 = vld [vmem:[%s924] sm:$0xff]
    %v926 = vld [vmem:[%s924 + $0x8] sm:$0xff]
    %v927 = vld [vmem:[%s924 + $0x10] sm:$0xff]
    %v928 = vld [vmem:[%s924 + $0x18] sm:$0xff]
    %v929 = vld [vmem:[%s924 + $0x20] sm:$0xff]
    %v930 = vld [vmem:[%s924 + $0x28] sm:$0xff]
    %v931 = vld [vmem:[%s924 + $0x30] sm:$0xff]
    %v932 = vld [vmem:[%s924 + $0x38] sm:$0xff]
    %v933 = vld [vmem:[%s924 + $0x40] sm:$0xff]
    %v934 = vld [vmem:[%s924 + $0x48] sm:$0xff]
    %v935 = vld [vmem:[%s924 + $0x50] sm:$0xff]
    %v936 = vld [vmem:[%s924 + $0x58] sm:$0xff]
    %v937 = vld [vmem:[%s924 + $0x60] sm:$0xff]
    %v938 = vld [vmem:[%s924 + $0x68] sm:$0xff]
    %v939 = vld [vmem:[%s924 + $0x70] sm:$0xff]
    %v940 = vld [vmem:[%s924 + $0x78] sm:$0xff]
    %v941 = vld [vmem:[%s924 + $0x100] sm:$0xff]
    %v942 = vld [vmem:[%s924 + $0x108] sm:$0xff]
    %v943 = vld [vmem:[%s924 + $0x110] sm:$0xff]
    %v944 = vld [vmem:[%s924 + $0x118] sm:$0xff]
    %v945 = vld [vmem:[%s924 + $0x120] sm:$0xff]
    %v946 = vld [vmem:[%s924 + $0x128] sm:$0xff]
    %v947 = vld [vmem:[%s924 + $0x130] sm:$0xff]
    %v948 = vld [vmem:[%s924 + $0x138] sm:$0xff]
    %v949 = vld [vmem:[%s924 + $0x140] sm:$0xff]
    %v950 = vld [vmem:[%s924 + $0x148] sm:$0xff]
    %v951 = vld [vmem:[%s924 + $0x150] sm:$0xff]
    %v952 = vld [vmem:[%s924 + $0x158] sm:$0xff]
    %v953 = vld [vmem:[%s924 + $0x160] sm:$0xff]
    %v954 = vld [vmem:[%s924 + $0x168] sm:$0xff]
    %v955 = vld [vmem:[%s924 + $0x170] sm:$0xff]
    %v956 = vld [vmem:[%s924 + $0x178] sm:$0xff]
    %v957 = vmul.f32 %v925, %v148
    %v958 = vmul.f32 %v926, %v148
    %v959 = vmul.f32 %v927, %v148
    %v960 = vmul.f32 %v928, %v148
    %v961 = vmul.f32 %v929, %v148
    %v962 = vmul.f32 %v930, %v148
    %v963 = vmul.f32 %v931, %v148
    %v964 = vmul.f32 %v932, %v148
    %v965 = vmul.f32 %v933, %v148
    %v966 = vmul.f32 %v934, %v148
    %v967 = vmul.f32 %v935, %v148
    %v968 = vmul.f32 %v936, %v148
    %v969 = vmul.f32 %v937, %v148
    %v970 = vmul.f32 %v938, %v148
    %v971 = vmul.f32 %v939, %v148
    %v972 = vmul.f32 %v940, %v148
    %v973 = vmul.f32 %v941, %v148
    %v974 = vmul.f32 %v942, %v148
    %v975 = vmul.f32 %v943, %v148
    %v976 = vmul.f32 %v944, %v148
    %v977 = vmul.f32 %v945, %v148
    %v978 = vmul.f32 %v946, %v148
    %v979 = vmul.f32 %v947, %v148
    %v980 = vmul.f32 %v948, %v148
    %v981 = vmul.f32 %v949, %v148
    %v982 = vmul.f32 %v950, %v148
    %v983 = vmul.f32 %v951, %v148
    %v984 = vmul.f32 %v952, %v148
    %v985 = vmul.f32 %v953, %v148
    %v986 = vmul.f32 %v954, %v148
    %v987 = vmul.f32 %v955, %v148
    %v988 = vmul.f32 %v956, %v148
    %v989 = vadd.f32 %v957, %v184
    %v990 = vadd.f32 %v958, %v184
    %v991 = vadd.f32 %v959, %v184
    %v992 = vadd.f32 %v960, %v184
    %v993 = vadd.f32 %v961, %v184
    %v994 = vadd.f32 %v962, %v184
    %v995 = vadd.f32 %v963, %v184
    %v996 = vadd.f32 %v964, %v184
    %v997 = vadd.f32 %v965, %v184
    %v998 = vadd.f32 %v966, %v184
    %v999 = vadd.f32 %v967, %v184
    %v1000 = vadd.f32 %v968, %v184
    %v1001 = vadd.f32 %v969, %v184
    %v1002 = vadd.f32 %v970, %v184
    %v1003 = vadd.f32 %v971, %v184
    %v1004 = vadd.f32 %v972, %v184
    %v1005 = vadd.f32 %v973, %v184
    %v1006 = vadd.f32 %v974, %v184
    %v1007 = vadd.f32 %v975, %v184
    %v1008 = vadd.f32 %v976, %v184
    %v1009 = vadd.f32 %v977, %v184
    %v1010 = vadd.f32 %v978, %v184
    %v1011 = vadd.f32 %v979, %v184
    %v1012 = vadd.f32 %v980, %v184
    %v1013 = vadd.f32 %v981, %v184
    %v1014 = vadd.f32 %v982, %v184
    %v1015 = vadd.f32 %v983, %v184
    %v1016 = vadd.f32 %v984, %v184
    %v1017 = vadd.f32 %v985, %v184
    %v1018 = vadd.f32 %v986, %v184
    %v1019 = vadd.f32 %v987, %v184
    %v1020 = vadd.f32 %v988, %v184
    %v1053 = vrot.slane %v989, 7
    %v1054 = vrot.slane %v990, 7
    %v1055 = vsel %vm249, %v1053, %v1054
    %v1056 = vrot.slane %v991, 7
    %v1057 = vrot.slane %v992, 7
    %v1058 = vsel %vm249, %v1056, %v1057
    %v1059 = vrot.slane %v993, 7
    %v1060 = vrot.slane %v994, 7
    %v1061 = vsel %vm249, %v1059, %v1060
    %v1062 = vrot.slane %v995, 7
    %v1063 = vrot.slane %v996, 7
    %v1064 = vsel %vm249, %v1062, %v1063
    %v1065 = vrot.slane %v997, 7
    %v1066 = vrot.slane %v998, 7
    %v1067 = vsel %vm249, %v1065, %v1066
    %v1068 = vrot.slane %v999, 7
    %v1069 = vrot.slane %v1000, 7
    %v1070 = vsel %vm249, %v1068, %v1069
    %v1071 = vrot.slane %v1001, 7
    %v1072 = vrot.slane %v1002, 7
    %v1073 = vsel %vm249, %v1071, %v1072
    %v1074 = vrot.slane %v1003, 7
    %v1075 = vrot.slane %v1004, 7
    %v1076 = vsel %vm249, %v1074, %v1075
    %v1077 = vrot.slane %v1005, 7
    %v1078 = vrot.slane %v1006, 7
    %v1079 = vsel %vm249, %v1077, %v1078
    %v1080 = vrot.slane %v1007, 7
    %v1081 = vrot.slane %v1008, 7
    %v1082 = vsel %vm249, %v1080, %v1081
    %v1083 = vrot.slane %v1009, 7
    %v1084 = vrot.slane %v1010, 7
    %v1085 = vsel %vm249, %v1083, %v1084
    %v1086 = vrot.slane %v1011, 7
    %v1087 = vrot.slane %v1012, 7
    %v1088 = vsel %vm249, %v1086, %v1087
    %v1089 = vrot.slane %v1013, 7
    %v1090 = vrot.slane %v1014, 7
    %v1091 = vsel %vm249, %v1089, %v1090
    %v1092 = vrot.slane %v1015, 7
    %v1093 = vrot.slane %v1016, 7
    %v1094 = vsel %vm249, %v1092, %v1093
    %v1095 = vrot.slane %v1017, 7
    %v1096 = vrot.slane %v1018, 7
    %v1097 = vsel %vm249, %v1095, %v1096
    %v1098 = vrot.slane %v1019, 7
    %v1099 = vrot.slane %v1020, 7
    %v1100 = vsel %vm249, %v1098, %v1099
    %v1133 = vsel %vm249, 0.0, %v1053
    %v1134 = vsel %vm249, 0.0, %v1056
    %v1135 = vsel %vm249, 0.0, %v1059
    %v1136 = vsel %vm249, 0.0, %v1062
    %v1137 = vsel %vm249, 0.0, %v1065
    %v1138 = vsel %vm249, 0.0, %v1068
    %v1139 = vsel %vm249, 0.0, %v1071
    %v1140 = vsel %vm249, 0.0, %v1074
    %v1141 = vsel %vm249, 0.0, %v1077
    %v1142 = vsel %vm249, 0.0, %v1080
    %v1143 = vsel %vm249, 0.0, %v1083
    %v1144 = vsel %vm249, 0.0, %v1086
    %v1145 = vsel %vm249, 0.0, %v1089
    %v1146 = vsel %vm249, 0.0, %v1092
    %v1147 = vsel %vm249, 0.0, %v1095
    %v1148 = vsel %vm249, 0.0, %v1098
    %v1149 = vrot.slane %v989, 1
    %v1150 = vrot.slane %v990, 1
    %v1151 = vsel %vm346, %v1149, %v1150
    %v1152 = vrot.slane %v991, 1
    %v1153 = vrot.slane %v992, 1
    %v1154 = vsel %vm346, %v1152, %v1153
    %v1155 = vrot.slane %v993, 1
    %v1156 = vrot.slane %v994, 1
    %v1157 = vsel %vm346, %v1155, %v1156
    %v1158 = vrot.slane %v995, 1
    %v1159 = vrot.slane %v996, 1
    %v1160 = vsel %vm346, %v1158, %v1159
    %v1161 = vrot.slane %v997, 1
    %v1162 = vrot.slane %v998, 1
    %v1163 = vsel %vm346, %v1161, %v1162
    %v1164 = vrot.slane %v999, 1
    %v1165 = vrot.slane %v1000, 1
    %v1166 = vsel %vm346, %v1164, %v1165
    %v1167 = vrot.slane %v1001, 1
    %v1168 = vrot.slane %v1002, 1
    %v1169 = vsel %vm346, %v1167, %v1168
    %v1170 = vrot.slane %v1003, 1
    %v1171 = vrot.slane %v1004, 1
    %v1172 = vsel %vm346, %v1170, %v1171
    %v1173 = vrot.slane %v1005, 1
    %v1174 = vrot.slane %v1006, 1
    %v1175 = vsel %vm346, %v1173, %v1174
    %v1176 = vrot.slane %v1007, 1
    %v1177 = vrot.slane %v1008, 1
    %v1178 = vsel %vm346, %v1176, %v1177
    %v1179 = vrot.slane %v1009, 1
    %v1180 = vrot.slane %v1010, 1
    %v1181 = vsel %vm346, %v1179, %v1180
    %v1182 = vrot.slane %v1011, 1
    %v1183 = vrot.slane %v1012, 1
    %v1184 = vsel %vm346, %v1182, %v1183
    %v1185 = vrot.slane %v1013, 1
    %v1186 = vrot.slane %v1014, 1
    %v1187 = vsel %vm346, %v1185, %v1186
    %v1188 = vrot.slane %v1015, 1
    %v1189 = vrot.slane %v1016, 1
    %v1190 = vsel %vm346, %v1188, %v1189
    %v1191 = vrot.slane %v1017, 1
    %v1192 = vrot.slane %v1018, 1
    %v1193 = vsel %vm346, %v1191, %v1192
    %v1194 = vrot.slane %v1019, 1
    %v1195 = vrot.slane %v1020, 1
    %v1196 = vsel %vm346, %v1194, %v1195
    %v1229 = vsel %vm346, %v1150, 0.0
    %v1230 = vsel %vm346, %v1153, 0.0
    %v1231 = vsel %vm346, %v1156, 0.0
    %v1232 = vsel %vm346, %v1159, 0.0
    %v1233 = vsel %vm346, %v1162, 0.0
    %v1234 = vsel %vm346, %v1165, 0.0
    %v1235 = vsel %vm346, %v1168, 0.0
    %v1236 = vsel %vm346, %v1171, 0.0
    %v1237 = vsel %vm346, %v1174, 0.0
    %v1238 = vsel %vm346, %v1177, 0.0
    %v1239 = vsel %vm346, %v1180, 0.0
    %v1240 = vsel %vm346, %v1183, 0.0
    %v1241 = vsel %vm346, %v1186, 0.0
    %v1242 = vsel %vm346, %v1189, 0.0
    %v1243 = vsel %vm346, %v1192, 0.0
    %v1244 = vsel %vm346, %v1195, 0.0
    %v1245 = vpack.c.bf16 %v1055, %v1133
    %v1246 = vpack.c.bf16 %v1058, %v1134
    %v1247 = vpack.c.bf16 %v1061, %v1135
    %v1248 = vpack.c.bf16 %v1064, %v1136
    %v1249 = vpack.c.bf16 %v1067, %v1137
    %v1250 = vpack.c.bf16 %v1070, %v1138
    %v1251 = vpack.c.bf16 %v1073, %v1139
    %v1252 = vpack.c.bf16 %v1076, %v1140
    %v1253 = vpack.c.bf16 %v1079, %v1141
    %v1254 = vpack.c.bf16 %v1082, %v1142
    %v1255 = vpack.c.bf16 %v1085, %v1143
    %v1256 = vpack.c.bf16 %v1088, %v1144
    %v1257 = vpack.c.bf16 %v1091, %v1145
    %v1258 = vpack.c.bf16 %v1094, %v1146
    %v1259 = vpack.c.bf16 %v1097, %v1147
    %v1260 = vpack.c.bf16 %v1100, %v1148
    %v1277 = vunpack.c.l.b16 %v1245
    %v1278 = vunpack.c.h.b16 %v1245
    %v1279 = vunpack.c.l.b16 %v1246
    %v1280 = vunpack.c.h.b16 %v1246
    %v1281 = vunpack.c.l.b16 %v1247
    %v1282 = vunpack.c.h.b16 %v1247
    %v1283 = vunpack.c.l.b16 %v1248
    %v1284 = vunpack.c.h.b16 %v1248
    %v1285 = vunpack.c.l.b16 %v1249
    %v1286 = vunpack.c.h.b16 %v1249
    %v1287 = vunpack.c.l.b16 %v1250
    %v1288 = vunpack.c.h.b16 %v1250
    %v1289 = vunpack.c.l.b16 %v1251
    %v1290 = vunpack.c.h.b16 %v1251
    %v1291 = vunpack.c.l.b16 %v1252
    %v1292 = vunpack.c.h.b16 %v1252
    %v1293 = vunpack.c.l.b16 %v1253
    %v1294 = vunpack.c.h.b16 %v1253
    %v1295 = vunpack.c.l.b16 %v1254
    %v1296 = vunpack.c.h.b16 %v1254
    %v1297 = vunpack.c.l.b16 %v1255
    %v1298 = vunpack.c.h.b16 %v1255
    %v1299 = vunpack.c.l.b16 %v1256
    %v1300 = vunpack.c.h.b16 %v1256
    %v1301 = vunpack.c.l.b16 %v1257
    %v1302 = vunpack.c.h.b16 %v1257
    %v1303 = vunpack.c.l.b16 %v1258
    %v1304 = vunpack.c.h.b16 %v1258
    %v1305 = vunpack.c.l.b16 %v1259
    %v1306 = vunpack.c.h.b16 %v1259
    %v1307 = vunpack.c.l.b16 %v1260
    %v1308 = vunpack.c.h.b16 %v1260
    %v1309 = vpack.c.b16 %v1277, %v1277
    %v1310 = vpack.c.b16 %v1278, %v1278
    %v1311 = vpack.c.b16 %v1279, %v1279
    %v1312 = vpack.c.b16 %v1280, %v1280
    %v1313 = vpack.c.b16 %v1281, %v1281
    %v1314 = vpack.c.b16 %v1282, %v1282
    %v1315 = vpack.c.b16 %v1283, %v1283
    %v1316 = vpack.c.b16 %v1284, %v1284
    %v1317 = vpack.c.b16 %v1285, %v1285
    %v1318 = vpack.c.b16 %v1286, %v1286
    %v1319 = vpack.c.b16 %v1287, %v1287
    %v1320 = vpack.c.b16 %v1288, %v1288
    %v1321 = vpack.c.b16 %v1289, %v1289
    %v1322 = vpack.c.b16 %v1290, %v1290
    %v1323 = vpack.c.b16 %v1291, %v1291
    %v1324 = vpack.c.b16 %v1292, %v1292
    %v1325 = vpack.c.b16 %v1293, %v1293
    %v1326 = vpack.c.b16 %v1294, %v1294
    %v1327 = vpack.c.b16 %v1295, %v1295
    %v1328 = vpack.c.b16 %v1296, %v1296
    %v1329 = vpack.c.b16 %v1297, %v1297
    %v1330 = vpack.c.b16 %v1298, %v1298
    %v1331 = vpack.c.b16 %v1299, %v1299
    %v1332 = vpack.c.b16 %v1300, %v1300
    %v1333 = vpack.c.b16 %v1301, %v1301
    %v1334 = vpack.c.b16 %v1302, %v1302
    %v1335 = vpack.c.b16 %v1303, %v1303
    %v1336 = vpack.c.b16 %v1304, %v1304
    %v1337 = vpack.c.b16 %v1305, %v1305
    %v1338 = vpack.c.b16 %v1306, %v1306
    %v1339 = vpack.c.b16 %v1307, %v1307
    %v1340 = vpack.c.b16 %v1308, %v1308
    %s1373 = scalar_lea.vmem [#allocation2], 216
    %1374 = vst [vmem:[%s1373] sm:$0xf] %v1309
    %1375 = vst [vmem:[%s1373 + $0xc] sm:$0xf] %v1310
    %1376 = vst [vmem:[%s1373 + $0x18] sm:$0xf] %v1311
    %1377 = vst [vmem:[%s1373 + $0x24] sm:$0xf] %v1312
    %1378 = vst [vmem:[%s1373 + $0x30] sm:$0xf] %v1313
    %1379 = vst [vmem:[%s1373 + $0x3c] sm:$0xf] %v1314
    %1380 = vst [vmem:[%s1373 + $0x48] sm:$0xf] %v1315
    %1381 = vst [vmem:[%s1373 + $0x54] sm:$0xf] %v1316
    %1382 = vst [vmem:[%s1373 + $0x60] sm:$0xf] %v1317
    %1383 = vst [vmem:[%s1373 + $0x6c] sm:$0xf] %v1318
    %1384 = vst [vmem:[%s1373 + $0x78] sm:$0xf] %v1319
    %1385 = vst [vmem:[%s1373 + $0x84] sm:$0xf] %v1320
    %1386 = vst [vmem:[%s1373 + $0x90] sm:$0xf] %v1321
    %1387 = vst [vmem:[%s1373 + $0x9c] sm:$0xf] %v1322
    %1388 = vst [vmem:[%s1373 + $0xa8] sm:$0xf] %v1323
    %1389 = vst [vmem:[%s1373 + $0xb4] sm:$0xf] %v1324
    %1390 = vst [vmem:[%s1373 + $0x1b0] sm:$0xf] %v1325
    %1391 = vst [vmem:[%s1373 + $0x1bc] sm:$0xf] %v1326
    %1392 = vst [vmem:[%s1373 + $0x1c8] sm:$0xf] %v1327
    %1393 = vst [vmem:[%s1373 + $0x1d4] sm:$0xf] %v1328
    %1394 = vst [vmem:[%s1373 + $0x1e0] sm:$0xf] %v1329
    %1395 = vst [vmem:[%s1373 + $0x1ec] sm:$0xf] %v1330
    %1396 = vst [vmem:[%s1373 + $0x1f8] sm:$0xf] %v1331
    %1397 = vst [vmem:[%s1373 + $0x204] sm:$0xf] %v1332
    %1398 = vst [vmem:[%s1373 + $0x210] sm:$0xf] %v1333
    %1399 = vst [vmem:[%s1373 + $0x21c] sm:$0xf] %v1334
    %1400 = vst [vmem:[%s1373 + $0x228] sm:$0xf] %v1335
    %1401 = vst [vmem:[%s1373 + $0x234] sm:$0xf] %v1336
    %1402 = vst [vmem:[%s1373 + $0x240] sm:$0xf] %v1337
    %1403 = vst [vmem:[%s1373 + $0x24c] sm:$0xf] %v1338
    %1404 = vst [vmem:[%s1373 + $0x258] sm:$0xf] %v1339
    %1405 = vst [vmem:[%s1373 + $0x264] sm:$0xf] %v1340
    %v1406 = vpack.c.bf16 %v990, %v989
    %v1407 = vpack.c.bf16 %v992, %v991
    %v1408 = vpack.c.bf16 %v994, %v993
    %v1409 = vpack.c.bf16 %v996, %v995
    %v1410 = vpack.c.bf16 %v998, %v997
    %v1411 = vpack.c.bf16 %v1000, %v999
    %v1412 = vpack.c.bf16 %v1002, %v1001
    %v1413 = vpack.c.bf16 %v1004, %v1003
    %v1414 = vpack.c.bf16 %v1006, %v1005
    %v1415 = vpack.c.bf16 %v1008, %v1007
    %v1416 = vpack.c.bf16 %v1010, %v1009
    %v1417 = vpack.c.bf16 %v1012, %v1011
    %v1418 = vpack.c.bf16 %v1014, %v1013
    %v1419 = vpack.c.bf16 %v1016, %v1015
    %v1420 = vpack.c.bf16 %v1018, %v1017
    %v1421 = vpack.c.bf16 %v1020, %v1019
    %v1438 = vunpack.c.l.b16 %v1406
    %v1439 = vunpack.c.h.b16 %v1406
    %v1440 = vunpack.c.l.b16 %v1407
    %v1441 = vunpack.c.h.b16 %v1407
    %v1442 = vunpack.c.l.b16 %v1408
    %v1443 = vunpack.c.h.b16 %v1408
    %v1444 = vunpack.c.l.b16 %v1409
    %v1445 = vunpack.c.h.b16 %v1409
    %v1446 = vunpack.c.l.b16 %v1410
    %v1447 = vunpack.c.h.b16 %v1410
    %v1448 = vunpack.c.l.b16 %v1411
    %v1449 = vunpack.c.h.b16 %v1411
    %v1450 = vunpack.c.l.b16 %v1412
    %v1451 = vunpack.c.h.b16 %v1412
    %v1452 = vunpack.c.l.b16 %v1413
    %v1453 = vunpack.c.h.b16 %v1413
    %v1454 = vunpack.c.l.b16 %v1414
    %v1455 = vunpack.c.h.b16 %v1414
    %v1456 = vunpack.c.l.b16 %v1415
    %v1457 = vunpack.c.h.b16 %v1415
    %v1458 = vunpack.c.l.b16 %v1416
    %v1459 = vunpack.c.h.b16 %v1416
    %v1460 = vunpack.c.l.b16 %v1417
    %v1461 = vunpack.c.h.b16 %v1417
    %v1462 = vunpack.c.l.b16 %v1418
    %v1463 = vunpack.c.h.b16 %v1418
    %v1464 = vunpack.c.l.b16 %v1419
    %v1465 = vunpack.c.h.b16 %v1419
    %v1466 = vunpack.c.l.b16 %v1420
    %v1467 = vunpack.c.h.b16 %v1420
    %v1468 = vunpack.c.l.b16 %v1421
    %v1469 = vunpack.c.h.b16 %v1421
    %v1470 = vpack.c.b16 %v1438, %v1438
    %v1471 = vpack.c.b16 %v1439, %v1439
    %v1472 = vpack.c.b16 %v1440, %v1440
    %v1473 = vpack.c.b16 %v1441, %v1441
    %v1474 = vpack.c.b16 %v1442, %v1442
    %v1475 = vpack.c.b16 %v1443, %v1443
    %v1476 = vpack.c.b16 %v1444, %v1444
    %v1477 = vpack.c.b16 %v1445, %v1445
    %v1478 = vpack.c.b16 %v1446, %v1446
    %v1479 = vpack.c.b16 %v1447, %v1447
    %v1480 = vpack.c.b16 %v1448, %v1448
    %v1481 = vpack.c.b16 %v1449, %v1449
    %v1482 = vpack.c.b16 %v1450, %v1450
    %v1483 = vpack.c.b16 %v1451, %v1451
    %v1484 = vpack.c.b16 %v1452, %v1452
    %v1485 = vpack.c.b16 %v1453, %v1453
    %v1486 = vpack.c.b16 %v1454, %v1454
    %v1487 = vpack.c.b16 %v1455, %v1455
    %v1488 = vpack.c.b16 %v1456, %v1456
    %v1489 = vpack.c.b16 %v1457, %v1457
    %v1490 = vpack.c.b16 %v1458, %v1458
    %v1491 = vpack.c.b16 %v1459, %v1459
    %v1492 = vpack.c.b16 %v1460, %v1460
    %v1493 = vpack.c.b16 %v1461, %v1461
    %v1494 = vpack.c.b16 %v1462, %v1462
    %v1495 = vpack.c.b16 %v1463, %v1463
    %v1496 = vpack.c.b16 %v1464, %v1464
    %v1497 = vpack.c.b16 %v1465, %v1465
    %v1498 = vpack.c.b16 %v1466, %v1466
    %v1499 = vpack.c.b16 %v1467, %v1467
    %v1500 = vpack.c.b16 %v1468, %v1468
    %v1501 = vpack.c.b16 %v1469, %v1469
    %1534 = vst [vmem:[%s1373 + $0x4] sm:$0xf] %v1470
    %1535 = vst [vmem:[%s1373 + $0x10] sm:$0xf] %v1471
    %1536 = vst [vmem:[%s1373 + $0x1c] sm:$0xf] %v1472
    %1537 = vst [vmem:[%s1373 + $0x28] sm:$0xf] %v1473
    %1538 = vst [vmem:[%s1373 + $0x34] sm:$0xf] %v1474
    %1539 = vst [vmem:[%s1373 + $0x40] sm:$0xf] %v1475
    %1540 = vst [vmem:[%s1373 + $0x4c] sm:$0xf] %v1476
    %1541 = vst [vmem:[%s1373 + $0x58] sm:$0xf] %v1477
    %1542 = vst [vmem:[%s1373 + $0x64] sm:$0xf] %v1478
    %1543 = vst [vmem:[%s1373 + $0x70] sm:$0xf] %v1479
    %1544 = vst [vmem:[%s1373 + $0x7c] sm:$0xf] %v1480
    %1545 = vst [vmem:[%s1373 + $0x88] sm:$0xf] %v1481
    %1546 = vst [vmem:[%s1373 + $0x94] sm:$0xf] %v1482
    %1547 = vst [vmem:[%s1373 + $0xa0] sm:$0xf] %v1483
    %1548 = vst [vmem:[%s1373 + $0xac] sm:$0xf] %v1484
    %1549 = vst [vmem:[%s1373 + $0xb8] sm:$0xf] %v1485
    %1550 = vst [vmem:[%s1373 + $0x1b4] sm:$0xf] %v1486
    %1551 = vst [vmem:[%s1373 + $0x1c0] sm:$0xf] %v1487
    %1552 = vst [vmem:[%s1373 + $0x1cc] sm:$0xf] %v1488
    %1553 = vst [vmem:[%s1373 + $0x1d8] sm:$0xf] %v1489
    %1554 = vst [vmem:[%s1373 + $0x1e4] sm:$0xf] %v1490
    %1555 = vst [vmem:[%s1373 + $0x1f0] sm:$0xf] %v1491
    %1556 = vst [vmem:[%s1373 + $0x1fc] sm:$0xf] %v1492
    %1557 = vst [vmem:[%s1373 + $0x208] sm:$0xf] %v1493
    %1558 = vst [vmem:[%s1373 + $0x214] sm:$0xf] %v1494
    %1559 = vst [vmem:[%s1373 + $0x220] sm:$0xf] %v1495
    %1560 = vst [vmem:[%s1373 + $0x22c] sm:$0xf] %v1496
    %1561 = vst [vmem:[%s1373 + $0x238] sm:$0xf] %v1497
    %1562 = vst [vmem:[%s1373 + $0x244] sm:$0xf] %v1498
    %1563 = vst [vmem:[%s1373 + $0x250] sm:$0xf] %v1499
    %1564 = vst [vmem:[%s1373 + $0x25c] sm:$0xf] %v1500
    %1565 = vst [vmem:[%s1373 + $0x268] sm:$0xf] %v1501
    %v1566 = vpack.c.bf16 %v1229, %v1151
    %v1567 = vpack.c.bf16 %v1230, %v1154
    %v1568 = vpack.c.bf16 %v1231, %v1157
    %v1569 = vpack.c.bf16 %v1232, %v1160
    %v1570 = vpack.c.bf16 %v1233, %v1163
    %v1571 = vpack.c.bf16 %v1234, %v1166
    %v1572 = vpack.c.bf16 %v1235, %v1169
    %v1573 = vpack.c.bf16 %v1236, %v1172
    %v1574 = vpack.c.bf16 %v1237, %v1175
    %v1575 = vpack.c.bf16 %v1238, %v1178
    %v1576 = vpack.c.bf16 %v1239, %v1181
    %v1577 = vpack.c.bf16 %v1240, %v1184
    %v1578 = vpack.c.bf16 %v1241, %v1187
    %v1579 = vpack.c.bf16 %v1242, %v1190
    %v1580 = vpack.c.bf16 %v1243, %v1193
    %v1581 = vpack.c.bf16 %v1244, %v1196
    %v1598 = vunpack.c.l.b16 %v1566
    %v1599 = vunpack.c.h.b16 %v1566
    %v1600 = vunpack.c.l.b16 %v1567
    %v1601 = vunpack.c.h.b16 %v1567
    %v1602 = vunpack.c.l.b16 %v1568
    %v1603 = vunpack.c.h.b16 %v1568
    %v1604 = vunpack.c.l.b16 %v1569
    %v1605 = vunpack.c.h.b16 %v1569
    %v1606 = vunpack.c.l.b16 %v1570
    %v1607 = vunpack.c.h.b16 %v1570
    %v1608 = vunpack.c.l.b16 %v1571
    %v1609 = vunpack.c.h.b16 %v1571
    %v1610 = vunpack.c.l.b16 %v1572
    %v1611 = vunpack.c.h.b16 %v1572
    %v1612 = vunpack.c.l.b16 %v1573
    %v1613 = vunpack.c.h.b16 %v1573
    %v1614 = vunpack.c.l.b16 %v1574
    %v1615 = vunpack.c.h.b16 %v1574
    %v1616 = vunpack.c.l.b16 %v1575
    %v1617 = vunpack.c.h.b16 %v1575
    %v1618 = vunpack.c.l.b16 %v1576
    %v1619 = vunpack.c.h.b16 %v1576
    %v1620 = vunpack.c.l.b16 %v1577
    %v1621 = vunpack.c.h.b16 %v1577
    %v1622 = vunpack.c.l.b16 %v1578
    %v1623 = vunpack.c.h.b16 %v1578
    %v1624 = vunpack.c.l.b16 %v1579
    %v1625 = vunpack.c.h.b16 %v1579
    %v1626 = vunpack.c.l.b16 %v1580
    %v1627 = vunpack.c.h.b16 %v1580
    %v1628 = vunpack.c.l.b16 %v1581
    %v1629 = vunpack.c.h.b16 %v1581
    %v1630 = vpack.c.b16 %v1598, %v1598
    %v1631 = vpack.c.b16 %v1599, %v1599
    %v1632 = vpack.c.b16 %v1600, %v1600
    %v1633 = vpack.c.b16 %v1601, %v1601
    %v1634 = vpack.c.b16 %v1602, %v1602
    %v1635 = vpack.c.b16 %v1603, %v1603
    %v1636 = vpack.c.b16 %v1604, %v1604
    %v1637 = vpack.c.b16 %v1605, %v1605
    %v1638 = vpack.c.b16 %v1606, %v1606
    %v1639 = vpack.c.b16 %v1607, %v1607
    %v1640 = vpack.c.b16 %v1608, %v1608
    %v1641 = vpack.c.b16 %v1609, %v1609
    %v1642 = vpack.c.b16 %v1610, %v1610
    %v1643 = vpack.c.b16 %v1611, %v1611
    %v1644 = vpack.c.b16 %v1612, %v1612
    %v1645 = vpack.c.b16 %v1613, %v1613
    %v1646 = vpack.c.b16 %v1614, %v1614
    %v1647 = vpack.c.b16 %v1615, %v1615
    %v1648 = vpack.c.b16 %v1616, %v1616
    %v1649 = vpack.c.b16 %v1617, %v1617
    %v1650 = vpack.c.b16 %v1618, %v1618
    %v1651 = vpack.c.b16 %v1619, %v1619
    %v1652 = vpack.c.b16 %v1620, %v1620
    %v1653 = vpack.c.b16 %v1621, %v1621
    %v1654 = vpack.c.b16 %v1622, %v1622
    %v1655 = vpack.c.b16 %v1623, %v1623
    %v1656 = vpack.c.b16 %v1624, %v1624
    %v1657 = vpack.c.b16 %v1625, %v1625
    %v1658 = vpack.c.b16 %v1626, %v1626
    %v1659 = vpack.c.b16 %v1627, %v1627
    %v1660 = vpack.c.b16 %v1628, %v1628
    %v1661 = vpack.c.b16 %v1629, %v1629
    %1694 = vst [vmem:[%s1373 + $0x8] sm:$0xf] %v1630
    %1695 = vst [vmem:[%s1373 + $0x14] sm:$0xf] %v1631
    %1696 = vst [vmem:[%s1373 + $0x20] sm:$0xf] %v1632
    %1697 = vst [vmem:[%s1373 + $0x2c] sm:$0xf] %v1633
    %1698 = vst [vmem:[%s1373 + $0x38] sm:$0xf] %v1634
    %1699 = vst [vmem:[%s1373 + $0x44] sm:$0xf] %v1635
    %1700 = vst [vmem:[%s1373 + $0x50] sm:$0xf] %v1636
    %1701 = vst [vmem:[%s1373 + $0x5c] sm:$0xf] %v1637
    %1702 = vst [vmem:[%s1373 + $0x68] sm:$0xf] %v1638
    %1703 = vst [vmem:[%s1373 + $0x74] sm:$0xf] %v1639
    %1704 = vst [vmem:[%s1373 + $0x80] sm:$0xf] %v1640
    %1705 = vst [vmem:[%s1373 + $0x8c] sm:$0xf] %v1641
    %1706 = vst [vmem:[%s1373 + $0x98] sm:$0xf] %v1642
    %1707 = vst [vmem:[%s1373 + $0xa4] sm:$0xf] %v1643
    %1708 = vst [vmem:[%s1373 + $0xb0] sm:$0xf] %v1644
    %1709 = vst [vmem:[%s1373 + $0xbc] sm:$0xf] %v1645
    %1710 = vst [vmem:[%s1373 + $0x1b8] sm:$0xf] %v1646
    %1711 = vst [vmem:[%s1373 + $0x1c4] sm:$0xf] %v1647
    %1712 = vst [vmem:[%s1373 + $0x1d0] sm:$0xf] %v1648
    %1713 = vst [vmem:[%s1373 + $0x1dc] sm:$0xf] %v1649
    %1714 = vst [vmem:[%s1373 + $0x1e8] sm:$0xf] %v1650
    %1715 = vst [vmem:[%s1373 + $0x1f4] sm:$0xf] %v1651
    %1716 = vst [vmem:[%s1373 + $0x200] sm:$0xf] %v1652
    %1717 = vst [vmem:[%s1373 + $0x20c] sm:$0xf] %v1653
    %1718 = vst [vmem:[%s1373 + $0x218] sm:$0xf] %v1654
    %1719 = vst [vmem:[%s1373 + $0x224] sm:$0xf] %v1655
    %1720 = vst [vmem:[%s1373 + $0x230] sm:$0xf] %v1656
    %1721 = vst [vmem:[%s1373 + $0x23c] sm:$0xf] %v1657
    %1722 = vst [vmem:[%s1373 + $0x248] sm:$0xf] %v1658
    %1723 = vst [vmem:[%s1373 + $0x254] sm:$0xf] %v1659
    %1724 = vst [vmem:[%s1373 + $0x260] sm:$0xf] %v1660
    %1725 = vst [vmem:[%s1373 + $0x26c] sm:$0xf] %v1661
    %v1726 = vld [vmem:[#allocation2] sm:$0xff]
    %v1727 = vld [vmem:[#allocation2 + $0x8] sm:$0xf]
    %v1728 = vld [vmem:[#allocation2 + $0xc] sm:$0xff]
    %v1729 = vld [vmem:[#allocation2 + $0x14] sm:$0xf]
    %v1730 = vld [vmem:[#allocation2 + $0x18] sm:$0xff]
    %v1731 = vld [vmem:[#allocation2 + $0x20] sm:$0xf]
    %v1732 = vld [vmem:[#allocation2 + $0x24] sm:$0xff]
    %v1733 = vld [vmem:[#allocation2 + $0x2c] sm:$0xf]
    %v1734 = vld [vmem:[#allocation2 + $0x30] sm:$0xff]
    %v1735 = vld [vmem:[#allocation2 + $0x38] sm:$0xf]
    %v1736 = vld [vmem:[#allocation2 + $0x3c] sm:$0xff]
    %v1737 = vld [vmem:[#allocation2 + $0x44] sm:$0xf]
    %v1738 = vld [vmem:[#allocation2 + $0x48] sm:$0xff]
    %v1739 = vld [vmem:[#allocation2 + $0x50] sm:$0xf]
    %v1740 = vld [vmem:[#allocation2 + $0x54] sm:$0xff]
    %v1741 = vld [vmem:[#allocation2 + $0x5c] sm:$0xf]
    %v1742 = vld [vmem:[#allocation2 + $0x60] sm:$0xff]
    %v1743 = vld [vmem:[#allocation2 + $0x68] sm:$0xf]
    %v1744 = vld [vmem:[#allocation2 + $0x6c] sm:$0xff]
    %v1745 = vld [vmem:[#allocation2 + $0x74] sm:$0xf]
    %v1746 = vld [vmem:[#allocation2 + $0x78] sm:$0xff]
    %v1747 = vld [vmem:[#allocation2 + $0x80] sm:$0xf]
    %v1748 = vld [vmem:[#allocation2 + $0x84] sm:$0xff]
    %v1749 = vld [vmem:[#allocation2 + $0x8c] sm:$0xf]
    %v1750 = vld [vmem:[#allocation2 + $0x90] sm:$0xff]
    %v1751 = vld [vmem:[#allocation2 + $0x98] sm:$0xf]
    %v1752 = vld [vmem:[#allocation2 + $0x9c] sm:$0xff]
    %v1753 = vld [vmem:[#allocation2 + $0xa4] sm:$0xf]
    %v1754 = vld [vmem:[#allocation2 + $0xa8] sm:$0xff]
    %v1755 = vld [vmem:[#allocation2 + $0xb0] sm:$0xf]
    %v1756 = vld [vmem:[#allocation2 + $0xb4] sm:$0xff]
    %v1757 = vld [vmem:[#allocation2 + $0xbc] sm:$0xf]
    %v1758 = vld [vmem:[#allocation2 + $0x1b0] sm:$0xff]
    %v1759 = vld [vmem:[#allocation2 + $0x1b8] sm:$0xf]
    %v1760 = vld [vmem:[#allocation2 + $0x1bc] sm:$0xff]
    %v1761 = vld [vmem:[#allocation2 + $0x1c4] sm:$0xf]
    %v1762 = vld [vmem:[#allocation2 + $0x1c8] sm:$0xff]
    %v1763 = vld [vmem:[#allocation2 + $0x1d0] sm:$0xf]
    %v1764 = vld [vmem:[#allocation2 + $0x1d4] sm:$0xff]
    %v1765 = vld [vmem:[#allocation2 + $0x1dc] sm:$0xf]
    %v1766 = vld [vmem:[#allocation2 + $0x1e0] sm:$0xff]
    %v1767 = vld [vmem:[#allocation2 + $0x1e8] sm:$0xf]
    %v1768 = vld [vmem:[#allocation2 + $0x1ec] sm:$0xff]
    %v1769 = vld [vmem:[#allocation2 + $0x1f4] sm:$0xf]
    %v1770 = vld [vmem:[#allocation2 + $0x1f8] sm:$0xff]
    %v1771 = vld [vmem:[#allocation2 + $0x200] sm:$0xf]
    %v1772 = vld [vmem:[#allocation2 + $0x204] sm:$0xff]
    %v1773 = vld [vmem:[#allocation2 + $0x20c] sm:$0xf]
    %v1774 = vld [vmem:[#allocation2 + $0x210] sm:$0xff]
    %v1775 = vld [vmem:[#allocation2 + $0x218] sm:$0xf]
    %v1776 = vld [vmem:[#allocation2 + $0x21c] sm:$0xff]
    %v1777 = vld [vmem:[#allocation2 + $0x224] sm:$0xf]
    %v1778 = vld [vmem:[#allocation2 + $0x228] sm:$0xff]
    %v1779 = vld [vmem:[#allocation2 + $0x230] sm:$0xf]
    %v1780 = vld [vmem:[#allocation2 + $0x234] sm:$0xff]
    %v1781 = vld [vmem:[#allocation2 + $0x23c] sm:$0xf]
    %v1782 = vld [vmem:[#allocation2 + $0x240] sm:$0xff]
    %v1783 = vld [vmem:[#allocation2 + $0x248] sm:$0xf]
    %v1784 = vld [vmem:[#allocation2 + $0x24c] sm:$0xff]
    %v1785 = vld [vmem:[#allocation2 + $0x254] sm:$0xf]
    %v1786 = vld [vmem:[#allocation2 + $0x258] sm:$0xff]
    %v1787 = vld [vmem:[#allocation2 + $0x260] sm:$0xf]
    %v1788 = vld [vmem:[#allocation2 + $0x264] sm:$0xff]
    %v1789 = vld [vmem:[#allocation2 + $0x26c] sm:$0xf]
    %v1790 = vld [vmem:[#allocation9] sm:$0xf]
    %v1791 = vld [vmem:[#allocation9 + $0x4] sm:$0xf]
    %v1792 = vld [vmem:[#allocation9 + $0x8] sm:$0xf]
    %v1793 = vld [vmem:[#allocation9 + $0xc] sm:$0xf]
    %v1794 = vld [vmem:[#allocation9 + $0x10] sm:$0xf]
    %v1795 = vld [vmem:[#allocation9 + $0x14] sm:$0xf]
    %v1796 = vld [vmem:[#allocation9 + $0x18] sm:$0xf]
    %v1797 = vld [vmem:[#allocation9 + $0x1c] sm:$0xf]
    %v1798 = vld [vmem:[#allocation9 + $0x20] sm:$0xf]
    %v1799 = vld [vmem:[#allocation9 + $0x24] sm:$0xf]
    %v1800 = vld [vmem:[#allocation9 + $0x28] sm:$0xf]
    %v1801 = vld [vmem:[#allocation9 + $0x2c] sm:$0xf]
    %v1802 = vld [vmem:[#allocation9 + $0x30] sm:$0xf]
    %v1803 = vld [vmem:[#allocation9 + $0x34] sm:$0xf]
    %v1804 = vld [vmem:[#allocation9 + $0x38] sm:$0xf]
    %v1805 = vld [vmem:[#allocation9 + $0x3c] sm:$0xf]
    %v1806 = vld [vmem:[#allocation9 + $0x40] sm:$0xf]
    %v1807 = vld [vmem:[#allocation9 + $0x44] sm:$0xf]
    %v1808 = vld [vmem:[#allocation9 + $0x48] sm:$0xf]
    %v1809 = vld [vmem:[#allocation9 + $0x4c] sm:$0xf]
    %v1810 = vld [vmem:[#allocation9 + $0x50] sm:$0xf]
    %v1811 = vld [vmem:[#allocation9 + $0x54] sm:$0xf]
    %v1812 = vld [vmem:[#allocation9 + $0x58] sm:$0xf]
    %v1813 = vld [vmem:[#allocation9 + $0x5c] sm:$0xf]
    %v1814 = vld [vmem:[#allocation9 + $0x60] sm:$0xf]
    %v1815 = vld [vmem:[#allocation9 + $0x64] sm:$0xf]
    %v1816 = vld [vmem:[#allocation9 + $0x68] sm:$0xf]
    %v1817 = vld [vmem:[#allocation9 + $0x6c] sm:$0xf]
    %v1818 = vld [vmem:[#allocation9 + $0x70] sm:$0xf]
    %v1819 = vld [vmem:[#allocation9 + $0x74] sm:$0xf]
    %v1820 = vld [vmem:[#allocation9 + $0x78] sm:$0xf]
    %v1821 = vld [vmem:[#allocation9 + $0x7c] sm:$0xf]
    %v1822 = vld [vmem:[#allocation9 + $0x80] sm:$0xf]
    %v1823 = vld [vmem:[#allocation9 + $0x84] sm:$0xf]
    %v1824 = vld [vmem:[#allocation9 + $0x88] sm:$0xf]
    %v1825 = vld [vmem:[#allocation9 + $0x8c] sm:$0xf]
    %v1826 = vld [vmem:[#allocation9 + $0x90] sm:$0xf]
    %v1827 = vld [vmem:[#allocation9 + $0x94] sm:$0xf]
    %v1828 = vld [vmem:[#allocation9 + $0x98] sm:$0xf]
    %v1829 = vld [vmem:[#allocation9 + $0x9c] sm:$0xf]
    %v1830 = vld [vmem:[#allocation9 + $0xa0] sm:$0xf]
    %v1831 = vld [vmem:[#allocation9 + $0xa4] sm:$0xf]
    %v1832 = vld [vmem:[#allocation9 + $0xa8] sm:$0xf]
    %v1833 = vld [vmem:[#allocation9 + $0xac] sm:$0xf]
    %v1834 = vld [vmem:[#allocation9 + $0xb0] sm:$0xf]
    %v1835 = vld [vmem:[#allocation9 + $0xb4] sm:$0xf]
    %v1836 = vld [vmem:[#allocation9 + $0xb8] sm:$0xf]
    %v1837 = vld [vmem:[#allocation9 + $0xbc] sm:$0xf]
    %v1838 = vld [vmem:[%s571] sm:$0xff]
    %v1839 = vld [vmem:[%s571 + $0x8] sm:$0xf]
    %v1840 = vld [vmem:[%s571 + $0xc] sm:$0xff]
    %v1841 = vld [vmem:[%s571 + $0x14] sm:$0xf]
    %v1842 = vld [vmem:[%s571 + $0x18] sm:$0xff]
    %v1843 = vld [vmem:[%s571 + $0x20] sm:$0xf]
    %v1844 = vld [vmem:[%s571 + $0x24] sm:$0xff]
    %v1845 = vld [vmem:[%s571 + $0x2c] sm:$0xf]
    %v1846 = vld [vmem:[%s571 + $0x30] sm:$0xff]
    %v1847 = vld [vmem:[%s571 + $0x38] sm:$0xf]
    %v1848 = vld [vmem:[%s571 + $0x3c] sm:$0xff]
    %v1849 = vld [vmem:[%s571 + $0x44] sm:$0xf]
    %v1850 = vld [vmem:[%s571 + $0x48] sm:$0xff]
    %v1851 = vld [vmem:[%s571 + $0x50] sm:$0xf]
    %v1852 = vld [vmem:[%s571 + $0x54] sm:$0xff]
    %v1853 = vld [vmem:[%s571 + $0x5c] sm:$0xf]
    %v1854 = vld [vmem:[%s571 + $0x60] sm:$0xff]
    %v1855 = vld [vmem:[%s571 + $0x68] sm:$0xf]
    %v1856 = vld [vmem:[%s571 + $0x6c] sm:$0xff]
    %v1857 = vld [vmem:[%s571 + $0x74] sm:$0xf]
    %v1858 = vld [vmem:[%s571 + $0x78] sm:$0xff]
    %v1859 = vld [vmem:[%s571 + $0x80] sm:$0xf]
    %v1860 = vld [vmem:[%s571 + $0x84] sm:$0xff]
    %v1861 = vld [vmem:[%s571 + $0x8c] sm:$0xf]
    %v1862 = vld [vmem:[%s571 + $0x90] sm:$0xff]
    %v1863 = vld [vmem:[%s571 + $0x98] sm:$0xf]
    %v1864 = vld [vmem:[%s571 + $0x9c] sm:$0xff]
    %v1865 = vld [vmem:[%s571 + $0xa4] sm:$0xf]
    %v1866 = vld [vmem:[%s571 + $0xa8] sm:$0xff]
    %v1867 = vld [vmem:[%s571 + $0xb0] sm:$0xf]
    %v1868 = vld [vmem:[%s571 + $0xb4] sm:$0xff]
    %v1869 = vld [vmem:[%s571 + $0xbc] sm:$0xf]
    %v1870 = vld [vmem:[%s571 + $0x1b0] sm:$0xff]
    %v1871 = vld [vmem:[%s571 + $0x1b8] sm:$0xf]
    %v1872 = vld [vmem:[%s571 + $0x1bc] sm:$0xff]
    %v1873 = vld [vmem:[%s571 + $0x1c4] sm:$0xf]
    %v1874 = vld [vmem:[%s571 + $0x1c8] sm:$0xff]
    %v1875 = vld [vmem:[%s571 + $0x1d0] sm:$0xf]
    %v1876 = vld [vmem:[%s571 + $0x1d4] sm:$0xff]
    %v1877 = vld [vmem:[%s571 + $0x1dc] sm:$0xf]
    %v1878 = vld [vmem:[%s571 + $0x1e0] sm:$0xff]
    %v1879 = vld [vmem:[%s571 + $0x1e8] sm:$0xf]
    %v1880 = vld [vmem:[%s571 + $0x1ec] sm:$0xff]
    %v1881 = vld [vmem:[%s571 + $0x1f4] sm:$0xf]
    %v1882 = vld [vmem:[%s571 + $0x1f8] sm:$0xff]
    %v1883 = vld [vmem:[%s571 + $0x200] sm:$0xf]
    %v1884 = vld [vmem:[%s571 + $0x204] sm:$0xff]
    %v1885 = vld [vmem:[%s571 + $0x20c] sm:$0xf]
    %v1886 = vld [vmem:[%s571 + $0x210] sm:$0xff]
    %v1887 = vld [vmem:[%s571 + $0x218] sm:$0xf]
    %v1888 = vld [vmem:[%s571 + $0x21c] sm:$0xff]
    %v1889 = vld [vmem:[%s571 + $0x224] sm:$0xf]
    %v1890 = vld [vmem:[%s571 + $0x228] sm:$0xff]
    %v1891 = vld [vmem:[%s571 + $0x230] sm:$0xf]
    %v1892 = vld [vmem:[%s571 + $0x234] sm:$0xff]
    %v1893 = vld [vmem:[%s571 + $0x23c] sm:$0xf]
    %v1894 = vld [vmem:[%s571 + $0x240] sm:$0xff]
    %v1895 = vld [vmem:[%s571 + $0x248] sm:$0xf]
    %v1896 = vld [vmem:[%s571 + $0x24c] sm:$0xff]
    %v1897 = vld [vmem:[%s571 + $0x254] sm:$0xf]
    %v1898 = vld [vmem:[%s571 + $0x258] sm:$0xff]
    %v1899 = vld [vmem:[%s571 + $0x260] sm:$0xf]
    %v1900 = vld [vmem:[%s571 + $0x264] sm:$0xff]
    %v1901 = vld [vmem:[%s571 + $0x26c] sm:$0xf]
    %s1902 = scalar_lea.vmem [#allocation9], 192
    %v1903 = vld [vmem:[%s1902] sm:$0xf]
    %v1904 = vld [vmem:[%s1902 + $0x4] sm:$0xf]
    %v1905 = vld [vmem:[%s1902 + $0x8] sm:$0xf]
    %v1906 = vld [vmem:[%s1902 + $0xc] sm:$0xf]
    %v1907 = vld [vmem:[%s1902 + $0x10] sm:$0xf]
    %v1908 = vld [vmem:[%s1902 + $0x14] sm:$0xf]
    %v1909 = vld [vmem:[%s1902 + $0x18] sm:$0xf]
    %v1910 = vld [vmem:[%s1902 + $0x1c] sm:$0xf]
    %v1911 = vld [vmem:[%s1902 + $0x20] sm:$0xf]
    %v1912 = vld [vmem:[%s1902 + $0x24] sm:$0xf]
    %v1913 = vld [vmem:[%s1902 + $0x28] sm:$0xf]
    %v1914 = vld [vmem:[%s1902 + $0x2c] sm:$0xf]
    %v1915 = vld [vmem:[%s1902 + $0x30] sm:$0xf]
    %v1916 = vld [vmem:[%s1902 + $0x34] sm:$0xf]
    %v1917 = vld [vmem:[%s1902 + $0x38] sm:$0xf]
    %v1918 = vld [vmem:[%s1902 + $0x3c] sm:$0xf]
    %v1919 = vld [vmem:[%s1902 + $0x40] sm:$0xf]
    %v1920 = vld [vmem:[%s1902 + $0x44] sm:$0xf]
    %v1921 = vld [vmem:[%s1902 + $0x48] sm:$0xf]
    %v1922 = vld [vmem:[%s1902 + $0x4c] sm:$0xf]
    %v1923 = vld [vmem:[%s1902 + $0x50] sm:$0xf]
    %v1924 = vld [vmem:[%s1902 + $0x54] sm:$0xf]
    %v1925 = vld [vmem:[%s1902 + $0x58] sm:$0xf]
    %v1926 = vld [vmem:[%s1902 + $0x5c] sm:$0xf]
    %v1927 = vld [vmem:[%s1902 + $0x60] sm:$0xf]
    %v1928 = vld [vmem:[%s1902 + $0x64] sm:$0xf]
    %v1929 = vld [vmem:[%s1902 + $0x68] sm:$0xf]
    %v1930 = vld [vmem:[%s1902 + $0x6c] sm:$0xf]
    %v1931 = vld [vmem:[%s1902 + $0x70] sm:$0xf]
    %v1932 = vld [vmem:[%s1902 + $0x74] sm:$0xf]
    %v1933 = vld [vmem:[%s1902 + $0x78] sm:$0xf]
    %v1934 = vld [vmem:[%s1902 + $0x7c] sm:$0xf]
    %v1935 = vld [vmem:[%s1902 + $0x80] sm:$0xf]
    %v1936 = vld [vmem:[%s1902 + $0x84] sm:$0xf]
    %v1937 = vld [vmem:[%s1902 + $0x88] sm:$0xf]
    %v1938 = vld [vmem:[%s1902 + $0x8c] sm:$0xf]
    %v1939 = vld [vmem:[%s1902 + $0x90] sm:$0xf]
    %v1940 = vld [vmem:[%s1902 + $0x94] sm:$0xf]
    %v1941 = vld [vmem:[%s1902 + $0x98] sm:$0xf]
    %v1942 = vld [vmem:[%s1902 + $0x9c] sm:$0xf]
    %v1943 = vld [vmem:[%s1902 + $0xa0] sm:$0xf]
    %v1944 = vld [vmem:[%s1902 + $0xa4] sm:$0xf]
    %v1945 = vld [vmem:[%s1902 + $0xa8] sm:$0xf]
    %v1946 = vld [vmem:[%s1902 + $0xac] sm:$0xf]
    %v1947 = vld [vmem:[%s1902 + $0xb0] sm:$0xf]
    %v1948 = vld [vmem:[%s1902 + $0xb4] sm:$0xf]
    %v1949 = vld [vmem:[%s1902 + $0xb8] sm:$0xf]
    %v1950 = vld [vmem:[%s1902 + $0xbc] sm:$0xf]
    %v2015 = vunpack.c.l.b16 %v1838
    %v2016 = vunpack.c.h.b16 %v1838
    %v2017 = vunpack.c.l.b16 %v1839
    %v2018 = vunpack.c.l.b16 %v1840
    %v2019 = vunpack.c.h.b16 %v1840
    %v2020 = vunpack.c.l.b16 %v1841
    %v2021 = vunpack.c.l.b16 %v1842
    %v2022 = vunpack.c.h.b16 %v1842
    %v2023 = vunpack.c.l.b16 %v1843
    %v2024 = vunpack.c.l.b16 %v1844
    %v2025 = vunpack.c.h.b16 %v1844
    %v2026 = vunpack.c.l.b16 %v1845
    %v2027 = vunpack.c.l.b16 %v1846
    %v2028 = vunpack.c.h.b16 %v1846
    %v2029 = vunpack.c.l.b16 %v1847
    %v2030 = vunpack.c.l.b16 %v1848
    %v2031 = vunpack.c.h.b16 %v1848
    %v2032 = vunpack.c.l.b16 %v1849
    %v2033 = vunpack.c.l.b16 %v1850
    %v2034 = vunpack.c.h.b16 %v1850
    %v2035 = vunpack.c.l.b16 %v1851
    %v2036 = vunpack.c.l.b16 %v1852
    %v2037 = vunpack.c.h.b16 %v1852
    %v2038 = vunpack.c.l.b16 %v1853
    %v2039 = vunpack.c.l.b16 %v1854
    %v2040 = vunpack.c.h.b16 %v1854
    %v2041 = vunpack.c.l.b16 %v1855
    %v2042 = vunpack.c.l.b16 %v1856
    %v2043 = vunpack.c.h.b16 %v1856
    %v2044 = vunpack.c.l.b16 %v1857
    %v2045 = vunpack.c.l.b16 %v1858
    %v2046 = vunpack.c.h.b16 %v1858
    %v2047 = vunpack.c.l.b16 %v1859
    %v2048 = vunpack.c.l.b16 %v1860
    %v2049 = vunpack.c.h.b16 %v1860
    %v2050 = vunpack.c.l.b16 %v1861
    %v2051 = vunpack.c.l.b16 %v1862
    %v2052 = vunpack.c.h.b16 %v1862
    %v2053 = vunpack.c.l.b16 %v1863
    %v2054 = vunpack.c.l.b16 %v1864
    %v2055 = vunpack.c.h.b16 %v1864
    %v2056 = vunpack.c.l.b16 %v1865
    %v2057 = vunpack.c.l.b16 %v1866
    %v2058 = vunpack.c.h.b16 %v1866
    %v2059 = vunpack.c.l.b16 %v1867
    %v2060 = vunpack.c.l.b16 %v1868
    %v2061 = vunpack.c.h.b16 %v1868
    %v2062 = vunpack.c.l.b16 %v1869
    %v2063 = vunpack.c.l.b16 %v1870
    %v2064 = vunpack.c.h.b16 %v1870
    %v2065 = vunpack.c.l.b16 %v1871
    %v2066 = vunpack.c.l.b16 %v1872
    %v2067 = vunpack.c.h.b16 %v1872
    %v2068 = vunpack.c.l.b16 %v1873
    %v2069 = vunpack.c.l.b16 %v1874
    %v2070 = vunpack.c.h.b16 %v1874
    %v2071 = vunpack.c.l.b16 %v1875
    %v2072 = vunpack.c.l.b16 %v1876
    %v2073 = vunpack.c.h.b16 %v1876
    %v2074 = vunpack.c.l.b16 %v1877
    %v2075 = vunpack.c.l.b16 %v1878
    %v2076 = vunpack.c.h.b16 %v1878
    %v2077 = vunpack.c.l.b16 %v1879
    %v2078 = vunpack.c.l.b16 %v1880
    %v2079 = vunpack.c.h.b16 %v1880
    %v2080 = vunpack.c.l.b16 %v1881
    %v2081 = vunpack.c.l.b16 %v1882
    %v2082 = vunpack.c.h.b16 %v1882
    %v2083 = vunpack.c.l.b16 %v1883
    %v2084 = vunpack.c.l.b16 %v1884
    %v2085 = vunpack.c.h.b16 %v1884
    %v2086 = vunpack.c.l.b16 %v1885
    %v2087 = vunpack.c.l.b16 %v1886
    %v2088 = vunpack.c.h.b16 %v1886
    %v2089 = vunpack.c.l.b16 %v1887
    %v2090 = vunpack.c.l.b16 %v1888
    %v2091 = vunpack.c.h.b16 %v1888
    %v2092 = vunpack.c.l.b16 %v1889
    %v2093 = vunpack.c.l.b16 %v1890
    %v2094 = vunpack.c.h.b16 %v1890
    %v2095 = vunpack.c.l.b16 %v1891
    %v2096 = vunpack.c.l.b16 %v1892
    %v2097 = vunpack.c.h.b16 %v1892
    %v2098 = vunpack.c.l.b16 %v1893
    %v2099 = vunpack.c.l.b16 %v1894
    %v2100 = vunpack.c.h.b16 %v1894
    %v2101 = vunpack.c.l.b16 %v1895
    %v2102 = vunpack.c.l.b16 %v1896
    %v2103 = vunpack.c.h.b16 %v1896
    %v2104 = vunpack.c.l.b16 %v1897
    %v2105 = vunpack.c.l.b16 %v1898
    %v2106 = vunpack.c.h.b16 %v1898
    %v2107 = vunpack.c.l.b16 %v1899
    %v2108 = vunpack.c.l.b16 %v1900
    %v2109 = vunpack.c.h.b16 %v1900
    %v2110 = vunpack.c.l.b16 %v1901
    %v2111 = vpack.c.b16 %v2018, %v2015
    %v2112 = vpack.c.b16 %v2019, %v2016
    %v2113 = vpack.c.b16 %v2020, %v2017
    %v2114 = vpack.c.b16 %v2024, %v2021
    %v2115 = vpack.c.b16 %v2025, %v2022
    %v2116 = vpack.c.b16 %v2026, %v2023
    %v2117 = vpack.c.b16 %v2030, %v2027
    %v2118 = vpack.c.b16 %v2031, %v2028
    %v2119 = vpack.c.b16 %v2032, %v2029
    %v2120 = vpack.c.b16 %v2036, %v2033
    %v2121 = vpack.c.b16 %v2037, %v2034
    %v2122 = vpack.c.b16 %v2038, %v2035
    %v2123 = vpack.c.b16 %v2042, %v2039
    %v2124 = vpack.c.b16 %v2043, %v2040
    %v2125 = vpack.c.b16 %v2044, %v2041
    %v2126 = vpack.c.b16 %v2048, %v2045
    %v2127 = vpack.c.b16 %v2049, %v2046
    %v2128 = vpack.c.b16 %v2050, %v2047
    %v2129 = vpack.c.b16 %v2054, %v2051
    %v2130 = vpack.c.b16 %v2055, %v2052
    %v2131 = vpack.c.b16 %v2056, %v2053
    %v2132 = vpack.c.b16 %v2060, %v2057
    %v2133 = vpack.c.b16 %v2061, %v2058
    %v2134 = vpack.c.b16 %v2062, %v2059
    %v2135 = vpack.c.b16 %v2066, %v2063
    %v2136 = vpack.c.b16 %v2067, %v2064
    %v2137 = vpack.c.b16 %v2068, %v2065
    %v2138 = vpack.c.b16 %v2072, %v2069
    %v2139 = vpack.c.b16 %v2073, %v2070
    %v2140 = vpack.c.b16 %v2074, %v2071
    %v2141 = vpack.c.b16 %v2078, %v2075
    %v2142 = vpack.c.b16 %v2079, %v2076
    %v2143 = vpack.c.b16 %v2080, %v2077
    %v2144 = vpack.c.b16 %v2084, %v2081
    %v2145 = vpack.c.b16 %v2085, %v2082
    %v2146 = vpack.c.b16 %v2086, %v2083
    %v2147 = vpack.c.b16 %v2090, %v2087
    %v2148 = vpack.c.b16 %v2091, %v2088
    %v2149 = vpack.c.b16 %v2092, %v2089
    %v2150 = vpack.c.b16 %v2096, %v2093
    %v2151 = vpack.c.b16 %v2097, %v2094
    %v2152 = vpack.c.b16 %v2098, %v2095
    %v2153 = vpack.c.b16 %v2102, %v2099
    %v2154 = vpack.c.b16 %v2103, %v2100
    %v2155 = vpack.c.b16 %v2104, %v2101
    %v2156 = vpack.c.b16 %v2108, %v2105
    %v2157 = vpack.c.b16 %v2109, %v2106
    %v2158 = vpack.c.b16 %v2110, %v2107
    %v2255 = vunpack.c.l.b16 %v1903
    %v2256 = vunpack.c.l.b16 %v1904
    %v2257 = vunpack.c.l.b16 %v1905
    %v2258 = vunpack.c.l.b16 %v1906
    %v2259 = vunpack.c.l.b16 %v1907
    %v2260 = vunpack.c.l.b16 %v1908
    %v2261 = vunpack.c.l.b16 %v1909
    %v2262 = vunpack.c.l.b16 %v1910
    %v2263 = vunpack.c.l.b16 %v1911
    %v2264 = vunpack.c.l.b16 %v1912
    %v2265 = vunpack.c.l.b16 %v1913
    %v2266 = vunpack.c.l.b16 %v1914
    %v2267 = vunpack.c.l.b16 %v1915
    %v2268 = vunpack.c.l.b16 %v1916
    %v2269 = vunpack.c.l.b16 %v1917
    %v2270 = vunpack.c.l.b16 %v1918
    %v2271 = vunpack.c.l.b16 %v1919
    %v2272 = vunpack.c.l.b16 %v1920
    %v2273 = vunpack.c.l.b16 %v1921
    %v2274 = vunpack.c.l.b16 %v1922
    %v2275 = vunpack.c.l.b16 %v1923
    %v2276 = vunpack.c.l.b16 %v1924
    %v2277 = vunpack.c.l.b16 %v1925
    %v2278 = vunpack.c.l.b16 %v1926
    %v2279 = vunpack.c.l.b16 %v1927
    %v2280 = vunpack.c.l.b16 %v1928
    %v2281 = vunpack.c.l.b16 %v1929
    %v2282 = vunpack.c.l.b16 %v1930
    %v2283 = vunpack.c.l.b16 %v1931
    %v2284 = vunpack.c.l.b16 %v1932
    %v2285 = vunpack.c.l.b16 %v1933
    %v2286 = vunpack.c.l.b16 %v1934
    %v2287 = vunpack.c.l.b16 %v1935
    %v2288 = vunpack.c.l.b16 %v1936
    %v2289 = vunpack.c.l.b16 %v1937
    %v2290 = vunpack.c.l.b16 %v1938
    %v2291 = vunpack.c.l.b16 %v1939
    %v2292 = vunpack.c.l.b16 %v1940
    %v2293 = vunpack.c.l.b16 %v1941
    %v2294 = vunpack.c.l.b16 %v1942
    %v2295 = vunpack.c.l.b16 %v1943
    %v2296 = vunpack.c.l.b16 %v1944
    %v2297 = vunpack.c.l.b16 %v1945
    %v2298 = vunpack.c.l.b16 %v1946
    %v2299 = vunpack.c.l.b16 %v1947
    %v2300 = vunpack.c.l.b16 %v1948
    %v2301 = vunpack.c.l.b16 %v1949
    %v2302 = vunpack.c.l.b16 %v1950
    %v2303 = vpack.c.b16 %v2256, %v2255
    %v2304 = vpack.c.b16 %v2258, %v2257
    %v2305 = vpack.c.b16 %v2260, %v2259
    %v2306 = vpack.c.b16 %v2262, %v2261
    %v2307 = vpack.c.b16 %v2264, %v2263
    %v2308 = vpack.c.b16 %v2266, %v2265
    %v2309 = vpack.c.b16 %v2268, %v2267
    %v2310 = vpack.c.b16 %v2270, %v2269
    %v2311 = vpack.c.b16 %v2272, %v2271
    %v2312 = vpack.c.b16 %v2274, %v2273
    %v2313 = vpack.c.b16 %v2276, %v2275
    %v2314 = vpack.c.b16 %v2278, %v2277
    %v2315 = vpack.c.b16 %v2280, %v2279
    %v2316 = vpack.c.b16 %v2282, %v2281
    %v2317 = vpack.c.b16 %v2284, %v2283
    %v2318 = vpack.c.b16 %v2286, %v2285
    %v2319 = vpack.c.b16 %v2288, %v2287
    %v2320 = vpack.c.b16 %v2290, %v2289
    %v2321 = vpack.c.b16 %v2292, %v2291
    %v2322 = vpack.c.b16 %v2294, %v2293
    %v2323 = vpack.c.b16 %v2296, %v2295
    %v2324 = vpack.c.b16 %v2298, %v2297
    %v2325 = vpack.c.b16 %v2300, %v2299
    %v2326 = vpack.c.b16 %v2302, %v2301
    %2351 = vmatprep.subr.bf16.mxu0 0
    %2352 = vmatpush1.bf16.msra.mxu0 %v2310
    %2353 = vmatprep.subr.bf16.mxu0 0
    %2354 = vmatpush1.bf16.msra.mxu0 %v2309
    %2355 = vmatprep.subr.bf16.mxu0 0
    %2356 = vmatpush1.bf16.msra.mxu0 %v2308
    %2357 = vmatprep.subr.bf16.mxu0 0
    %2358 = vmatpush1.bf16.msra.mxu0 %v2307
    %2359 = vmatprep.subr.bf16.mxu0 0
    %2360 = vmatpush1.bf16.msra.mxu0 %v2306
    %2361 = vmatprep.subr.bf16.mxu0 0
    %2362 = vmatpush1.bf16.msra.mxu0 %v2305
    %2363 = vmatprep.subr.bf16.mxu0 0
    %2364 = vmatpush1.bf16.msra.mxu0 %v2304
    %2365 = vmatprep.subr.bf16.mxu0 0
    %2366 = vmatpush1.bf16.msra.mxu0 %v2303
    %2367 = vmatprep.subr.bf16.mxu0 0
    %2368 = vmatpush2.bf16.msra.mxu0 %v2318
    %2369 = vmatprep.subr.bf16.mxu0 0
    %2370 = vmatpush2.bf16.msra.mxu0 %v2317
    %2371 = vmatprep.subr.bf16.mxu0 0
    %2372 = vmatpush2.bf16.msra.mxu0 %v2316
    %2373 = vmatprep.subr.bf16.mxu0 0
    %2374 = vmatpush2.bf16.msra.mxu0 %v2315
    %2375 = vmatprep.subr.bf16.mxu0 0
    %2376 = vmatpush2.bf16.msra.mxu0 %v2314
    %2377 = vmatprep.subr.bf16.mxu0 0
    %2378 = vmatpush2.bf16.msra.mxu0 %v2313
    %2379 = vmatprep.subr.bf16.mxu0 0
    %2380 = vmatpush2.bf16.msra.mxu0 %v2312
    %2381 = vmatprep.subr.bf16.mxu0 0
    %2382 = vmatpush2.bf16.msra.mxu0 %v2311
    %2383 = vmatprep.mubr.bf16.mxu0 %v2112
    %2384 = vmatmul.mubr.bf16.gmra.mxu0 %v2111
    %v2385 = vpop.f32.mrf.mxu0
    %v2386 = vadd.f32 0.0, %v2385
    %v2387 = vpop.f32.mrf.mxu0
    %v2388 = vpop.f32.mrf.mxu0
    %v2389 = vadd.f32 0.0, %v2388
    %v2390 = vpop.f32.mrf.mxu0
    %2391 = vmatprep.mubr.bf16.mxu0 %v2115
    %2392 = vmatmul.mubr.bf16.gmra.mxu0 %v2114
    %v2393 = vpop.f32.mrf.mxu0
    %v2394 = vadd.f32 0.0, %v2393
    %v2395 = vpop.f32.mrf.mxu0
    %v2396 = vpop.f32.mrf.mxu0
    %v2397 = vadd.f32 0.0, %v2396
    %v2398 = vpop.f32.mrf.mxu0
    %2399 = vmatprep.mubr.bf16.mxu0 %v2118
    %2400 = vmatmul.mubr.bf16.gmra.mxu0 %v2117
    %v2401 = vpop.f32.mrf.mxu0
    %v2402 = vadd.f32 0.0, %v2401
    %v2403 = vpop.f32.mrf.mxu0
    %v2404 = vpop.f32.mrf.mxu0
    %v2405 = vadd.f32 0.0, %v2404
    %v2406 = vpop.f32.mrf.mxu0
    %2407 = vmatprep.mubr.bf16.mxu0 %v2121
    %2408 = vmatmul.mubr.bf16.gmra.mxu0 %v2120
    %v2409 = vpop.f32.mrf.mxu0
    %v2410 = vadd.f32 0.0, %v2409
    %v2411 = vpop.f32.mrf.mxu0
    %v2412 = vpop.f32.mrf.mxu0
    %v2413 = vadd.f32 0.0, %v2412
    %v2414 = vpop.f32.mrf.mxu0
    %2415 = vmatprep.mubr.bf16.mxu0 %v2124
    %2416 = vmatmul.mubr.bf16.gmra.mxu0 %v2123
    %v2417 = vpop.f32.mrf.mxu0
    %v2418 = vadd.f32 0.0, %v2417
    %v2419 = vpop.f32.mrf.mxu0
    %v2420 = vpop.f32.mrf.mxu0
    %v2421 = vadd.f32 0.0, %v2420
    %v2422 = vpop.f32.mrf.mxu0
    %2423 = vmatprep.mubr.bf16.mxu0 %v2127
    %2424 = vmatmul.mubr.bf16.gmra.mxu0 %v2126
    %v2425 = vpop.f32.mrf.mxu0
    %v2426 = vadd.f32 0.0, %v2425
    %v2427 = vpop.f32.mrf.mxu0
    %v2428 = vpop.f32.mrf.mxu0
    %v2429 = vadd.f32 0.0, %v2428
    %v2430 = vpop.f32.mrf.mxu0
    %2431 = vmatprep.mubr.bf16.mxu0 %v2130
    %2432 = vmatmul.mubr.bf16.gmra.mxu0 %v2129
    %v2433 = vpop.f32.mrf.mxu0
    %v2434 = vadd.f32 0.0, %v2433
    %v2435 = vpop.f32.mrf.mxu0
    %v2436 = vpop.f32.mrf.mxu0
    %v2437 = vadd.f32 0.0, %v2436
    %v2438 = vpop.f32.mrf.mxu0
    %2439 = vmatprep.mubr.bf16.mxu0 %v2133
    %2440 = vmatmul.mubr.bf16.gmra.mxu0 %v2132
    %v2441 = vpop.f32.mrf.mxu0
    %v2442 = vadd.f32 0.0, %v2441
    %v2443 = vpop.f32.mrf.mxu0
    %v2444 = vpop.f32.mrf.mxu0
    %v2445 = vadd.f32 0.0, %v2444
    %v2446 = vpop.f32.mrf.mxu0
    %2447 = vmatprep.mubr.bf16.mxu0 %v2136
    %2448 = vmatmul.mubr.bf16.gmra.mxu0 %v2135
    %v2449 = vpop.f32.mrf.mxu0
    %v2450 = vadd.f32 0.0, %v2449
    %v2451 = vpop.f32.mrf.mxu0
    %v2452 = vpop.f32.mrf.mxu0
    %v2453 = vadd.f32 0.0, %v2452
    %v2454 = vpop.f32.mrf.mxu0
    %2455 = vmatprep.mubr.bf16.mxu0 %v2139
    %2456 = vmatmul.mubr.bf16.gmra.mxu0 %v2138
    %v2457 = vpop.f32.mrf.mxu0
    %v2458 = vadd.f32 0.0, %v2457
    %v2459 = vpop.f32.mrf.mxu0
    %v2460 = vpop.f32.mrf.mxu0
    %v2461 = vadd.f32 0.0, %v2460
    %v2462 = vpop.f32.mrf.mxu0
    %2463 = vmatprep.mubr.bf16.mxu0 %v2142
    %2464 = vmatmul.mubr.bf16.gmra.mxu0 %v2141
    %v2465 = vpop.f32.mrf.mxu0
    %v2466 = vadd.f32 0.0, %v2465
    %v2467 = vpop.f32.mrf.mxu0
    %v2468 = vpop.f32.mrf.mxu0
    %v2469 = vadd.f32 0.0, %v2468
    %v2470 = vpop.f32.mrf.mxu0
    %2471 = vmatprep.mubr.bf16.mxu0 %v2145
    %2472 = vmatmul.mubr.bf16.gmra.mxu0 %v2144
    %v2473 = vpop.f32.mrf.mxu0
    %v2474 = vadd.f32 0.0, %v2473
    %v2475 = vpop.f32.mrf.mxu0
    %v2476 = vpop.f32.mrf.mxu0
    %v2477 = vadd.f32 0.0, %v2476
    %v2478 = vpop.f32.mrf.mxu0
    %2479 = vmatprep.mubr.bf16.mxu0 %v2148
    %2480 = vmatmul.mubr.bf16.gmra.mxu0 %v2147
    %v2481 = vpop.f32.mrf.mxu0
    %v2482 = vadd.f32 0.0, %v2481
    %v2483 = vpop.f32.mrf.mxu0
    %v2484 = vpop.f32.mrf.mxu0
    %v2485 = vadd.f32 0.0, %v2484
    %v2486 = vpop.f32.mrf.mxu0
    %2487 = vmatprep.mubr.bf16.mxu0 %v2151
    %2488 = vmatmul.mubr.bf16.gmra.mxu0 %v2150
    %v2489 = vpop.f32.mrf.mxu0
    %v2490 = vadd.f32 0.0, %v2489
    %v2491 = vpop.f32.mrf.mxu0
    %v2492 = vpop.f32.mrf.mxu0
    %v2493 = vadd.f32 0.0, %v2492
    %v2494 = vpop.f32.mrf.mxu0
    %2495 = vmatprep.mubr.bf16.mxu0 %v2154
    %2496 = vmatmul.mubr.bf16.gmra.mxu0 %v2153
    %v2497 = vpop.f32.mrf.mxu0
    %v2498 = vadd.f32 0.0, %v2497
    %v2499 = vpop.f32.mrf.mxu0
    %v2500 = vpop.f32.mrf.mxu0
    %v2501 = vadd.f32 0.0, %v2500
    %v2502 = vpop.f32.mrf.mxu0
    %2503 = vmatprep.mubr.bf16.mxu0 %v2157
    %2504 = vmatmul.mubr.bf16.gmra.mxu0 %v2156
    %v2505 = vpop.f32.mrf.mxu0
    %v2506 = vadd.f32 0.0, %v2505
    %v2507 = vpop.f32.mrf.mxu0
    %v2508 = vpop.f32.mrf.mxu0
    %v2509 = vadd.f32 0.0, %v2508
    %v2510 = vpop.f32.mrf.mxu0
    %2511 = vdwg.mxu0
    %2512 = vmatprep.subr.bf16.mxu0 0
    %2513 = vmatpush1.bf16.msra.mxu0 %v2326
    %2514 = vmatprep.subr.bf16.mxu0 0
    %2515 = vmatpush1.bf16.msra.mxu0 %v2325
    %2516 = vmatprep.subr.bf16.mxu0 0
    %2517 = vmatpush1.bf16.msra.mxu0 %v2324
    %2518 = vmatprep.subr.bf16.mxu0 0
    %2519 = vmatpush1.bf16.msra.mxu0 %v2323
    %2520 = vmatprep.subr.bf16.mxu0 0
    %2521 = vmatpush1.bf16.msra.mxu0 %v2322
    %2522 = vmatprep.subr.bf16.mxu0 0
    %2523 = vmatpush1.bf16.msra.mxu0 %v2321
    %2524 = vmatprep.subr.bf16.mxu0 0
    %2525 = vmatpush1.bf16.msra.mxu0 %v2320
    %2526 = vmatprep.subr.bf16.mxu0 0
    %2527 = vmatpush1.bf16.msra.mxu0 %v2319
    %2528 = vmatprep.subr.bf16.mxu0 0
    %2529 = vmatpush2.bf16.msra.mxu0 0
    %2530 = vmatprep.subr.bf16.mxu0 0
    %2531 = vmatpush2.bf16.msra.mxu0 0
    %2532 = vmatprep.subr.bf16.mxu0 0
    %2533 = vmatpush2.bf16.msra.mxu0 0
    %2534 = vmatprep.subr.bf16.mxu0 0
    %2535 = vmatpush2.bf16.msra.mxu0 0
    %2536 = vmatprep.subr.bf16.mxu0 0
    %2537 = vmatpush2.bf16.msra.mxu0 0
    %2538 = vmatprep.subr.bf16.mxu0 0
    %2539 = vmatpush2.bf16.msra.mxu0 0
    %2540 = vmatprep.subr.bf16.mxu0 0
    %2541 = vmatpush2.bf16.msra.mxu0 0
    %2542 = vmatprep.subr.bf16.mxu0 0
    %2543 = vmatpush2.bf16.msra.mxu0 0
    %2544 = vmatprep.mubr.bf16.mxu0 0
    %2545 = vmatmul.mubr.bf16.gmra.mxu0 %v2113
    %v2546 = vpop.f32.mrf.mxu0
    %v2547 = vadd.f32 %v2386, %v2546
    %v2548 = vpop.f32.mrf.mxu0
    %v2549 = vpop.f32.mrf.mxu0
    %v2550 = vadd.f32 %v2389, %v2549
    %v2551 = vpop.f32.mrf.mxu0
    %2552 = vmatprep.mubr.bf16.mxu0 0
    %2553 = vmatmul.mubr.bf16.gmra.mxu0 %v2116
    %v2554 = vpop.f32.mrf.mxu0
    %v2555 = vadd.f32 %v2394, %v2554
    %v2556 = vpop.f32.mrf.mxu0
    %v2557 = vpop.f32.mrf.mxu0
    %v2558 = vadd.f32 %v2397, %v2557
    %v2559 = vpop.f32.mrf.mxu0
    %2560 = vmatprep.mubr.bf16.mxu0 0
    %2561 = vmatmul.mubr.bf16.gmra.mxu0 %v2119
    %v2562 = vpop.f32.mrf.mxu0
    %v2563 = vadd.f32 %v2402, %v2562
    %v2564 = vpop.f32.mrf.mxu0
    %v2565 = vpop.f32.mrf.mxu0
    %v2566 = vadd.f32 %v2405, %v2565
    %v2567 = vpop.f32.mrf.mxu0
    %2568 = vmatprep.mubr.bf16.mxu0 0
    %2569 = vmatmul.mubr.bf16.gmra.mxu0 %v2122
    %v2570 = vpop.f32.mrf.mxu0
    %v2571 = vadd.f32 %v2410, %v2570
    %v2572 = vpop.f32.mrf.mxu0
    %v2573 = vpop.f32.mrf.mxu0
    %v2574 = vadd.f32 %v2413, %v2573
    %v2575 = vpop.f32.mrf.mxu0
    %2576 = vmatprep.mubr.bf16.mxu0 0
    %2577 = vmatmul.mubr.bf16.gmra.mxu0 %v2125
    %v2578 = vpop.f32.mrf.mxu0
    %v2579 = vadd.f32 %v2418, %v2578
    %v2580 = vpop.f32.mrf.mxu0
    %v2581 = vpop.f32.mrf.mxu0
    %v2582 = vadd.f32 %v2421, %v2581
    %v2583 = vpop.f32.mrf.mxu0
    %2584 = vmatprep.mubr.bf16.mxu0 0
    %2585 = vmatmul.mubr.bf16.gmra.mxu0 %v2128
    %v2586 = vpop.f32.mrf.mxu0
    %v2587 = vadd.f32 %v2426, %v2586
    %v2588 = vpop.f32.mrf.mxu0
    %v2589 = vpop.f32.mrf.mxu0
    %v2590 = vadd.f32 %v2429, %v2589
    %v2591 = vpop.f32.mrf.mxu0
    %2592 = vmatprep.mubr.bf16.mxu0 0
    %2593 = vmatmul.mubr.bf16.gmra.mxu0 %v2131
    %v2594 = vpop.f32.mrf.mxu0
    %v2595 = vadd.f32 %v2434, %v2594
    %v2596 = vpop.f32.mrf.mxu0
    %v2597 = vpop.f32.mrf.mxu0
    %v2598 = vadd.f32 %v2437, %v2597
    %v2599 = vpop.f32.mrf.mxu0
    %2600 = vmatprep.mubr.bf16.mxu0 0
    %2601 = vmatmul.mubr.bf16.gmra.mxu0 %v2134
    %v2602 = vpop.f32.mrf.mxu0
    %v2603 = vadd.f32 %v2442, %v2602
    %v2604 = vpop.f32.mrf.mxu0
    %v2605 = vpop.f32.mrf.mxu0
    %v2606 = vadd.f32 %v2445, %v2605
    %v2607 = vpop.f32.mrf.mxu0
    %2608 = vmatprep.mubr.bf16.mxu0 0
    %2609 = vmatmul.mubr.bf16.gmra.mxu0 %v2137
    %v2610 = vpop.f32.mrf.mxu0
    %v2611 = vadd.f32 %v2450, %v2610
    %v2612 = vpop.f32.mrf.mxu0
    %v2613 = vpop.f32.mrf.mxu0
    %v2614 = vadd.f32 %v2453, %v2613
    %v2615 = vpop.f32.mrf.mxu0
    %2616 = vmatprep.mubr.bf16.mxu0 0
    %2617 = vmatmul.mubr.bf16.gmra.mxu0 %v2140
    %v2618 = vpop.f32.mrf.mxu0
    %v2619 = vadd.f32 %v2458, %v2618
    %v2620 = vpop.f32.mrf.mxu0
    %v2621 = vpop.f32.mrf.mxu0
    %v2622 = vadd.f32 %v2461, %v2621
    %v2623 = vpop.f32.mrf.mxu0
    %2624 = vmatprep.mubr.bf16.mxu0 0
    %2625 = vmatmul.mubr.bf16.gmra.mxu0 %v2143
    %v2626 = vpop.f32.mrf.mxu0
    %v2627 = vadd.f32 %v2466, %v2626
    %v2628 = vpop.f32.mrf.mxu0
    %v2629 = vpop.f32.mrf.mxu0
    %v2630 = vadd.f32 %v2469, %v2629
    %v2631 = vpop.f32.mrf.mxu0
    %2632 = vmatprep.mubr.bf16.mxu0 0
    %2633 = vmatmul.mubr.bf16.gmra.mxu0 %v2146
    %v2634 = vpop.f32.mrf.mxu0
    %v2635 = vadd.f32 %v2474, %v2634
    %v2636 = vpop.f32.mrf.mxu0
    %v2637 = vpop.f32.mrf.mxu0
    %v2638 = vadd.f32 %v2477, %v2637
    %v2639 = vpop.f32.mrf.mxu0
    %2640 = vmatprep.mubr.bf16.mxu0 0
    %2641 = vmatmul.mubr.bf16.gmra.mxu0 %v2149
    %v2642 = vpop.f32.mrf.mxu0
    %v2643 = vadd.f32 %v2482, %v2642
    %v2644 = vpop.f32.mrf.mxu0
    %v2645 = vpop.f32.mrf.mxu0
    %v2646 = vadd.f32 %v2485, %v2645
    %v2647 = vpop.f32.mrf.mxu0
    %2648 = vmatprep.mubr.bf16.mxu0 0
    %2649 = vmatmul.mubr.bf16.gmra.mxu0 %v2152
    %v2650 = vpop.f32.mrf.mxu0
    %v2651 = vadd.f32 %v2490, %v2650
    %v2652 = vpop.f32.mrf.mxu0
    %v2653 = vpop.f32.mrf.mxu0
    %v2654 = vadd.f32 %v2493, %v2653
    %v2655 = vpop.f32.mrf.mxu0
    %2656 = vmatprep.mubr.bf16.mxu0 0
    %2657 = vmatmul.mubr.bf16.gmra.mxu0 %v2155
    %v2658 = vpop.f32.mrf.mxu0
    %v2659 = vadd.f32 %v2498, %v2658
    %v2660 = vpop.f32.mrf.mxu0
    %v2661 = vpop.f32.mrf.mxu0
    %v2662 = vadd.f32 %v2501, %v2661
    %v2663 = vpop.f32.mrf.mxu0
    %2664 = vmatprep.mubr.bf16.mxu0 0
    %2665 = vmatmul.mubr.bf16.gmra.mxu0 %v2158
    %v2666 = vpop.f32.mrf.mxu0
    %v2667 = vadd.f32 %v2506, %v2666
    %v2668 = vpop.f32.mrf.mxu0
    %v2669 = vpop.f32.mrf.mxu0
    %v2670 = vadd.f32 %v2509, %v2669
    %v2671 = vpop.f32.mrf.mxu0
    %2672 = vdwg.mxu0
    %v2737 = vunpack.c.l.b16 %v1726
    %v2738 = vunpack.c.h.b16 %v1726
    %v2739 = vunpack.c.l.b16 %v1727
    %v2740 = vunpack.c.l.b16 %v1728
    %v2741 = vunpack.c.h.b16 %v1728
    %v2742 = vunpack.c.l.b16 %v1729
    %v2743 = vunpack.c.l.b16 %v1730
    %v2744 = vunpack.c.h.b16 %v1730
    %v2745 = vunpack.c.l.b16 %v1731
    %v2746 = vunpack.c.l.b16 %v1732
    %v2747 = vunpack.c.h.b16 %v1732
    %v2748 = vunpack.c.l.b16 %v1733
    %v2749 = vunpack.c.l.b16 %v1734
    %v2750 = vunpack.c.h.b16 %v1734
    %v2751 = vunpack.c.l.b16 %v1735
    %v2752 = vunpack.c.l.b16 %v1736
    %v2753 = vunpack.c.h.b16 %v1736
    %v2754 = vunpack.c.l.b16 %v1737
    %v2755 = vunpack.c.l.b16 %v1738
    %v2756 = vunpack.c.h.b16 %v1738
    %v2757 = vunpack.c.l.b16 %v1739
    %v2758 = vunpack.c.l.b16 %v1740
    %v2759 = vunpack.c.h.b16 %v1740
    %v2760 = vunpack.c.l.b16 %v1741
    %v2761 = vunpack.c.l.b16 %v1742
    %v2762 = vunpack.c.h.b16 %v1742
    %v2763 = vunpack.c.l.b16 %v1743
    %v2764 = vunpack.c.l.b16 %v1744
    %v2765 = vunpack.c.h.b16 %v1744
    %v2766 = vunpack.c.l.b16 %v1745
    %v2767 = vunpack.c.l.b16 %v1746
    %v2768 = vunpack.c.h.b16 %v1746
    %v2769 = vunpack.c.l.b16 %v1747
    %v2770 = vunpack.c.l.b16 %v1748
    %v2771 = vunpack.c.h.b16 %v1748
    %v2772 = vunpack.c.l.b16 %v1749
    %v2773 = vunpack.c.l.b16 %v1750
    %v2774 = vunpack.c.h.b16 %v1750
    %v2775 = vunpack.c.l.b16 %v1751
    %v2776 = vunpack.c.l.b16 %v1752
    %v2777 = vunpack.c.h.b16 %v1752
    %v2778 = vunpack.c.l.b16 %v1753
    %v2779 = vunpack.c.l.b16 %v1754
    %v2780 = vunpack.c.h.b16 %v1754
    %v2781 = vunpack.c.l.b16 %v1755
    %v2782 = vunpack.c.l.b16 %v1756
    %v2783 = vunpack.c.h.b16 %v1756
    %v2784 = vunpack.c.l.b16 %v1757
    %v2785 = vunpack.c.l.b16 %v1758
    %v2786 = vunpack.c.h.b16 %v1758
    %v2787 = vunpack.c.l.b16 %v1759
    %v2788 = vunpack.c.l.b16 %v1760
    %v2789 = vunpack.c.h.b16 %v1760
    %v2790 = vunpack.c.l.b16 %v1761
    %v2791 = vunpack.c.l.b16 %v1762
    %v2792 = vunpack.c.h.b16 %v1762
    %v2793 = vunpack.c.l.b16 %v1763
    %v2794 = vunpack.c.l.b16 %v1764
    %v2795 = vunpack.c.h.b16 %v1764
    %v2796 = vunpack.c.l.b16 %v1765
    %v2797 = vunpack.c.l.b16 %v1766
    %v2798 = vunpack.c.h.b16 %v1766
    %v2799 = vunpack.c.l.b16 %v1767
    %v2800 = vunpack.c.l.b16 %v1768
    %v2801 = vunpack.c.h.b16 %v1768
    %v2802 = vunpack.c.l.b16 %v1769
    %v2803 = vunpack.c.l.b16 %v1770
    %v2804 = vunpack.c.h.b16 %v1770
    %v2805 = vunpack.c.l.b16 %v1771
    %v2806 = vunpack.c.l.b16 %v1772
    %v2807 = vunpack.c.h.b16 %v1772
    %v2808 = vunpack.c.l.b16 %v1773
    %v2809 = vunpack.c.l.b16 %v1774
    %v2810 = vunpack.c.h.b16 %v1774
    %v2811 = vunpack.c.l.b16 %v1775
    %v2812 = vunpack.c.l.b16 %v1776
    %v2813 = vunpack.c.h.b16 %v1776
    %v2814 = vunpack.c.l.b16 %v1777
    %v2815 = vunpack.c.l.b16 %v1778
    %v2816 = vunpack.c.h.b16 %v1778
    %v2817 = vunpack.c.l.b16 %v1779
    %v2818 = vunpack.c.l.b16 %v1780
    %v2819 = vunpack.c.h.b16 %v1780
    %v2820 = vunpack.c.l.b16 %v1781
    %v2821 = vunpack.c.l.b16 %v1782
    %v2822 = vunpack.c.h.b16 %v1782
    %v2823 = vunpack.c.l.b16 %v1783
    %v2824 = vunpack.c.l.b16 %v1784
    %v2825 = vunpack.c.h.b16 %v1784
    %v2826 = vunpack.c.l.b16 %v1785
    %v2827 = vunpack.c.l.b16 %v1786
    %v2828 = vunpack.c.h.b16 %v1786
    %v2829 = vunpack.c.l.b16 %v1787
    %v2830 = vunpack.c.l.b16 %v1788
    %v2831 = vunpack.c.h.b16 %v1788
    %v2832 = vunpack.c.l.b16 %v1789
    %v2833 = vpack.c.b16 %v2740, %v2737
    %v2834 = vpack.c.b16 %v2741, %v2738
    %v2835 = vpack.c.b16 %v2742, %v2739
    %v2836 = vpack.c.b16 %v2746, %v2743
    %v2837 = vpack.c.b16 %v2747, %v2744
    %v2838 = vpack.c.b16 %v2748, %v2745
    %v2839 = vpack.c.b16 %v2752, %v2749
    %v2840 = vpack.c.b16 %v2753, %v2750
    %v2841 = vpack.c.b16 %v2754, %v2751
    %v2842 = vpack.c.b16 %v2758, %v2755
    %v2843 = vpack.c.b16 %v2759, %v2756
    %v2844 = vpack.c.b16 %v2760, %v2757
    %v2845 = vpack.c.b16 %v2764, %v2761
    %v2846 = vpack.c.b16 %v2765, %v2762
    %v2847 = vpack.c.b16 %v2766, %v2763
    %v2848 = vpack.c.b16 %v2770, %v2767
    %v2849 = vpack.c.b16 %v2771, %v2768
    %v2850 = vpack.c.b16 %v2772, %v2769
    %v2851 = vpack.c.b16 %v2776, %v2773
    %v2852 = vpack.c.b16 %v2777, %v2774
    %v2853 = vpack.c.b16 %v2778, %v2775
    %v2854 = vpack.c.b16 %v2782, %v2779
    %v2855 = vpack.c.b16 %v2783, %v2780
    %v2856 = vpack.c.b16 %v2784, %v2781
    %v2857 = vpack.c.b16 %v2788, %v2785
    %v2858 = vpack.c.b16 %v2789, %v2786
    %v2859 = vpack.c.b16 %v2790, %v2787
    %v2860 = vpack.c.b16 %v2794, %v2791
    %v2861 = vpack.c.b16 %v2795, %v2792
    %v2862 = vpack.c.b16 %v2796, %v2793
    %v2863 = vpack.c.b16 %v2800, %v2797
    %v2864 = vpack.c.b16 %v2801, %v2798
    %v2865 = vpack.c.b16 %v2802, %v2799
    %v2866 = vpack.c.b16 %v2806, %v2803
    %v2867 = vpack.c.b16 %v2807, %v2804
    %v2868 = vpack.c.b16 %v2808, %v2805
    %v2869 = vpack.c.b16 %v2812, %v2809
    %v2870 = vpack.c.b16 %v2813, %v2810
    %v2871 = vpack.c.b16 %v2814, %v2811
    %v2872 = vpack.c.b16 %v2818, %v2815
    %v2873 = vpack.c.b16 %v2819, %v2816
    %v2874 = vpack.c.b16 %v2820, %v2817
    %v2875 = vpack.c.b16 %v2824, %v2821
    %v2876 = vpack.c.b16 %v2825, %v2822
    %v2877 = vpack.c.b16 %v2826, %v2823
    %v2878 = vpack.c.b16 %v2830, %v2827
    %v2879 = vpack.c.b16 %v2831, %v2828
    %v2880 = vpack.c.b16 %v2832, %v2829
    %v2977 = vunpack.c.l.b16 %v1790
    %v2978 = vunpack.c.l.b16 %v1791
    %v2979 = vunpack.c.l.b16 %v1792
    %v2980 = vunpack.c.l.b16 %v1793
    %v2981 = vunpack.c.l.b16 %v1794
    %v2982 = vunpack.c.l.b16 %v1795
    %v2983 = vunpack.c.l.b16 %v1796
    %v2984 = vunpack.c.l.b16 %v1797
    %v2985 = vunpack.c.l.b16 %v1798
    %v2986 = vunpack.c.l.b16 %v1799
    %v2987 = vunpack.c.l.b16 %v1800
    %v2988 = vunpack.c.l.b16 %v1801
    %v2989 = vunpack.c.l.b16 %v1802
    %v2990 = vunpack.c.l.b16 %v1803
    %v2991 = vunpack.c.l.b16 %v1804
    %v2992 = vunpack.c.l.b16 %v1805
    %v2993 = vunpack.c.l.b16 %v1806
    %v2994 = vunpack.c.l.b16 %v1807
    %v2995 = vunpack.c.l.b16 %v1808
    %v2996 = vunpack.c.l.b16 %v1809
    %v2997 = vunpack.c.l.b16 %v1810
    %v2998 = vunpack.c.l.b16 %v1811
    %v2999 = vunpack.c.l.b16 %v1812
    %v3000 = vunpack.c.l.b16 %v1813
    %v3001 = vunpack.c.l.b16 %v1814
    %v3002 = vunpack.c.l.b16 %v1815
    %v3003 = vunpack.c.l.b16 %v1816
    %v3004 = vunpack.c.l.b16 %v1817
    %v3005 = vunpack.c.l.b16 %v1818
    %v3006 = vunpack.c.l.b16 %v1819
    %v3007 = vunpack.c.l.b16 %v1820
    %v3008 = vunpack.c.l.b16 %v1821
    %v3009 = vunpack.c.l.b16 %v1822
    %v3010 = vunpack.c.l.b16 %v1823
    %v3011 = vunpack.c.l.b16 %v1824
    %v3012 = vunpack.c.l.b16 %v1825
    %v3013 = vunpack.c.l.b16 %v1826
    %v3014 = vunpack.c.l.b16 %v1827
    %v3015 = vunpack.c.l.b16 %v1828
    %v3016 = vunpack.c.l.b16 %v1829
    %v3017 = vunpack.c.l.b16 %v1830
    %v3018 = vunpack.c.l.b16 %v1831
    %v3019 = vunpack.c.l.b16 %v1832
    %v3020 = vunpack.c.l.b16 %v1833
    %v3021 = vunpack.c.l.b16 %v1834
    %v3022 = vunpack.c.l.b16 %v1835
    %v3023 = vunpack.c.l.b16 %v1836
    %v3024 = vunpack.c.l.b16 %v1837
    %v3025 = vpack.c.b16 %v2978, %v2977
    %v3026 = vpack.c.b16 %v2980, %v2979
    %v3027 = vpack.c.b16 %v2982, %v2981
    %v3028 = vpack.c.b16 %v2984, %v2983
    %v3029 = vpack.c.b16 %v2986, %v2985
    %v3030 = vpack.c.b16 %v2988, %v2987
    %v3031 = vpack.c.b16 %v2990, %v2989
    %v3032 = vpack.c.b16 %v2992, %v2991
    %v3033 = vpack.c.b16 %v2994, %v2993
    %v3034 = vpack.c.b16 %v2996, %v2995
    %v3035 = vpack.c.b16 %v2998, %v2997
    %v3036 = vpack.c.b16 %v3000, %v2999
    %v3037 = vpack.c.b16 %v3002, %v3001
    %v3038 = vpack.c.b16 %v3004, %v3003
    %v3039 = vpack.c.b16 %v3006, %v3005
    %v3040 = vpack.c.b16 %v3008, %v3007
    %v3041 = vpack.c.b16 %v3010, %v3009
    %v3042 = vpack.c.b16 %v3012, %v3011
    %v3043 = vpack.c.b16 %v3014, %v3013
    %v3044 = vpack.c.b16 %v3016, %v3015
    %v3045 = vpack.c.b16 %v3018, %v3017
    %v3046 = vpack.c.b16 %v3020, %v3019
    %v3047 = vpack.c.b16 %v3022, %v3021
    %v3048 = vpack.c.b16 %v3024, %v3023
    %3073 = vmatprep.subr.bf16.mxu0 0
    %3074 = vmatpush1.bf16.msra.mxu0 %v3032
    %3075 = vmatprep.subr.bf16.mxu0 0
    %3076 = vmatpush1.bf16.msra.mxu0 %v3031
    %3077 = vmatprep.subr.bf16.mxu0 0
    %3078 = vmatpush1.bf16.msra.mxu0 %v3030
    %3079 = vmatprep.subr.bf16.mxu0 0
    %3080 = vmatpush1.bf16.msra.mxu0 %v3029
    %3081 = vmatprep.subr.bf16.mxu0 0
    %3082 = vmatpush1.bf16.msra.mxu0 %v3028
    %3083 = vmatprep.subr.bf16.mxu0 0
    %3084 = vmatpush1.bf16.msra.mxu0 %v3027
    %3085 = vmatprep.subr.bf16.mxu0 0
    %3086 = vmatpush1.bf16.msra.mxu0 %v3026
    %3087 = vmatprep.subr.bf16.mxu0 0
    %3088 = vmatpush1.bf16.msra.mxu0 %v3025
    %3089 = vmatprep.subr.bf16.mxu0 0
    %3090 = vmatpush2.bf16.msra.mxu0 %v3040
    %3091 = vmatprep.subr.bf16.mxu0 0
    %3092 = vmatpush2.bf16.msra.mxu0 %v3039
    %3093 = vmatprep.subr.bf16.mxu0 0
    %3094 = vmatpush2.bf16.msra.mxu0 %v3038
    %3095 = vmatprep.subr.bf16.mxu0 0
    %3096 = vmatpush2.bf16.msra.mxu0 %v3037
    %3097 = vmatprep.subr.bf16.mxu0 0
    %3098 = vmatpush2.bf16.msra.mxu0 %v3036
    %3099 = vmatprep.subr.bf16.mxu0 0
    %3100 = vmatpush2.bf16.msra.mxu0 %v3035
    %3101 = vmatprep.subr.bf16.mxu0 0
    %3102 = vmatpush2.bf16.msra.mxu0 %v3034
    %3103 = vmatprep.subr.bf16.mxu0 0
    %3104 = vmatpush2.bf16.msra.mxu0 %v3033
    %3105 = vmatprep.mubr.bf16.mxu0 %v2834
    %3106 = vmatmul.mubr.bf16.gmra.mxu0 %v2833
    %v3107 = vpop.f32.mrf.mxu0
    %v3108 = vadd.f32 %v2547, %v3107
    %v3109 = vpop.f32.mrf.mxu0
    %v3110 = vpop.f32.mrf.mxu0
    %v3111 = vadd.f32 %v2550, %v3110
    %v3112 = vpop.f32.mrf.mxu0
    %3113 = vmatprep.mubr.bf16.mxu0 %v2837
    %3114 = vmatmul.mubr.bf16.gmra.mxu0 %v2836
    %v3115 = vpop.f32.mrf.mxu0
    %v3116 = vadd.f32 %v2555, %v3115
    %v3117 = vpop.f32.mrf.mxu0
    %v3118 = vpop.f32.mrf.mxu0
    %v3119 = vadd.f32 %v2558, %v3118
    %v3120 = vpop.f32.mrf.mxu0
    %3121 = vmatprep.mubr.bf16.mxu0 %v2840
    %3122 = vmatmul.mubr.bf16.gmra.mxu0 %v2839
    %v3123 = vpop.f32.mrf.mxu0
    %v3124 = vadd.f32 %v2563, %v3123
    %v3125 = vpop.f32.mrf.mxu0
    %v3126 = vpop.f32.mrf.mxu0
    %v3127 = vadd.f32 %v2566, %v3126
    %v3128 = vpop.f32.mrf.mxu0
    %3129 = vmatprep.mubr.bf16.mxu0 %v2843
    %3130 = vmatmul.mubr.bf16.gmra.mxu0 %v2842
    %v3131 = vpop.f32.mrf.mxu0
    %v3132 = vadd.f32 %v2571, %v3131
    %v3133 = vpop.f32.mrf.mxu0
    %v3134 = vpop.f32.mrf.mxu0
    %v3135 = vadd.f32 %v2574, %v3134
    %v3136 = vpop.f32.mrf.mxu0
    %3137 = vmatprep.mubr.bf16.mxu0 %v2846
    %3138 = vmatmul.mubr.bf16.gmra.mxu0 %v2845
    %v3139 = vpop.f32.mrf.mxu0
    %v3140 = vadd.f32 %v2579, %v3139
    %v3141 = vpop.f32.mrf.mxu0
    %v3142 = vpop.f32.mrf.mxu0
    %v3143 = vadd.f32 %v2582, %v3142
    %v3144 = vpop.f32.mrf.mxu0
    %3145 = vmatprep.mubr.bf16.mxu0 %v2849
    %3146 = vmatmul.mubr.bf16.gmra.mxu0 %v2848
    %v3147 = vpop.f32.mrf.mxu0
    %v3148 = vadd.f32 %v2587, %v3147
    %v3149 = vpop.f32.mrf.mxu0
    %v3150 = vpop.f32.mrf.mxu0
    %v3151 = vadd.f32 %v2590, %v3150
    %v3152 = vpop.f32.mrf.mxu0
    %3153 = vmatprep.mubr.bf16.mxu0 %v2852
    %3154 = vmatmul.mubr.bf16.gmra.mxu0 %v2851
    %v3155 = vpop.f32.mrf.mxu0
    %v3156 = vadd.f32 %v2595, %v3155
    %v3157 = vpop.f32.mrf.mxu0
    %v3158 = vpop.f32.mrf.mxu0
    %v3159 = vadd.f32 %v2598, %v3158
    %v3160 = vpop.f32.mrf.mxu0
    %3161 = vmatprep.mubr.bf16.mxu0 %v2855
    %3162 = vmatmul.mubr.bf16.gmra.mxu0 %v2854
    %v3163 = vpop.f32.mrf.mxu0
    %v3164 = vadd.f32 %v2603, %v3163
    %v3165 = vpop.f32.mrf.mxu0
    %v3166 = vpop.f32.mrf.mxu0
    %v3167 = vadd.f32 %v2606, %v3166
    %v3168 = vpop.f32.mrf.mxu0
    %3169 = vmatprep.mubr.bf16.mxu0 %v2858
    %3170 = vmatmul.mubr.bf16.gmra.mxu0 %v2857
    %v3171 = vpop.f32.mrf.mxu0
    %v3172 = vadd.f32 %v2611, %v3171
    %v3173 = vpop.f32.mrf.mxu0
    %v3174 = vpop.f32.mrf.mxu0
    %v3175 = vadd.f32 %v2614, %v3174
    %v3176 = vpop.f32.mrf.mxu0
    %3177 = vmatprep.mubr.bf16.mxu0 %v2861
    %3178 = vmatmul.mubr.bf16.gmra.mxu0 %v2860
    %v3179 = vpop.f32.mrf.mxu0
    %v3180 = vadd.f32 %v2619, %v3179
    %v3181 = vpop.f32.mrf.mxu0
    %v3182 = vpop.f32.mrf.mxu0
    %v3183 = vadd.f32 %v2622, %v3182
    %v3184 = vpop.f32.mrf.mxu0
    %3185 = vmatprep.mubr.bf16.mxu0 %v2864
    %3186 = vmatmul.mubr.bf16.gmra.mxu0 %v2863
    %v3187 = vpop.f32.mrf.mxu0
    %v3188 = vadd.f32 %v2627, %v3187
    %v3189 = vpop.f32.mrf.mxu0
    %v3190 = vpop.f32.mrf.mxu0
    %v3191 = vadd.f32 %v2630, %v3190
    %v3192 = vpop.f32.mrf.mxu0
    %3193 = vmatprep.mubr.bf16.mxu0 %v2867
    %3194 = vmatmul.mubr.bf16.gmra.mxu0 %v2866
    %v3195 = vpop.f32.mrf.mxu0
    %v3196 = vadd.f32 %v2635, %v3195
    %v3197 = vpop.f32.mrf.mxu0
    %v3198 = vpop.f32.mrf.mxu0
    %v3199 = vadd.f32 %v2638, %v3198
    %v3200 = vpop.f32.mrf.mxu0
    %3201 = vmatprep.mubr.bf16.mxu0 %v2870
    %3202 = vmatmul.mubr.bf16.gmra.mxu0 %v2869
    %v3203 = vpop.f32.mrf.mxu0
    %v3204 = vadd.f32 %v2643, %v3203
    %v3205 = vpop.f32.mrf.mxu0
    %v3206 = vpop.f32.mrf.mxu0
    %v3207 = vadd.f32 %v2646, %v3206
    %v3208 = vpop.f32.mrf.mxu0
    %3209 = vmatprep.mubr.bf16.mxu0 %v2873
    %3210 = vmatmul.mubr.bf16.gmra.mxu0 %v2872
    %v3211 = vpop.f32.mrf.mxu0
    %v3212 = vadd.f32 %v2651, %v3211
    %v3213 = vpop.f32.mrf.mxu0
    %v3214 = vpop.f32.mrf.mxu0
    %v3215 = vadd.f32 %v2654, %v3214
    %v3216 = vpop.f32.mrf.mxu0
    %3217 = vmatprep.mubr.bf16.mxu0 %v2876
    %3218 = vmatmul.mubr.bf16.gmra.mxu0 %v2875
    %v3219 = vpop.f32.mrf.mxu0
    %v3220 = vadd.f32 %v2659, %v3219
    %v3221 = vpop.f32.mrf.mxu0
    %v3222 = vpop.f32.mrf.mxu0
    %v3223 = vadd.f32 %v2662, %v3222
    %v3224 = vpop.f32.mrf.mxu0
    %3225 = vmatprep.mubr.bf16.mxu0 %v2879
    %3226 = vmatmul.mubr.bf16.gmra.mxu0 %v2878
    %v3227 = vpop.f32.mrf.mxu0
    %v3228 = vadd.f32 %v2667, %v3227
    %v3229 = vpop.f32.mrf.mxu0
    %v3230 = vpop.f32.mrf.mxu0
    %v3231 = vadd.f32 %v2670, %v3230
    %v3232 = vpop.f32.mrf.mxu0
    %3233 = vdwg.mxu0
    %3234 = vmatprep.subr.bf16.mxu0 0
    %3235 = vmatpush1.bf16.msra.mxu0 %v3048
    %3236 = vmatprep.subr.bf16.mxu0 0
    %3237 = vmatpush1.bf16.msra.mxu0 %v3047
    %3238 = vmatprep.subr.bf16.mxu0 0
    %3239 = vmatpush1.bf16.msra.mxu0 %v3046
    %3240 = vmatprep.subr.bf16.mxu0 0
    %3241 = vmatpush1.bf16.msra.mxu0 %v3045
    %3242 = vmatprep.subr.bf16.mxu0 0
    %3243 = vmatpush1.bf16.msra.mxu0 %v3044
    %3244 = vmatprep.subr.bf16.mxu0 0
    %3245 = vmatpush1.bf16.msra.mxu0 %v3043
    %3246 = vmatprep.subr.bf16.mxu0 0
    %3247 = vmatpush1.bf16.msra.mxu0 %v3042
    %3248 = vmatprep.subr.bf16.mxu0 0
    %3249 = vmatpush1.bf16.msra.mxu0 %v3041
    %3250 = vmatprep.subr.bf16.mxu0 0
    %3251 = vmatpush2.bf16.msra.mxu0 0
    %3252 = vmatprep.subr.bf16.mxu0 0
    %3253 = vmatpush2.bf16.msra.mxu0 0
    %3254 = vmatprep.subr.bf16.mxu0 0
    %3255 = vmatpush2.bf16.msra.mxu0 0
    %3256 = vmatprep.subr.bf16.mxu0 0
    %3257 = vmatpush2.bf16.msra.mxu0 0
    %3258 = vmatprep.subr.bf16.mxu0 0
    %3259 = vmatpush2.bf16.msra.mxu0 0
    %3260 = vmatprep.subr.bf16.mxu0 0
    %3261 = vmatpush2.bf16.msra.mxu0 0
    %3262 = vmatprep.subr.bf16.mxu0 0
    %3263 = vmatpush2.bf16.msra.mxu0 0
    %3264 = vmatprep.subr.bf16.mxu0 0
    %3265 = vmatpush2.bf16.msra.mxu0 0
    %3266 = vmatprep.mubr.bf16.mxu0 0
    %3267 = vmatmul.mubr.bf16.gmra.mxu0 %v2835
    %v3268 = vpop.f32.mrf.mxu0
    %v3269 = vadd.f32 %v3108, %v3268
    %v3270 = vpop.f32.mrf.mxu0
    %v3271 = vpop.f32.mrf.mxu0
    %v3272 = vadd.f32 %v3111, %v3271
    %v3273 = vpop.f32.mrf.mxu0
    %3274 = vmatprep.mubr.bf16.mxu0 0
    %3275 = vmatmul.mubr.bf16.gmra.mxu0 %v2838
    %v3276 = vpop.f32.mrf.mxu0
    %v3277 = vadd.f32 %v3116, %v3276
    %v3278 = vpop.f32.mrf.mxu0
    %v3279 = vpop.f32.mrf.mxu0
    %v3280 = vadd.f32 %v3119, %v3279
    %v3281 = vpop.f32.mrf.mxu0
    %3282 = vmatprep.mubr.bf16.mxu0 0
    %3283 = vmatmul.mubr.bf16.gmra.mxu0 %v2841
    %v3284 = vpop.f32.mrf.mxu0
    %v3285 = vadd.f32 %v3124, %v3284
    %v3286 = vpop.f32.mrf.mxu0
    %v3287 = vpop.f32.mrf.mxu0
    %v3288 = vadd.f32 %v3127, %v3287
    %v3289 = vpop.f32.mrf.mxu0
    %3290 = vmatprep.mubr.bf16.mxu0 0
    %3291 = vmatmul.mubr.bf16.gmra.mxu0 %v2844
    %v3292 = vpop.f32.mrf.mxu0
    %v3293 = vadd.f32 %v3132, %v3292
    %v3294 = vpop.f32.mrf.mxu0
    %v3295 = vpop.f32.mrf.mxu0
    %v3296 = vadd.f32 %v3135, %v3295
    %v3297 = vpop.f32.mrf.mxu0
    %3298 = vmatprep.mubr.bf16.mxu0 0
    %3299 = vmatmul.mubr.bf16.gmra.mxu0 %v2847
    %v3300 = vpop.f32.mrf.mxu0
    %v3301 = vadd.f32 %v3140, %v3300
    %v3302 = vpop.f32.mrf.mxu0
    %v3303 = vpop.f32.mrf.mxu0
    %v3304 = vadd.f32 %v3143, %v3303
    %v3305 = vpop.f32.mrf.mxu0
    %3306 = vmatprep.mubr.bf16.mxu0 0
    %3307 = vmatmul.mubr.bf16.gmra.mxu0 %v2850
    %v3308 = vpop.f32.mrf.mxu0
    %v3309 = vadd.f32 %v3148, %v3308
    %v3310 = vpop.f32.mrf.mxu0
    %v3311 = vpop.f32.mrf.mxu0
    %v3312 = vadd.f32 %v3151, %v3311
    %v3313 = vpop.f32.mrf.mxu0
    %3314 = vmatprep.mubr.bf16.mxu0 0
    %3315 = vmatmul.mubr.bf16.gmra.mxu0 %v2853
    %v3316 = vpop.f32.mrf.mxu0
    %v3317 = vadd.f32 %v3156, %v3316
    %v3318 = vpop.f32.mrf.mxu0
    %v3319 = vpop.f32.mrf.mxu0
    %v3320 = vadd.f32 %v3159, %v3319
    %v3321 = vpop.f32.mrf.mxu0
    %3322 = vmatprep.mubr.bf16.mxu0 0
    %3323 = vmatmul.mubr.bf16.gmra.mxu0 %v2856
    %v3324 = vpop.f32.mrf.mxu0
    %v3325 = vadd.f32 %v3164, %v3324
    %v3326 = vpop.f32.mrf.mxu0
    %v3327 = vpop.f32.mrf.mxu0
    %v3328 = vadd.f32 %v3167, %v3327
    %v3329 = vpop.f32.mrf.mxu0
    %3330 = vmatprep.mubr.bf16.mxu0 0
    %3331 = vmatmul.mubr.bf16.gmra.mxu0 %v2859
    %v3332 = vpop.f32.mrf.mxu0
    %v3333 = vadd.f32 %v3172, %v3332
    %v3334 = vpop.f32.mrf.mxu0
    %v3335 = vpop.f32.mrf.mxu0
    %v3336 = vadd.f32 %v3175, %v3335
    %v3337 = vpop.f32.mrf.mxu0
    %3338 = vmatprep.mubr.bf16.mxu0 0
    %3339 = vmatmul.mubr.bf16.gmra.mxu0 %v2862
    %v3340 = vpop.f32.mrf.mxu0
    %v3341 = vadd.f32 %v3180, %v3340
    %v3342 = vpop.f32.mrf.mxu0
    %v3343 = vpop.f32.mrf.mxu0
    %v3344 = vadd.f32 %v3183, %v3343
    %v3345 = vpop.f32.mrf.mxu0
    %3346 = vmatprep.mubr.bf16.mxu0 0
    %3347 = vmatmul.mubr.bf16.gmra.mxu0 %v2865
    %v3348 = vpop.f32.mrf.mxu0
    %v3349 = vadd.f32 %v3188, %v3348
    %v3350 = vpop.f32.mrf.mxu0
    %v3351 = vpop.f32.mrf.mxu0
    %v3352 = vadd.f32 %v3191, %v3351
    %v3353 = vpop.f32.mrf.mxu0
    %3354 = vmatprep.mubr.bf16.mxu0 0
    %3355 = vmatmul.mubr.bf16.gmra.mxu0 %v2868
    %v3356 = vpop.f32.mrf.mxu0
    %v3357 = vadd.f32 %v3196, %v3356
    %v3358 = vpop.f32.mrf.mxu0
    %v3359 = vpop.f32.mrf.mxu0
    %v3360 = vadd.f32 %v3199, %v3359
    %v3361 = vpop.f32.mrf.mxu0
    %3362 = vmatprep.mubr.bf16.mxu0 0
    %3363 = vmatmul.mubr.bf16.gmra.mxu0 %v2871
    %v3364 = vpop.f32.mrf.mxu0
    %v3365 = vadd.f32 %v3204, %v3364
    %v3366 = vpop.f32.mrf.mxu0
    %v3367 = vpop.f32.mrf.mxu0
    %v3368 = vadd.f32 %v3207, %v3367
    %v3369 = vpop.f32.mrf.mxu0
    %3370 = vmatprep.mubr.bf16.mxu0 0
    %3371 = vmatmul.mubr.bf16.gmra.mxu0 %v2874
    %v3372 = vpop.f32.mrf.mxu0
    %v3373 = vadd.f32 %v3212, %v3372
    %v3374 = vpop.f32.mrf.mxu0
    %v3375 = vpop.f32.mrf.mxu0
    %v3376 = vadd.f32 %v3215, %v3375
    %v3377 = vpop.f32.mrf.mxu0
    %3378 = vmatprep.mubr.bf16.mxu0 0
    %3379 = vmatmul.mubr.bf16.gmra.mxu0 %v2877
    %v3380 = vpop.f32.mrf.mxu0
    %v3381 = vadd.f32 %v3220, %v3380
    %v3382 = vpop.f32.mrf.mxu0
    %v3383 = vpop.f32.mrf.mxu0
    %v3384 = vadd.f32 %v3223, %v3383
    %v3385 = vpop.f32.mrf.mxu0
    %3386 = vmatprep.mubr.bf16.mxu0 0
    %3387 = vmatmul.mubr.bf16.gmra.mxu0 %v2880
    %v3388 = vpop.f32.mrf.mxu0
    %v3389 = vadd.f32 %v3228, %v3388
    %v3390 = vpop.f32.mrf.mxu0
    %v3391 = vpop.f32.mrf.mxu0
    %v3392 = vadd.f32 %v3231, %v3391
    %v3393 = vpop.f32.mrf.mxu0
    %3394 = vdwg.mxu0
    %s3395 = scalar_lea.vmem [#allocation2], 48
    %v3396 = vld [vmem:[%s3395] sm:$0xff]
    %v3397 = vld [vmem:[%s3395 + $0x8] sm:$0xf]
    %v3398 = vld [vmem:[%s3395 + $0xc] sm:$0xff]
    %v3399 = vld [vmem:[%s3395 + $0x14] sm:$0xf]
    %v3400 = vld [vmem:[%s3395 + $0x18] sm:$0xff]
    %v3401 = vld [vmem:[%s3395 + $0x20] sm:$0xf]
    %v3402 = vld [vmem:[%s3395 + $0x24] sm:$0xff]
    %v3403 = vld [vmem:[%s3395 + $0x2c] sm:$0xf]
    %v3404 = vld [vmem:[%s3395 + $0x30] sm:$0xff]
    %v3405 = vld [vmem:[%s3395 + $0x38] sm:$0xf]
    %v3406 = vld [vmem:[%s3395 + $0x3c] sm:$0xff]
    %v3407 = vld [vmem:[%s3395 + $0x44] sm:$0xf]
    %v3408 = vld [vmem:[%s3395 + $0x48] sm:$0xff]
    %v3409 = vld [vmem:[%s3395 + $0x50] sm:$0xf]
    %v3410 = vld [vmem:[%s3395 + $0x54] sm:$0xff]
    %v3411 = vld [vmem:[%s3395 + $0x5c] sm:$0xf]
    %v3412 = vld [vmem:[%s3395 + $0x60] sm:$0xff]
    %v3413 = vld [vmem:[%s3395 + $0x68] sm:$0xf]
    %v3414 = vld [vmem:[%s3395 + $0x6c] sm:$0xff]
    %v3415 = vld [vmem:[%s3395 + $0x74] sm:$0xf]
    %v3416 = vld [vmem:[%s3395 + $0x78] sm:$0xff]
    %v3417 = vld [vmem:[%s3395 + $0x80] sm:$0xf]
    %v3418 = vld [vmem:[%s3395 + $0x84] sm:$0xff]
    %v3419 = vld [vmem:[%s3395 + $0x8c] sm:$0xf]
    %v3420 = vld [vmem:[%s3395 + $0x90] sm:$0xff]
    %v3421 = vld [vmem:[%s3395 + $0x98] sm:$0xf]
    %v3422 = vld [vmem:[%s3395 + $0x9c] sm:$0xff]
    %v3423 = vld [vmem:[%s3395 + $0xa4] sm:$0xf]
    %v3424 = vld [vmem:[%s3395 + $0xa8] sm:$0xff]
    %v3425 = vld [vmem:[%s3395 + $0xb0] sm:$0xf]
    %v3426 = vld [vmem:[%s3395 + $0xb4] sm:$0xff]
    %v3427 = vld [vmem:[%s3395 + $0xbc] sm:$0xf]
    %v3428 = vld [vmem:[%s3395 + $0x1b0] sm:$0xff]
    %v3429 = vld [vmem:[%s3395 + $0x1b8] sm:$0xf]
    %v3430 = vld [vmem:[%s3395 + $0x1bc] sm:$0xff]
    %v3431 = vld [vmem:[%s3395 + $0x1c4] sm:$0xf]
    %v3432 = vld [vmem:[%s3395 + $0x1c8] sm:$0xff]
    %v3433 = vld [vmem:[%s3395 + $0x1d0] sm:$0xf]
    %v3434 = vld [vmem:[%s3395 + $0x1d4] sm:$0xff]
    %v3435 = vld [vmem:[%s3395 + $0x1dc] sm:$0xf]
    %v3436 = vld [vmem:[%s3395 + $0x1e0] sm:$0xff]
    %v3437 = vld [vmem:[%s3395 + $0x1e8] sm:$0xf]
    %v3438 = vld [vmem:[%s3395 + $0x1ec] sm:$0xff]
    %v3439 = vld [vmem:[%s3395 + $0x1f4] sm:$0xf]
    %v3440 = vld [vmem:[%s3395 + $0x1f8] sm:$0xff]
    %v3441 = vld [vmem:[%s3395 + $0x200] sm:$0xf]
    %v3442 = vld [vmem:[%s3395 + $0x204] sm:$0xff]
    %v3443 = vld [vmem:[%s3395 + $0x20c] sm:$0xf]
    %v3444 = vld [vmem:[%s3395 + $0x210] sm:$0xff]
    %v3445 = vld [vmem:[%s3395 + $0x218] sm:$0xf]
    %v3446 = vld [vmem:[%s3395 + $0x21c] sm:$0xff]
    %v3447 = vld [vmem:[%s3395 + $0x224] sm:$0xf]
    %v3448 = vld [vmem:[%s3395 + $0x228] sm:$0xff]
    %v3449 = vld [vmem:[%s3395 + $0x230] sm:$0xf]
    %v3450 = vld [vmem:[%s3395 + $0x234] sm:$0xff]
    %v3451 = vld [vmem:[%s3395 + $0x23c] sm:$0xf]
    %v3452 = vld [vmem:[%s3395 + $0x240] sm:$0xff]
    %v3453 = vld [vmem:[%s3395 + $0x248] sm:$0xf]
    %v3454 = vld [vmem:[%s3395 + $0x24c] sm:$0xff]
    %v3455 = vld [vmem:[%s3395 + $0x254] sm:$0xf]
    %v3456 = vld [vmem:[%s3395 + $0x258] sm:$0xff]
    %v3457 = vld [vmem:[%s3395 + $0x260] sm:$0xf]
    %v3458 = vld [vmem:[%s3395 + $0x264] sm:$0xff]
    %v3459 = vld [vmem:[%s3395 + $0x26c] sm:$0xf]
    %s3460 = scalar_lea.vmem [#allocation9], 384
    %v3461 = vld [vmem:[%s3460] sm:$0xf]
    %v3462 = vld [vmem:[%s3460 + $0x4] sm:$0xf]
    %v3463 = vld [vmem:[%s3460 + $0x8] sm:$0xf]
    %v3464 = vld [vmem:[%s3460 + $0xc] sm:$0xf]
    %v3465 = vld [vmem:[%s3460 + $0x10] sm:$0xf]
    %v3466 = vld [vmem:[%s3460 + $0x14] sm:$0xf]
    %v3467 = vld [vmem:[%s3460 + $0x18] sm:$0xf]
    %v3468 = vld [vmem:[%s3460 + $0x1c] sm:$0xf]
    %v3469 = vld [vmem:[%s3460 + $0x20] sm:$0xf]
    %v3470 = vld [vmem:[%s3460 + $0x24] sm:$0xf]
    %v3471 = vld [vmem:[%s3460 + $0x28] sm:$0xf]
    %v3472 = vld [vmem:[%s3460 + $0x2c] sm:$0xf]
    %v3473 = vld [vmem:[%s3460 + $0x30] sm:$0xf]
    %v3474 = vld [vmem:[%s3460 + $0x34] sm:$0xf]
    %v3475 = vld [vmem:[%s3460 + $0x38] sm:$0xf]
    %v3476 = vld [vmem:[%s3460 + $0x3c] sm:$0xf]
    %v3477 = vld [vmem:[%s3460 + $0x40] sm:$0xf]
    %v3478 = vld [vmem:[%s3460 + $0x44] sm:$0xf]
    %v3479 = vld [vmem:[%s3460 + $0x48] sm:$0xf]
    %v3480 = vld [vmem:[%s3460 + $0x4c] sm:$0xf]
    %v3481 = vld [vmem:[%s3460 + $0x50] sm:$0xf]
    %v3482 = vld [vmem:[%s3460 + $0x54] sm:$0xf]
    %v3483 = vld [vmem:[%s3460 + $0x58] sm:$0xf]
    %v3484 = vld [vmem:[%s3460 + $0x5c] sm:$0xf]
    %v3485 = vld [vmem:[%s3460 + $0x60] sm:$0xf]
    %v3486 = vld [vmem:[%s3460 + $0x64] sm:$0xf]
    %v3487 = vld [vmem:[%s3460 + $0x68] sm:$0xf]
    %v3488 = vld [vmem:[%s3460 + $0x6c] sm:$0xf]
    %v3489 = vld [vmem:[%s3460 + $0x70] sm:$0xf]
    %v3490 = vld [vmem:[%s3460 + $0x74] sm:$0xf]
    %v3491 = vld [vmem:[%s3460 + $0x78] sm:$0xf]
    %v3492 = vld [vmem:[%s3460 + $0x7c] sm:$0xf]
    %v3493 = vld [vmem:[%s3460 + $0x80] sm:$0xf]
    %v3494 = vld [vmem:[%s3460 + $0x84] sm:$0xf]
    %v3495 = vld [vmem:[%s3460 + $0x88] sm:$0xf]
    %v3496 = vld [vmem:[%s3460 + $0x8c] sm:$0xf]
    %v3497 = vld [vmem:[%s3460 + $0x90] sm:$0xf]
    %v3498 = vld [vmem:[%s3460 + $0x94] sm:$0xf]
    %v3499 = vld [vmem:[%s3460 + $0x98] sm:$0xf]
    %v3500 = vld [vmem:[%s3460 + $0x9c] sm:$0xf]
    %v3501 = vld [vmem:[%s3460 + $0xa0] sm:$0xf]
    %v3502 = vld [vmem:[%s3460 + $0xa4] sm:$0xf]
    %v3503 = vld [vmem:[%s3460 + $0xa8] sm:$0xf]
    %v3504 = vld [vmem:[%s3460 + $0xac] sm:$0xf]
    %v3505 = vld [vmem:[%s3460 + $0xb0] sm:$0xf]
    %v3506 = vld [vmem:[%s3460 + $0xb4] sm:$0xf]
    %v3507 = vld [vmem:[%s3460 + $0xb8] sm:$0xf]
    %v3508 = vld [vmem:[%s3460 + $0xbc] sm:$0xf]
    %v3573 = vunpack.c.l.b16 %v3396
    %v3574 = vunpack.c.h.b16 %v3396
    %v3575 = vunpack.c.l.b16 %v3397
    %v3576 = vunpack.c.l.b16 %v3398
    %v3577 = vunpack.c.h.b16 %v3398
    %v3578 = vunpack.c.l.b16 %v3399
    %v3579 = vunpack.c.l.b16 %v3400
    %v3580 = vunpack.c.h.b16 %v3400
    %v3581 = vunpack.c.l.b16 %v3401
    %v3582 = vunpack.c.l.b16 %v3402
    %v3583 = vunpack.c.h.b16 %v3402
    %v3584 = vunpack.c.l.b16 %v3403
    %v3585 = vunpack.c.l.b16 %v3404
    %v3586 = vunpack.c.h.b16 %v3404
    %v3587 = vunpack.c.l.b16 %v3405
    %v3588 = vunpack.c.l.b16 %v3406
    %v3589 = vunpack.c.h.b16 %v3406
    %v3590 = vunpack.c.l.b16 %v3407
    %v3591 = vunpack.c.l.b16 %v3408
    %v3592 = vunpack.c.h.b16 %v3408
    %v3593 = vunpack.c.l.b16 %v3409
    %v3594 = vunpack.c.l.b16 %v3410
    %v3595 = vunpack.c.h.b16 %v3410
    %v3596 = vunpack.c.l.b16 %v3411
    %v3597 = vunpack.c.l.b16 %v3412
    %v3598 = vunpack.c.h.b16 %v3412
    %v3599 = vunpack.c.l.b16 %v3413
    %v3600 = vunpack.c.l.b16 %v3414
    %v3601 = vunpack.c.h.b16 %v3414
    %v3602 = vunpack.c.l.b16 %v3415
    %v3603 = vunpack.c.l.b16 %v3416
    %v3604 = vunpack.c.h.b16 %v3416
    %v3605 = vunpack.c.l.b16 %v3417
    %v3606 = vunpack.c.l.b16 %v3418
    %v3607 = vunpack.c.h.b16 %v3418
    %v3608 = vunpack.c.l.b16 %v3419
    %v3609 = vunpack.c.l.b16 %v3420
    %v3610 = vunpack.c.h.b16 %v3420
    %v3611 = vunpack.c.l.b16 %v3421
    %v3612 = vunpack.c.l.b16 %v3422
    %v3613 = vunpack.c.h.b16 %v3422
    %v3614 = vunpack.c.l.b16 %v3423
    %v3615 = vunpack.c.l.b16 %v3424
    %v3616 = vunpack.c.h.b16 %v3424
    %v3617 = vunpack.c.l.b16 %v3425
    %v3618 = vunpack.c.l.b16 %v3426
    %v3619 = vunpack.c.h.b16 %v3426
    %v3620 = vunpack.c.l.b16 %v3427
    %v3621 = vunpack.c.l.b16 %v3428
    %v3622 = vunpack.c.h.b16 %v3428
    %v3623 = vunpack.c.l.b16 %v3429
    %v3624 = vunpack.c.l.b16 %v3430
    %v3625 = vunpack.c.h.b16 %v3430
    %v3626 = vunpack.c.l.b16 %v3431
    %v3627 = vunpack.c.l.b16 %v3432
    %v3628 = vunpack.c.h.b16 %v3432
    %v3629 = vunpack.c.l.b16 %v3433
    %v3630 = vunpack.c.l.b16 %v3434
    %v3631 = vunpack.c.h.b16 %v3434
    %v3632 = vunpack.c.l.b16 %v3435
    %v3633 = vunpack.c.l.b16 %v3436
    %v3634 = vunpack.c.h.b16 %v3436
    %v3635 = vunpack.c.l.b16 %v3437
    %v3636 = vunpack.c.l.b16 %v3438
    %v3637 = vunpack.c.h.b16 %v3438
    %v3638 = vunpack.c.l.b16 %v3439
    %v3639 = vunpack.c.l.b16 %v3440
    %v3640 = vunpack.c.h.b16 %v3440
    %v3641 = vunpack.c.l.b16 %v3441
    %v3642 = vunpack.c.l.b16 %v3442
    %v3643 = vunpack.c.h.b16 %v3442
    %v3644 = vunpack.c.l.b16 %v3443
    %v3645 = vunpack.c.l.b16 %v3444
    %v3646 = vunpack.c.h.b16 %v3444
    %v3647 = vunpack.c.l.b16 %v3445
    %v3648 = vunpack.c.l.b16 %v3446
    %v3649 = vunpack.c.h.b16 %v3446
    %v3650 = vunpack.c.l.b16 %v3447
    %v3651 = vunpack.c.l.b16 %v3448
    %v3652 = vunpack.c.h.b16 %v3448
    %v3653 = vunpack.c.l.b16 %v3449
    %v3654 = vunpack.c.l.b16 %v3450
    %v3655 = vunpack.c.h.b16 %v3450
    %v3656 = vunpack.c.l.b16 %v3451
    %v3657 = vunpack.c.l.b16 %v3452
    %v3658 = vunpack.c.h.b16 %v3452
    %v3659 = vunpack.c.l.b16 %v3453
    %v3660 = vunpack.c.l.b16 %v3454
    %v3661 = vunpack.c.h.b16 %v3454
    %v3662 = vunpack.c.l.b16 %v3455
    %v3663 = vunpack.c.l.b16 %v3456
    %v3664 = vunpack.c.h.b16 %v3456
    %v3665 = vunpack.c.l.b16 %v3457
    %v3666 = vunpack.c.l.b16 %v3458
    %v3667 = vunpack.c.h.b16 %v3458
    %v3668 = vunpack.c.l.b16 %v3459
    %v3669 = vpack.c.b16 %v3576, %v3573
    %v3670 = vpack.c.b16 %v3577, %v3574
    %v3671 = vpack.c.b16 %v3578, %v3575
    %v3672 = vpack.c.b16 %v3582, %v3579
    %v3673 = vpack.c.b16 %v3583, %v3580
    %v3674 = vpack.c.b16 %v3584, %v3581
    %v3675 = vpack.c.b16 %v3588, %v3585
    %v3676 = vpack.c.b16 %v3589, %v3586
    %v3677 = vpack.c.b16 %v3590, %v3587
    %v3678 = vpack.c.b16 %v3594, %v3591
    %v3679 = vpack.c.b16 %v3595, %v3592
    %v3680 = vpack.c.b16 %v3596, %v3593
    %v3681 = vpack.c.b16 %v3600, %v3597
    %v3682 = vpack.c.b16 %v3601, %v3598
    %v3683 = vpack.c.b16 %v3602, %v3599
    %v3684 = vpack.c.b16 %v3606, %v3603
    %v3685 = vpack.c.b16 %v3607, %v3604
    %v3686 = vpack.c.b16 %v3608, %v3605
    %v3687 = vpack.c.b16 %v3612, %v3609
    %v3688 = vpack.c.b16 %v3613, %v3610
    %v3689 = vpack.c.b16 %v3614, %v3611
    %v3690 = vpack.c.b16 %v3618, %v3615
    %v3691 = vpack.c.b16 %v3619, %v3616
    %v3692 = vpack.c.b16 %v3620, %v3617
    %v3693 = vpack.c.b16 %v3624, %v3621
    %v3694 = vpack.c.b16 %v3625, %v3622
    %v3695 = vpack.c.b16 %v3626, %v3623
    %v3696 = vpack.c.b16 %v3630, %v3627
    %v3697 = vpack.c.b16 %v3631, %v3628
    %v3698 = vpack.c.b16 %v3632, %v3629
    %v3699 = vpack.c.b16 %v3636, %v3633
    %v3700 = vpack.c.b16 %v3637, %v3634
    %v3701 = vpack.c.b16 %v3638, %v3635
    %v3702 = vpack.c.b16 %v3642, %v3639
    %v3703 = vpack.c.b16 %v3643, %v3640
    %v3704 = vpack.c.b16 %v3644, %v3641
    %v3705 = vpack.c.b16 %v3648, %v3645
    %v3706 = vpack.c.b16 %v3649, %v3646
    %v3707 = vpack.c.b16 %v3650, %v3647
    %v3708 = vpack.c.b16 %v3654, %v3651
    %v3709 = vpack.c.b16 %v3655, %v3652
    %v3710 = vpack.c.b16 %v3656, %v3653
    %v3711 = vpack.c.b16 %v3660, %v3657
    %v3712 = vpack.c.b16 %v3661, %v3658
    %v3713 = vpack.c.b16 %v3662, %v3659
    %v3714 = vpack.c.b16 %v3666, %v3663
    %v3715 = vpack.c.b16 %v3667, %v3664
    %v3716 = vpack.c.b16 %v3668, %v3665
    %v3813 = vunpack.c.l.b16 %v3461
    %v3814 = vunpack.c.l.b16 %v3462
    %v3815 = vunpack.c.l.b16 %v3463
    %v3816 = vunpack.c.l.b16 %v3464
    %v3817 = vunpack.c.l.b16 %v3465
    %v3818 = vunpack.c.l.b16 %v3466
    %v3819 = vunpack.c.l.b16 %v3467
    %v3820 = vunpack.c.l.b16 %v3468
    %v3821 = vunpack.c.l.b16 %v3469
    %v3822 = vunpack.c.l.b16 %v3470
    %v3823 = vunpack.c.l.b16 %v3471
    %v3824 = vunpack.c.l.b16 %v3472
    %v3825 = vunpack.c.l.b16 %v3473
    %v3826 = vunpack.c.l.b16 %v3474
    %v3827 = vunpack.c.l.b16 %v3475
    %v3828 = vunpack.c.l.b16 %v3476
    %v3829 = vunpack.c.l.b16 %v3477
    %v3830 = vunpack.c.l.b16 %v3478
    %v3831 = vunpack.c.l.b16 %v3479
    %v3832 = vunpack.c.l.b16 %v3480
    %v3833 = vunpack.c.l.b16 %v3481
    %v3834 = vunpack.c.l.b16 %v3482
    %v3835 = vunpack.c.l.b16 %v3483
    %v3836 = vunpack.c.l.b16 %v3484
    %v3837 = vunpack.c.l.b16 %v3485
    %v3838 = vunpack.c.l.b16 %v3486
    %v3839 = vunpack.c.l.b16 %v3487
    %v3840 = vunpack.c.l.b16 %v3488
    %v3841 = vunpack.c.l.b16 %v3489
    %v3842 = vunpack.c.l.b16 %v3490
    %v3843 = vunpack.c.l.b16 %v3491
    %v3844 = vunpack.c.l.b16 %v3492
    %v3845 = vunpack.c.l.b16 %v3493
    %v3846 = vunpack.c.l.b16 %v3494
    %v3847 = vunpack.c.l.b16 %v3495
    %v3848 = vunpack.c.l.b16 %v3496
    %v3849 = vunpack.c.l.b16 %v3497
    %v3850 = vunpack.c.l.b16 %v3498
    %v3851 = vunpack.c.l.b16 %v3499
    %v3852 = vunpack.c.l.b16 %v3500
    %v3853 = vunpack.c.l.b16 %v3501
    %v3854 = vunpack.c.l.b16 %v3502
    %v3855 = vunpack.c.l.b16 %v3503
    %v3856 = vunpack.c.l.b16 %v3504
    %v3857 = vunpack.c.l.b16 %v3505
    %v3858 = vunpack.c.l.b16 %v3506
    %v3859 = vunpack.c.l.b16 %v3507
    %v3860 = vunpack.c.l.b16 %v3508
    %v3861 = vpack.c.b16 %v3814, %v3813
    %v3862 = vpack.c.b16 %v3816, %v3815
    %v3863 = vpack.c.b16 %v3818, %v3817
    %v3864 = vpack.c.b16 %v3820, %v3819
    %v3865 = vpack.c.b16 %v3822, %v3821
    %v3866 = vpack.c.b16 %v3824, %v3823
    %v3867 = vpack.c.b16 %v3826, %v3825
    %v3868 = vpack.c.b16 %v3828, %v3827
    %v3869 = vpack.c.b16 %v3830, %v3829
    %v3870 = vpack.c.b16 %v3832, %v3831
    %v3871 = vpack.c.b16 %v3834, %v3833
    %v3872 = vpack.c.b16 %v3836, %v3835
    %v3873 = vpack.c.b16 %v3838, %v3837
    %v3874 = vpack.c.b16 %v3840, %v3839
    %v3875 = vpack.c.b16 %v3842, %v3841
    %v3876 = vpack.c.b16 %v3844, %v3843
    %v3877 = vpack.c.b16 %v3846, %v3845
    %v3878 = vpack.c.b16 %v3848, %v3847
    %v3879 = vpack.c.b16 %v3850, %v3849
    %v3880 = vpack.c.b16 %v3852, %v3851
    %v3881 = vpack.c.b16 %v3854, %v3853
    %v3882 = vpack.c.b16 %v3856, %v3855
    %v3883 = vpack.c.b16 %v3858, %v3857
    %v3884 = vpack.c.b16 %v3860, %v3859
    %3909 = vmatprep.subr.bf16.mxu0 0
    %3910 = vmatpush1.bf16.msra.mxu0 %v3868
    %3911 = vmatprep.subr.bf16.mxu0 0
    %3912 = vmatpush1.bf16.msra.mxu0 %v3867
    %3913 = vmatprep.subr.bf16.mxu0 0
    %3914 = vmatpush1.bf16.msra.mxu0 %v3866
    %3915 = vmatprep.subr.bf16.mxu0 0
    %3916 = vmatpush1.bf16.msra.mxu0 %v3865
    %3917 = vmatprep.subr.bf16.mxu0 0
    %3918 = vmatpush1.bf16.msra.mxu0 %v3864
    %3919 = vmatprep.subr.bf16.mxu0 0
    %3920 = vmatpush1.bf16.msra.mxu0 %v3863
    %3921 = vmatprep.subr.bf16.mxu0 0
    %3922 = vmatpush1.bf16.msra.mxu0 %v3862
    %3923 = vmatprep.subr.bf16.mxu0 0
    %3924 = vmatpush1.bf16.msra.mxu0 %v3861
    %3925 = vmatprep.subr.bf16.mxu0 0
    %3926 = vmatpush2.bf16.msra.mxu0 %v3876
    %3927 = vmatprep.subr.bf16.mxu0 0
    %3928 = vmatpush2.bf16.msra.mxu0 %v3875
    %3929 = vmatprep.subr.bf16.mxu0 0
    %3930 = vmatpush2.bf16.msra.mxu0 %v3874
    %3931 = vmatprep.subr.bf16.mxu0 0
    %3932 = vmatpush2.bf16.msra.mxu0 %v3873
    %3933 = vmatprep.subr.bf16.mxu0 0
    %3934 = vmatpush2.bf16.msra.mxu0 %v3872
    %3935 = vmatprep.subr.bf16.mxu0 0
    %3936 = vmatpush2.bf16.msra.mxu0 %v3871
    %3937 = vmatprep.subr.bf16.mxu0 0
    %3938 = vmatpush2.bf16.msra.mxu0 %v3870
    %3939 = vmatprep.subr.bf16.mxu0 0
    %3940 = vmatpush2.bf16.msra.mxu0 %v3869
    %3941 = vmatprep.mubr.bf16.mxu0 %v3670
    %3942 = vmatmul.mubr.bf16.gmra.mxu0 %v3669
    %v3943 = vpop.f32.mrf.mxu0
    %v3944 = vadd.f32 0.0, %v3943
    %v3945 = vpop.f32.mrf.mxu0
    %v3946 = vpop.f32.mrf.mxu0
    %v3947 = vadd.f32 0.0, %v3946
    %v3948 = vpop.f32.mrf.mxu0
    %3949 = vmatprep.mubr.bf16.mxu0 %v3673
    %3950 = vmatmul.mubr.bf16.gmra.mxu0 %v3672
    %v3951 = vpop.f32.mrf.mxu0
    %v3952 = vadd.f32 0.0, %v3951
    %v3953 = vpop.f32.mrf.mxu0
    %v3954 = vpop.f32.mrf.mxu0
    %v3955 = vadd.f32 0.0, %v3954
    %v3956 = vpop.f32.mrf.mxu0
    %3957 = vmatprep.mubr.bf16.mxu0 %v3676
    %3958 = vmatmul.mubr.bf16.gmra.mxu0 %v3675
    %v3959 = vpop.f32.mrf.mxu0
    %v3960 = vadd.f32 0.0, %v3959
    %v3961 = vpop.f32.mrf.mxu0
    %v3962 = vpop.f32.mrf.mxu0
    %v3963 = vadd.f32 0.0, %v3962
    %v3964 = vpop.f32.mrf.mxu0
    %3965 = vmatprep.mubr.bf16.mxu0 %v3679
    %3966 = vmatmul.mubr.bf16.gmra.mxu0 %v3678
    %v3967 = vpop.f32.mrf.mxu0
    %v3968 = vadd.f32 0.0, %v3967
    %v3969 = vpop.f32.mrf.mxu0
    %v3970 = vpop.f32.mrf.mxu0
    %v3971 = vadd.f32 0.0, %v3970
    %v3972 = vpop.f32.mrf.mxu0
    %3973 = vmatprep.mubr.bf16.mxu0 %v3682
    %3974 = vmatmul.mubr.bf16.gmra.mxu0 %v3681
    %v3975 = vpop.f32.mrf.mxu0
    %v3976 = vadd.f32 0.0, %v3975
    %v3977 = vpop.f32.mrf.mxu0
    %v3978 = vpop.f32.mrf.mxu0
    %v3979 = vadd.f32 0.0, %v3978
    %v3980 = vpop.f32.mrf.mxu0
    %3981 = vmatprep.mubr.bf16.mxu0 %v3685
    %3982 = vmatmul.mubr.bf16.gmra.mxu0 %v3684
    %v3983 = vpop.f32.mrf.mxu0
    %v3984 = vadd.f32 0.0, %v3983
    %v3985 = vpop.f32.mrf.mxu0
    %v3986 = vpop.f32.mrf.mxu0
    %v3987 = vadd.f32 0.0, %v3986
    %v3988 = vpop.f32.mrf.mxu0
    %3989 = vmatprep.mubr.bf16.mxu0 %v3688
    %3990 = vmatmul.mubr.bf16.gmra.mxu0 %v3687
    %v3991 = vpop.f32.mrf.mxu0
    %v3992 = vadd.f32 0.0, %v3991
    %v3993 = vpop.f32.mrf.mxu0
    %v3994 = vpop.f32.mrf.mxu0
    %v3995 = vadd.f32 0.0, %v3994
    %v3996 = vpop.f32.mrf.mxu0
    %3997 = vmatprep.mubr.bf16.mxu0 %v3691
    %3998 = vmatmul.mubr.bf16.gmra.mxu0 %v3690
    %v3999 = vpop.f32.mrf.mxu0
    %v4000 = vadd.f32 0.0, %v3999
    %v4001 = vpop.f32.mrf.mxu0
    %v4002 = vpop.f32.mrf.mxu0
    %v4003 = vadd.f32 0.0, %v4002
    %v4004 = vpop.f32.mrf.mxu0
    %4005 = vmatprep.mubr.bf16.mxu0 %v3694
    %4006 = vmatmul.mubr.bf16.gmra.mxu0 %v3693
    %v4007 = vpop.f32.mrf.mxu0
    %v4008 = vadd.f32 0.0, %v4007
    %v4009 = vpop.f32.mrf.mxu0
    %v4010 = vpop.f32.mrf.mxu0
    %v4011 = vadd.f32 0.0, %v4010
    %v4012 = vpop.f32.mrf.mxu0
    %4013 = vmatprep.mubr.bf16.mxu0 %v3697
    %4014 = vmatmul.mubr.bf16.gmra.mxu0 %v3696
    %v4015 = vpop.f32.mrf.mxu0
    %v4016 = vadd.f32 0.0, %v4015
    %v4017 = vpop.f32.mrf.mxu0
    %v4018 = vpop.f32.mrf.mxu0
    %v4019 = vadd.f32 0.0, %v4018
    %v4020 = vpop.f32.mrf.mxu0
    %4021 = vmatprep.mubr.bf16.mxu0 %v3700
    %4022 = vmatmul.mubr.bf16.gmra.mxu0 %v3699
    %v4023 = vpop.f32.mrf.mxu0
    %v4024 = vadd.f32 0.0, %v4023
    %v4025 = vpop.f32.mrf.mxu0
    %v4026 = vpop.f32.mrf.mxu0
    %v4027 = vadd.f32 0.0, %v4026
    %v4028 = vpop.f32.mrf.mxu0
    %4029 = vmatprep.mubr.bf16.mxu0 %v3703
    %4030 = vmatmul.mubr.bf16.gmra.mxu0 %v3702
    %v4031 = vpop.f32.mrf.mxu0
    %v4032 = vadd.f32 0.0, %v4031
    %v4033 = vpop.f32.mrf.mxu0
    %v4034 = vpop.f32.mrf.mxu0
    %v4035 = vadd.f32 0.0, %v4034
    %v4036 = vpop.f32.mrf.mxu0
    %4037 = vmatprep.mubr.bf16.mxu0 %v3706
    %4038 = vmatmul.mubr.bf16.gmra.mxu0 %v3705
    %v4039 = vpop.f32.mrf.mxu0
    %v4040 = vadd.f32 0.0, %v4039
    %v4041 = vpop.f32.mrf.mxu0
    %v4042 = vpop.f32.mrf.mxu0
    %v4043 = vadd.f32 0.0, %v4042
    %v4044 = vpop.f32.mrf.mxu0
    %4045 = vmatprep.mubr.bf16.mxu0 %v3709
    %4046 = vmatmul.mubr.bf16.gmra.mxu0 %v3708
    %v4047 = vpop.f32.mrf.mxu0
    %v4048 = vadd.f32 0.0, %v4047
    %v4049 = vpop.f32.mrf.mxu0
    %v4050 = vpop.f32.mrf.mxu0
    %v4051 = vadd.f32 0.0, %v4050
    %v4052 = vpop.f32.mrf.mxu0
    %4053 = vmatprep.mubr.bf16.mxu0 %v3712
    %4054 = vmatmul.mubr.bf16.gmra.mxu0 %v3711
    %v4055 = vpop.f32.mrf.mxu0
    %v4056 = vadd.f32 0.0, %v4055
    %v4057 = vpop.f32.mrf.mxu0
    %v4058 = vpop.f32.mrf.mxu0
    %v4059 = vadd.f32 0.0, %v4058
    %v4060 = vpop.f32.mrf.mxu0
    %4061 = vmatprep.mubr.bf16.mxu0 %v3715
    %4062 = vmatmul.mubr.bf16.gmra.mxu0 %v3714
    %v4063 = vpop.f32.mrf.mxu0
    %v4064 = vadd.f32 0.0, %v4063
    %v4065 = vpop.f32.mrf.mxu0
    %v4066 = vpop.f32.mrf.mxu0
    %v4067 = vadd.f32 0.0, %v4066
    %v4068 = vpop.f32.mrf.mxu0
    %4069 = vdwg.mxu0
    %4070 = vmatprep.subr.bf16.mxu0 0
    %4071 = vmatpush1.bf16.msra.mxu0 %v3884
    %4072 = vmatprep.subr.bf16.mxu0 0
    %4073 = vmatpush1.bf16.msra.mxu0 %v3883
    %4074 = vmatprep.subr.bf16.mxu0 0
    %4075 = vmatpush1.bf16.msra.mxu0 %v3882
    %4076 = vmatprep.subr.bf16.mxu0 0
    %4077 = vmatpush1.bf16.msra.mxu0 %v3881
    %4078 = vmatprep.subr.bf16.mxu0 0
    %4079 = vmatpush1.bf16.msra.mxu0 %v3880
    %4080 = vmatprep.subr.bf16.mxu0 0
    %4081 = vmatpush1.bf16.msra.mxu0 %v3879
    %4082 = vmatprep.subr.bf16.mxu0 0
    %4083 = vmatpush1.bf16.msra.mxu0 %v3878
    %4084 = vmatprep.subr.bf16.mxu0 0
    %4085 = vmatpush1.bf16.msra.mxu0 %v3877
    %4086 = vmatprep.subr.bf16.mxu0 0
    %4087 = vmatpush2.bf16.msra.mxu0 0
    %4088 = vmatprep.subr.bf16.mxu0 0
    %4089 = vmatpush2.bf16.msra.mxu0 0
    %4090 = vmatprep.subr.bf16.mxu0 0
    %4091 = vmatpush2.bf16.msra.mxu0 0
    %4092 = vmatprep.subr.bf16.mxu0 0
    %4093 = vmatpush2.bf16.msra.mxu0 0
    %4094 = vmatprep.subr.bf16.mxu0 0
    %4095 = vmatpush2.bf16.msra.mxu0 0
    %4096 = vmatprep.subr.bf16.mxu0 0
    %4097 = vmatpush2.bf16.msra.mxu0 0
    %4098 = vmatprep.subr.bf16.mxu0 0
    %4099 = vmatpush2.bf16.msra.mxu0 0
    %4100 = vmatprep.subr.bf16.mxu0 0
    %4101 = vmatpush2.bf16.msra.mxu0 0
    %4102 = vmatprep.mubr.bf16.mxu0 0
    %4103 = vmatmul.mubr.bf16.gmra.mxu0 %v3671
    %v4104 = vpop.f32.mrf.mxu0
    %v4105 = vadd.f32 %v3944, %v4104
    %v4106 = vpop.f32.mrf.mxu0
    %v4107 = vpop.f32.mrf.mxu0
    %v4108 = vadd.f32 %v3947, %v4107
    %v4109 = vpop.f32.mrf.mxu0
    %4110 = vmatprep.mubr.bf16.mxu0 0
    %4111 = vmatmul.mubr.bf16.gmra.mxu0 %v3674
    %v4112 = vpop.f32.mrf.mxu0
    %v4113 = vadd.f32 %v3952, %v4112
    %v4114 = vpop.f32.mrf.mxu0
    %v4115 = vpop.f32.mrf.mxu0
    %v4116 = vadd.f32 %v3955, %v4115
    %v4117 = vpop.f32.mrf.mxu0
    %4118 = vmatprep.mubr.bf16.mxu0 0
    %4119 = vmatmul.mubr.bf16.gmra.mxu0 %v3677
    %v4120 = vpop.f32.mrf.mxu0
    %v4121 = vadd.f32 %v3960, %v4120
    %v4122 = vpop.f32.mrf.mxu0
    %v4123 = vpop.f32.mrf.mxu0
    %v4124 = vadd.f32 %v3963, %v4123
    %v4125 = vpop.f32.mrf.mxu0
    %4126 = vmatprep.mubr.bf16.mxu0 0
    %4127 = vmatmul.mubr.bf16.gmra.mxu0 %v3680
    %v4128 = vpop.f32.mrf.mxu0
    %v4129 = vadd.f32 %v3968, %v4128
    %v4130 = vpop.f32.mrf.mxu0
    %v4131 = vpop.f32.mrf.mxu0
    %v4132 = vadd.f32 %v3971, %v4131
    %v4133 = vpop.f32.mrf.mxu0
    %4134 = vmatprep.mubr.bf16.mxu0 0
    %4135 = vmatmul.mubr.bf16.gmra.mxu0 %v3683
    %v4136 = vpop.f32.mrf.mxu0
    %v4137 = vadd.f32 %v3976, %v4136
    %v4138 = vpop.f32.mrf.mxu0
    %v4139 = vpop.f32.mrf.mxu0
    %v4140 = vadd.f32 %v3979, %v4139
    %v4141 = vpop.f32.mrf.mxu0
    %4142 = vmatprep.mubr.bf16.mxu0 0
    %4143 = vmatmul.mubr.bf16.gmra.mxu0 %v3686
    %v4144 = vpop.f32.mrf.mxu0
    %v4145 = vadd.f32 %v3984, %v4144
    %v4146 = vpop.f32.mrf.mxu0
    %v4147 = vpop.f32.mrf.mxu0
    %v4148 = vadd.f32 %v3987, %v4147
    %v4149 = vpop.f32.mrf.mxu0
    %4150 = vmatprep.mubr.bf16.mxu0 0
    %4151 = vmatmul.mubr.bf16.gmra.mxu0 %v3689
    %v4152 = vpop.f32.mrf.mxu0
    %v4153 = vadd.f32 %v3992, %v4152
    %v4154 = vpop.f32.mrf.mxu0
    %v4155 = vpop.f32.mrf.mxu0
    %v4156 = vadd.f32 %v3995, %v4155
    %v4157 = vpop.f32.mrf.mxu0
    %4158 = vmatprep.mubr.bf16.mxu0 0
    %4159 = vmatmul.mubr.bf16.gmra.mxu0 %v3692
    %v4160 = vpop.f32.mrf.mxu0
    %v4161 = vadd.f32 %v4000, %v4160
    %v4162 = vpop.f32.mrf.mxu0
    %v4163 = vpop.f32.mrf.mxu0
    %v4164 = vadd.f32 %v4003, %v4163
    %v4165 = vpop.f32.mrf.mxu0
    %4166 = vmatprep.mubr.bf16.mxu0 0
    %4167 = vmatmul.mubr.bf16.gmra.mxu0 %v3695
    %v4168 = vpop.f32.mrf.mxu0
    %v4169 = vadd.f32 %v4008, %v4168
    %v4170 = vpop.f32.mrf.mxu0
    %v4171 = vpop.f32.mrf.mxu0
    %v4172 = vadd.f32 %v4011, %v4171
    %v4173 = vpop.f32.mrf.mxu0
    %4174 = vmatprep.mubr.bf16.mxu0 0
    %4175 = vmatmul.mubr.bf16.gmra.mxu0 %v3698
    %v4176 = vpop.f32.mrf.mxu0
    %v4177 = vadd.f32 %v4016, %v4176
    %v4178 = vpop.f32.mrf.mxu0
    %v4179 = vpop.f32.mrf.mxu0
    %v4180 = vadd.f32 %v4019, %v4179
    %v4181 = vpop.f32.mrf.mxu0
    %4182 = vmatprep.mubr.bf16.mxu0 0
    %4183 = vmatmul.mubr.bf16.gmra.mxu0 %v3701
    %v4184 = vpop.f32.mrf.mxu0
    %v4185 = vadd.f32 %v4024, %v4184
    %v4186 = vpop.f32.mrf.mxu0
    %v4187 = vpop.f32.mrf.mxu0
    %v4188 = vadd.f32 %v4027, %v4187
    %v4189 = vpop.f32.mrf.mxu0
    %4190 = vmatprep.mubr.bf16.mxu0 0
    %4191 = vmatmul.mubr.bf16.gmra.mxu0 %v3704
    %v4192 = vpop.f32.mrf.mxu0
    %v4193 = vadd.f32 %v4032, %v4192
    %v4194 = vpop.f32.mrf.mxu0
    %v4195 = vpop.f32.mrf.mxu0
    %v4196 = vadd.f32 %v4035, %v4195
    %v4197 = vpop.f32.mrf.mxu0
    %4198 = vmatprep.mubr.bf16.mxu0 0
    %4199 = vmatmul.mubr.bf16.gmra.mxu0 %v3707
    %v4200 = vpop.f32.mrf.mxu0
    %v4201 = vadd.f32 %v4040, %v4200
    %v4202 = vpop.f32.mrf.mxu0
    %v4203 = vpop.f32.mrf.mxu0
    %v4204 = vadd.f32 %v4043, %v4203
    %v4205 = vpop.f32.mrf.mxu0
    %4206 = vmatprep.mubr.bf16.mxu0 0
    %4207 = vmatmul.mubr.bf16.gmra.mxu0 %v3710
    %v4208 = vpop.f32.mrf.mxu0
    %v4209 = vadd.f32 %v4048, %v4208
    %v4210 = vpop.f32.mrf.mxu0
    %v4211 = vpop.f32.mrf.mxu0
    %v4212 = vadd.f32 %v4051, %v4211
    %v4213 = vpop.f32.mrf.mxu0
    %4214 = vmatprep.mubr.bf16.mxu0 0
    %4215 = vmatmul.mubr.bf16.gmra.mxu0 %v3713
    %v4216 = vpop.f32.mrf.mxu0
    %v4217 = vadd.f32 %v4056, %v4216
    %v4218 = vpop.f32.mrf.mxu0
    %v4219 = vpop.f32.mrf.mxu0
    %v4220 = vadd.f32 %v4059, %v4219
    %v4221 = vpop.f32.mrf.mxu0
    %4222 = vmatprep.mubr.bf16.mxu0 0
    %4223 = vmatmul.mubr.bf16.gmra.mxu0 %v3716
    %v4224 = vpop.f32.mrf.mxu0
    %v4225 = vadd.f32 %v4064, %v4224
    %v4226 = vpop.f32.mrf.mxu0
    %v4227 = vpop.f32.mrf.mxu0
    %v4228 = vadd.f32 %v4067, %v4227
    %v4229 = vpop.f32.mrf.mxu0
    %4230 = vdwg.mxu0
    %v4231 = vadd.f32 %v3269, %v4105
    %v4232 = vadd.f32 %v3272, %v4108
    %v4233 = vadd.f32 %v3277, %v4113
    %v4234 = vadd.f32 %v3280, %v4116
    %v4235 = vadd.f32 %v3285, %v4121
    %v4236 = vadd.f32 %v3288, %v4124
    %v4237 = vadd.f32 %v3293, %v4129
    %v4238 = vadd.f32 %v3296, %v4132
    %v4239 = vadd.f32 %v3301, %v4137
    %v4240 = vadd.f32 %v3304, %v4140
    %v4241 = vadd.f32 %v3309, %v4145
    %v4242 = vadd.f32 %v3312, %v4148
    %v4243 = vadd.f32 %v3317, %v4153
    %v4244 = vadd.f32 %v3320, %v4156
    %v4245 = vadd.f32 %v3325, %v4161
    %v4246 = vadd.f32 %v3328, %v4164
    %v4247 = vadd.f32 %v3333, %v4169
    %v4248 = vadd.f32 %v3336, %v4172
    %v4249 = vadd.f32 %v3341, %v4177
    %v4250 = vadd.f32 %v3344, %v4180
    %v4251 = vadd.f32 %v3349, %v4185
    %v4252 = vadd.f32 %v3352, %v4188
    %v4253 = vadd.f32 %v3357, %v4193
    %v4254 = vadd.f32 %v3360, %v4196
    %v4255 = vadd.f32 %v3365, %v4201
    %v4256 = vadd.f32 %v3368, %v4204
    %v4257 = vadd.f32 %v3373, %v4209
    %v4258 = vadd.f32 %v3376, %v4212
    %v4259 = vadd.f32 %v3381, %v4217
    %v4260 = vadd.f32 %v3384, %v4220
    %v4261 = vadd.f32 %v3389, %v4225
    %v4262 = vadd.f32 %v3392, %v4228
    %v4263 = vlaneseq
    %v4264 = vshrl.u32 %v4263, 7
    %v4265 = vsub.s32 0, %v4264
    %v4266 = vrot.slane %v74, %v4265
    %v4267 = vmul.f32 %v4231, %v4266
    %v4268 = vmul.f32 %v4232, %v4266
    %v4269 = vmul.f32 %v4233, %v4266
    %v4270 = vmul.f32 %v4234, %v4266
    %v4271 = vmul.f32 %v4235, %v4266
    %v4272 = vmul.f32 %v4236, %v4266
    %v4273 = vmul.f32 %v4237, %v4266
    %v4274 = vmul.f32 %v4238, %v4266
    %v4275 = vmul.f32 %v4239, %v4266
    %v4276 = vmul.f32 %v4240, %v4266
    %v4277 = vmul.f32 %v4241, %v4266
    %v4278 = vmul.f32 %v4242, %v4266
    %v4279 = vmul.f32 %v4243, %v4266
    %v4280 = vmul.f32 %v4244, %v4266
    %v4281 = vmul.f32 %v4245, %v4266
    %v4282 = vmul.f32 %v4246, %v4266
    %v4283 = vmul.f32 %v4247, %v4266
    %v4284 = vmul.f32 %v4248, %v4266
    %v4285 = vmul.f32 %v4249, %v4266
    %v4286 = vmul.f32 %v4250, %v4266
    %v4287 = vmul.f32 %v4251, %v4266
    %v4288 = vmul.f32 %v4252, %v4266
    %v4289 = vmul.f32 %v4253, %v4266
    %v4290 = vmul.f32 %v4254, %v4266
    %v4291 = vmul.f32 %v4255, %v4266
    %v4292 = vmul.f32 %v4256, %v4266
    %v4293 = vmul.f32 %v4257, %v4266
    %v4294 = vmul.f32 %v4258, %v4266
    %v4295 = vmul.f32 %v4259, %v4266
    %v4296 = vmul.f32 %v4260, %v4266
    %v4297 = vmul.f32 %v4261, %v4266
    %v4298 = vmul.f32 %v4262, %v4266
    %v4299 = vlaneseq
    %v4300 = vshrl.u32 %v4299, 7
    %v4301 = vsub.s32 0, %v4300
    %v4302 = vrot.slane %v75, %v4301
    %v4303 = vadd.f32 %v4267, %v4302
    %v4304 = vadd.f32 %v4268, %v4302
    %v4305 = vadd.f32 %v4269, %v4302
    %v4306 = vadd.f32 %v4270, %v4302
    %v4307 = vadd.f32 %v4271, %v4302
    %v4308 = vadd.f32 %v4272, %v4302
    %v4309 = vadd.f32 %v4273, %v4302
    %v4310 = vadd.f32 %v4274, %v4302
    %v4311 = vadd.f32 %v4275, %v4302
    %v4312 = vadd.f32 %v4276, %v4302
    %v4313 = vadd.f32 %v4277, %v4302
    %v4314 = vadd.f32 %v4278, %v4302
    %v4315 = vadd.f32 %v4279, %v4302
    %v4316 = vadd.f32 %v4280, %v4302
    %v4317 = vadd.f32 %v4281, %v4302
    %v4318 = vadd.f32 %v4282, %v4302
    %v4319 = vadd.f32 %v4283, %v4302
    %v4320 = vadd.f32 %v4284, %v4302
    %v4321 = vadd.f32 %v4285, %v4302
    %v4322 = vadd.f32 %v4286, %v4302
    %v4323 = vadd.f32 %v4287, %v4302
    %v4324 = vadd.f32 %v4288, %v4302
    %v4325 = vadd.f32 %v4289, %v4302
    %v4326 = vadd.f32 %v4290, %v4302
    %v4327 = vadd.f32 %v4291, %v4302
    %v4328 = vadd.f32 %v4292, %v4302
    %v4329 = vadd.f32 %v4293, %v4302
    %v4330 = vadd.f32 %v4294, %v4302
    %v4331 = vadd.f32 %v4295, %v4302
    %v4332 = vadd.f32 %v4296, %v4302
    %v4333 = vadd.f32 %v4297, %v4302
    %v4334 = vadd.f32 %v4298, %v4302
    %vm4335 = vcmp.ge.f32.partialorder %v4303, 0.0
    %vm4336 = vcmp.ge.f32.partialorder %v4304, 0.0
    %vm4337 = vcmp.ge.f32.partialorder %v4305, 0.0
    %vm4338 = vcmp.ge.f32.partialorder %v4306, 0.0
    %vm4339 = vcmp.ge.f32.partialorder %v4307, 0.0
    %vm4340 = vcmp.ge.f32.partialorder %v4308, 0.0
    %vm4341 = vcmp.ge.f32.partialorder %v4309, 0.0
    %vm4342 = vcmp.ge.f32.partialorder %v4310, 0.0
    %vm4343 = vcmp.ge.f32.partialorder %v4311, 0.0
    %vm4344 = vcmp.ge.f32.partialorder %v4312, 0.0
    %vm4345 = vcmp.ge.f32.partialorder %v4313, 0.0
    %vm4346 = vcmp.ge.f32.partialorder %v4314, 0.0
    %vm4347 = vcmp.ge.f32.partialorder %v4315, 0.0
    %vm4348 = vcmp.ge.f32.partialorder %v4316, 0.0
    %vm4349 = vcmp.ge.f32.partialorder %v4317, 0.0
    %vm4350 = vcmp.ge.f32.partialorder %v4318, 0.0
    %vm4351 = vcmp.ge.f32.partialorder %v4319, 0.0
    %vm4352 = vcmp.ge.f32.partialorder %v4320, 0.0
    %vm4353 = vcmp.ge.f32.partialorder %v4321, 0.0
    %vm4354 = vcmp.ge.f32.partialorder %v4322, 0.0
    %vm4355 = vcmp.ge.f32.partialorder %v4323, 0.0
    %vm4356 = vcmp.ge.f32.partialorder %v4324, 0.0
    %vm4357 = vcmp.ge.f32.partialorder %v4325, 0.0
    %vm4358 = vcmp.ge.f32.partialorder %v4326, 0.0
    %vm4359 = vcmp.ge.f32.partialorder %v4327, 0.0
    %vm4360 = vcmp.ge.f32.partialorder %v4328, 0.0
    %vm4361 = vcmp.ge.f32.partialorder %v4329, 0.0
    %vm4362 = vcmp.ge.f32.partialorder %v4330, 0.0
    %vm4363 = vcmp.ge.f32.partialorder %v4331, 0.0
    %vm4364 = vcmp.ge.f32.partialorder %v4332, 0.0
    %vm4365 = vcmp.ge.f32.partialorder %v4333, 0.0
    %vm4366 = vcmp.ge.f32.partialorder %v4334, 0.0
    %v4367 = vlaneseq
    %v4368 = vshrl.u32 %v4367, 7
    %v4369 = vsub.s32 0, %v4368
    %v4370 = vrot.slane %v76, %v4369
    %v4371 = vmul.f32 %v4370, %v4303
    %v4372 = vmul.f32 %v4370, %v4304
    %v4373 = vmul.f32 %v4370, %v4305
    %v4374 = vmul.f32 %v4370, %v4306
    %v4375 = vmul.f32 %v4370, %v4307
    %v4376 = vmul.f32 %v4370, %v4308
    %v4377 = vmul.f32 %v4370, %v4309
    %v4378 = vmul.f32 %v4370, %v4310
    %v4379 = vmul.f32 %v4370, %v4311
    %v4380 = vmul.f32 %v4370, %v4312
    %v4381 = vmul.f32 %v4370, %v4313
    %v4382 = vmul.f32 %v4370, %v4314
    %v4383 = vmul.f32 %v4370, %v4315
    %v4384 = vmul.f32 %v4370, %v4316
    %v4385 = vmul.f32 %v4370, %v4317
    %v4386 = vmul.f32 %v4370, %v4318
    %v4387 = vmul.f32 %v4370, %v4319
    %v4388 = vmul.f32 %v4370, %v4320
    %v4389 = vmul.f32 %v4370, %v4321
    %v4390 = vmul.f32 %v4370, %v4322
    %v4391 = vmul.f32 %v4370, %v4323
    %v4392 = vmul.f32 %v4370, %v4324
    %v4393 = vmul.f32 %v4370, %v4325
    %v4394 = vmul.f32 %v4370, %v4326
    %v4395 = vmul.f32 %v4370, %v4327
    %v4396 = vmul.f32 %v4370, %v4328
    %v4397 = vmul.f32 %v4370, %v4329
    %v4398 = vmul.f32 %v4370, %v4330
    %v4399 = vmul.f32 %v4370, %v4331
    %v4400 = vmul.f32 %v4370, %v4332
    %v4401 = vmul.f32 %v4370, %v4333
    %v4402 = vmul.f32 %v4370, %v4334
    %v4403 = vsel %vm4335, %v4303, %v4371
    %v4404 = vsel %vm4336, %v4304, %v4372
    %v4405 = vsel %vm4337, %v4305, %v4373
    %v4406 = vsel %vm4338, %v4306, %v4374
    %v4407 = vsel %vm4339, %v4307, %v4375
    %v4408 = vsel %vm4340, %v4308, %v4376
    %v4409 = vsel %vm4341, %v4309, %v4377
    %v4410 = vsel %vm4342, %v4310, %v4378
    %v4411 = vsel %vm4343, %v4311, %v4379
    %v4412 = vsel %vm4344, %v4312, %v4380
    %v4413 = vsel %vm4345, %v4313, %v4381
    %v4414 = vsel %vm4346, %v4314, %v4382
    %v4415 = vsel %vm4347, %v4315, %v4383
    %v4416 = vsel %vm4348, %v4316, %v4384
    %v4417 = vsel %vm4349, %v4317, %v4385
    %v4418 = vsel %vm4350, %v4318, %v4386
    %v4419 = vsel %vm4351, %v4319, %v4387
    %v4420 = vsel %vm4352, %v4320, %v4388
    %v4421 = vsel %vm4353, %v4321, %v4389
    %v4422 = vsel %vm4354, %v4322, %v4390
    %v4423 = vsel %vm4355, %v4323, %v4391
    %v4424 = vsel %vm4356, %v4324, %v4392
    %v4425 = vsel %vm4357, %v4325, %v4393
    %v4426 = vsel %vm4358, %v4326, %v4394
    %v4427 = vsel %vm4359, %v4327, %v4395
    %v4428 = vsel %vm4360, %v4328, %v4396
    %v4429 = vsel %vm4361, %v4329, %v4397
    %v4430 = vsel %vm4362, %v4330, %v4398
    %v4431 = vsel %vm4363, %v4331, %v4399
    %v4432 = vsel %vm4364, %v4332, %v4400
    %v4433 = vsel %vm4365, %v4333, %v4401
    %v4434 = vsel %vm4366, %v4334, %v4402
    %v4467 = vrot.slane %v4403, 7
    %v4468 = vrot.slane %v4404, 7
    %v4469 = vsel %vm249, %v4467, %v4468
    %v4470 = vrot.slane %v4405, 7
    %v4471 = vrot.slane %v4406, 7
    %v4472 = vsel %vm249, %v4470, %v4471
    %v4473 = vrot.slane %v4407, 7
    %v4474 = vrot.slane %v4408, 7
    %v4475 = vsel %vm249, %v4473, %v4474
    %v4476 = vrot.slane %v4409, 7
    %v4477 = vrot.slane %v4410, 7
    %v4478 = vsel %vm249, %v4476, %v4477
    %v4479 = vrot.slane %v4411, 7
    %v4480 = vrot.slane %v4412, 7
    %v4481 = vsel %vm249, %v4479, %v4480
    %v4482 = vrot.slane %v4413, 7
    %v4483 = vrot.slane %v4414, 7
    %v4484 = vsel %vm249, %v4482, %v4483
    %v4485 = vrot.slane %v4415, 7
    %v4486 = vrot.slane %v4416, 7
    %v4487 = vsel %vm249, %v4485, %v4486
    %v4488 = vrot.slane %v4417, 7
    %v4489 = vrot.slane %v4418, 7
    %v4490 = vsel %vm249, %v4488, %v4489
    %v4491 = vrot.slane %v4419, 7
    %v4492 = vrot.slane %v4420, 7
    %v4493 = vsel %vm249, %v4491, %v4492
    %v4494 = vrot.slane %v4421, 7
    %v4495 = vrot.slane %v4422, 7
    %v4496 = vsel %vm249, %v4494, %v4495
    %v4497 = vrot.slane %v4423, 7
    %v4498 = vrot.slane %v4424, 7
    %v4499 = vsel %vm249, %v4497, %v4498
    %v4500 = vrot.slane %v4425, 7
    %v4501 = vrot.slane %v4426, 7
    %v4502 = vsel %vm249, %v4500, %v4501
    %v4503 = vrot.slane %v4427, 7
    %v4504 = vrot.slane %v4428, 7
    %v4505 = vsel %vm249, %v4503, %v4504
    %v4506 = vrot.slane %v4429, 7
    %v4507 = vrot.slane %v4430, 7
    %v4508 = vsel %vm249, %v4506, %v4507
    %v4509 = vrot.slane %v4431, 7
    %v4510 = vrot.slane %v4432, 7
    %v4511 = vsel %vm249, %v4509, %v4510
    %v4512 = vrot.slane %v4433, 7
    %v4513 = vrot.slane %v4434, 7
    %v4514 = vsel %vm249, %v4512, %v4513
    %v4547 = vsel %vm249, 0.0, %v4467
    %v4548 = vsel %vm249, 0.0, %v4470
    %v4549 = vsel %vm249, 0.0, %v4473
    %v4550 = vsel %vm249, 0.0, %v4476
    %v4551 = vsel %vm249, 0.0, %v4479
    %v4552 = vsel %vm249, 0.0, %v4482
    %v4553 = vsel %vm249, 0.0, %v4485
    %v4554 = vsel %vm249, 0.0, %v4488
    %v4555 = vsel %vm249, 0.0, %v4491
    %v4556 = vsel %vm249, 0.0, %v4494
    %v4557 = vsel %vm249, 0.0, %v4497
    %v4558 = vsel %vm249, 0.0, %v4500
    %v4559 = vsel %vm249, 0.0, %v4503
    %v4560 = vsel %vm249, 0.0, %v4506
    %v4561 = vsel %vm249, 0.0, %v4509
    %v4562 = vsel %vm249, 0.0, %v4512
    %v4563 = vrot.slane %v4403, 1
    %v4564 = vrot.slane %v4404, 1
    %v4565 = vsel %vm346, %v4563, %v4564
    %v4566 = vrot.slane %v4405, 1
    %v4567 = vrot.slane %v4406, 1
    %v4568 = vsel %vm346, %v4566, %v4567
    %v4569 = vrot.slane %v4407, 1
    %v4570 = vrot.slane %v4408, 1
    %v4571 = vsel %vm346, %v4569, %v4570
    %v4572 = vrot.slane %v4409, 1
    %v4573 = vrot.slane %v4410, 1
    %v4574 = vsel %vm346, %v4572, %v4573
    %v4575 = vrot.slane %v4411, 1
    %v4576 = vrot.slane %v4412, 1
    %v4577 = vsel %vm346, %v4575, %v4576
    %v4578 = vrot.slane %v4413, 1
    %v4579 = vrot.slane %v4414, 1
    %v4580 = vsel %vm346, %v4578, %v4579
    %v4581 = vrot.slane %v4415, 1
    %v4582 = vrot.slane %v4416, 1
    %v4583 = vsel %vm346, %v4581, %v4582
    %v4584 = vrot.slane %v4417, 1
    %v4585 = vrot.slane %v4418, 1
    %v4586 = vsel %vm346, %v4584, %v4585
    %v4587 = vrot.slane %v4419, 1
    %v4588 = vrot.slane %v4420, 1
    %v4589 = vsel %vm346, %v4587, %v4588
    %v4590 = vrot.slane %v4421, 1
    %v4591 = vrot.slane %v4422, 1
    %v4592 = vsel %vm346, %v4590, %v4591
    %v4593 = vrot.slane %v4423, 1
    %v4594 = vrot.slane %v4424, 1
    %v4595 = vsel %vm346, %v4593, %v4594
    %v4596 = vrot.slane %v4425, 1
    %v4597 = vrot.slane %v4426, 1
    %v4598 = vsel %vm346, %v4596, %v4597
    %v4599 = vrot.slane %v4427, 1
    %v4600 = vrot.slane %v4428, 1
    %v4601 = vsel %vm346, %v4599, %v4600
    %v4602 = vrot.slane %v4429, 1
    %v4603 = vrot.slane %v4430, 1
    %v4604 = vsel %vm346, %v4602, %v4603
    %v4605 = vrot.slane %v4431, 1
    %v4606 = vrot.slane %v4432, 1
    %v4607 = vsel %vm346, %v4605, %v4606
    %v4608 = vrot.slane %v4433, 1
    %v4609 = vrot.slane %v4434, 1
    %v4610 = vsel %vm346, %v4608, %v4609
    %v4643 = vsel %vm346, %v4564, 0.0
    %v4644 = vsel %vm346, %v4567, 0.0
    %v4645 = vsel %vm346, %v4570, 0.0
    %v4646 = vsel %vm346, %v4573, 0.0
    %v4647 = vsel %vm346, %v4576, 0.0
    %v4648 = vsel %vm346, %v4579, 0.0
    %v4649 = vsel %vm346, %v4582, 0.0
    %v4650 = vsel %vm346, %v4585, 0.0
    %v4651 = vsel %vm346, %v4588, 0.0
    %v4652 = vsel %vm346, %v4591, 0.0
    %v4653 = vsel %vm346, %v4594, 0.0
    %v4654 = vsel %vm346, %v4597, 0.0
    %v4655 = vsel %vm346, %v4600, 0.0
    %v4656 = vsel %vm346, %v4603, 0.0
    %v4657 = vsel %vm346, %v4606, 0.0
    %v4658 = vsel %vm346, %v4609, 0.0
    %v4659 = vpack.c.bf16 %v4469, %v4547
    %v4660 = vpack.c.bf16 %v4472, %v4548
    %v4661 = vpack.c.bf16 %v4475, %v4549
    %v4662 = vpack.c.bf16 %v4478, %v4550
    %v4663 = vpack.c.bf16 %v4481, %v4551
    %v4664 = vpack.c.bf16 %v4484, %v4552
    %v4665 = vpack.c.bf16 %v4487, %v4553
    %v4666 = vpack.c.bf16 %v4490, %v4554
    %v4667 = vpack.c.bf16 %v4493, %v4555
    %v4668 = vpack.c.bf16 %v4496, %v4556
    %v4669 = vpack.c.bf16 %v4499, %v4557
    %v4670 = vpack.c.bf16 %v4502, %v4558
    %v4671 = vpack.c.bf16 %v4505, %v4559
    %v4672 = vpack.c.bf16 %v4508, %v4560
    %v4673 = vpack.c.bf16 %v4511, %v4561
    %v4674 = vpack.c.bf16 %v4514, %v4562
    %v4691 = vunpack.c.l.b16 %v4659
    %v4692 = vunpack.c.h.b16 %v4659
    %v4693 = vunpack.c.l.b16 %v4660
    %v4694 = vunpack.c.h.b16 %v4660
    %v4695 = vunpack.c.l.b16 %v4661
    %v4696 = vunpack.c.h.b16 %v4661
    %v4697 = vunpack.c.l.b16 %v4662
    %v4698 = vunpack.c.h.b16 %v4662
    %v4699 = vunpack.c.l.b16 %v4663
    %v4700 = vunpack.c.h.b16 %v4663
    %v4701 = vunpack.c.l.b16 %v4664
    %v4702 = vunpack.c.h.b16 %v4664
    %v4703 = vunpack.c.l.b16 %v4665
    %v4704 = vunpack.c.h.b16 %v4665
    %v4705 = vunpack.c.l.b16 %v4666
    %v4706 = vunpack.c.h.b16 %v4666
    %v4707 = vunpack.c.l.b16 %v4667
    %v4708 = vunpack.c.h.b16 %v4667
    %v4709 = vunpack.c.l.b16 %v4668
    %v4710 = vunpack.c.h.b16 %v4668
    %v4711 = vunpack.c.l.b16 %v4669
    %v4712 = vunpack.c.h.b16 %v4669
    %v4713 = vunpack.c.l.b16 %v4670
    %v4714 = vunpack.c.h.b16 %v4670
    %v4715 = vunpack.c.l.b16 %v4671
    %v4716 = vunpack.c.h.b16 %v4671
    %v4717 = vunpack.c.l.b16 %v4672
    %v4718 = vunpack.c.h.b16 %v4672
    %v4719 = vunpack.c.l.b16 %v4673
    %v4720 = vunpack.c.h.b16 %v4673
    %v4721 = vunpack.c.l.b16 %v4674
    %v4722 = vunpack.c.h.b16 %v4674
    %v4723 = vpack.c.b16 %v4691, %v4691
    %v4724 = vpack.c.b16 %v4692, %v4692
    %v4725 = vpack.c.b16 %v4693, %v4693
    %v4726 = vpack.c.b16 %v4694, %v4694
    %v4727 = vpack.c.b16 %v4695, %v4695
    %v4728 = vpack.c.b16 %v4696, %v4696
    %v4729 = vpack.c.b16 %v4697, %v4697
    %v4730 = vpack.c.b16 %v4698, %v4698
    %v4731 = vpack.c.b16 %v4699, %v4699
    %v4732 = vpack.c.b16 %v4700, %v4700
    %v4733 = vpack.c.b16 %v4701, %v4701
    %v4734 = vpack.c.b16 %v4702, %v4702
    %v4735 = vpack.c.b16 %v4703, %v4703
    %v4736 = vpack.c.b16 %v4704, %v4704
    %v4737 = vpack.c.b16 %v4705, %v4705
    %v4738 = vpack.c.b16 %v4706, %v4706
    %v4739 = vpack.c.b16 %v4707, %v4707
    %v4740 = vpack.c.b16 %v4708, %v4708
    %v4741 = vpack.c.b16 %v4709, %v4709
    %v4742 = vpack.c.b16 %v4710, %v4710
    %v4743 = vpack.c.b16 %v4711, %v4711
    %v4744 = vpack.c.b16 %v4712, %v4712
    %v4745 = vpack.c.b16 %v4713, %v4713
    %v4746 = vpack.c.b16 %v4714, %v4714
    %v4747 = vpack.c.b16 %v4715, %v4715
    %v4748 = vpack.c.b16 %v4716, %v4716
    %v4749 = vpack.c.b16 %v4717, %v4717
    %v4750 = vpack.c.b16 %v4718, %v4718
    %v4751 = vpack.c.b16 %v4719, %v4719
    %v4752 = vpack.c.b16 %v4720, %v4720
    %v4753 = vpack.c.b16 %v4721, %v4721
    %v4754 = vpack.c.b16 %v4722, %v4722
    %s4787 = scalar_lea.vmem [#allocation3], 24
    %4788 = vst [vmem:[%s4787] sm:$0xf] %v4723
    %4789 = vst [vmem:[%s4787 + $0xc] sm:$0xf] %v4724
    %4790 = vst [vmem:[%s4787 + $0x18] sm:$0xf] %v4725
    %4791 = vst [vmem:[%s4787 + $0x24] sm:$0xf] %v4726
    %4792 = vst [vmem:[%s4787 + $0x30] sm:$0xf] %v4727
    %4793 = vst [vmem:[%s4787 + $0x3c] sm:$0xf] %v4728
    %4794 = vst [vmem:[%s4787 + $0x48] sm:$0xf] %v4729
    %4795 = vst [vmem:[%s4787 + $0x54] sm:$0xf] %v4730
    %4796 = vst [vmem:[%s4787 + $0x60] sm:$0xf] %v4731
    %4797 = vst [vmem:[%s4787 + $0x6c] sm:$0xf] %v4732
    %4798 = vst [vmem:[%s4787 + $0x78] sm:$0xf] %v4733
    %4799 = vst [vmem:[%s4787 + $0x84] sm:$0xf] %v4734
    %4800 = vst [vmem:[%s4787 + $0x90] sm:$0xf] %v4735
    %4801 = vst [vmem:[%s4787 + $0x9c] sm:$0xf] %v4736
    %4802 = vst [vmem:[%s4787 + $0xa8] sm:$0xf] %v4737
    %4803 = vst [vmem:[%s4787 + $0xb4] sm:$0xf] %v4738
    %4804 = vst [vmem:[%s4787 + $0x1b0] sm:$0xf] %v4739
    %4805 = vst [vmem:[%s4787 + $0x1bc] sm:$0xf] %v4740
    %4806 = vst [vmem:[%s4787 + $0x1c8] sm:$0xf] %v4741
    %4807 = vst [vmem:[%s4787 + $0x1d4] sm:$0xf] %v4742
    %4808 = vst [vmem:[%s4787 + $0x1e0] sm:$0xf] %v4743
    %4809 = vst [vmem:[%s4787 + $0x1ec] sm:$0xf] %v4744
    %4810 = vst [vmem:[%s4787 + $0x1f8] sm:$0xf] %v4745
    %4811 = vst [vmem:[%s4787 + $0x204] sm:$0xf] %v4746
    %4812 = vst [vmem:[%s4787 + $0x210] sm:$0xf] %v4747
    %4813 = vst [vmem:[%s4787 + $0x21c] sm:$0xf] %v4748
    %4814 = vst [vmem:[%s4787 + $0x228] sm:$0xf] %v4749
    %4815 = vst [vmem:[%s4787 + $0x234] sm:$0xf] %v4750
    %4816 = vst [vmem:[%s4787 + $0x240] sm:$0xf] %v4751
    %4817 = vst [vmem:[%s4787 + $0x24c] sm:$0xf] %v4752
    %4818 = vst [vmem:[%s4787 + $0x258] sm:$0xf] %v4753
    %4819 = vst [vmem:[%s4787 + $0x264] sm:$0xf] %v4754
    %v4820 = vpack.c.bf16 %v4404, %v4403
    %v4821 = vpack.c.bf16 %v4406, %v4405
    %v4822 = vpack.c.bf16 %v4408, %v4407
    %v4823 = vpack.c.bf16 %v4410, %v4409
    %v4824 = vpack.c.bf16 %v4412, %v4411
    %v4825 = vpack.c.bf16 %v4414, %v4413
    %v4826 = vpack.c.bf16 %v4416, %v4415
    %v4827 = vpack.c.bf16 %v4418, %v4417
    %v4828 = vpack.c.bf16 %v4420, %v4419
    %v4829 = vpack.c.bf16 %v4422, %v4421
    %v4830 = vpack.c.bf16 %v4424, %v4423
    %v4831 = vpack.c.bf16 %v4426, %v4425
    %v4832 = vpack.c.bf16 %v4428, %v4427
    %v4833 = vpack.c.bf16 %v4430, %v4429
    %v4834 = vpack.c.bf16 %v4432, %v4431
    %v4835 = vpack.c.bf16 %v4434, %v4433
    %v4852 = vunpack.c.l.b16 %v4820
    %v4853 = vunpack.c.h.b16 %v4820
    %v4854 = vunpack.c.l.b16 %v4821
    %v4855 = vunpack.c.h.b16 %v4821
    %v4856 = vunpack.c.l.b16 %v4822
    %v4857 = vunpack.c.h.b16 %v4822
    %v4858 = vunpack.c.l.b16 %v4823
    %v4859 = vunpack.c.h.b16 %v4823
    %v4860 = vunpack.c.l.b16 %v4824
    %v4861 = vunpack.c.h.b16 %v4824
    %v4862 = vunpack.c.l.b16 %v4825
    %v4863 = vunpack.c.h.b16 %v4825
    %v4864 = vunpack.c.l.b16 %v4826
    %v4865 = vunpack.c.h.b16 %v4826
    %v4866 = vunpack.c.l.b16 %v4827
    %v4867 = vunpack.c.h.b16 %v4827
    %v4868 = vunpack.c.l.b16 %v4828
    %v4869 = vunpack.c.h.b16 %v4828
    %v4870 = vunpack.c.l.b16 %v4829
    %v4871 = vunpack.c.h.b16 %v4829
    %v4872 = vunpack.c.l.b16 %v4830
    %v4873 = vunpack.c.h.b16 %v4830
    %v4874 = vunpack.c.l.b16 %v4831
    %v4875 = vunpack.c.h.b16 %v4831
    %v4876 = vunpack.c.l.b16 %v4832
    %v4877 = vunpack.c.h.b16 %v4832
    %v4878 = vunpack.c.l.b16 %v4833
    %v4879 = vunpack.c.h.b16 %v4833
    %v4880 = vunpack.c.l.b16 %v4834
    %v4881 = vunpack.c.h.b16 %v4834
    %v4882 = vunpack.c.l.b16 %v4835
    %v4883 = vunpack.c.h.b16 %v4835
    %v4884 = vpack.c.b16 %v4852, %v4852
    %v4885 = vpack.c.b16 %v4853, %v4853
    %v4886 = vpack.c.b16 %v4854, %v4854
    %v4887 = vpack.c.b16 %v4855, %v4855
    %v4888 = vpack.c.b16 %v4856, %v4856
    %v4889 = vpack.c.b16 %v4857, %v4857
    %v4890 = vpack.c.b16 %v4858, %v4858
    %v4891 = vpack.c.b16 %v4859, %v4859
    %v4892 = vpack.c.b16 %v4860, %v4860
    %v4893 = vpack.c.b16 %v4861, %v4861
    %v4894 = vpack.c.b16 %v4862, %v4862
    %v4895 = vpack.c.b16 %v4863, %v4863
    %v4896 = vpack.c.b16 %v4864, %v4864
    %v4897 = vpack.c.b16 %v4865, %v4865
    %v4898 = vpack.c.b16 %v4866, %v4866
    %v4899 = vpack.c.b16 %v4867, %v4867
    %v4900 = vpack.c.b16 %v4868, %v4868
    %v4901 = vpack.c.b16 %v4869, %v4869
    %v4902 = vpack.c.b16 %v4870, %v4870
    %v4903 = vpack.c.b16 %v4871, %v4871
    %v4904 = vpack.c.b16 %v4872, %v4872
    %v4905 = vpack.c.b16 %v4873, %v4873
    %v4906 = vpack.c.b16 %v4874, %v4874
    %v4907 = vpack.c.b16 %v4875, %v4875
    %v4908 = vpack.c.b16 %v4876, %v4876
    %v4909 = vpack.c.b16 %v4877, %v4877
    %v4910 = vpack.c.b16 %v4878, %v4878
    %v4911 = vpack.c.b16 %v4879, %v4879
    %v4912 = vpack.c.b16 %v4880, %v4880
    %v4913 = vpack.c.b16 %v4881, %v4881
    %v4914 = vpack.c.b16 %v4882, %v4882
    %v4915 = vpack.c.b16 %v4883, %v4883
    %4948 = vst [vmem:[%s4787 + $0x4] sm:$0xf] %v4884
    %4949 = vst [vmem:[%s4787 + $0x10] sm:$0xf] %v4885
    %4950 = vst [vmem:[%s4787 + $0x1c] sm:$0xf] %v4886
    %4951 = vst [vmem:[%s4787 + $0x28] sm:$0xf] %v4887
    %4952 = vst [vmem:[%s4787 + $0x34] sm:$0xf] %v4888
    %4953 = vst [vmem:[%s4787 + $0x40] sm:$0xf] %v4889
    %4954 = vst [vmem:[%s4787 + $0x4c] sm:$0xf] %v4890
    %4955 = vst [vmem:[%s4787 + $0x58] sm:$0xf] %v4891
    %4956 = vst [vmem:[%s4787 + $0x64] sm:$0xf] %v4892
    %4957 = vst [vmem:[%s4787 + $0x70] sm:$0xf] %v4893
    %4958 = vst [vmem:[%s4787 + $0x7c] sm:$0xf] %v4894
    %4959 = vst [vmem:[%s4787 + $0x88] sm:$0xf] %v4895
    %4960 = vst [vmem:[%s4787 + $0x94] sm:$0xf] %v4896
    %4961 = vst [vmem:[%s4787 + $0xa0] sm:$0xf] %v4897
    %4962 = vst [vmem:[%s4787 + $0xac] sm:$0xf] %v4898
    %4963 = vst [vmem:[%s4787 + $0xb8] sm:$0xf] %v4899
    %4964 = vst [vmem:[%s4787 + $0x1b4] sm:$0xf] %v4900
    %4965 = vst [vmem:[%s4787 + $0x1c0] sm:$0xf] %v4901
    %4966 = vst [vmem:[%s4787 + $0x1cc] sm:$0xf] %v4902
    %4967 = vst [vmem:[%s4787 + $0x1d8] sm:$0xf] %v4903
    %4968 = vst [vmem:[%s4787 + $0x1e4] sm:$0xf] %v4904
    %4969 = vst [vmem:[%s4787 + $0x1f0] sm:$0xf] %v4905
    %4970 = vst [vmem:[%s4787 + $0x1fc] sm:$0xf] %v4906
    %4971 = vst [vmem:[%s4787 + $0x208] sm:$0xf] %v4907
    %4972 = vst [vmem:[%s4787 + $0x214] sm:$0xf] %v4908
    %4973 = vst [vmem:[%s4787 + $0x220] sm:$0xf] %v4909
    %4974 = vst [vmem:[%s4787 + $0x22c] sm:$0xf] %v4910
    %4975 = vst [vmem:[%s4787 + $0x238] sm:$0xf] %v4911
    %4976 = vst [vmem:[%s4787 + $0x244] sm:$0xf] %v4912
    %4977 = vst [vmem:[%s4787 + $0x250] sm:$0xf] %v4913
    %4978 = vst [vmem:[%s4787 + $0x25c] sm:$0xf] %v4914
    %4979 = vst [vmem:[%s4787 + $0x268] sm:$0xf] %v4915
    %v4980 = vpack.c.bf16 %v4643, %v4565
    %v4981 = vpack.c.bf16 %v4644, %v4568
    %v4982 = vpack.c.bf16 %v4645, %v4571
    %v4983 = vpack.c.bf16 %v4646, %v4574
    %v4984 = vpack.c.bf16 %v4647, %v4577
    %v4985 = vpack.c.bf16 %v4648, %v4580
    %v4986 = vpack.c.bf16 %v4649, %v4583
    %v4987 = vpack.c.bf16 %v4650, %v4586
    %v4988 = vpack.c.bf16 %v4651, %v4589
    %v4989 = vpack.c.bf16 %v4652, %v4592
    %v4990 = vpack.c.bf16 %v4653, %v4595
    %v4991 = vpack.c.bf16 %v4654, %v4598
    %v4992 = vpack.c.bf16 %v4655, %v4601
    %v4993 = vpack.c.bf16 %v4656, %v4604
    %v4994 = vpack.c.bf16 %v4657, %v4607
    %v4995 = vpack.c.bf16 %v4658, %v4610
    %v5012 = vunpack.c.l.b16 %v4980
    %v5013 = vunpack.c.h.b16 %v4980
    %v5014 = vunpack.c.l.b16 %v4981
    %v5015 = vunpack.c.h.b16 %v4981
    %v5016 = vunpack.c.l.b16 %v4982
    %v5017 = vunpack.c.h.b16 %v4982
    %v5018 = vunpack.c.l.b16 %v4983
    %v5019 = vunpack.c.h.b16 %v4983
    %v5020 = vunpack.c.l.b16 %v4984
    %v5021 = vunpack.c.h.b16 %v4984
    %v5022 = vunpack.c.l.b16 %v4985
    %v5023 = vunpack.c.h.b16 %v4985
    %v5024 = vunpack.c.l.b16 %v4986
    %v5025 = vunpack.c.h.b16 %v4986
    %v5026 = vunpack.c.l.b16 %v4987
    %v5027 = vunpack.c.h.b16 %v4987
    %v5028 = vunpack.c.l.b16 %v4988
    %v5029 = vunpack.c.h.b16 %v4988
    %v5030 = vunpack.c.l.b16 %v4989
    %v5031 = vunpack.c.h.b16 %v4989
    %v5032 = vunpack.c.l.b16 %v4990
    %v5033 = vunpack.c.h.b16 %v4990
    %v5034 = vunpack.c.l.b16 %v4991
    %v5035 = vunpack.c.h.b16 %v4991
    %v5036 = vunpack.c.l.b16 %v4992
    %v5037 = vunpack.c.h.b16 %v4992
    %v5038 = vunpack.c.l.b16 %v4993
    %v5039 = vunpack.c.h.b16 %v4993
    %v5040 = vunpack.c.l.b16 %v4994
    %v5041 = vunpack.c.h.b16 %v4994
    %v5042 = vunpack.c.l.b16 %v4995
    %v5043 = vunpack.c.h.b16 %v4995
    %v5044 = vpack.c.b16 %v5012, %v5012
    %v5045 = vpack.c.b16 %v5013, %v5013
    %v5046 = vpack.c.b16 %v5014, %v5014
    %v5047 = vpack.c.b16 %v5015, %v5015
    %v5048 = vpack.c.b16 %v5016, %v5016
    %v5049 = vpack.c.b16 %v5017, %v5017
    %v5050 = vpack.c.b16 %v5018, %v5018
    %v5051 = vpack.c.b16 %v5019, %v5019
    %v5052 = vpack.c.b16 %v5020, %v5020
    %v5053 = vpack.c.b16 %v5021, %v5021
    %v5054 = vpack.c.b16 %v5022, %v5022
    %v5055 = vpack.c.b16 %v5023, %v5023
    %v5056 = vpack.c.b16 %v5024, %v5024
    %v5057 = vpack.c.b16 %v5025, %v5025
    %v5058 = vpack.c.b16 %v5026, %v5026
    %v5059 = vpack.c.b16 %v5027, %v5027
    %v5060 = vpack.c.b16 %v5028, %v5028
    %v5061 = vpack.c.b16 %v5029, %v5029
    %v5062 = vpack.c.b16 %v5030, %v5030
    %v5063 = vpack.c.b16 %v5031, %v5031
    %v5064 = vpack.c.b16 %v5032, %v5032
    %v5065 = vpack.c.b16 %v5033, %v5033
    %v5066 = vpack.c.b16 %v5034, %v5034
    %v5067 = vpack.c.b16 %v5035, %v5035
    %v5068 = vpack.c.b16 %v5036, %v5036
    %v5069 = vpack.c.b16 %v5037, %v5037
    %v5070 = vpack.c.b16 %v5038, %v5038
    %v5071 = vpack.c.b16 %v5039, %v5039
    %v5072 = vpack.c.b16 %v5040, %v5040
    %v5073 = vpack.c.b16 %v5041, %v5041
    %v5074 = vpack.c.b16 %v5042, %v5042
    %v5075 = vpack.c.b16 %v5043, %v5043
    %5108 = vst [vmem:[%s4787 + $0x8] sm:$0xf] %v5044
    %5109 = vst [vmem:[%s4787 + $0x14] sm:$0xf] %v5045
    %5110 = vst [vmem:[%s4787 + $0x20] sm:$0xf] %v5046
    %5111 = vst [vmem:[%s4787 + $0x2c] sm:$0xf] %v5047
    %5112 = vst [vmem:[%s4787 + $0x38] sm:$0xf] %v5048
    %5113 = vst [vmem:[%s4787 + $0x44] sm:$0xf] %v5049
    %5114 = vst [vmem:[%s4787 + $0x50] sm:$0xf] %v5050
    %5115 = vst [vmem:[%s4787 + $0x5c] sm:$0xf] %v5051
    %5116 = vst [vmem:[%s4787 + $0x68] sm:$0xf] %v5052
    %5117 = vst [vmem:[%s4787 + $0x74] sm:$0xf] %v5053
    %5118 = vst [vmem:[%s4787 + $0x80] sm:$0xf] %v5054
    %5119 = vst [vmem:[%s4787 + $0x8c] sm:$0xf] %v5055
    %5120 = vst [vmem:[%s4787 + $0x98] sm:$0xf] %v5056
    %5121 = vst [vmem:[%s4787 + $0xa4] sm:$0xf] %v5057
    %5122 = vst [vmem:[%s4787 + $0xb0] sm:$0xf] %v5058
    %5123 = vst [vmem:[%s4787 + $0xbc] sm:$0xf] %v5059
    %5124 = vst [vmem:[%s4787 + $0x1b8] sm:$0xf] %v5060
    %5125 = vst [vmem:[%s4787 + $0x1c4] sm:$0xf] %v5061
    %5126 = vst [vmem:[%s4787 + $0x1d0] sm:$0xf] %v5062
    %5127 = vst [vmem:[%s4787 + $0x1dc] sm:$0xf] %v5063
    %5128 = vst [vmem:[%s4787 + $0x1e8] sm:$0xf] %v5064
    %5129 = vst [vmem:[%s4787 + $0x1f4] sm:$0xf] %v5065
    %5130 = vst [vmem:[%s4787 + $0x200] sm:$0xf] %v5066
    %5131 = vst [vmem:[%s4787 + $0x20c] sm:$0xf] %v5067
    %5132 = vst [vmem:[%s4787 + $0x218] sm:$0xf] %v5068
    %5133 = vst [vmem:[%s4787 + $0x224] sm:$0xf] %v5069
    %5134 = vst [vmem:[%s4787 + $0x230] sm:$0xf] %v5070
    %5135 = vst [vmem:[%s4787 + $0x23c] sm:$0xf] %v5071
    %5136 = vst [vmem:[%s4787 + $0x248] sm:$0xf] %v5072
    %5137 = vst [vmem:[%s4787 + $0x254] sm:$0xf] %v5073
    %5138 = vst [vmem:[%s4787 + $0x260] sm:$0xf] %v5074
    %5139 = vst [vmem:[%s4787 + $0x26c] sm:$0xf] %v5075
    %s5140 = scalar_lea.vmem [#allocation2], 192
    %v5141 = vld [vmem:[%s5140] sm:$0xff]
    %v5142 = vld [vmem:[%s5140 + $0x8] sm:$0xf]
    %v5143 = vld [vmem:[%s5140 + $0xc] sm:$0xff]
    %v5144 = vld [vmem:[%s5140 + $0x14] sm:$0xf]
    %v5145 = vld [vmem:[%s5140 + $0x18] sm:$0xff]
    %v5146 = vld [vmem:[%s5140 + $0x20] sm:$0xf]
    %v5147 = vld [vmem:[%s5140 + $0x24] sm:$0xff]
    %v5148 = vld [vmem:[%s5140 + $0x2c] sm:$0xf]
    %v5149 = vld [vmem:[%s5140 + $0x30] sm:$0xff]
    %v5150 = vld [vmem:[%s5140 + $0x38] sm:$0xf]
    %v5151 = vld [vmem:[%s5140 + $0x3c] sm:$0xff]
    %v5152 = vld [vmem:[%s5140 + $0x44] sm:$0xf]
    %v5153 = vld [vmem:[%s5140 + $0x48] sm:$0xff]
    %v5154 = vld [vmem:[%s5140 + $0x50] sm:$0xf]
    %v5155 = vld [vmem:[%s5140 + $0x54] sm:$0xff]
    %v5156 = vld [vmem:[%s5140 + $0x5c] sm:$0xf]
    %v5157 = vld [vmem:[%s5140 + $0x60] sm:$0xff]
    %v5158 = vld [vmem:[%s5140 + $0x68] sm:$0xf]
    %v5159 = vld [vmem:[%s5140 + $0x6c] sm:$0xff]
    %v5160 = vld [vmem:[%s5140 + $0x74] sm:$0xf]
    %v5161 = vld [vmem:[%s5140 + $0x78] sm:$0xff]
    %v5162 = vld [vmem:[%s5140 + $0x80] sm:$0xf]
    %v5163 = vld [vmem:[%s5140 + $0x84] sm:$0xff]
    %v5164 = vld [vmem:[%s5140 + $0x8c] sm:$0xf]
    %v5165 = vld [vmem:[%s5140 + $0x90] sm:$0xff]
    %v5166 = vld [vmem:[%s5140 + $0x98] sm:$0xf]
    %v5167 = vld [vmem:[%s5140 + $0x9c] sm:$0xff]
    %v5168 = vld [vmem:[%s5140 + $0xa4] sm:$0xf]
    %v5169 = vld [vmem:[%s5140 + $0xa8] sm:$0xff]
    %v5170 = vld [vmem:[%s5140 + $0xb0] sm:$0xf]
    %v5171 = vld [vmem:[%s5140 + $0xb4] sm:$0xff]
    %v5172 = vld [vmem:[%s5140 + $0xbc] sm:$0xf]
    %v5173 = vld [vmem:[%s5140 + $0x1b0] sm:$0xff]
    %v5174 = vld [vmem:[%s5140 + $0x1b8] sm:$0xf]
    %v5175 = vld [vmem:[%s5140 + $0x1bc] sm:$0xff]
    %v5176 = vld [vmem:[%s5140 + $0x1c4] sm:$0xf]
    %v5177 = vld [vmem:[%s5140 + $0x1c8] sm:$0xff]
    %v5178 = vld [vmem:[%s5140 + $0x1d0] sm:$0xf]
    %v5179 = vld [vmem:[%s5140 + $0x1d4] sm:$0xff]
    %v5180 = vld [vmem:[%s5140 + $0x1dc] sm:$0xf]
    %v5181 = vld [vmem:[%s5140 + $0x1e0] sm:$0xff]
    %v5182 = vld [vmem:[%s5140 + $0x1e8] sm:$0xf]
    %v5183 = vld [vmem:[%s5140 + $0x1ec] sm:$0xff]
    %v5184 = vld [vmem:[%s5140 + $0x1f4] sm:$0xf]
    %v5185 = vld [vmem:[%s5140 + $0x1f8] sm:$0xff]
    %v5186 = vld [vmem:[%s5140 + $0x200] sm:$0xf]
    %v5187 = vld [vmem:[%s5140 + $0x204] sm:$0xff]
    %v5188 = vld [vmem:[%s5140 + $0x20c] sm:$0xf]
    %v5189 = vld [vmem:[%s5140 + $0x210] sm:$0xff]
    %v5190 = vld [vmem:[%s5140 + $0x218] sm:$0xf]
    %v5191 = vld [vmem:[%s5140 + $0x21c] sm:$0xff]
    %v5192 = vld [vmem:[%s5140 + $0x224] sm:$0xf]
    %v5193 = vld [vmem:[%s5140 + $0x228] sm:$0xff]
    %v5194 = vld [vmem:[%s5140 + $0x230] sm:$0xf]
    %v5195 = vld [vmem:[%s5140 + $0x234] sm:$0xff]
    %v5196 = vld [vmem:[%s5140 + $0x23c] sm:$0xf]
    %v5197 = vld [vmem:[%s5140 + $0x240] sm:$0xff]
    %v5198 = vld [vmem:[%s5140 + $0x248] sm:$0xf]
    %v5199 = vld [vmem:[%s5140 + $0x24c] sm:$0xff]
    %v5200 = vld [vmem:[%s5140 + $0x254] sm:$0xf]
    %v5201 = vld [vmem:[%s5140 + $0x258] sm:$0xff]
    %v5202 = vld [vmem:[%s5140 + $0x260] sm:$0xf]
    %v5203 = vld [vmem:[%s5140 + $0x264] sm:$0xff]
    %v5204 = vld [vmem:[%s5140 + $0x26c] sm:$0xf]
    %v5205 = vld [vmem:[#allocation9] sm:$0xf]
    %v5206 = vld [vmem:[#allocation9 + $0x4] sm:$0xf]
    %v5207 = vld [vmem:[#allocation9 + $0x8] sm:$0xf]
    %v5208 = vld [vmem:[#allocation9 + $0xc] sm:$0xf]
    %v5209 = vld [vmem:[#allocation9 + $0x10] sm:$0xf]
    %v5210 = vld [vmem:[#allocation9 + $0x14] sm:$0xf]
    %v5211 = vld [vmem:[#allocation9 + $0x18] sm:$0xf]
    %v5212 = vld [vmem:[#allocation9 + $0x1c] sm:$0xf]
    %v5213 = vld [vmem:[#allocation9 + $0x20] sm:$0xf]
    %v5214 = vld [vmem:[#allocation9 + $0x24] sm:$0xf]
    %v5215 = vld [vmem:[#allocation9 + $0x28] sm:$0xf]
    %v5216 = vld [vmem:[#allocation9 + $0x2c] sm:$0xf]
    %v5217 = vld [vmem:[#allocation9 + $0x30] sm:$0xf]
    %v5218 = vld [vmem:[#allocation9 + $0x34] sm:$0xf]
    %v5219 = vld [vmem:[#allocation9 + $0x38] sm:$0xf]
    %v5220 = vld [vmem:[#allocation9 + $0x3c] sm:$0xf]
    %v5221 = vld [vmem:[#allocation9 + $0x40] sm:$0xf]
    %v5222 = vld [vmem:[#allocation9 + $0x44] sm:$0xf]
    %v5223 = vld [vmem:[#allocation9 + $0x48] sm:$0xf]
    %v5224 = vld [vmem:[#allocation9 + $0x4c] sm:$0xf]
    %v5225 = vld [vmem:[#allocation9 + $0x50] sm:$0xf]
    %v5226 = vld [vmem:[#allocation9 + $0x54] sm:$0xf]
    %v5227 = vld [vmem:[#allocation9 + $0x58] sm:$0xf]
    %v5228 = vld [vmem:[#allocation9 + $0x5c] sm:$0xf]
    %v5229 = vld [vmem:[#allocation9 + $0x60] sm:$0xf]
    %v5230 = vld [vmem:[#allocation9 + $0x64] sm:$0xf]
    %v5231 = vld [vmem:[#allocation9 + $0x68] sm:$0xf]
    %v5232 = vld [vmem:[#allocation9 + $0x6c] sm:$0xf]
    %v5233 = vld [vmem:[#allocation9 + $0x70] sm:$0xf]
    %v5234 = vld [vmem:[#allocation9 + $0x74] sm:$0xf]
    %v5235 = vld [vmem:[#allocation9 + $0x78] sm:$0xf]
    %v5236 = vld [vmem:[#allocation9 + $0x7c] sm:$0xf]
    %v5237 = vld [vmem:[#allocation9 + $0x80] sm:$0xf]
    %v5238 = vld [vmem:[#allocation9 + $0x84] sm:$0xf]
    %v5239 = vld [vmem:[#allocation9 + $0x88] sm:$0xf]
    %v5240 = vld [vmem:[#allocation9 + $0x8c] sm:$0xf]
    %v5241 = vld [vmem:[#allocation9 + $0x90] sm:$0xf]
    %v5242 = vld [vmem:[#allocation9 + $0x94] sm:$0xf]
    %v5243 = vld [vmem:[#allocation9 + $0x98] sm:$0xf]
    %v5244 = vld [vmem:[#allocation9 + $0x9c] sm:$0xf]
    %v5245 = vld [vmem:[#allocation9 + $0xa0] sm:$0xf]
    %v5246 = vld [vmem:[#allocation9 + $0xa4] sm:$0xf]
    %v5247 = vld [vmem:[#allocation9 + $0xa8] sm:$0xf]
    %v5248 = vld [vmem:[#allocation9 + $0xac] sm:$0xf]
    %v5249 = vld [vmem:[#allocation9 + $0xb0] sm:$0xf]
    %v5250 = vld [vmem:[#allocation9 + $0xb4] sm:$0xf]
    %v5251 = vld [vmem:[#allocation9 + $0xb8] sm:$0xf]
    %v5252 = vld [vmem:[#allocation9 + $0xbc] sm:$0xf]
    %v5253 = vld [vmem:[%s1373] sm:$0xff]
    %v5254 = vld [vmem:[%s1373 + $0x8] sm:$0xf]
    %v5255 = vld [vmem:[%s1373 + $0xc] sm:$0xff]
    %v5256 = vld [vmem:[%s1373 + $0x14] sm:$0xf]
    %v5257 = vld [vmem:[%s1373 + $0x18] sm:$0xff]
    %v5258 = vld [vmem:[%s1373 + $0x20] sm:$0xf]
    %v5259 = vld [vmem:[%s1373 + $0x24] sm:$0xff]
    %v5260 = vld [vmem:[%s1373 + $0x2c] sm:$0xf]
    %v5261 = vld [vmem:[%s1373 + $0x30] sm:$0xff]
    %v5262 = vld [vmem:[%s1373 + $0x38] sm:$0xf]
    %v5263 = vld [vmem:[%s1373 + $0x3c] sm:$0xff]
    %v5264 = vld [vmem:[%s1373 + $0x44] sm:$0xf]
    %v5265 = vld [vmem:[%s1373 + $0x48] sm:$0xff]
    %v5266 = vld [vmem:[%s1373 + $0x50] sm:$0xf]
    %v5267 = vld [vmem:[%s1373 + $0x54] sm:$0xff]
    %v5268 = vld [vmem:[%s1373 + $0x5c] sm:$0xf]
    %v5269 = vld [vmem:[%s1373 + $0x60] sm:$0xff]
    %v5270 = vld [vmem:[%s1373 + $0x68] sm:$0xf]
    %v5271 = vld [vmem:[%s1373 + $0x6c] sm:$0xff]
    %v5272 = vld [vmem:[%s1373 + $0x74] sm:$0xf]
    %v5273 = vld [vmem:[%s1373 + $0x78] sm:$0xff]
    %v5274 = vld [vmem:[%s1373 + $0x80] sm:$0xf]
    %v5275 = vld [vmem:[%s1373 + $0x84] sm:$0xff]
    %v5276 = vld [vmem:[%s1373 + $0x8c] sm:$0xf]
    %v5277 = vld [vmem:[%s1373 + $0x90] sm:$0xff]
    %v5278 = vld [vmem:[%s1373 + $0x98] sm:$0xf]
    %v5279 = vld [vmem:[%s1373 + $0x9c] sm:$0xff]
    %v5280 = vld [vmem:[%s1373 + $0xa4] sm:$0xf]
    %v5281 = vld [vmem:[%s1373 + $0xa8] sm:$0xff]
    %v5282 = vld [vmem:[%s1373 + $0xb0] sm:$0xf]
    %v5283 = vld [vmem:[%s1373 + $0xb4] sm:$0xff]
    %v5284 = vld [vmem:[%s1373 + $0xbc] sm:$0xf]
    %v5285 = vld [vmem:[%s1373 + $0x1b0] sm:$0xff]
    %v5286 = vld [vmem:[%s1373 + $0x1b8] sm:$0xf]
    %v5287 = vld [vmem:[%s1373 + $0x1bc] sm:$0xff]
    %v5288 = vld [vmem:[%s1373 + $0x1c4] sm:$0xf]
    %v5289 = vld [vmem:[%s1373 + $0x1c8] sm:$0xff]
    %v5290 = vld [vmem:[%s1373 + $0x1d0] sm:$0xf]
    %v5291 = vld [vmem:[%s1373 + $0x1d4] sm:$0xff]
    %v5292 = vld [vmem:[%s1373 + $0x1dc] sm:$0xf]
    %v5293 = vld [vmem:[%s1373 + $0x1e0] sm:$0xff]
    %v5294 = vld [vmem:[%s1373 + $0x1e8] sm:$0xf]
    %v5295 = vld [vmem:[%s1373 + $0x1ec] sm:$0xff]
    %v5296 = vld [vmem:[%s1373 + $0x1f4] sm:$0xf]
    %v5297 = vld [vmem:[%s1373 + $0x1f8] sm:$0xff]
    %v5298 = vld [vmem:[%s1373 + $0x200] sm:$0xf]
    %v5299 = vld [vmem:[%s1373 + $0x204] sm:$0xff]
    %v5300 = vld [vmem:[%s1373 + $0x20c] sm:$0xf]
    %v5301 = vld [vmem:[%s1373 + $0x210] sm:$0xff]
    %v5302 = vld [vmem:[%s1373 + $0x218] sm:$0xf]
    %v5303 = vld [vmem:[%s1373 + $0x21c] sm:$0xff]
    %v5304 = vld [vmem:[%s1373 + $0x224] sm:$0xf]
    %v5305 = vld [vmem:[%s1373 + $0x228] sm:$0xff]
    %v5306 = vld [vmem:[%s1373 + $0x230] sm:$0xf]
    %v5307 = vld [vmem:[%s1373 + $0x234] sm:$0xff]
    %v5308 = vld [vmem:[%s1373 + $0x23c] sm:$0xf]
    %v5309 = vld [vmem:[%s1373 + $0x240] sm:$0xff]
    %v5310 = vld [vmem:[%s1373 + $0x248] sm:$0xf]
    %v5311 = vld [vmem:[%s1373 + $0x24c] sm:$0xff]
    %v5312 = vld [vmem:[%s1373 + $0x254] sm:$0xf]
    %v5313 = vld [vmem:[%s1373 + $0x258] sm:$0xff]
    %v5314 = vld [vmem:[%s1373 + $0x260] sm:$0xf]
    %v5315 = vld [vmem:[%s1373 + $0x264] sm:$0xff]
    %v5316 = vld [vmem:[%s1373 + $0x26c] sm:$0xf]
    %v5317 = vld [vmem:[%s1902] sm:$0xf]
    %v5318 = vld [vmem:[%s1902 + $0x4] sm:$0xf]
    %v5319 = vld [vmem:[%s1902 + $0x8] sm:$0xf]
    %v5320 = vld [vmem:[%s1902 + $0xc] sm:$0xf]
    %v5321 = vld [vmem:[%s1902 + $0x10] sm:$0xf]
    %v5322 = vld [vmem:[%s1902 + $0x14] sm:$0xf]
    %v5323 = vld [vmem:[%s1902 + $0x18] sm:$0xf]
    %v5324 = vld [vmem:[%s1902 + $0x1c] sm:$0xf]
    %v5325 = vld [vmem:[%s1902 + $0x20] sm:$0xf]
    %v5326 = vld [vmem:[%s1902 + $0x24] sm:$0xf]
    %v5327 = vld [vmem:[%s1902 + $0x28] sm:$0xf]
    %v5328 = vld [vmem:[%s1902 + $0x2c] sm:$0xf]
    %v5329 = vld [vmem:[%s1902 + $0x30] sm:$0xf]
    %v5330 = vld [vmem:[%s1902 + $0x34] sm:$0xf]
    %v5331 = vld [vmem:[%s1902 + $0x38] sm:$0xf]
    %v5332 = vld [vmem:[%s1902 + $0x3c] sm:$0xf]
    %v5333 = vld [vmem:[%s1902 + $0x40] sm:$0xf]
    %v5334 = vld [vmem:[%s1902 + $0x44] sm:$0xf]
    %v5335 = vld [vmem:[%s1902 + $0x48] sm:$0xf]
    %v5336 = vld [vmem:[%s1902 + $0x4c] sm:$0xf]
    %v5337 = vld [vmem:[%s1902 + $0x50] sm:$0xf]
    %v5338 = vld [vmem:[%s1902 + $0x54] sm:$0xf]
    %v5339 = vld [vmem:[%s1902 + $0x58] sm:$0xf]
    %v5340 = vld [vmem:[%s1902 + $0x5c] sm:$0xf]
    %v5341 = vld [vmem:[%s1902 + $0x60] sm:$0xf]
    %v5342 = vld [vmem:[%s1902 + $0x64] sm:$0xf]
    %v5343 = vld [vmem:[%s1902 + $0x68] sm:$0xf]
    %v5344 = vld [vmem:[%s1902 + $0x6c] sm:$0xf]
    %v5345 = vld [vmem:[%s1902 + $0x70] sm:$0xf]
    %v5346 = vld [vmem:[%s1902 + $0x74] sm:$0xf]
    %v5347 = vld [vmem:[%s1902 + $0x78] sm:$0xf]
    %v5348 = vld [vmem:[%s1902 + $0x7c] sm:$0xf]
    %v5349 = vld [vmem:[%s1902 + $0x80] sm:$0xf]
    %v5350 = vld [vmem:[%s1902 + $0x84] sm:$0xf]
    %v5351 = vld [vmem:[%s1902 + $0x88] sm:$0xf]
    %v5352 = vld [vmem:[%s1902 + $0x8c] sm:$0xf]
    %v5353 = vld [vmem:[%s1902 + $0x90] sm:$0xf]
    %v5354 = vld [vmem:[%s1902 + $0x94] sm:$0xf]
    %v5355 = vld [vmem:[%s1902 + $0x98] sm:$0xf]
    %v5356 = vld [vmem:[%s1902 + $0x9c] sm:$0xf]
    %v5357 = vld [vmem:[%s1902 + $0xa0] sm:$0xf]
    %v5358 = vld [vmem:[%s1902 + $0xa4] sm:$0xf]
    %v5359 = vld [vmem:[%s1902 + $0xa8] sm:$0xf]
    %v5360 = vld [vmem:[%s1902 + $0xac] sm:$0xf]
    %v5361 = vld [vmem:[%s1902 + $0xb0] sm:$0xf]
    %v5362 = vld [vmem:[%s1902 + $0xb4] sm:$0xf]
    %v5363 = vld [vmem:[%s1902 + $0xb8] sm:$0xf]
    %v5364 = vld [vmem:[%s1902 + $0xbc] sm:$0xf]
    %v5429 = vunpack.c.l.b16 %v5253
    %v5430 = vunpack.c.h.b16 %v5253
    %v5431 = vunpack.c.l.b16 %v5254
    %v5432 = vunpack.c.l.b16 %v5255
    %v5433 = vunpack.c.h.b16 %v5255
    %v5434 = vunpack.c.l.b16 %v5256
    %v5435 = vunpack.c.l.b16 %v5257
    %v5436 = vunpack.c.h.b16 %v5257
    %v5437 = vunpack.c.l.b16 %v5258
    %v5438 = vunpack.c.l.b16 %v5259
    %v5439 = vunpack.c.h.b16 %v5259
    %v5440 = vunpack.c.l.b16 %v5260
    %v5441 = vunpack.c.l.b16 %v5261
    %v5442 = vunpack.c.h.b16 %v5261
    %v5443 = vunpack.c.l.b16 %v5262
    %v5444 = vunpack.c.l.b16 %v5263
    %v5445 = vunpack.c.h.b16 %v5263
    %v5446 = vunpack.c.l.b16 %v5264
    %v5447 = vunpack.c.l.b16 %v5265
    %v5448 = vunpack.c.h.b16 %v5265
    %v5449 = vunpack.c.l.b16 %v5266
    %v5450 = vunpack.c.l.b16 %v5267
    %v5451 = vunpack.c.h.b16 %v5267
    %v5452 = vunpack.c.l.b16 %v5268
    %v5453 = vunpack.c.l.b16 %v5269
    %v5454 = vunpack.c.h.b16 %v5269
    %v5455 = vunpack.c.l.b16 %v5270
    %v5456 = vunpack.c.l.b16 %v5271
    %v5457 = vunpack.c.h.b16 %v5271
    %v5458 = vunpack.c.l.b16 %v5272
    %v5459 = vunpack.c.l.b16 %v5273
    %v5460 = vunpack.c.h.b16 %v5273
    %v5461 = vunpack.c.l.b16 %v5274
    %v5462 = vunpack.c.l.b16 %v5275
    %v5463 = vunpack.c.h.b16 %v5275
    %v5464 = vunpack.c.l.b16 %v5276
    %v5465 = vunpack.c.l.b16 %v5277
    %v5466 = vunpack.c.h.b16 %v5277
    %v5467 = vunpack.c.l.b16 %v5278
    %v5468 = vunpack.c.l.b16 %v5279
    %v5469 = vunpack.c.h.b16 %v5279
    %v5470 = vunpack.c.l.b16 %v5280
    %v5471 = vunpack.c.l.b16 %v5281
    %v5472 = vunpack.c.h.b16 %v5281
    %v5473 = vunpack.c.l.b16 %v5282
    %v5474 = vunpack.c.l.b16 %v5283
    %v5475 = vunpack.c.h.b16 %v5283
    %v5476 = vunpack.c.l.b16 %v5284
    %v5477 = vunpack.c.l.b16 %v5285
    %v5478 = vunpack.c.h.b16 %v5285
    %v5479 = vunpack.c.l.b16 %v5286
    %v5480 = vunpack.c.l.b16 %v5287
    %v5481 = vunpack.c.h.b16 %v5287
    %v5482 = vunpack.c.l.b16 %v5288
    %v5483 = vunpack.c.l.b16 %v5289
    %v5484 = vunpack.c.h.b16 %v5289
    %v5485 = vunpack.c.l.b16 %v5290
    %v5486 = vunpack.c.l.b16 %v5291
    %v5487 = vunpack.c.h.b16 %v5291
    %v5488 = vunpack.c.l.b16 %v5292
    %v5489 = vunpack.c.l.b16 %v5293
    %v5490 = vunpack.c.h.b16 %v5293
    %v5491 = vunpack.c.l.b16 %v5294
    %v5492 = vunpack.c.l.b16 %v5295
    %v5493 = vunpack.c.h.b16 %v5295
    %v5494 = vunpack.c.l.b16 %v5296
    %v5495 = vunpack.c.l.b16 %v5297
    %v5496 = vunpack.c.h.b16 %v5297
    %v5497 = vunpack.c.l.b16 %v5298
    %v5498 = vunpack.c.l.b16 %v5299
    %v5499 = vunpack.c.h.b16 %v5299
    %v5500 = vunpack.c.l.b16 %v5300
    %v5501 = vunpack.c.l.b16 %v5301
    %v5502 = vunpack.c.h.b16 %v5301
    %v5503 = vunpack.c.l.b16 %v5302
    %v5504 = vunpack.c.l.b16 %v5303
    %v5505 = vunpack.c.h.b16 %v5303
    %v5506 = vunpack.c.l.b16 %v5304
    %v5507 = vunpack.c.l.b16 %v5305
    %v5508 = vunpack.c.h.b16 %v5305
    %v5509 = vunpack.c.l.b16 %v5306
    %v5510 = vunpack.c.l.b16 %v5307
    %v5511 = vunpack.c.h.b16 %v5307
    %v5512 = vunpack.c.l.b16 %v5308
    %v5513 = vunpack.c.l.b16 %v5309
    %v5514 = vunpack.c.h.b16 %v5309
    %v5515 = vunpack.c.l.b16 %v5310
    %v5516 = vunpack.c.l.b16 %v5311
    %v5517 = vunpack.c.h.b16 %v5311
    %v5518 = vunpack.c.l.b16 %v5312
    %v5519 = vunpack.c.l.b16 %v5313
    %v5520 = vunpack.c.h.b16 %v5313
    %v5521 = vunpack.c.l.b16 %v5314
    %v5522 = vunpack.c.l.b16 %v5315
    %v5523 = vunpack.c.h.b16 %v5315
    %v5524 = vunpack.c.l.b16 %v5316
    %v5525 = vpack.c.b16 %v5432, %v5429
    %v5526 = vpack.c.b16 %v5433, %v5430
    %v5527 = vpack.c.b16 %v5434, %v5431
    %v5528 = vpack.c.b16 %v5438, %v5435
    %v5529 = vpack.c.b16 %v5439, %v5436
    %v5530 = vpack.c.b16 %v5440, %v5437
    %v5531 = vpack.c.b16 %v5444, %v5441
    %v5532 = vpack.c.b16 %v5445, %v5442
    %v5533 = vpack.c.b16 %v5446, %v5443
    %v5534 = vpack.c.b16 %v5450, %v5447
    %v5535 = vpack.c.b16 %v5451, %v5448
    %v5536 = vpack.c.b16 %v5452, %v5449
    %v5537 = vpack.c.b16 %v5456, %v5453
    %v5538 = vpack.c.b16 %v5457, %v5454
    %v5539 = vpack.c.b16 %v5458, %v5455
    %v5540 = vpack.c.b16 %v5462, %v5459
    %v5541 = vpack.c.b16 %v5463, %v5460
    %v5542 = vpack.c.b16 %v5464, %v5461
    %v5543 = vpack.c.b16 %v5468, %v5465
    %v5544 = vpack.c.b16 %v5469, %v5466
    %v5545 = vpack.c.b16 %v5470, %v5467
    %v5546 = vpack.c.b16 %v5474, %v5471
    %v5547 = vpack.c.b16 %v5475, %v5472
    %v5548 = vpack.c.b16 %v5476, %v5473
    %v5549 = vpack.c.b16 %v5480, %v5477
    %v5550 = vpack.c.b16 %v5481, %v5478
    %v5551 = vpack.c.b16 %v5482, %v5479
    %v5552 = vpack.c.b16 %v5486, %v5483
    %v5553 = vpack.c.b16 %v5487, %v5484
    %v5554 = vpack.c.b16 %v5488, %v5485
    %v5555 = vpack.c.b16 %v5492, %v5489
    %v5556 = vpack.c.b16 %v5493, %v5490
    %v5557 = vpack.c.b16 %v5494, %v5491
    %v5558 = vpack.c.b16 %v5498, %v5495
    %v5559 = vpack.c.b16 %v5499, %v5496
    %v5560 = vpack.c.b16 %v5500, %v5497
    %v5561 = vpack.c.b16 %v5504, %v5501
    %v5562 = vpack.c.b16 %v5505, %v5502
    %v5563 = vpack.c.b16 %v5506, %v5503
    %v5564 = vpack.c.b16 %v5510, %v5507
    %v5565 = vpack.c.b16 %v5511, %v5508
    %v5566 = vpack.c.b16 %v5512, %v5509
    %v5567 = vpack.c.b16 %v5516, %v5513
    %v5568 = vpack.c.b16 %v5517, %v5514
    %v5569 = vpack.c.b16 %v5518, %v5515
    %v5570 = vpack.c.b16 %v5522, %v5519
    %v5571 = vpack.c.b16 %v5523, %v5520
    %v5572 = vpack.c.b16 %v5524, %v5521
    %v5669 = vunpack.c.l.b16 %v5317
    %v5670 = vunpack.c.l.b16 %v5318
    %v5671 = vunpack.c.l.b16 %v5319
    %v5672 = vunpack.c.l.b16 %v5320
    %v5673 = vunpack.c.l.b16 %v5321
    %v5674 = vunpack.c.l.b16 %v5322
    %v5675 = vunpack.c.l.b16 %v5323
    %v5676 = vunpack.c.l.b16 %v5324
    %v5677 = vunpack.c.l.b16 %v5325
    %v5678 = vunpack.c.l.b16 %v5326
    %v5679 = vunpack.c.l.b16 %v5327
    %v5680 = vunpack.c.l.b16 %v5328
    %v5681 = vunpack.c.l.b16 %v5329
    %v5682 = vunpack.c.l.b16 %v5330
    %v5683 = vunpack.c.l.b16 %v5331
    %v5684 = vunpack.c.l.b16 %v5332
    %v5685 = vunpack.c.l.b16 %v5333
    %v5686 = vunpack.c.l.b16 %v5334
    %v5687 = vunpack.c.l.b16 %v5335
    %v5688 = vunpack.c.l.b16 %v5336
    %v5689 = vunpack.c.l.b16 %v5337
    %v5690 = vunpack.c.l.b16 %v5338
    %v5691 = vunpack.c.l.b16 %v5339
    %v5692 = vunpack.c.l.b16 %v5340
    %v5693 = vunpack.c.l.b16 %v5341
    %v5694 = vunpack.c.l.b16 %v5342
    %v5695 = vunpack.c.l.b16 %v5343
    %v5696 = vunpack.c.l.b16 %v5344
    %v5697 = vunpack.c.l.b16 %v5345
    %v5698 = vunpack.c.l.b16 %v5346
    %v5699 = vunpack.c.l.b16 %v5347
    %v5700 = vunpack.c.l.b16 %v5348
    %v5701 = vunpack.c.l.b16 %v5349
    %v5702 = vunpack.c.l.b16 %v5350
    %v5703 = vunpack.c.l.b16 %v5351
    %v5704 = vunpack.c.l.b16 %v5352
    %v5705 = vunpack.c.l.b16 %v5353
    %v5706 = vunpack.c.l.b16 %v5354
    %v5707 = vunpack.c.l.b16 %v5355
    %v5708 = vunpack.c.l.b16 %v5356
    %v5709 = vunpack.c.l.b16 %v5357
    %v5710 = vunpack.c.l.b16 %v5358
    %v5711 = vunpack.c.l.b16 %v5359
    %v5712 = vunpack.c.l.b16 %v5360
    %v5713 = vunpack.c.l.b16 %v5361
    %v5714 = vunpack.c.l.b16 %v5362
    %v5715 = vunpack.c.l.b16 %v5363
    %v5716 = vunpack.c.l.b16 %v5364
    %v5717 = vpack.c.b16 %v5670, %v5669
    %v5718 = vpack.c.b16 %v5672, %v5671
    %v5719 = vpack.c.b16 %v5674, %v5673
    %v5720 = vpack.c.b16 %v5676, %v5675
    %v5721 = vpack.c.b16 %v5678, %v5677
    %v5722 = vpack.c.b16 %v5680, %v5679
    %v5723 = vpack.c.b16 %v5682, %v5681
    %v5724 = vpack.c.b16 %v5684, %v5683
    %v5725 = vpack.c.b16 %v5686, %v5685
    %v5726 = vpack.c.b16 %v5688, %v5687
    %v5727 = vpack.c.b16 %v5690, %v5689
    %v5728 = vpack.c.b16 %v5692, %v5691
    %v5729 = vpack.c.b16 %v5694, %v5693
    %v5730 = vpack.c.b16 %v5696, %v5695
    %v5731 = vpack.c.b16 %v5698, %v5697
    %v5732 = vpack.c.b16 %v5700, %v5699
    %v5733 = vpack.c.b16 %v5702, %v5701
    %v5734 = vpack.c.b16 %v5704, %v5703
    %v5735 = vpack.c.b16 %v5706, %v5705
    %v5736 = vpack.c.b16 %v5708, %v5707
    %v5737 = vpack.c.b16 %v5710, %v5709
    %v5738 = vpack.c.b16 %v5712, %v5711
    %v5739 = vpack.c.b16 %v5714, %v5713
    %v5740 = vpack.c.b16 %v5716, %v5715
    %5765 = vmatprep.subr.bf16.mxu0 0
    %5766 = vmatpush1.bf16.msra.mxu0 %v5724
    %5767 = vmatprep.subr.bf16.mxu0 0
    %5768 = vmatpush1.bf16.msra.mxu0 %v5723
    %5769 = vmatprep.subr.bf16.mxu0 0
    %5770 = vmatpush1.bf16.msra.mxu0 %v5722
    %5771 = vmatprep.subr.bf16.mxu0 0
    %5772 = vmatpush1.bf16.msra.mxu0 %v5721
    %5773 = vmatprep.subr.bf16.mxu0 0
    %5774 = vmatpush1.bf16.msra.mxu0 %v5720
    %5775 = vmatprep.subr.bf16.mxu0 0
    %5776 = vmatpush1.bf16.msra.mxu0 %v5719
    %5777 = vmatprep.subr.bf16.mxu0 0
    %5778 = vmatpush1.bf16.msra.mxu0 %v5718
    %5779 = vmatprep.subr.bf16.mxu0 0
    %5780 = vmatpush1.bf16.msra.mxu0 %v5717
    %5781 = vmatprep.subr.bf16.mxu0 0
    %5782 = vmatpush2.bf16.msra.mxu0 %v5732
    %5783 = vmatprep.subr.bf16.mxu0 0
    %5784 = vmatpush2.bf16.msra.mxu0 %v5731
    %5785 = vmatprep.subr.bf16.mxu0 0
    %5786 = vmatpush2.bf16.msra.mxu0 %v5730
    %5787 = vmatprep.subr.bf16.mxu0 0
    %5788 = vmatpush2.bf16.msra.mxu0 %v5729
    %5789 = vmatprep.subr.bf16.mxu0 0
    %5790 = vmatpush2.bf16.msra.mxu0 %v5728
    %5791 = vmatprep.subr.bf16.mxu0 0
    %5792 = vmatpush2.bf16.msra.mxu0 %v5727
    %5793 = vmatprep.subr.bf16.mxu0 0
    %5794 = vmatpush2.bf16.msra.mxu0 %v5726
    %5795 = vmatprep.subr.bf16.mxu0 0
    %5796 = vmatpush2.bf16.msra.mxu0 %v5725
    %5797 = vmatprep.mubr.bf16.mxu0 %v5526
    %5798 = vmatmul.mubr.bf16.gmra.mxu0 %v5525
    %v5799 = vpop.f32.mrf.mxu0
    %v5800 = vadd.f32 0.0, %v5799
    %v5801 = vpop.f32.mrf.mxu0
    %v5802 = vpop.f32.mrf.mxu0
    %v5803 = vadd.f32 0.0, %v5802
    %v5804 = vpop.f32.mrf.mxu0
    %5805 = vmatprep.mubr.bf16.mxu0 %v5529
    %5806 = vmatmul.mubr.bf16.gmra.mxu0 %v5528
    %v5807 = vpop.f32.mrf.mxu0
    %v5808 = vadd.f32 0.0, %v5807
    %v5809 = vpop.f32.mrf.mxu0
    %v5810 = vpop.f32.mrf.mxu0
    %v5811 = vadd.f32 0.0, %v5810
    %v5812 = vpop.f32.mrf.mxu0
    %5813 = vmatprep.mubr.bf16.mxu0 %v5532
    %5814 = vmatmul.mubr.bf16.gmra.mxu0 %v5531
    %v5815 = vpop.f32.mrf.mxu0
    %v5816 = vadd.f32 0.0, %v5815
    %v5817 = vpop.f32.mrf.mxu0
    %v5818 = vpop.f32.mrf.mxu0
    %v5819 = vadd.f32 0.0, %v5818
    %v5820 = vpop.f32.mrf.mxu0
    %5821 = vmatprep.mubr.bf16.mxu0 %v5535
    %5822 = vmatmul.mubr.bf16.gmra.mxu0 %v5534
    %v5823 = vpop.f32.mrf.mxu0
    %v5824 = vadd.f32 0.0, %v5823
    %v5825 = vpop.f32.mrf.mxu0
    %v5826 = vpop.f32.mrf.mxu0
    %v5827 = vadd.f32 0.0, %v5826
    %v5828 = vpop.f32.mrf.mxu0
    %5829 = vmatprep.mubr.bf16.mxu0 %v5538
    %5830 = vmatmul.mubr.bf16.gmra.mxu0 %v5537
    %v5831 = vpop.f32.mrf.mxu0
    %v5832 = vadd.f32 0.0, %v5831
    %v5833 = vpop.f32.mrf.mxu0
    %v5834 = vpop.f32.mrf.mxu0
    %v5835 = vadd.f32 0.0, %v5834
    %v5836 = vpop.f32.mrf.mxu0
    %5837 = vmatprep.mubr.bf16.mxu0 %v5541
    %5838 = vmatmul.mubr.bf16.gmra.mxu0 %v5540
    %v5839 = vpop.f32.mrf.mxu0
    %v5840 = vadd.f32 0.0, %v5839
    %v5841 = vpop.f32.mrf.mxu0
    %v5842 = vpop.f32.mrf.mxu0
    %v5843 = vadd.f32 0.0, %v5842
    %v5844 = vpop.f32.mrf.mxu0
    %5845 = vmatprep.mubr.bf16.mxu0 %v5544
    %5846 = vmatmul.mubr.bf16.gmra.mxu0 %v5543
    %v5847 = vpop.f32.mrf.mxu0
    %v5848 = vadd.f32 0.0, %v5847
    %v5849 = vpop.f32.mrf.mxu0
    %v5850 = vpop.f32.mrf.mxu0
    %v5851 = vadd.f32 0.0, %v5850
    %v5852 = vpop.f32.mrf.mxu0
    %5853 = vmatprep.mubr.bf16.mxu0 %v5547
    %5854 = vmatmul.mubr.bf16.gmra.mxu0 %v5546
    %v5855 = vpop.f32.mrf.mxu0
    %v5856 = vadd.f32 0.0, %v5855
    %v5857 = vpop.f32.mrf.mxu0
    %v5858 = vpop.f32.mrf.mxu0
    %v5859 = vadd.f32 0.0, %v5858
    %v5860 = vpop.f32.mrf.mxu0
    %5861 = vmatprep.mubr.bf16.mxu0 %v5550
    %5862 = vmatmul.mubr.bf16.gmra.mxu0 %v5549
    %v5863 = vpop.f32.mrf.mxu0
    %v5864 = vadd.f32 0.0, %v5863
    %v5865 = vpop.f32.mrf.mxu0
    %v5866 = vpop.f32.mrf.mxu0
    %v5867 = vadd.f32 0.0, %v5866
    %v5868 = vpop.f32.mrf.mxu0
    %5869 = vmatprep.mubr.bf16.mxu0 %v5553
    %5870 = vmatmul.mubr.bf16.gmra.mxu0 %v5552
    %v5871 = vpop.f32.mrf.mxu0
    %v5872 = vadd.f32 0.0, %v5871
    %v5873 = vpop.f32.mrf.mxu0
    %v5874 = vpop.f32.mrf.mxu0
    %v5875 = vadd.f32 0.0, %v5874
    %v5876 = vpop.f32.mrf.mxu0
    %5877 = vmatprep.mubr.bf16.mxu0 %v5556
    %5878 = vmatmul.mubr.bf16.gmra.mxu0 %v5555
    %v5879 = vpop.f32.mrf.mxu0
    %v5880 = vadd.f32 0.0, %v5879
    %v5881 = vpop.f32.mrf.mxu0
    %v5882 = vpop.f32.mrf.mxu0
    %v5883 = vadd.f32 0.0, %v5882
    %v5884 = vpop.f32.mrf.mxu0
    %5885 = vmatprep.mubr.bf16.mxu0 %v5559
    %5886 = vmatmul.mubr.bf16.gmra.mxu0 %v5558
    %v5887 = vpop.f32.mrf.mxu0
    %v5888 = vadd.f32 0.0, %v5887
    %v5889 = vpop.f32.mrf.mxu0
    %v5890 = vpop.f32.mrf.mxu0
    %v5891 = vadd.f32 0.0, %v5890
    %v5892 = vpop.f32.mrf.mxu0
    %5893 = vmatprep.mubr.bf16.mxu0 %v5562
    %5894 = vmatmul.mubr.bf16.gmra.mxu0 %v5561
    %v5895 = vpop.f32.mrf.mxu0
    %v5896 = vadd.f32 0.0, %v5895
    %v5897 = vpop.f32.mrf.mxu0
    %v5898 = vpop.f32.mrf.mxu0
    %v5899 = vadd.f32 0.0, %v5898
    %v5900 = vpop.f32.mrf.mxu0
    %5901 = vmatprep.mubr.bf16.mxu0 %v5565
    %5902 = vmatmul.mubr.bf16.gmra.mxu0 %v5564
    %v5903 = vpop.f32.mrf.mxu0
    %v5904 = vadd.f32 0.0, %v5903
    %v5905 = vpop.f32.mrf.mxu0
    %v5906 = vpop.f32.mrf.mxu0
    %v5907 = vadd.f32 0.0, %v5906
    %v5908 = vpop.f32.mrf.mxu0
    %5909 = vmatprep.mubr.bf16.mxu0 %v5568
    %5910 = vmatmul.mubr.bf16.gmra.mxu0 %v5567
    %v5911 = vpop.f32.mrf.mxu0
    %v5912 = vadd.f32 0.0, %v5911
    %v5913 = vpop.f32.mrf.mxu0
    %v5914 = vpop.f32.mrf.mxu0
    %v5915 = vadd.f32 0.0, %v5914
    %v5916 = vpop.f32.mrf.mxu0
    %5917 = vmatprep.mubr.bf16.mxu0 %v5571
    %5918 = vmatmul.mubr.bf16.gmra.mxu0 %v5570
    %v5919 = vpop.f32.mrf.mxu0
    %v5920 = vadd.f32 0.0, %v5919
    %v5921 = vpop.f32.mrf.mxu0
    %v5922 = vpop.f32.mrf.mxu0
    %v5923 = vadd.f32 0.0, %v5922
    %v5924 = vpop.f32.mrf.mxu0
    %5925 = vdwg.mxu0
    %5926 = vmatprep.subr.bf16.mxu0 0
    %5927 = vmatpush1.bf16.msra.mxu0 %v5740
    %5928 = vmatprep.subr.bf16.mxu0 0
    %5929 = vmatpush1.bf16.msra.mxu0 %v5739
    %5930 = vmatprep.subr.bf16.mxu0 0
    %5931 = vmatpush1.bf16.msra.mxu0 %v5738
    %5932 = vmatprep.subr.bf16.mxu0 0
    %5933 = vmatpush1.bf16.msra.mxu0 %v5737
    %5934 = vmatprep.subr.bf16.mxu0 0
    %5935 = vmatpush1.bf16.msra.mxu0 %v5736
    %5936 = vmatprep.subr.bf16.mxu0 0
    %5937 = vmatpush1.bf16.msra.mxu0 %v5735
    %5938 = vmatprep.subr.bf16.mxu0 0
    %5939 = vmatpush1.bf16.msra.mxu0 %v5734
    %5940 = vmatprep.subr.bf16.mxu0 0
    %5941 = vmatpush1.bf16.msra.mxu0 %v5733
    %5942 = vmatprep.subr.bf16.mxu0 0
    %5943 = vmatpush2.bf16.msra.mxu0 0
    %5944 = vmatprep.subr.bf16.mxu0 0
    %5945 = vmatpush2.bf16.msra.mxu0 0
    %5946 = vmatprep.subr.bf16.mxu0 0
    %5947 = vmatpush2.bf16.msra.mxu0 0
    %5948 = vmatprep.subr.bf16.mxu0 0
    %5949 = vmatpush2.bf16.msra.mxu0 0
    %5950 = vmatprep.subr.bf16.mxu0 0
    %5951 = vmatpush2.bf16.msra.mxu0 0
    %5952 = vmatprep.subr.bf16.mxu0 0
    %5953 = vmatpush2.bf16.msra.mxu0 0
    %5954 = vmatprep.subr.bf16.mxu0 0
    %5955 = vmatpush2.bf16.msra.mxu0 0
    %5956 = vmatprep.subr.bf16.mxu0 0
    %5957 = vmatpush2.bf16.msra.mxu0 0
    %5958 = vmatprep.mubr.bf16.mxu0 0
    %5959 = vmatmul.mubr.bf16.gmra.mxu0 %v5527
    %v5960 = vpop.f32.mrf.mxu0
    %v5961 = vadd.f32 %v5800, %v5960
    %v5962 = vpop.f32.mrf.mxu0
    %v5963 = vpop.f32.mrf.mxu0
    %v5964 = vadd.f32 %v5803, %v5963
    %v5965 = vpop.f32.mrf.mxu0
    %5966 = vmatprep.mubr.bf16.mxu0 0
    %5967 = vmatmul.mubr.bf16.gmra.mxu0 %v5530
    %v5968 = vpop.f32.mrf.mxu0
    %v5969 = vadd.f32 %v5808, %v5968
    %v5970 = vpop.f32.mrf.mxu0
    %v5971 = vpop.f32.mrf.mxu0
    %v5972 = vadd.f32 %v5811, %v5971
    %v5973 = vpop.f32.mrf.mxu0
    %5974 = vmatprep.mubr.bf16.mxu0 0
    %5975 = vmatmul.mubr.bf16.gmra.mxu0 %v5533
    %v5976 = vpop.f32.mrf.mxu0
    %v5977 = vadd.f32 %v5816, %v5976
    %v5978 = vpop.f32.mrf.mxu0
    %v5979 = vpop.f32.mrf.mxu0
    %v5980 = vadd.f32 %v5819, %v5979
    %v5981 = vpop.f32.mrf.mxu0
    %5982 = vmatprep.mubr.bf16.mxu0 0
    %5983 = vmatmul.mubr.bf16.gmra.mxu0 %v5536
    %v5984 = vpop.f32.mrf.mxu0
    %v5985 = vadd.f32 %v5824, %v5984
    %v5986 = vpop.f32.mrf.mxu0
    %v5987 = vpop.f32.mrf.mxu0
    %v5988 = vadd.f32 %v5827, %v5987
    %v5989 = vpop.f32.mrf.mxu0
    %5990 = vmatprep.mubr.bf16.mxu0 0
    %5991 = vmatmul.mubr.bf16.gmra.mxu0 %v5539
    %v5992 = vpop.f32.mrf.mxu0
    %v5993 = vadd.f32 %v5832, %v5992
    %v5994 = vpop.f32.mrf.mxu0
    %v5995 = vpop.f32.mrf.mxu0
    %v5996 = vadd.f32 %v5835, %v5995
    %v5997 = vpop.f32.mrf.mxu0
    %5998 = vmatprep.mubr.bf16.mxu0 0
    %5999 = vmatmul.mubr.bf16.gmra.mxu0 %v5542
    %v6000 = vpop.f32.mrf.mxu0
    %v6001 = vadd.f32 %v5840, %v6000
    %v6002 = vpop.f32.mrf.mxu0
    %v6003 = vpop.f32.mrf.mxu0
    %v6004 = vadd.f32 %v5843, %v6003
    %v6005 = vpop.f32.mrf.mxu0
    %6006 = vmatprep.mubr.bf16.mxu0 0
    %6007 = vmatmul.mubr.bf16.gmra.mxu0 %v5545
    %v6008 = vpop.f32.mrf.mxu0
    %v6009 = vadd.f32 %v5848, %v6008
    %v6010 = vpop.f32.mrf.mxu0
    %v6011 = vpop.f32.mrf.mxu0
    %v6012 = vadd.f32 %v5851, %v6011
    %v6013 = vpop.f32.mrf.mxu0
    %6014 = vmatprep.mubr.bf16.mxu0 0
    %6015 = vmatmul.mubr.bf16.gmra.mxu0 %v5548
    %v6016 = vpop.f32.mrf.mxu0
    %v6017 = vadd.f32 %v5856, %v6016
    %v6018 = vpop.f32.mrf.mxu0
    %v6019 = vpop.f32.mrf.mxu0
    %v6020 = vadd.f32 %v5859, %v6019
    %v6021 = vpop.f32.mrf.mxu0
    %6022 = vmatprep.mubr.bf16.mxu0 0
    %6023 = vmatmul.mubr.bf16.gmra.mxu0 %v5551
    %v6024 = vpop.f32.mrf.mxu0
    %v6025 = vadd.f32 %v5864, %v6024
    %v6026 = vpop.f32.mrf.mxu0
    %v6027 = vpop.f32.mrf.mxu0
    %v6028 = vadd.f32 %v5867, %v6027
    %v6029 = vpop.f32.mrf.mxu0
    %6030 = vmatprep.mubr.bf16.mxu0 0
    %6031 = vmatmul.mubr.bf16.gmra.mxu0 %v5554
    %v6032 = vpop.f32.mrf.mxu0
    %v6033 = vadd.f32 %v5872, %v6032
    %v6034 = vpop.f32.mrf.mxu0
    %v6035 = vpop.f32.mrf.mxu0
    %v6036 = vadd.f32 %v5875, %v6035
    %v6037 = vpop.f32.mrf.mxu0
    %6038 = vmatprep.mubr.bf16.mxu0 0
    %6039 = vmatmul.mubr.bf16.gmra.mxu0 %v5557
    %v6040 = vpop.f32.mrf.mxu0
    %v6041 = vadd.f32 %v5880, %v6040
    %v6042 = vpop.f32.mrf.mxu0
    %v6043 = vpop.f32.mrf.mxu0
    %v6044 = vadd.f32 %v5883, %v6043
    %v6045 = vpop.f32.mrf.mxu0
    %6046 = vmatprep.mubr.bf16.mxu0 0
    %6047 = vmatmul.mubr.bf16.gmra.mxu0 %v5560
    %v6048 = vpop.f32.mrf.mxu0
    %v6049 = vadd.f32 %v5888, %v6048
    %v6050 = vpop.f32.mrf.mxu0
    %v6051 = vpop.f32.mrf.mxu0
    %v6052 = vadd.f32 %v5891, %v6051
    %v6053 = vpop.f32.mrf.mxu0
    %6054 = vmatprep.mubr.bf16.mxu0 0
    %6055 = vmatmul.mubr.bf16.gmra.mxu0 %v5563
    %v6056 = vpop.f32.mrf.mxu0
    %v6057 = vadd.f32 %v5896, %v6056
    %v6058 = vpop.f32.mrf.mxu0
    %v6059 = vpop.f32.mrf.mxu0
    %v6060 = vadd.f32 %v5899, %v6059
    %v6061 = vpop.f32.mrf.mxu0
    %6062 = vmatprep.mubr.bf16.mxu0 0
    %6063 = vmatmul.mubr.bf16.gmra.mxu0 %v5566
    %v6064 = vpop.f32.mrf.mxu0
    %v6065 = vadd.f32 %v5904, %v6064
    %v6066 = vpop.f32.mrf.mxu0
    %v6067 = vpop.f32.mrf.mxu0
    %v6068 = vadd.f32 %v5907, %v6067
    %v6069 = vpop.f32.mrf.mxu0
    %6070 = vmatprep.mubr.bf16.mxu0 0
    %6071 = vmatmul.mubr.bf16.gmra.mxu0 %v5569
    %v6072 = vpop.f32.mrf.mxu0
    %v6073 = vadd.f32 %v5912, %v6072
    %v6074 = vpop.f32.mrf.mxu0
    %v6075 = vpop.f32.mrf.mxu0
    %v6076 = vadd.f32 %v5915, %v6075
    %v6077 = vpop.f32.mrf.mxu0
    %6078 = vmatprep.mubr.bf16.mxu0 0
    %6079 = vmatmul.mubr.bf16.gmra.mxu0 %v5572
    %v6080 = vpop.f32.mrf.mxu0
    %v6081 = vadd.f32 %v5920, %v6080
    %v6082 = vpop.f32.mrf.mxu0
    %v6083 = vpop.f32.mrf.mxu0
    %v6084 = vadd.f32 %v5923, %v6083
    %v6085 = vpop.f32.mrf.mxu0
    %6086 = vdwg.mxu0
    %v6151 = vunpack.c.l.b16 %v5141
    %v6152 = vunpack.c.h.b16 %v5141
    %v6153 = vunpack.c.l.b16 %v5142
    %v6154 = vunpack.c.l.b16 %v5143
    %v6155 = vunpack.c.h.b16 %v5143
    %v6156 = vunpack.c.l.b16 %v5144
    %v6157 = vunpack.c.l.b16 %v5145
    %v6158 = vunpack.c.h.b16 %v5145
    %v6159 = vunpack.c.l.b16 %v5146
    %v6160 = vunpack.c.l.b16 %v5147
    %v6161 = vunpack.c.h.b16 %v5147
    %v6162 = vunpack.c.l.b16 %v5148
    %v6163 = vunpack.c.l.b16 %v5149
    %v6164 = vunpack.c.h.b16 %v5149
    %v6165 = vunpack.c.l.b16 %v5150
    %v6166 = vunpack.c.l.b16 %v5151
    %v6167 = vunpack.c.h.b16 %v5151
    %v6168 = vunpack.c.l.b16 %v5152
    %v6169 = vunpack.c.l.b16 %v5153
    %v6170 = vunpack.c.h.b16 %v5153
    %v6171 = vunpack.c.l.b16 %v5154
    %v6172 = vunpack.c.l.b16 %v5155
    %v6173 = vunpack.c.h.b16 %v5155
    %v6174 = vunpack.c.l.b16 %v5156
    %v6175 = vunpack.c.l.b16 %v5157
    %v6176 = vunpack.c.h.b16 %v5157
    %v6177 = vunpack.c.l.b16 %v5158
    %v6178 = vunpack.c.l.b16 %v5159
    %v6179 = vunpack.c.h.b16 %v5159
    %v6180 = vunpack.c.l.b16 %v5160
    %v6181 = vunpack.c.l.b16 %v5161
    %v6182 = vunpack.c.h.b16 %v5161
    %v6183 = vunpack.c.l.b16 %v5162
    %v6184 = vunpack.c.l.b16 %v5163
    %v6185 = vunpack.c.h.b16 %v5163
    %v6186 = vunpack.c.l.b16 %v5164
    %v6187 = vunpack.c.l.b16 %v5165
    %v6188 = vunpack.c.h.b16 %v5165
    %v6189 = vunpack.c.l.b16 %v5166
    %v6190 = vunpack.c.l.b16 %v5167
    %v6191 = vunpack.c.h.b16 %v5167
    %v6192 = vunpack.c.l.b16 %v5168
    %v6193 = vunpack.c.l.b16 %v5169
    %v6194 = vunpack.c.h.b16 %v5169
    %v6195 = vunpack.c.l.b16 %v5170
    %v6196 = vunpack.c.l.b16 %v5171
    %v6197 = vunpack.c.h.b16 %v5171
    %v6198 = vunpack.c.l.b16 %v5172
    %v6199 = vunpack.c.l.b16 %v5173
    %v6200 = vunpack.c.h.b16 %v5173
    %v6201 = vunpack.c.l.b16 %v5174
    %v6202 = vunpack.c.l.b16 %v5175
    %v6203 = vunpack.c.h.b16 %v5175
    %v6204 = vunpack.c.l.b16 %v5176
    %v6205 = vunpack.c.l.b16 %v5177
    %v6206 = vunpack.c.h.b16 %v5177
    %v6207 = vunpack.c.l.b16 %v5178
    %v6208 = vunpack.c.l.b16 %v5179
    %v6209 = vunpack.c.h.b16 %v5179
    %v6210 = vunpack.c.l.b16 %v5180
    %v6211 = vunpack.c.l.b16 %v5181
    %v6212 = vunpack.c.h.b16 %v5181
    %v6213 = vunpack.c.l.b16 %v5182
    %v6214 = vunpack.c.l.b16 %v5183
    %v6215 = vunpack.c.h.b16 %v5183
    %v6216 = vunpack.c.l.b16 %v5184
    %v6217 = vunpack.c.l.b16 %v5185
    %v6218 = vunpack.c.h.b16 %v5185
    %v6219 = vunpack.c.l.b16 %v5186
    %v6220 = vunpack.c.l.b16 %v5187
    %v6221 = vunpack.c.h.b16 %v5187
    %v6222 = vunpack.c.l.b16 %v5188
    %v6223 = vunpack.c.l.b16 %v5189
    %v6224 = vunpack.c.h.b16 %v5189
    %v6225 = vunpack.c.l.b16 %v5190
    %v6226 = vunpack.c.l.b16 %v5191
    %v6227 = vunpack.c.h.b16 %v5191
    %v6228 = vunpack.c.l.b16 %v5192
    %v6229 = vunpack.c.l.b16 %v5193
    %v6230 = vunpack.c.h.b16 %v5193
    %v6231 = vunpack.c.l.b16 %v5194
    %v6232 = vunpack.c.l.b16 %v5195
    %v6233 = vunpack.c.h.b16 %v5195
    %v6234 = vunpack.c.l.b16 %v5196
    %v6235 = vunpack.c.l.b16 %v5197
    %v6236 = vunpack.c.h.b16 %v5197
    %v6237 = vunpack.c.l.b16 %v5198
    %v6238 = vunpack.c.l.b16 %v5199
    %v6239 = vunpack.c.h.b16 %v5199
    %v6240 = vunpack.c.l.b16 %v5200
    %v6241 = vunpack.c.l.b16 %v5201
    %v6242 = vunpack.c.h.b16 %v5201
    %v6243 = vunpack.c.l.b16 %v5202
    %v6244 = vunpack.c.l.b16 %v5203
    %v6245 = vunpack.c.h.b16 %v5203
    %v6246 = vunpack.c.l.b16 %v5204
    %v6247 = vpack.c.b16 %v6154, %v6151
    %v6248 = vpack.c.b16 %v6155, %v6152
    %v6249 = vpack.c.b16 %v6156, %v6153
    %v6250 = vpack.c.b16 %v6160, %v6157
    %v6251 = vpack.c.b16 %v6161, %v6158
    %v6252 = vpack.c.b16 %v6162, %v6159
    %v6253 = vpack.c.b16 %v6166, %v6163
    %v6254 = vpack.c.b16 %v6167, %v6164
    %v6255 = vpack.c.b16 %v6168, %v6165
    %v6256 = vpack.c.b16 %v6172, %v6169
    %v6257 = vpack.c.b16 %v6173, %v6170
    %v6258 = vpack.c.b16 %v6174, %v6171
    %v6259 = vpack.c.b16 %v6178, %v6175
    %v6260 = vpack.c.b16 %v6179, %v6176
    %v6261 = vpack.c.b16 %v6180, %v6177
    %v6262 = vpack.c.b16 %v6184, %v6181
    %v6263 = vpack.c.b16 %v6185, %v6182
    %v6264 = vpack.c.b16 %v6186, %v6183
    %v6265 = vpack.c.b16 %v6190, %v6187
    %v6266 = vpack.c.b16 %v6191, %v6188
    %v6267 = vpack.c.b16 %v6192, %v6189
    %v6268 = vpack.c.b16 %v6196, %v6193
    %v6269 = vpack.c.b16 %v6197, %v6194
    %v6270 = vpack.c.b16 %v6198, %v6195
    %v6271 = vpack.c.b16 %v6202, %v6199
    %v6272 = vpack.c.b16 %v6203, %v6200
    %v6273 = vpack.c.b16 %v6204, %v6201
    %v6274 = vpack.c.b16 %v6208, %v6205
    %v6275 = vpack.c.b16 %v6209, %v6206
    %v6276 = vpack.c.b16 %v6210, %v6207
    %v6277 = vpack.c.b16 %v6214, %v6211
    %v6278 = vpack.c.b16 %v6215, %v6212
    %v6279 = vpack.c.b16 %v6216, %v6213
    %v6280 = vpack.c.b16 %v6220, %v6217
    %v6281 = vpack.c.b16 %v6221, %v6218
    %v6282 = vpack.c.b16 %v6222, %v6219
    %v6283 = vpack.c.b16 %v6226, %v6223
    %v6284 = vpack.c.b16 %v6227, %v6224
    %v6285 = vpack.c.b16 %v6228, %v6225
    %v6286 = vpack.c.b16 %v6232, %v6229
    %v6287 = vpack.c.b16 %v6233, %v6230
    %v6288 = vpack.c.b16 %v6234, %v6231
    %v6289 = vpack.c.b16 %v6238, %v6235
    %v6290 = vpack.c.b16 %v6239, %v6236
    %v6291 = vpack.c.b16 %v6240, %v6237
    %v6292 = vpack.c.b16 %v6244, %v6241
    %v6293 = vpack.c.b16 %v6245, %v6242
    %v6294 = vpack.c.b16 %v6246, %v6243
    %v6391 = vunpack.c.l.b16 %v5205
    %v6392 = vunpack.c.l.b16 %v5206
    %v6393 = vunpack.c.l.b16 %v5207
    %v6394 = vunpack.c.l.b16 %v5208
    %v6395 = vunpack.c.l.b16 %v5209
    %v6396 = vunpack.c.l.b16 %v5210
    %v6397 = vunpack.c.l.b16 %v5211
    %v6398 = vunpack.c.l.b16 %v5212
    %v6399 = vunpack.c.l.b16 %v5213
    %v6400 = vunpack.c.l.b16 %v5214
    %v6401 = vunpack.c.l.b16 %v5215
    %v6402 = vunpack.c.l.b16 %v5216
    %v6403 = vunpack.c.l.b16 %v5217
    %v6404 = vunpack.c.l.b16 %v5218
    %v6405 = vunpack.c.l.b16 %v5219
    %v6406 = vunpack.c.l.b16 %v5220
    %v6407 = vunpack.c.l.b16 %v5221
    %v6408 = vunpack.c.l.b16 %v5222
    %v6409 = vunpack.c.l.b16 %v5223
    %v6410 = vunpack.c.l.b16 %v5224
    %v6411 = vunpack.c.l.b16 %v5225
    %v6412 = vunpack.c.l.b16 %v5226
    %v6413 = vunpack.c.l.b16 %v5227
    %v6414 = vunpack.c.l.b16 %v5228
    %v6415 = vunpack.c.l.b16 %v5229
    %v6416 = vunpack.c.l.b16 %v5230
    %v6417 = vunpack.c.l.b16 %v5231
    %v6418 = vunpack.c.l.b16 %v5232
    %v6419 = vunpack.c.l.b16 %v5233
    %v6420 = vunpack.c.l.b16 %v5234
    %v6421 = vunpack.c.l.b16 %v5235
    %v6422 = vunpack.c.l.b16 %v5236
    %v6423 = vunpack.c.l.b16 %v5237
    %v6424 = vunpack.c.l.b16 %v5238
    %v6425 = vunpack.c.l.b16 %v5239
    %v6426 = vunpack.c.l.b16 %v5240
    %v6427 = vunpack.c.l.b16 %v5241
    %v6428 = vunpack.c.l.b16 %v5242
    %v6429 = vunpack.c.l.b16 %v5243
    %v6430 = vunpack.c.l.b16 %v5244
    %v6431 = vunpack.c.l.b16 %v5245
    %v6432 = vunpack.c.l.b16 %v5246
    %v6433 = vunpack.c.l.b16 %v5247
    %v6434 = vunpack.c.l.b16 %v5248
    %v6435 = vunpack.c.l.b16 %v5249
    %v6436 = vunpack.c.l.b16 %v5250
    %v6437 = vunpack.c.l.b16 %v5251
    %v6438 = vunpack.c.l.b16 %v5252
    %v6439 = vpack.c.b16 %v6392, %v6391
    %v6440 = vpack.c.b16 %v6394, %v6393
    %v6441 = vpack.c.b16 %v6396, %v6395
    %v6442 = vpack.c.b16 %v6398, %v6397
    %v6443 = vpack.c.b16 %v6400, %v6399
    %v6444 = vpack.c.b16 %v6402, %v6401
    %v6445 = vpack.c.b16 %v6404, %v6403
    %v6446 = vpack.c.b16 %v6406, %v6405
    %v6447 = vpack.c.b16 %v6408, %v6407
    %v6448 = vpack.c.b16 %v6410, %v6409
    %v6449 = vpack.c.b16 %v6412, %v6411
    %v6450 = vpack.c.b16 %v6414, %v6413
    %v6451 = vpack.c.b16 %v6416, %v6415
    %v6452 = vpack.c.b16 %v6418, %v6417
    %v6453 = vpack.c.b16 %v6420, %v6419
    %v6454 = vpack.c.b16 %v6422, %v6421
    %v6455 = vpack.c.b16 %v6424, %v6423
    %v6456 = vpack.c.b16 %v6426, %v6425
    %v6457 = vpack.c.b16 %v6428, %v6427
    %v6458 = vpack.c.b16 %v6430, %v6429
    %v6459 = vpack.c.b16 %v6432, %v6431
    %v6460 = vpack.c.b16 %v6434, %v6433
    %v6461 = vpack.c.b16 %v6436, %v6435
    %v6462 = vpack.c.b16 %v6438, %v6437
    %6487 = vmatprep.subr.bf16.mxu0 0
    %6488 = vmatpush1.bf16.msra.mxu0 %v6446
    %6489 = vmatprep.subr.bf16.mxu0 0
    %6490 = vmatpush1.bf16.msra.mxu0 %v6445
    %6491 = vmatprep.subr.bf16.mxu0 0
    %6492 = vmatpush1.bf16.msra.mxu0 %v6444
    %6493 = vmatprep.subr.bf16.mxu0 0
    %6494 = vmatpush1.bf16.msra.mxu0 %v6443
    %6495 = vmatprep.subr.bf16.mxu0 0
    %6496 = vmatpush1.bf16.msra.mxu0 %v6442
    %6497 = vmatprep.subr.bf16.mxu0 0
    %6498 = vmatpush1.bf16.msra.mxu0 %v6441
    %6499 = vmatprep.subr.bf16.mxu0 0
    %6500 = vmatpush1.bf16.msra.mxu0 %v6440
    %6501 = vmatprep.subr.bf16.mxu0 0
    %6502 = vmatpush1.bf16.msra.mxu0 %v6439
    %6503 = vmatprep.subr.bf16.mxu0 0
    %6504 = vmatpush2.bf16.msra.mxu0 %v6454
    %6505 = vmatprep.subr.bf16.mxu0 0
    %6506 = vmatpush2.bf16.msra.mxu0 %v6453
    %6507 = vmatprep.subr.bf16.mxu0 0
    %6508 = vmatpush2.bf16.msra.mxu0 %v6452
    %6509 = vmatprep.subr.bf16.mxu0 0
    %6510 = vmatpush2.bf16.msra.mxu0 %v6451
    %6511 = vmatprep.subr.bf16.mxu0 0
    %6512 = vmatpush2.bf16.msra.mxu0 %v6450
    %6513 = vmatprep.subr.bf16.mxu0 0
    %6514 = vmatpush2.bf16.msra.mxu0 %v6449
    %6515 = vmatprep.subr.bf16.mxu0 0
    %6516 = vmatpush2.bf16.msra.mxu0 %v6448
    %6517 = vmatprep.subr.bf16.mxu0 0
    %6518 = vmatpush2.bf16.msra.mxu0 %v6447
    %6519 = vmatprep.mubr.bf16.mxu0 %v6248
    %6520 = vmatmul.mubr.bf16.gmra.mxu0 %v6247
    %v6521 = vpop.f32.mrf.mxu0
    %v6522 = vadd.f32 %v5961, %v6521
    %v6523 = vpop.f32.mrf.mxu0
    %v6524 = vpop.f32.mrf.mxu0
    %v6525 = vadd.f32 %v5964, %v6524
    %v6526 = vpop.f32.mrf.mxu0
    %6527 = vmatprep.mubr.bf16.mxu0 %v6251
    %6528 = vmatmul.mubr.bf16.gmra.mxu0 %v6250
    %v6529 = vpop.f32.mrf.mxu0
    %v6530 = vadd.f32 %v5969, %v6529
    %v6531 = vpop.f32.mrf.mxu0
    %v6532 = vpop.f32.mrf.mxu0
    %v6533 = vadd.f32 %v5972, %v6532
    %v6534 = vpop.f32.mrf.mxu0
    %6535 = vmatprep.mubr.bf16.mxu0 %v6254
    %6536 = vmatmul.mubr.bf16.gmra.mxu0 %v6253
    %v6537 = vpop.f32.mrf.mxu0
    %v6538 = vadd.f32 %v5977, %v6537
    %v6539 = vpop.f32.mrf.mxu0
    %v6540 = vpop.f32.mrf.mxu0
    %v6541 = vadd.f32 %v5980, %v6540
    %v6542 = vpop.f32.mrf.mxu0
    %6543 = vmatprep.mubr.bf16.mxu0 %v6257
    %6544 = vmatmul.mubr.bf16.gmra.mxu0 %v6256
    %v6545 = vpop.f32.mrf.mxu0
    %v6546 = vadd.f32 %v5985, %v6545
    %v6547 = vpop.f32.mrf.mxu0
    %v6548 = vpop.f32.mrf.mxu0
    %v6549 = vadd.f32 %v5988, %v6548
    %v6550 = vpop.f32.mrf.mxu0
    %6551 = vmatprep.mubr.bf16.mxu0 %v6260
    %6552 = vmatmul.mubr.bf16.gmra.mxu0 %v6259
    %v6553 = vpop.f32.mrf.mxu0
    %v6554 = vadd.f32 %v5993, %v6553
    %v6555 = vpop.f32.mrf.mxu0
    %v6556 = vpop.f32.mrf.mxu0
    %v6557 = vadd.f32 %v5996, %v6556
    %v6558 = vpop.f32.mrf.mxu0
    %6559 = vmatprep.mubr.bf16.mxu0 %v6263
    %6560 = vmatmul.mubr.bf16.gmra.mxu0 %v6262
    %v6561 = vpop.f32.mrf.mxu0
    %v6562 = vadd.f32 %v6001, %v6561
    %v6563 = vpop.f32.mrf.mxu0
    %v6564 = vpop.f32.mrf.mxu0
    %v6565 = vadd.f32 %v6004, %v6564
    %v6566 = vpop.f32.mrf.mxu0
    %6567 = vmatprep.mubr.bf16.mxu0 %v6266
    %6568 = vmatmul.mubr.bf16.gmra.mxu0 %v6265
    %v6569 = vpop.f32.mrf.mxu0
    %v6570 = vadd.f32 %v6009, %v6569
    %v6571 = vpop.f32.mrf.mxu0
    %v6572 = vpop.f32.mrf.mxu0
    %v6573 = vadd.f32 %v6012, %v6572
    %v6574 = vpop.f32.mrf.mxu0
    %6575 = vmatprep.mubr.bf16.mxu0 %v6269
    %6576 = vmatmul.mubr.bf16.gmra.mxu0 %v6268
    %v6577 = vpop.f32.mrf.mxu0
    %v6578 = vadd.f32 %v6017, %v6577
    %v6579 = vpop.f32.mrf.mxu0
    %v6580 = vpop.f32.mrf.mxu0
    %v6581 = vadd.f32 %v6020, %v6580
    %v6582 = vpop.f32.mrf.mxu0
    %6583 = vmatprep.mubr.bf16.mxu0 %v6272
    %6584 = vmatmul.mubr.bf16.gmra.mxu0 %v6271
    %v6585 = vpop.f32.mrf.mxu0
    %v6586 = vadd.f32 %v6025, %v6585
    %v6587 = vpop.f32.mrf.mxu0
    %v6588 = vpop.f32.mrf.mxu0
    %v6589 = vadd.f32 %v6028, %v6588
    %v6590 = vpop.f32.mrf.mxu0
    %6591 = vmatprep.mubr.bf16.mxu0 %v6275
    %6592 = vmatmul.mubr.bf16.gmra.mxu0 %v6274
    %v6593 = vpop.f32.mrf.mxu0
    %v6594 = vadd.f32 %v6033, %v6593
    %v6595 = vpop.f32.mrf.mxu0
    %v6596 = vpop.f32.mrf.mxu0
    %v6597 = vadd.f32 %v6036, %v6596
    %v6598 = vpop.f32.mrf.mxu0
    %6599 = vmatprep.mubr.bf16.mxu0 %v6278
    %6600 = vmatmul.mubr.bf16.gmra.mxu0 %v6277
    %v6601 = vpop.f32.mrf.mxu0
    %v6602 = vadd.f32 %v6041, %v6601
    %v6603 = vpop.f32.mrf.mxu0
    %v6604 = vpop.f32.mrf.mxu0
    %v6605 = vadd.f32 %v6044, %v6604
    %v6606 = vpop.f32.mrf.mxu0
    %6607 = vmatprep.mubr.bf16.mxu0 %v6281
    %6608 = vmatmul.mubr.bf16.gmra.mxu0 %v6280
    %v6609 = vpop.f32.mrf.mxu0
    %v6610 = vadd.f32 %v6049, %v6609
    %v6611 = vpop.f32.mrf.mxu0
    %v6612 = vpop.f32.mrf.mxu0
    %v6613 = vadd.f32 %v6052, %v6612
    %v6614 = vpop.f32.mrf.mxu0
    %6615 = vmatprep.mubr.bf16.mxu0 %v6284
    %6616 = vmatmul.mubr.bf16.gmra.mxu0 %v6283
    %v6617 = vpop.f32.mrf.mxu0
    %v6618 = vadd.f32 %v6057, %v6617
    %v6619 = vpop.f32.mrf.mxu0
    %v6620 = vpop.f32.mrf.mxu0
    %v6621 = vadd.f32 %v6060, %v6620
    %v6622 = vpop.f32.mrf.mxu0
    %6623 = vmatprep.mubr.bf16.mxu0 %v6287
    %6624 = vmatmul.mubr.bf16.gmra.mxu0 %v6286
    %v6625 = vpop.f32.mrf.mxu0
    %v6626 = vadd.f32 %v6065, %v6625
    %v6627 = vpop.f32.mrf.mxu0
    %v6628 = vpop.f32.mrf.mxu0
    %v6629 = vadd.f32 %v6068, %v6628
    %v6630 = vpop.f32.mrf.mxu0
    %6631 = vmatprep.mubr.bf16.mxu0 %v6290
    %6632 = vmatmul.mubr.bf16.gmra.mxu0 %v6289
    %v6633 = vpop.f32.mrf.mxu0
    %v6634 = vadd.f32 %v6073, %v6633
    %v6635 = vpop.f32.mrf.mxu0
    %v6636 = vpop.f32.mrf.mxu0
    %v6637 = vadd.f32 %v6076, %v6636
    %v6638 = vpop.f32.mrf.mxu0
    %6639 = vmatprep.mubr.bf16.mxu0 %v6293
    %6640 = vmatmul.mubr.bf16.gmra.mxu0 %v6292
    %v6641 = vpop.f32.mrf.mxu0
    %v6642 = vadd.f32 %v6081, %v6641
    %v6643 = vpop.f32.mrf.mxu0
    %v6644 = vpop.f32.mrf.mxu0
    %v6645 = vadd.f32 %v6084, %v6644
    %v6646 = vpop.f32.mrf.mxu0
    %6647 = vdwg.mxu0
    %6648 = vmatprep.subr.bf16.mxu0 0
    %6649 = vmatpush1.bf16.msra.mxu0 %v6462
    %6650 = vmatprep.subr.bf16.mxu0 0
    %6651 = vmatpush1.bf16.msra.mxu0 %v6461
    %6652 = vmatprep.subr.bf16.mxu0 0
    %6653 = vmatpush1.bf16.msra.mxu0 %v6460
    %6654 = vmatprep.subr.bf16.mxu0 0
    %6655 = vmatpush1.bf16.msra.mxu0 %v6459
    %6656 = vmatprep.subr.bf16.mxu0 0
    %6657 = vmatpush1.bf16.msra.mxu0 %v6458
    %6658 = vmatprep.subr.bf16.mxu0 0
    %6659 = vmatpush1.bf16.msra.mxu0 %v6457
    %6660 = vmatprep.subr.bf16.mxu0 0
    %6661 = vmatpush1.bf16.msra.mxu0 %v6456
    %6662 = vmatprep.subr.bf16.mxu0 0
    %6663 = vmatpush1.bf16.msra.mxu0 %v6455
    %6664 = vmatprep.subr.bf16.mxu0 0
    %6665 = vmatpush2.bf16.msra.mxu0 0
    %6666 = vmatprep.subr.bf16.mxu0 0
    %6667 = vmatpush2.bf16.msra.mxu0 0
    %6668 = vmatprep.subr.bf16.mxu0 0
    %6669 = vmatpush2.bf16.msra.mxu0 0
    %6670 = vmatprep.subr.bf16.mxu0 0
    %6671 = vmatpush2.bf16.msra.mxu0 0
    %6672 = vmatprep.subr.bf16.mxu0 0
    %6673 = vmatpush2.bf16.msra.mxu0 0
    %6674 = vmatprep.subr.bf16.mxu0 0
    %6675 = vmatpush2.bf16.msra.mxu0 0
    %6676 = vmatprep.subr.bf16.mxu0 0
    %6677 = vmatpush2.bf16.msra.mxu0 0
    %6678 = vmatprep.subr.bf16.mxu0 0
    %6679 = vmatpush2.bf16.msra.mxu0 0
    %6680 = vmatprep.mubr.bf16.mxu0 0
    %6681 = vmatmul.mubr.bf16.gmra.mxu0 %v6249
    %v6682 = vpop.f32.mrf.mxu0
    %v6683 = vadd.f32 %v6522, %v6682
    %v6684 = vpop.f32.mrf.mxu0
    %v6685 = vpop.f32.mrf.mxu0
    %v6686 = vadd.f32 %v6525, %v6685
    %v6687 = vpop.f32.mrf.mxu0
    %6688 = vmatprep.mubr.bf16.mxu0 0
    %6689 = vmatmul.mubr.bf16.gmra.mxu0 %v6252
    %v6690 = vpop.f32.mrf.mxu0
    %v6691 = vadd.f32 %v6530, %v6690
    %v6692 = vpop.f32.mrf.mxu0
    %v6693 = vpop.f32.mrf.mxu0
    %v6694 = vadd.f32 %v6533, %v6693
    %v6695 = vpop.f32.mrf.mxu0
    %6696 = vmatprep.mubr.bf16.mxu0 0
    %6697 = vmatmul.mubr.bf16.gmra.mxu0 %v6255
    %v6698 = vpop.f32.mrf.mxu0
    %v6699 = vadd.f32 %v6538, %v6698
    %v6700 = vpop.f32.mrf.mxu0
    %v6701 = vpop.f32.mrf.mxu0
    %v6702 = vadd.f32 %v6541, %v6701
    %v6703 = vpop.f32.mrf.mxu0
    %6704 = vmatprep.mubr.bf16.mxu0 0
    %6705 = vmatmul.mubr.bf16.gmra.mxu0 %v6258
    %v6706 = vpop.f32.mrf.mxu0
    %v6707 = vadd.f32 %v6546, %v6706
    %v6708 = vpop.f32.mrf.mxu0
    %v6709 = vpop.f32.mrf.mxu0
    %v6710 = vadd.f32 %v6549, %v6709
    %v6711 = vpop.f32.mrf.mxu0
    %6712 = vmatprep.mubr.bf16.mxu0 0
    %6713 = vmatmul.mubr.bf16.gmra.mxu0 %v6261
    %v6714 = vpop.f32.mrf.mxu0
    %v6715 = vadd.f32 %v6554, %v6714
    %v6716 = vpop.f32.mrf.mxu0
    %v6717 = vpop.f32.mrf.mxu0
    %v6718 = vadd.f32 %v6557, %v6717
    %v6719 = vpop.f32.mrf.mxu0
    %6720 = vmatprep.mubr.bf16.mxu0 0
    %6721 = vmatmul.mubr.bf16.gmra.mxu0 %v6264
    %v6722 = vpop.f32.mrf.mxu0
    %v6723 = vadd.f32 %v6562, %v6722
    %v6724 = vpop.f32.mrf.mxu0
    %v6725 = vpop.f32.mrf.mxu0
    %v6726 = vadd.f32 %v6565, %v6725
    %v6727 = vpop.f32.mrf.mxu0
    %6728 = vmatprep.mubr.bf16.mxu0 0
    %6729 = vmatmul.mubr.bf16.gmra.mxu0 %v6267
    %v6730 = vpop.f32.mrf.mxu0
    %v6731 = vadd.f32 %v6570, %v6730
    %v6732 = vpop.f32.mrf.mxu0
    %v6733 = vpop.f32.mrf.mxu0
    %v6734 = vadd.f32 %v6573, %v6733
    %v6735 = vpop.f32.mrf.mxu0
    %6736 = vmatprep.mubr.bf16.mxu0 0
    %6737 = vmatmul.mubr.bf16.gmra.mxu0 %v6270
    %v6738 = vpop.f32.mrf.mxu0
    %v6739 = vadd.f32 %v6578, %v6738
    %v6740 = vpop.f32.mrf.mxu0
    %v6741 = vpop.f32.mrf.mxu0
    %v6742 = vadd.f32 %v6581, %v6741
    %v6743 = vpop.f32.mrf.mxu0
    %6744 = vmatprep.mubr.bf16.mxu0 0
    %6745 = vmatmul.mubr.bf16.gmra.mxu0 %v6273
    %v6746 = vpop.f32.mrf.mxu0
    %v6747 = vadd.f32 %v6586, %v6746
    %v6748 = vpop.f32.mrf.mxu0
    %v6749 = vpop.f32.mrf.mxu0
    %v6750 = vadd.f32 %v6589, %v6749
    %v6751 = vpop.f32.mrf.mxu0
    %6752 = vmatprep.mubr.bf16.mxu0 0
    %6753 = vmatmul.mubr.bf16.gmra.mxu0 %v6276
    %v6754 = vpop.f32.mrf.mxu0
    %v6755 = vadd.f32 %v6594, %v6754
    %v6756 = vpop.f32.mrf.mxu0
    %v6757 = vpop.f32.mrf.mxu0
    %v6758 = vadd.f32 %v6597, %v6757
    %v6759 = vpop.f32.mrf.mxu0
    %6760 = vmatprep.mubr.bf16.mxu0 0
    %6761 = vmatmul.mubr.bf16.gmra.mxu0 %v6279
    %v6762 = vpop.f32.mrf.mxu0
    %v6763 = vadd.f32 %v6602, %v6762
    %v6764 = vpop.f32.mrf.mxu0
    %v6765 = vpop.f32.mrf.mxu0
    %v6766 = vadd.f32 %v6605, %v6765
    %v6767 = vpop.f32.mrf.mxu0
    %6768 = vmatprep.mubr.bf16.mxu0 0
    %6769 = vmatmul.mubr.bf16.gmra.mxu0 %v6282
    %v6770 = vpop.f32.mrf.mxu0
    %v6771 = vadd.f32 %v6610, %v6770
    %v6772 = vpop.f32.mrf.mxu0
    %v6773 = vpop.f32.mrf.mxu0
    %v6774 = vadd.f32 %v6613, %v6773
    %v6775 = vpop.f32.mrf.mxu0
    %6776 = vmatprep.mubr.bf16.mxu0 0
    %6777 = vmatmul.mubr.bf16.gmra.mxu0 %v6285
    %v6778 = vpop.f32.mrf.mxu0
    %v6779 = vadd.f32 %v6618, %v6778
    %v6780 = vpop.f32.mrf.mxu0
    %v6781 = vpop.f32.mrf.mxu0
    %v6782 = vadd.f32 %v6621, %v6781
    %v6783 = vpop.f32.mrf.mxu0
    %6784 = vmatprep.mubr.bf16.mxu0 0
    %6785 = vmatmul.mubr.bf16.gmra.mxu0 %v6288
    %v6786 = vpop.f32.mrf.mxu0
    %v6787 = vadd.f32 %v6626, %v6786
    %v6788 = vpop.f32.mrf.mxu0
    %v6789 = vpop.f32.mrf.mxu0
    %v6790 = vadd.f32 %v6629, %v6789
    %v6791 = vpop.f32.mrf.mxu0
    %6792 = vmatprep.mubr.bf16.mxu0 0
    %6793 = vmatmul.mubr.bf16.gmra.mxu0 %v6291
    %v6794 = vpop.f32.mrf.mxu0
    %v6795 = vadd.f32 %v6634, %v6794
    %v6796 = vpop.f32.mrf.mxu0
    %v6797 = vpop.f32.mrf.mxu0
    %v6798 = vadd.f32 %v6637, %v6797
    %v6799 = vpop.f32.mrf.mxu0
    %6800 = vmatprep.mubr.bf16.mxu0 0
    %6801 = vmatmul.mubr.bf16.gmra.mxu0 %v6294
    %v6802 = vpop.f32.mrf.mxu0
    %v6803 = vadd.f32 %v6642, %v6802
    %v6804 = vpop.f32.mrf.mxu0
    %v6805 = vpop.f32.mrf.mxu0
    %v6806 = vadd.f32 %v6645, %v6805
    %v6807 = vpop.f32.mrf.mxu0
    %6808 = vdwg.mxu0
    %s6809 = scalar_lea.vmem [#allocation2], 240
    %v6810 = vld [vmem:[%s6809] sm:$0xff]
    %v6811 = vld [vmem:[%s6809 + $0x8] sm:$0xf]
    %v6812 = vld [vmem:[%s6809 + $0xc] sm:$0xff]
    %v6813 = vld [vmem:[%s6809 + $0x14] sm:$0xf]
    %v6814 = vld [vmem:[%s6809 + $0x18] sm:$0xff]
    %v6815 = vld [vmem:[%s6809 + $0x20] sm:$0xf]
    %v6816 = vld [vmem:[%s6809 + $0x24] sm:$0xff]
    %v6817 = vld [vmem:[%s6809 + $0x2c] sm:$0xf]
    %v6818 = vld [vmem:[%s6809 + $0x30] sm:$0xff]
    %v6819 = vld [vmem:[%s6809 + $0x38] sm:$0xf]
    %v6820 = vld [vmem:[%s6809 + $0x3c] sm:$0xff]
    %v6821 = vld [vmem:[%s6809 + $0x44] sm:$0xf]
    %v6822 = vld [vmem:[%s6809 + $0x48] sm:$0xff]
    %v6823 = vld [vmem:[%s6809 + $0x50] sm:$0xf]
    %v6824 = vld [vmem:[%s6809 + $0x54] sm:$0xff]
    %v6825 = vld [vmem:[%s6809 + $0x5c] sm:$0xf]
    %v6826 = vld [vmem:[%s6809 + $0x60] sm:$0xff]
    %v6827 = vld [vmem:[%s6809 + $0x68] sm:$0xf]
    %v6828 = vld [vmem:[%s6809 + $0x6c] sm:$0xff]
    %v6829 = vld [vmem:[%s6809 + $0x74] sm:$0xf]
    %v6830 = vld [vmem:[%s6809 + $0x78] sm:$0xff]
    %v6831 = vld [vmem:[%s6809 + $0x80] sm:$0xf]
    %v6832 = vld [vmem:[%s6809 + $0x84] sm:$0xff]
    %v6833 = vld [vmem:[%s6809 + $0x8c] sm:$0xf]
    %v6834 = vld [vmem:[%s6809 + $0x90] sm:$0xff]
    %v6835 = vld [vmem:[%s6809 + $0x98] sm:$0xf]
    %v6836 = vld [vmem:[%s6809 + $0x9c] sm:$0xff]
    %v6837 = vld [vmem:[%s6809 + $0xa4] sm:$0xf]
    %v6838 = vld [vmem:[%s6809 + $0xa8] sm:$0xff]
    %v6839 = vld [vmem:[%s6809 + $0xb0] sm:$0xf]
    %v6840 = vld [vmem:[%s6809 + $0xb4] sm:$0xff]
    %v6841 = vld [vmem:[%s6809 + $0xbc] sm:$0xf]
    %v6842 = vld [vmem:[%s6809 + $0x1b0] sm:$0xff]
    %v6843 = vld [vmem:[%s6809 + $0x1b8] sm:$0xf]
    %v6844 = vld [vmem:[%s6809 + $0x1bc] sm:$0xff]
    %v6845 = vld [vmem:[%s6809 + $0x1c4] sm:$0xf]
    %v6846 = vld [vmem:[%s6809 + $0x1c8] sm:$0xff]
    %v6847 = vld [vmem:[%s6809 + $0x1d0] sm:$0xf]
    %v6848 = vld [vmem:[%s6809 + $0x1d4] sm:$0xff]
    %v6849 = vld [vmem:[%s6809 + $0x1dc] sm:$0xf]
    %v6850 = vld [vmem:[%s6809 + $0x1e0] sm:$0xff]
    %v6851 = vld [vmem:[%s6809 + $0x1e8] sm:$0xf]
    %v6852 = vld [vmem:[%s6809 + $0x1ec] sm:$0xff]
    %v6853 = vld [vmem:[%s6809 + $0x1f4] sm:$0xf]
    %v6854 = vld [vmem:[%s6809 + $0x1f8] sm:$0xff]
    %v6855 = vld [vmem:[%s6809 + $0x200] sm:$0xf]
    %v6856 = vld [vmem:[%s6809 + $0x204] sm:$0xff]
    %v6857 = vld [vmem:[%s6809 + $0x20c] sm:$0xf]
    %v6858 = vld [vmem:[%s6809 + $0x210] sm:$0xff]
    %v6859 = vld [vmem:[%s6809 + $0x218] sm:$0xf]
    %v6860 = vld [vmem:[%s6809 + $0x21c] sm:$0xff]
    %v6861 = vld [vmem:[%s6809 + $0x224] sm:$0xf]
    %v6862 = vld [vmem:[%s6809 + $0x228] sm:$0xff]
    %v6863 = vld [vmem:[%s6809 + $0x230] sm:$0xf]
    %v6864 = vld [vmem:[%s6809 + $0x234] sm:$0xff]
    %v6865 = vld [vmem:[%s6809 + $0x23c] sm:$0xf]
    %v6866 = vld [vmem:[%s6809 + $0x240] sm:$0xff]
    %v6867 = vld [vmem:[%s6809 + $0x248] sm:$0xf]
    %v6868 = vld [vmem:[%s6809 + $0x24c] sm:$0xff]
    %v6869 = vld [vmem:[%s6809 + $0x254] sm:$0xf]
    %v6870 = vld [vmem:[%s6809 + $0x258] sm:$0xff]
    %v6871 = vld [vmem:[%s6809 + $0x260] sm:$0xf]
    %v6872 = vld [vmem:[%s6809 + $0x264] sm:$0xff]
    %v6873 = vld [vmem:[%s6809 + $0x26c] sm:$0xf]
    %v6874 = vld [vmem:[%s3460] sm:$0xf]
    %v6875 = vld [vmem:[%s3460 + $0x4] sm:$0xf]
    %v6876 = vld [vmem:[%s3460 + $0x8] sm:$0xf]
    %v6877 = vld [vmem:[%s3460 + $0xc] sm:$0xf]
    %v6878 = vld [vmem:[%s3460 + $0x10] sm:$0xf]
    %v6879 = vld [vmem:[%s3460 + $0x14] sm:$0xf]
    %v6880 = vld [vmem:[%s3460 + $0x18] sm:$0xf]
    %v6881 = vld [vmem:[%s3460 + $0x1c] sm:$0xf]
    %v6882 = vld [vmem:[%s3460 + $0x20] sm:$0xf]
    %v6883 = vld [vmem:[%s3460 + $0x24] sm:$0xf]
    %v6884 = vld [vmem:[%s3460 + $0x28] sm:$0xf]
    %v6885 = vld [vmem:[%s3460 + $0x2c] sm:$0xf]
    %v6886 = vld [vmem:[%s3460 + $0x30] sm:$0xf]
    %v6887 = vld [vmem:[%s3460 + $0x34] sm:$0xf]
    %v6888 = vld [vmem:[%s3460 + $0x38] sm:$0xf]
    %v6889 = vld [vmem:[%s3460 + $0x3c] sm:$0xf]
    %v6890 = vld [vmem:[%s3460 + $0x40] sm:$0xf]
    %v6891 = vld [vmem:[%s3460 + $0x44] sm:$0xf]
    %v6892 = vld [vmem:[%s3460 + $0x48] sm:$0xf]
    %v6893 = vld [vmem:[%s3460 + $0x4c] sm:$0xf]
    %v6894 = vld [vmem:[%s3460 + $0x50] sm:$0xf]
    %v6895 = vld [vmem:[%s3460 + $0x54] sm:$0xf]
    %v6896 = vld [vmem:[%s3460 + $0x58] sm:$0xf]
    %v6897 = vld [vmem:[%s3460 + $0x5c] sm:$0xf]
    %v6898 = vld [vmem:[%s3460 + $0x60] sm:$0xf]
    %v6899 = vld [vmem:[%s3460 + $0x64] sm:$0xf]
    %v6900 = vld [vmem:[%s3460 + $0x68] sm:$0xf]
    %v6901 = vld [vmem:[%s3460 + $0x6c] sm:$0xf]
    %v6902 = vld [vmem:[%s3460 + $0x70] sm:$0xf]
    %v6903 = vld [vmem:[%s3460 + $0x74] sm:$0xf]
    %v6904 = vld [vmem:[%s3460 + $0x78] sm:$0xf]
    %v6905 = vld [vmem:[%s3460 + $0x7c] sm:$0xf]
    %v6906 = vld [vmem:[%s3460 + $0x80] sm:$0xf]
    %v6907 = vld [vmem:[%s3460 + $0x84] sm:$0xf]
    %v6908 = vld [vmem:[%s3460 + $0x88] sm:$0xf]
    %v6909 = vld [vmem:[%s3460 + $0x8c] sm:$0xf]
    %v6910 = vld [vmem:[%s3460 + $0x90] sm:$0xf]
    %v6911 = vld [vmem:[%s3460 + $0x94] sm:$0xf]
    %v6912 = vld [vmem:[%s3460 + $0x98] sm:$0xf]
    %v6913 = vld [vmem:[%s3460 + $0x9c] sm:$0xf]
    %v6914 = vld [vmem:[%s3460 + $0xa0] sm:$0xf]
    %v6915 = vld [vmem:[%s3460 + $0xa4] sm:$0xf]
    %v6916 = vld [vmem:[%s3460 + $0xa8] sm:$0xf]
    %v6917 = vld [vmem:[%s3460 + $0xac] sm:$0xf]
    %v6918 = vld [vmem:[%s3460 + $0xb0] sm:$0xf]
    %v6919 = vld [vmem:[%s3460 + $0xb4] sm:$0xf]
    %v6920 = vld [vmem:[%s3460 + $0xb8] sm:$0xf]
    %v6921 = vld [vmem:[%s3460 + $0xbc] sm:$0xf]
    %v6986 = vunpack.c.l.b16 %v6810
    %v6987 = vunpack.c.h.b16 %v6810
    %v6988 = vunpack.c.l.b16 %v6811
    %v6989 = vunpack.c.l.b16 %v6812
    %v6990 = vunpack.c.h.b16 %v6812
    %v6991 = vunpack.c.l.b16 %v6813
    %v6992 = vunpack.c.l.b16 %v6814
    %v6993 = vunpack.c.h.b16 %v6814
    %v6994 = vunpack.c.l.b16 %v6815
    %v6995 = vunpack.c.l.b16 %v6816
    %v6996 = vunpack.c.h.b16 %v6816
    %v6997 = vunpack.c.l.b16 %v6817
    %v6998 = vunpack.c.l.b16 %v6818
    %v6999 = vunpack.c.h.b16 %v6818
    %v7000 = vunpack.c.l.b16 %v6819
    %v7001 = vunpack.c.l.b16 %v6820
    %v7002 = vunpack.c.h.b16 %v6820
    %v7003 = vunpack.c.l.b16 %v6821
    %v7004 = vunpack.c.l.b16 %v6822
    %v7005 = vunpack.c.h.b16 %v6822
    %v7006 = vunpack.c.l.b16 %v6823
    %v7007 = vunpack.c.l.b16 %v6824
    %v7008 = vunpack.c.h.b16 %v6824
    %v7009 = vunpack.c.l.b16 %v6825
    %v7010 = vunpack.c.l.b16 %v6826
    %v7011 = vunpack.c.h.b16 %v6826
    %v7012 = vunpack.c.l.b16 %v6827
    %v7013 = vunpack.c.l.b16 %v6828
    %v7014 = vunpack.c.h.b16 %v6828
    %v7015 = vunpack.c.l.b16 %v6829
    %v7016 = vunpack.c.l.b16 %v6830
    %v7017 = vunpack.c.h.b16 %v6830
    %v7018 = vunpack.c.l.b16 %v6831
    %v7019 = vunpack.c.l.b16 %v6832
    %v7020 = vunpack.c.h.b16 %v6832
    %v7021 = vunpack.c.l.b16 %v6833
    %v7022 = vunpack.c.l.b16 %v6834
    %v7023 = vunpack.c.h.b16 %v6834
    %v7024 = vunpack.c.l.b16 %v6835
    %v7025 = vunpack.c.l.b16 %v6836
    %v7026 = vunpack.c.h.b16 %v6836
    %v7027 = vunpack.c.l.b16 %v6837
    %v7028 = vunpack.c.l.b16 %v6838
    %v7029 = vunpack.c.h.b16 %v6838
    %v7030 = vunpack.c.l.b16 %v6839
    %v7031 = vunpack.c.l.b16 %v6840
    %v7032 = vunpack.c.h.b16 %v6840
    %v7033 = vunpack.c.l.b16 %v6841
    %v7034 = vunpack.c.l.b16 %v6842
    %v7035 = vunpack.c.h.b16 %v6842
    %v7036 = vunpack.c.l.b16 %v6843
    %v7037 = vunpack.c.l.b16 %v6844
    %v7038 = vunpack.c.h.b16 %v6844
    %v7039 = vunpack.c.l.b16 %v6845
    %v7040 = vunpack.c.l.b16 %v6846
    %v7041 = vunpack.c.h.b16 %v6846
    %v7042 = vunpack.c.l.b16 %v6847
    %v7043 = vunpack.c.l.b16 %v6848
    %v7044 = vunpack.c.h.b16 %v6848
    %v7045 = vunpack.c.l.b16 %v6849
    %v7046 = vunpack.c.l.b16 %v6850
    %v7047 = vunpack.c.h.b16 %v6850
    %v7048 = vunpack.c.l.b16 %v6851
    %v7049 = vunpack.c.l.b16 %v6852
    %v7050 = vunpack.c.h.b16 %v6852
    %v7051 = vunpack.c.l.b16 %v6853
    %v7052 = vunpack.c.l.b16 %v6854
    %v7053 = vunpack.c.h.b16 %v6854
    %v7054 = vunpack.c.l.b16 %v6855
    %v7055 = vunpack.c.l.b16 %v6856
    %v7056 = vunpack.c.h.b16 %v6856
    %v7057 = vunpack.c.l.b16 %v6857
    %v7058 = vunpack.c.l.b16 %v6858
    %v7059 = vunpack.c.h.b16 %v6858
    %v7060 = vunpack.c.l.b16 %v6859
    %v7061 = vunpack.c.l.b16 %v6860
    %v7062 = vunpack.c.h.b16 %v6860
    %v7063 = vunpack.c.l.b16 %v6861
    %v7064 = vunpack.c.l.b16 %v6862
    %v7065 = vunpack.c.h.b16 %v6862
    %v7066 = vunpack.c.l.b16 %v6863
    %v7067 = vunpack.c.l.b16 %v6864
    %v7068 = vunpack.c.h.b16 %v6864
    %v7069 = vunpack.c.l.b16 %v6865
    %v7070 = vunpack.c.l.b16 %v6866
    %v7071 = vunpack.c.h.b16 %v6866
    %v7072 = vunpack.c.l.b16 %v6867
    %v7073 = vunpack.c.l.b16 %v6868
    %v7074 = vunpack.c.h.b16 %v6868
    %v7075 = vunpack.c.l.b16 %v6869
    %v7076 = vunpack.c.l.b16 %v6870
    %v7077 = vunpack.c.h.b16 %v6870
    %v7078 = vunpack.c.l.b16 %v6871
    %v7079 = vunpack.c.l.b16 %v6872
    %v7080 = vunpack.c.h.b16 %v6872
    %v7081 = vunpack.c.l.b16 %v6873
    %v7082 = vpack.c.b16 %v6989, %v6986
    %v7083 = vpack.c.b16 %v6990, %v6987
    %v7084 = vpack.c.b16 %v6991, %v6988
    %v7085 = vpack.c.b16 %v6995, %v6992
    %v7086 = vpack.c.b16 %v6996, %v6993
    %v7087 = vpack.c.b16 %v6997, %v6994
    %v7088 = vpack.c.b16 %v7001, %v6998
    %v7089 = vpack.c.b16 %v7002, %v6999
    %v7090 = vpack.c.b16 %v7003, %v7000
    %v7091 = vpack.c.b16 %v7007, %v7004
    %v7092 = vpack.c.b16 %v7008, %v7005
    %v7093 = vpack.c.b16 %v7009, %v7006
    %v7094 = vpack.c.b16 %v7013, %v7010
    %v7095 = vpack.c.b16 %v7014, %v7011
    %v7096 = vpack.c.b16 %v7015, %v7012
    %v7097 = vpack.c.b16 %v7019, %v7016
    %v7098 = vpack.c.b16 %v7020, %v7017
    %v7099 = vpack.c.b16 %v7021, %v7018
    %v7100 = vpack.c.b16 %v7025, %v7022
    %v7101 = vpack.c.b16 %v7026, %v7023
    %v7102 = vpack.c.b16 %v7027, %v7024
    %v7103 = vpack.c.b16 %v7031, %v7028
    %v7104 = vpack.c.b16 %v7032, %v7029
    %v7105 = vpack.c.b16 %v7033, %v7030
    %v7106 = vpack.c.b16 %v7037, %v7034
    %v7107 = vpack.c.b16 %v7038, %v7035
    %v7108 = vpack.c.b16 %v7039, %v7036
    %v7109 = vpack.c.b16 %v7043, %v7040
    %v7110 = vpack.c.b16 %v7044, %v7041
    %v7111 = vpack.c.b16 %v7045, %v7042
    %v7112 = vpack.c.b16 %v7049, %v7046
    %v7113 = vpack.c.b16 %v7050, %v7047
    %v7114 = vpack.c.b16 %v7051, %v7048
    %v7115 = vpack.c.b16 %v7055, %v7052
    %v7116 = vpack.c.b16 %v7056, %v7053
    %v7117 = vpack.c.b16 %v7057, %v7054
    %v7118 = vpack.c.b16 %v7061, %v7058
    %v7119 = vpack.c.b16 %v7062, %v7059
    %v7120 = vpack.c.b16 %v7063, %v7060
    %v7121 = vpack.c.b16 %v7067, %v7064
    %v7122 = vpack.c.b16 %v7068, %v7065
    %v7123 = vpack.c.b16 %v7069, %v7066
    %v7124 = vpack.c.b16 %v7073, %v7070
    %v7125 = vpack.c.b16 %v7074, %v7071
    %v7126 = vpack.c.b16 %v7075, %v7072
    %v7127 = vpack.c.b16 %v7079, %v7076
    %v7128 = vpack.c.b16 %v7080, %v7077
    %v7129 = vpack.c.b16 %v7081, %v7078
    %v7226 = vunpack.c.l.b16 %v6874
    %v7227 = vunpack.c.l.b16 %v6875
    %v7228 = vunpack.c.l.b16 %v6876
    %v7229 = vunpack.c.l.b16 %v6877
    %v7230 = vunpack.c.l.b16 %v6878
    %v7231 = vunpack.c.l.b16 %v6879
    %v7232 = vunpack.c.l.b16 %v6880
    %v7233 = vunpack.c.l.b16 %v6881
    %v7234 = vunpack.c.l.b16 %v6882
    %v7235 = vunpack.c.l.b16 %v6883
    %v7236 = vunpack.c.l.b16 %v6884
    %v7237 = vunpack.c.l.b16 %v6885
    %v7238 = vunpack.c.l.b16 %v6886
    %v7239 = vunpack.c.l.b16 %v6887
    %v7240 = vunpack.c.l.b16 %v6888
    %v7241 = vunpack.c.l.b16 %v6889
    %v7242 = vunpack.c.l.b16 %v6890
    %v7243 = vunpack.c.l.b16 %v6891
    %v7244 = vunpack.c.l.b16 %v6892
    %v7245 = vunpack.c.l.b16 %v6893
    %v7246 = vunpack.c.l.b16 %v6894
    %v7247 = vunpack.c.l.b16 %v6895
    %v7248 = vunpack.c.l.b16 %v6896
    %v7249 = vunpack.c.l.b16 %v6897
    %v7250 = vunpack.c.l.b16 %v6898
    %v7251 = vunpack.c.l.b16 %v6899
    %v7252 = vunpack.c.l.b16 %v6900
    %v7253 = vunpack.c.l.b16 %v6901
    %v7254 = vunpack.c.l.b16 %v6902
    %v7255 = vunpack.c.l.b16 %v6903
    %v7256 = vunpack.c.l.b16 %v6904
    %v7257 = vunpack.c.l.b16 %v6905
    %v7258 = vunpack.c.l.b16 %v6906
    %v7259 = vunpack.c.l.b16 %v6907
    %v7260 = vunpack.c.l.b16 %v6908
    %v7261 = vunpack.c.l.b16 %v6909
    %v7262 = vunpack.c.l.b16 %v6910
    %v7263 = vunpack.c.l.b16 %v6911
    %v7264 = vunpack.c.l.b16 %v6912
    %v7265 = vunpack.c.l.b16 %v6913
    %v7266 = vunpack.c.l.b16 %v6914
    %v7267 = vunpack.c.l.b16 %v6915
    %v7268 = vunpack.c.l.b16 %v6916
    %v7269 = vunpack.c.l.b16 %v6917
    %v7270 = vunpack.c.l.b16 %v6918
    %v7271 = vunpack.c.l.b16 %v6919
    %v7272 = vunpack.c.l.b16 %v6920
    %v7273 = vunpack.c.l.b16 %v6921
    %v7274 = vpack.c.b16 %v7227, %v7226
    %v7275 = vpack.c.b16 %v7229, %v7228
    %v7276 = vpack.c.b16 %v7231, %v7230
    %v7277 = vpack.c.b16 %v7233, %v7232
    %v7278 = vpack.c.b16 %v7235, %v7234
    %v7279 = vpack.c.b16 %v7237, %v7236
    %v7280 = vpack.c.b16 %v7239, %v7238
    %v7281 = vpack.c.b16 %v7241, %v7240
    %v7282 = vpack.c.b16 %v7243, %v7242
    %v7283 = vpack.c.b16 %v7245, %v7244
    %v7284 = vpack.c.b16 %v7247, %v7246
    %v7285 = vpack.c.b16 %v7249, %v7248
    %v7286 = vpack.c.b16 %v7251, %v7250
    %v7287 = vpack.c.b16 %v7253, %v7252
    %v7288 = vpack.c.b16 %v7255, %v7254
    %v7289 = vpack.c.b16 %v7257, %v7256
    %v7290 = vpack.c.b16 %v7259, %v7258
    %v7291 = vpack.c.b16 %v7261, %v7260
    %v7292 = vpack.c.b16 %v7263, %v7262
    %v7293 = vpack.c.b16 %v7265, %v7264
    %v7294 = vpack.c.b16 %v7267, %v7266
    %v7295 = vpack.c.b16 %v7269, %v7268
    %v7296 = vpack.c.b16 %v7271, %v7270
    %v7297 = vpack.c.b16 %v7273, %v7272
    %7322 = vmatprep.subr.bf16.mxu0 0
    %7323 = vmatpush1.bf16.msra.mxu0 %v7281
    %7324 = vmatprep.subr.bf16.mxu0 0
    %7325 = vmatpush1.bf16.msra.mxu0 %v7280
    %7326 = vmatprep.subr.bf16.mxu0 0
    %7327 = vmatpush1.bf16.msra.mxu0 %v7279
    %7328 = vmatprep.subr.bf16.mxu0 0
    %7329 = vmatpush1.bf16.msra.mxu0 %v7278
    %7330 = vmatprep.subr.bf16.mxu0 0
    %7331 = vmatpush1.bf16.msra.mxu0 %v7277
    %7332 = vmatprep.subr.bf16.mxu0 0
    %7333 = vmatpush1.bf16.msra.mxu0 %v7276
    %7334 = vmatprep.subr.bf16.mxu0 0
    %7335 = vmatpush1.bf16.msra.mxu0 %v7275
    %7336 = vmatprep.subr.bf16.mxu0 0
    %7337 = vmatpush1.bf16.msra.mxu0 %v7274
    %7338 = vmatprep.subr.bf16.mxu0 0
    %7339 = vmatpush2.bf16.msra.mxu0 %v7289
    %7340 = vmatprep.subr.bf16.mxu0 0
    %7341 = vmatpush2.bf16.msra.mxu0 %v7288
    %7342 = vmatprep.subr.bf16.mxu0 0
    %7343 = vmatpush2.bf16.msra.mxu0 %v7287
    %7344 = vmatprep.subr.bf16.mxu0 0
    %7345 = vmatpush2.bf16.msra.mxu0 %v7286
    %7346 = vmatprep.subr.bf16.mxu0 0
    %7347 = vmatpush2.bf16.msra.mxu0 %v7285
    %7348 = vmatprep.subr.bf16.mxu0 0
    %7349 = vmatpush2.bf16.msra.mxu0 %v7284
    %7350 = vmatprep.subr.bf16.mxu0 0
    %7351 = vmatpush2.bf16.msra.mxu0 %v7283
    %7352 = vmatprep.subr.bf16.mxu0 0
    %7353 = vmatpush2.bf16.msra.mxu0 %v7282
    %7354 = vmatprep.mubr.bf16.mxu0 %v7083
    %7355 = vmatmul.mubr.bf16.gmra.mxu0 %v7082
    %v7356 = vpop.f32.mrf.mxu0
    %v7357 = vadd.f32 0.0, %v7356
    %v7358 = vpop.f32.mrf.mxu0
    %v7359 = vpop.f32.mrf.mxu0
    %v7360 = vadd.f32 0.0, %v7359
    %v7361 = vpop.f32.mrf.mxu0
    %7362 = vmatprep.mubr.bf16.mxu0 %v7086
    %7363 = vmatmul.mubr.bf16.gmra.mxu0 %v7085
    %v7364 = vpop.f32.mrf.mxu0
    %v7365 = vadd.f32 0.0, %v7364
    %v7366 = vpop.f32.mrf.mxu0
    %v7367 = vpop.f32.mrf.mxu0
    %v7368 = vadd.f32 0.0, %v7367
    %v7369 = vpop.f32.mrf.mxu0
    %7370 = vmatprep.mubr.bf16.mxu0 %v7089
    %7371 = vmatmul.mubr.bf16.gmra.mxu0 %v7088
    %v7372 = vpop.f32.mrf.mxu0
    %v7373 = vadd.f32 0.0, %v7372
    %v7374 = vpop.f32.mrf.mxu0
    %v7375 = vpop.f32.mrf.mxu0
    %v7376 = vadd.f32 0.0, %v7375
    %v7377 = vpop.f32.mrf.mxu0
    %7378 = vmatprep.mubr.bf16.mxu0 %v7092
    %7379 = vmatmul.mubr.bf16.gmra.mxu0 %v7091
    %v7380 = vpop.f32.mrf.mxu0
    %v7381 = vadd.f32 0.0, %v7380
    %v7382 = vpop.f32.mrf.mxu0
    %v7383 = vpop.f32.mrf.mxu0
    %v7384 = vadd.f32 0.0, %v7383
    %v7385 = vpop.f32.mrf.mxu0
    %7386 = vmatprep.mubr.bf16.mxu0 %v7095
    %7387 = vmatmul.mubr.bf16.gmra.mxu0 %v7094
    %v7388 = vpop.f32.mrf.mxu0
    %v7389 = vadd.f32 0.0, %v7388
    %v7390 = vpop.f32.mrf.mxu0
    %v7391 = vpop.f32.mrf.mxu0
    %v7392 = vadd.f32 0.0, %v7391
    %v7393 = vpop.f32.mrf.mxu0
    %7394 = vmatprep.mubr.bf16.mxu0 %v7098
    %7395 = vmatmul.mubr.bf16.gmra.mxu0 %v7097
    %v7396 = vpop.f32.mrf.mxu0
    %v7397 = vadd.f32 0.0, %v7396
    %v7398 = vpop.f32.mrf.mxu0
    %v7399 = vpop.f32.mrf.mxu0
    %v7400 = vadd.f32 0.0, %v7399
    %v7401 = vpop.f32.mrf.mxu0
    %7402 = vmatprep.mubr.bf16.mxu0 %v7101
    %7403 = vmatmul.mubr.bf16.gmra.mxu0 %v7100
    %v7404 = vpop.f32.mrf.mxu0
    %v7405 = vadd.f32 0.0, %v7404
    %v7406 = vpop.f32.mrf.mxu0
    %v7407 = vpop.f32.mrf.mxu0
    %v7408 = vadd.f32 0.0, %v7407
    %v7409 = vpop.f32.mrf.mxu0
    %7410 = vmatprep.mubr.bf16.mxu0 %v7104
    %7411 = vmatmul.mubr.bf16.gmra.mxu0 %v7103
    %v7412 = vpop.f32.mrf.mxu0
    %v7413 = vadd.f32 0.0, %v7412
    %v7414 = vpop.f32.mrf.mxu0
    %v7415 = vpop.f32.mrf.mxu0
    %v7416 = vadd.f32 0.0, %v7415
    %v7417 = vpop.f32.mrf.mxu0
    %7418 = vmatprep.mubr.bf16.mxu0 %v7107
    %7419 = vmatmul.mubr.bf16.gmra.mxu0 %v7106
    %v7420 = vpop.f32.mrf.mxu0
    %v7421 = vadd.f32 0.0, %v7420
    %v7422 = vpop.f32.mrf.mxu0
    %v7423 = vpop.f32.mrf.mxu0
    %v7424 = vadd.f32 0.0, %v7423
    %v7425 = vpop.f32.mrf.mxu0
    %7426 = vmatprep.mubr.bf16.mxu0 %v7110
    %7427 = vmatmul.mubr.bf16.gmra.mxu0 %v7109
    %v7428 = vpop.f32.mrf.mxu0
    %v7429 = vadd.f32 0.0, %v7428
    %v7430 = vpop.f32.mrf.mxu0
    %v7431 = vpop.f32.mrf.mxu0
    %v7432 = vadd.f32 0.0, %v7431
    %v7433 = vpop.f32.mrf.mxu0
    %7434 = vmatprep.mubr.bf16.mxu0 %v7113
    %7435 = vmatmul.mubr.bf16.gmra.mxu0 %v7112
    %v7436 = vpop.f32.mrf.mxu0
    %v7437 = vadd.f32 0.0, %v7436
    %v7438 = vpop.f32.mrf.mxu0
    %v7439 = vpop.f32.mrf.mxu0
    %v7440 = vadd.f32 0.0, %v7439
    %v7441 = vpop.f32.mrf.mxu0
    %7442 = vmatprep.mubr.bf16.mxu0 %v7116
    %7443 = vmatmul.mubr.bf16.gmra.mxu0 %v7115
    %v7444 = vpop.f32.mrf.mxu0
    %v7445 = vadd.f32 0.0, %v7444
    %v7446 = vpop.f32.mrf.mxu0
    %v7447 = vpop.f32.mrf.mxu0
    %v7448 = vadd.f32 0.0, %v7447
    %v7449 = vpop.f32.mrf.mxu0
    %7450 = vmatprep.mubr.bf16.mxu0 %v7119
    %7451 = vmatmul.mubr.bf16.gmra.mxu0 %v7118
    %v7452 = vpop.f32.mrf.mxu0
    %v7453 = vadd.f32 0.0, %v7452
    %v7454 = vpop.f32.mrf.mxu0
    %v7455 = vpop.f32.mrf.mxu0
    %v7456 = vadd.f32 0.0, %v7455
    %v7457 = vpop.f32.mrf.mxu0
    %7458 = vmatprep.mubr.bf16.mxu0 %v7122
    %7459 = vmatmul.mubr.bf16.gmra.mxu0 %v7121
    %v7460 = vpop.f32.mrf.mxu0
    %v7461 = vadd.f32 0.0, %v7460
    %v7462 = vpop.f32.mrf.mxu0
    %v7463 = vpop.f32.mrf.mxu0
    %v7464 = vadd.f32 0.0, %v7463
    %v7465 = vpop.f32.mrf.mxu0
    %7466 = vmatprep.mubr.bf16.mxu0 %v7125
    %7467 = vmatmul.mubr.bf16.gmra.mxu0 %v7124
    %v7468 = vpop.f32.mrf.mxu0
    %v7469 = vadd.f32 0.0, %v7468
    %v7470 = vpop.f32.mrf.mxu0
    %v7471 = vpop.f32.mrf.mxu0
    %v7472 = vadd.f32 0.0, %v7471
    %v7473 = vpop.f32.mrf.mxu0
    %7474 = vmatprep.mubr.bf16.mxu0 %v7128
    %7475 = vmatmul.mubr.bf16.gmra.mxu0 %v7127
    %v7476 = vpop.f32.mrf.mxu0
    %v7477 = vadd.f32 0.0, %v7476
    %v7478 = vpop.f32.mrf.mxu0
    %v7479 = vpop.f32.mrf.mxu0
    %v7480 = vadd.f32 0.0, %v7479
    %v7481 = vpop.f32.mrf.mxu0
    %7482 = vdwg.mxu0
    %7483 = vmatprep.subr.bf16.mxu0 0
    %7484 = vmatpush1.bf16.msra.mxu0 %v7297
    %7485 = vmatprep.subr.bf16.mxu0 0
    %7486 = vmatpush1.bf16.msra.mxu0 %v7296
    %7487 = vmatprep.subr.bf16.mxu0 0
    %7488 = vmatpush1.bf16.msra.mxu0 %v7295
    %7489 = vmatprep.subr.bf16.mxu0 0
    %7490 = vmatpush1.bf16.msra.mxu0 %v7294
    %7491 = vmatprep.subr.bf16.mxu0 0
    %7492 = vmatpush1.bf16.msra.mxu0 %v7293
    %7493 = vmatprep.subr.bf16.mxu0 0
    %7494 = vmatpush1.bf16.msra.mxu0 %v7292
    %7495 = vmatprep.subr.bf16.mxu0 0
    %7496 = vmatpush1.bf16.msra.mxu0 %v7291
    %7497 = vmatprep.subr.bf16.mxu0 0
    %7498 = vmatpush1.bf16.msra.mxu0 %v7290
    %7499 = vmatprep.subr.bf16.mxu0 0
    %7500 = vmatpush2.bf16.msra.mxu0 0
    %7501 = vmatprep.subr.bf16.mxu0 0
    %7502 = vmatpush2.bf16.msra.mxu0 0
    %7503 = vmatprep.subr.bf16.mxu0 0
    %7504 = vmatpush2.bf16.msra.mxu0 0
    %7505 = vmatprep.subr.bf16.mxu0 0
    %7506 = vmatpush2.bf16.msra.mxu0 0
    %7507 = vmatprep.subr.bf16.mxu0 0
    %7508 = vmatpush2.bf16.msra.mxu0 0
    %7509 = vmatprep.subr.bf16.mxu0 0
    %7510 = vmatpush2.bf16.msra.mxu0 0
    %7511 = vmatprep.subr.bf16.mxu0 0
    %7512 = vmatpush2.bf16.msra.mxu0 0
    %7513 = vmatprep.subr.bf16.mxu0 0
    %7514 = vmatpush2.bf16.msra.mxu0 0
    %7515 = vmatprep.mubr.bf16.mxu0 0
    %7516 = vmatmul.mubr.bf16.gmra.mxu0 %v7084
    %v7517 = vpop.f32.mrf.mxu0
    %v7518 = vadd.f32 %v7357, %v7517
    %v7519 = vpop.f32.mrf.mxu0
    %v7520 = vpop.f32.mrf.mxu0
    %v7521 = vadd.f32 %v7360, %v7520
    %v7522 = vpop.f32.mrf.mxu0
    %7523 = vmatprep.mubr.bf16.mxu0 0
    %7524 = vmatmul.mubr.bf16.gmra.mxu0 %v7087
    %v7525 = vpop.f32.mrf.mxu0
    %v7526 = vadd.f32 %v7365, %v7525
    %v7527 = vpop.f32.mrf.mxu0
    %v7528 = vpop.f32.mrf.mxu0
    %v7529 = vadd.f32 %v7368, %v7528
    %v7530 = vpop.f32.mrf.mxu0
    %7531 = vmatprep.mubr.bf16.mxu0 0
    %7532 = vmatmul.mubr.bf16.gmra.mxu0 %v7090
    %v7533 = vpop.f32.mrf.mxu0
    %v7534 = vadd.f32 %v7373, %v7533
    %v7535 = vpop.f32.mrf.mxu0
    %v7536 = vpop.f32.mrf.mxu0
    %v7537 = vadd.f32 %v7376, %v7536
    %v7538 = vpop.f32.mrf.mxu0
    %7539 = vmatprep.mubr.bf16.mxu0 0
    %7540 = vmatmul.mubr.bf16.gmra.mxu0 %v7093
    %v7541 = vpop.f32.mrf.mxu0
    %v7542 = vadd.f32 %v7381, %v7541
    %v7543 = vpop.f32.mrf.mxu0
    %v7544 = vpop.f32.mrf.mxu0
    %v7545 = vadd.f32 %v7384, %v7544
    %v7546 = vpop.f32.mrf.mxu0
    %7547 = vmatprep.mubr.bf16.mxu0 0
    %7548 = vmatmul.mubr.bf16.gmra.mxu0 %v7096
    %v7549 = vpop.f32.mrf.mxu0
    %v7550 = vadd.f32 %v7389, %v7549
    %v7551 = vpop.f32.mrf.mxu0
    %v7552 = vpop.f32.mrf.mxu0
    %v7553 = vadd.f32 %v7392, %v7552
    %v7554 = vpop.f32.mrf.mxu0
    %7555 = vmatprep.mubr.bf16.mxu0 0
    %7556 = vmatmul.mubr.bf16.gmra.mxu0 %v7099
    %v7557 = vpop.f32.mrf.mxu0
    %v7558 = vadd.f32 %v7397, %v7557
    %v7559 = vpop.f32.mrf.mxu0
    %v7560 = vpop.f32.mrf.mxu0
    %v7561 = vadd.f32 %v7400, %v7560
    %v7562 = vpop.f32.mrf.mxu0
    %7563 = vmatprep.mubr.bf16.mxu0 0
    %7564 = vmatmul.mubr.bf16.gmra.mxu0 %v7102
    %v7565 = vpop.f32.mrf.mxu0
    %v7566 = vadd.f32 %v7405, %v7565
    %v7567 = vpop.f32.mrf.mxu0
    %v7568 = vpop.f32.mrf.mxu0
    %v7569 = vadd.f32 %v7408, %v7568
    %v7570 = vpop.f32.mrf.mxu0
    %7571 = vmatprep.mubr.bf16.mxu0 0
    %7572 = vmatmul.mubr.bf16.gmra.mxu0 %v7105
    %v7573 = vpop.f32.mrf.mxu0
    %v7574 = vadd.f32 %v7413, %v7573
    %v7575 = vpop.f32.mrf.mxu0
    %v7576 = vpop.f32.mrf.mxu0
    %v7577 = vadd.f32 %v7416, %v7576
    %v7578 = vpop.f32.mrf.mxu0
    %7579 = vmatprep.mubr.bf16.mxu0 0
    %7580 = vmatmul.mubr.bf16.gmra.mxu0 %v7108
    %v7581 = vpop.f32.mrf.mxu0
    %v7582 = vadd.f32 %v7421, %v7581
    %v7583 = vpop.f32.mrf.mxu0
    %v7584 = vpop.f32.mrf.mxu0
    %v7585 = vadd.f32 %v7424, %v7584
    %v7586 = vpop.f32.mrf.mxu0
    %7587 = vmatprep.mubr.bf16.mxu0 0
    %7588 = vmatmul.mubr.bf16.gmra.mxu0 %v7111
    %v7589 = vpop.f32.mrf.mxu0
    %v7590 = vadd.f32 %v7429, %v7589
    %v7591 = vpop.f32.mrf.mxu0
    %v7592 = vpop.f32.mrf.mxu0
    %v7593 = vadd.f32 %v7432, %v7592
    %v7594 = vpop.f32.mrf.mxu0
    %7595 = vmatprep.mubr.bf16.mxu0 0
    %7596 = vmatmul.mubr.bf16.gmra.mxu0 %v7114
    %v7597 = vpop.f32.mrf.mxu0
    %v7598 = vadd.f32 %v7437, %v7597
    %v7599 = vpop.f32.mrf.mxu0
    %v7600 = vpop.f32.mrf.mxu0
    %v7601 = vadd.f32 %v7440, %v7600
    %v7602 = vpop.f32.mrf.mxu0
    %7603 = vmatprep.mubr.bf16.mxu0 0
    %7604 = vmatmul.mubr.bf16.gmra.mxu0 %v7117
    %v7605 = vpop.f32.mrf.mxu0
    %v7606 = vadd.f32 %v7445, %v7605
    %v7607 = vpop.f32.mrf.mxu0
    %v7608 = vpop.f32.mrf.mxu0
    %v7609 = vadd.f32 %v7448, %v7608
    %v7610 = vpop.f32.mrf.mxu0
    %7611 = vmatprep.mubr.bf16.mxu0 0
    %7612 = vmatmul.mubr.bf16.gmra.mxu0 %v7120
    %v7613 = vpop.f32.mrf.mxu0
    %v7614 = vadd.f32 %v7453, %v7613
    %v7615 = vpop.f32.mrf.mxu0
    %v7616 = vpop.f32.mrf.mxu0
    %v7617 = vadd.f32 %v7456, %v7616
    %v7618 = vpop.f32.mrf.mxu0
    %7619 = vmatprep.mubr.bf16.mxu0 0
    %7620 = vmatmul.mubr.bf16.gmra.mxu0 %v7123
    %v7621 = vpop.f32.mrf.mxu0
    %v7622 = vadd.f32 %v7461, %v7621
    %v7623 = vpop.f32.mrf.mxu0
    %v7624 = vpop.f32.mrf.mxu0
    %v7625 = vadd.f32 %v7464, %v7624
    %v7626 = vpop.f32.mrf.mxu0
    %7627 = vmatprep.mubr.bf16.mxu0 0
    %7628 = vmatmul.mubr.bf16.gmra.mxu0 %v7126
    %v7629 = vpop.f32.mrf.mxu0
    %v7630 = vadd.f32 %v7469, %v7629
    %v7631 = vpop.f32.mrf.mxu0
    %v7632 = vpop.f32.mrf.mxu0
    %v7633 = vadd.f32 %v7472, %v7632
    %v7634 = vpop.f32.mrf.mxu0
    %7635 = vmatprep.mubr.bf16.mxu0 0
    %7636 = vmatmul.mubr.bf16.gmra.mxu0 %v7129
    %v7637 = vpop.f32.mrf.mxu0
    %v7638 = vadd.f32 %v7477, %v7637
    %v7639 = vpop.f32.mrf.mxu0
    %v7640 = vpop.f32.mrf.mxu0
    %v7641 = vadd.f32 %v7480, %v7640
    %v7642 = vpop.f32.mrf.mxu0
    %7643 = vdwg.mxu0
    %v7644 = vadd.f32 %v6683, %v7518
    %v7645 = vadd.f32 %v6686, %v7521
    %v7646 = vadd.f32 %v6691, %v7526
    %v7647 = vadd.f32 %v6694, %v7529
    %v7648 = vadd.f32 %v6699, %v7534
    %v7649 = vadd.f32 %v6702, %v7537
    %v7650 = vadd.f32 %v6707, %v7542
    %v7651 = vadd.f32 %v6710, %v7545
    %v7652 = vadd.f32 %v6715, %v7550
    %v7653 = vadd.f32 %v6718, %v7553
    %v7654 = vadd.f32 %v6723, %v7558
    %v7655 = vadd.f32 %v6726, %v7561
    %v7656 = vadd.f32 %v6731, %v7566
    %v7657 = vadd.f32 %v6734, %v7569
    %v7658 = vadd.f32 %v6739, %v7574
    %v7659 = vadd.f32 %v6742, %v7577
    %v7660 = vadd.f32 %v6747, %v7582
    %v7661 = vadd.f32 %v6750, %v7585
    %v7662 = vadd.f32 %v6755, %v7590
    %v7663 = vadd.f32 %v6758, %v7593
    %v7664 = vadd.f32 %v6763, %v7598
    %v7665 = vadd.f32 %v6766, %v7601
    %v7666 = vadd.f32 %v6771, %v7606
    %v7667 = vadd.f32 %v6774, %v7609
    %v7668 = vadd.f32 %v6779, %v7614
    %v7669 = vadd.f32 %v6782, %v7617
    %v7670 = vadd.f32 %v6787, %v7622
    %v7671 = vadd.f32 %v6790, %v7625
    %v7672 = vadd.f32 %v6795, %v7630
    %v7673 = vadd.f32 %v6798, %v7633
    %v7674 = vadd.f32 %v6803, %v7638
    %v7675 = vadd.f32 %v6806, %v7641
    %v7676 = vmul.f32 %v7644, %v4266
    %v7677 = vmul.f32 %v7645, %v4266
    %v7678 = vmul.f32 %v7646, %v4266
    %v7679 = vmul.f32 %v7647, %v4266
    %v7680 = vmul.f32 %v7648, %v4266
    %v7681 = vmul.f32 %v7649, %v4266
    %v7682 = vmul.f32 %v7650, %v4266
    %v7683 = vmul.f32 %v7651, %v4266
    %v7684 = vmul.f32 %v7652, %v4266
    %v7685 = vmul.f32 %v7653, %v4266
    %v7686 = vmul.f32 %v7654, %v4266
    %v7687 = vmul.f32 %v7655, %v4266
    %v7688 = vmul.f32 %v7656, %v4266
    %v7689 = vmul.f32 %v7657, %v4266
    %v7690 = vmul.f32 %v7658, %v4266
    %v7691 = vmul.f32 %v7659, %v4266
    %v7692 = vmul.f32 %v7660, %v4266
    %v7693 = vmul.f32 %v7661, %v4266
    %v7694 = vmul.f32 %v7662, %v4266
    %v7695 = vmul.f32 %v7663, %v4266
    %v7696 = vmul.f32 %v7664, %v4266
    %v7697 = vmul.f32 %v7665, %v4266
    %v7698 = vmul.f32 %v7666, %v4266
    %v7699 = vmul.f32 %v7667, %v4266
    %v7700 = vmul.f32 %v7668, %v4266
    %v7701 = vmul.f32 %v7669, %v4266
    %v7702 = vmul.f32 %v7670, %v4266
    %v7703 = vmul.f32 %v7671, %v4266
    %v7704 = vmul.f32 %v7672, %v4266
    %v7705 = vmul.f32 %v7673, %v4266
    %v7706 = vmul.f32 %v7674, %v4266
    %v7707 = vmul.f32 %v7675, %v4266
    %v7708 = vadd.f32 %v7676, %v4302
    %v7709 = vadd.f32 %v7677, %v4302
    %v7710 = vadd.f32 %v7678, %v4302
    %v7711 = vadd.f32 %v7679, %v4302
    %v7712 = vadd.f32 %v7680, %v4302
    %v7713 = vadd.f32 %v7681, %v4302
    %v7714 = vadd.f32 %v7682, %v4302
    %v7715 = vadd.f32 %v7683, %v4302
    %v7716 = vadd.f32 %v7684, %v4302
    %v7717 = vadd.f32 %v7685, %v4302
    %v7718 = vadd.f32 %v7686, %v4302
    %v7719 = vadd.f32 %v7687, %v4302
    %v7720 = vadd.f32 %v7688, %v4302
    %v7721 = vadd.f32 %v7689, %v4302
    %v7722 = vadd.f32 %v7690, %v4302
    %v7723 = vadd.f32 %v7691, %v4302
    %v7724 = vadd.f32 %v7692, %v4302
    %v7725 = vadd.f32 %v7693, %v4302
    %v7726 = vadd.f32 %v7694, %v4302
    %v7727 = vadd.f32 %v7695, %v4302
    %v7728 = vadd.f32 %v7696, %v4302
    %v7729 = vadd.f32 %v7697, %v4302
    %v7730 = vadd.f32 %v7698, %v4302
    %v7731 = vadd.f32 %v7699, %v4302
    %v7732 = vadd.f32 %v7700, %v4302
    %v7733 = vadd.f32 %v7701, %v4302
    %v7734 = vadd.f32 %v7702, %v4302
    %v7735 = vadd.f32 %v7703, %v4302
    %v7736 = vadd.f32 %v7704, %v4302
    %v7737 = vadd.f32 %v7705, %v4302
    %v7738 = vadd.f32 %v7706, %v4302
    %v7739 = vadd.f32 %v7707, %v4302
    %vm7740 = vcmp.ge.f32.partialorder %v7708, 0.0
    %vm7741 = vcmp.ge.f32.partialorder %v7709, 0.0
    %vm7742 = vcmp.ge.f32.partialorder %v7710, 0.0
    %vm7743 = vcmp.ge.f32.partialorder %v7711, 0.0
    %vm7744 = vcmp.ge.f32.partialorder %v7712, 0.0
    %vm7745 = vcmp.ge.f32.partialorder %v7713, 0.0
    %vm7746 = vcmp.ge.f32.partialorder %v7714, 0.0
    %vm7747 = vcmp.ge.f32.partialorder %v7715, 0.0
    %vm7748 = vcmp.ge.f32.partialorder %v7716, 0.0
    %vm7749 = vcmp.ge.f32.partialorder %v7717, 0.0
    %vm7750 = vcmp.ge.f32.partialorder %v7718, 0.0
    %vm7751 = vcmp.ge.f32.partialorder %v7719, 0.0
    %vm7752 = vcmp.ge.f32.partialorder %v7720, 0.0
    %vm7753 = vcmp.ge.f32.partialorder %v7721, 0.0
    %vm7754 = vcmp.ge.f32.partialorder %v7722, 0.0
    %vm7755 = vcmp.ge.f32.partialorder %v7723, 0.0
    %vm7756 = vcmp.ge.f32.partialorder %v7724, 0.0
    %vm7757 = vcmp.ge.f32.partialorder %v7725, 0.0
    %vm7758 = vcmp.ge.f32.partialorder %v7726, 0.0
    %vm7759 = vcmp.ge.f32.partialorder %v7727, 0.0
    %vm7760 = vcmp.ge.f32.partialorder %v7728, 0.0
    %vm7761 = vcmp.ge.f32.partialorder %v7729, 0.0
    %vm7762 = vcmp.ge.f32.partialorder %v7730, 0.0
    %vm7763 = vcmp.ge.f32.partialorder %v7731, 0.0
    %vm7764 = vcmp.ge.f32.partialorder %v7732, 0.0
    %vm7765 = vcmp.ge.f32.partialorder %v7733, 0.0
    %vm7766 = vcmp.ge.f32.partialorder %v7734, 0.0
    %vm7767 = vcmp.ge.f32.partialorder %v7735, 0.0
    %vm7768 = vcmp.ge.f32.partialorder %v7736, 0.0
    %vm7769 = vcmp.ge.f32.partialorder %v7737, 0.0
    %vm7770 = vcmp.ge.f32.partialorder %v7738, 0.0
    %vm7771 = vcmp.ge.f32.partialorder %v7739, 0.0
    %v7772 = vmul.f32 %v4370, %v7708
    %v7773 = vmul.f32 %v4370, %v7709
    %v7774 = vmul.f32 %v4370, %v7710
    %v7775 = vmul.f32 %v4370, %v7711
    %v7776 = vmul.f32 %v4370, %v7712
    %v7777 = vmul.f32 %v4370, %v7713
    %v7778 = vmul.f32 %v4370, %v7714
    %v7779 = vmul.f32 %v4370, %v7715
    %v7780 = vmul.f32 %v4370, %v7716
    %v7781 = vmul.f32 %v4370, %v7717
    %v7782 = vmul.f32 %v4370, %v7718
    %v7783 = vmul.f32 %v4370, %v7719
    %v7784 = vmul.f32 %v4370, %v7720
    %v7785 = vmul.f32 %v4370, %v7721
    %v7786 = vmul.f32 %v4370, %v7722
    %v7787 = vmul.f32 %v4370, %v7723
    %v7788 = vmul.f32 %v4370, %v7724
    %v7789 = vmul.f32 %v4370, %v7725
    %v7790 = vmul.f32 %v4370, %v7726
    %v7791 = vmul.f32 %v4370, %v7727
    %v7792 = vmul.f32 %v4370, %v7728
    %v7793 = vmul.f32 %v4370, %v7729
    %v7794 = vmul.f32 %v4370, %v7730
    %v7795 = vmul.f32 %v4370, %v7731
    %v7796 = vmul.f32 %v4370, %v7732
    %v7797 = vmul.f32 %v4370, %v7733
    %v7798 = vmul.f32 %v4370, %v7734
    %v7799 = vmul.f32 %v4370, %v7735
    %v7800 = vmul.f32 %v4370, %v7736
    %v7801 = vmul.f32 %v4370, %v7737
    %v7802 = vmul.f32 %v4370, %v7738
    %v7803 = vmul.f32 %v4370, %v7739
    %v7804 = vsel %vm7740, %v7708, %v7772
    %v7805 = vsel %vm7741, %v7709, %v7773
    %v7806 = vsel %vm7742, %v7710, %v7774
    %v7807 = vsel %vm7743, %v7711, %v7775
    %v7808 = vsel %vm7744, %v7712, %v7776
    %v7809 = vsel %vm7745, %v7713, %v7777
    %v7810 = vsel %vm7746, %v7714, %v7778
    %v7811 = vsel %vm7747, %v7715, %v7779
    %v7812 = vsel %vm7748, %v7716, %v7780
    %v7813 = vsel %vm7749, %v7717, %v7781
    %v7814 = vsel %vm7750, %v7718, %v7782
    %v7815 = vsel %vm7751, %v7719, %v7783
    %v7816 = vsel %vm7752, %v7720, %v7784
    %v7817 = vsel %vm7753, %v7721, %v7785
    %v7818 = vsel %vm7754, %v7722, %v7786
    %v7819 = vsel %vm7755, %v7723, %v7787
    %v7820 = vsel %vm7756, %v7724, %v7788
    %v7821 = vsel %vm7757, %v7725, %v7789
    %v7822 = vsel %vm7758, %v7726, %v7790
    %v7823 = vsel %vm7759, %v7727, %v7791
    %v7824 = vsel %vm7760, %v7728, %v7792
    %v7825 = vsel %vm7761, %v7729, %v7793
    %v7826 = vsel %vm7762, %v7730, %v7794
    %v7827 = vsel %vm7763, %v7731, %v7795
    %v7828 = vsel %vm7764, %v7732, %v7796
    %v7829 = vsel %vm7765, %v7733, %v7797
    %v7830 = vsel %vm7766, %v7734, %v7798
    %v7831 = vsel %vm7767, %v7735, %v7799
    %v7832 = vsel %vm7768, %v7736, %v7800
    %v7833 = vsel %vm7769, %v7737, %v7801
    %v7834 = vsel %vm7770, %v7738, %v7802
    %v7835 = vsel %vm7771, %v7739, %v7803
    %v7868 = vrot.slane %v7804, 7
    %v7869 = vrot.slane %v7805, 7
    %v7870 = vsel %vm249, %v7868, %v7869
    %v7871 = vrot.slane %v7806, 7
    %v7872 = vrot.slane %v7807, 7
    %v7873 = vsel %vm249, %v7871, %v7872
    %v7874 = vrot.slane %v7808, 7
    %v7875 = vrot.slane %v7809, 7
    %v7876 = vsel %vm249, %v7874, %v7875
    %v7877 = vrot.slane %v7810, 7
    %v7878 = vrot.slane %v7811, 7
    %v7879 = vsel %vm249, %v7877, %v7878
    %v7880 = vrot.slane %v7812, 7
    %v7881 = vrot.slane %v7813, 7
    %v7882 = vsel %vm249, %v7880, %v7881
    %v7883 = vrot.slane %v7814, 7
    %v7884 = vrot.slane %v7815, 7
    %v7885 = vsel %vm249, %v7883, %v7884
    %v7886 = vrot.slane %v7816, 7
    %v7887 = vrot.slane %v7817, 7
    %v7888 = vsel %vm249, %v7886, %v7887
    %v7889 = vrot.slane %v7818, 7
    %v7890 = vrot.slane %v7819, 7
    %v7891 = vsel %vm249, %v7889, %v7890
    %v7892 = vrot.slane %v7820, 7
    %v7893 = vrot.slane %v7821, 7
    %v7894 = vsel %vm249, %v7892, %v7893
    %v7895 = vrot.slane %v7822, 7
    %v7896 = vrot.slane %v7823, 7
    %v7897 = vsel %vm249, %v7895, %v7896
    %v7898 = vrot.slane %v7824, 7
    %v7899 = vrot.slane %v7825, 7
    %v7900 = vsel %vm249, %v7898, %v7899
    %v7901 = vrot.slane %v7826, 7
    %v7902 = vrot.slane %v7827, 7
    %v7903 = vsel %vm249, %v7901, %v7902
    %v7904 = vrot.slane %v7828, 7
    %v7905 = vrot.slane %v7829, 7
    %v7906 = vsel %vm249, %v7904, %v7905
    %v7907 = vrot.slane %v7830, 7
    %v7908 = vrot.slane %v7831, 7
    %v7909 = vsel %vm249, %v7907, %v7908
    %v7910 = vrot.slane %v7832, 7
    %v7911 = vrot.slane %v7833, 7
    %v7912 = vsel %vm249, %v7910, %v7911
    %v7913 = vrot.slane %v7834, 7
    %v7914 = vrot.slane %v7835, 7
    %v7915 = vsel %vm249, %v7913, %v7914
    %v7948 = vsel %vm249, 0.0, %v7868
    %v7949 = vsel %vm249, 0.0, %v7871
    %v7950 = vsel %vm249, 0.0, %v7874
    %v7951 = vsel %vm249, 0.0, %v7877
    %v7952 = vsel %vm249, 0.0, %v7880
    %v7953 = vsel %vm249, 0.0, %v7883
    %v7954 = vsel %vm249, 0.0, %v7886
    %v7955 = vsel %vm249, 0.0, %v7889
    %v7956 = vsel %vm249, 0.0, %v7892
    %v7957 = vsel %vm249, 0.0, %v7895
    %v7958 = vsel %vm249, 0.0, %v7898
    %v7959 = vsel %vm249, 0.0, %v7901
    %v7960 = vsel %vm249, 0.0, %v7904
    %v7961 = vsel %vm249, 0.0, %v7907
    %v7962 = vsel %vm249, 0.0, %v7910
    %v7963 = vsel %vm249, 0.0, %v7913
    %v7964 = vrot.slane %v7804, 1
    %v7965 = vrot.slane %v7805, 1
    %v7966 = vsel %vm346, %v7964, %v7965
    %v7967 = vrot.slane %v7806, 1
    %v7968 = vrot.slane %v7807, 1
    %v7969 = vsel %vm346, %v7967, %v7968
    %v7970 = vrot.slane %v7808, 1
    %v7971 = vrot.slane %v7809, 1
    %v7972 = vsel %vm346, %v7970, %v7971
    %v7973 = vrot.slane %v7810, 1
    %v7974 = vrot.slane %v7811, 1
    %v7975 = vsel %vm346, %v7973, %v7974
    %v7976 = vrot.slane %v7812, 1
    %v7977 = vrot.slane %v7813, 1
    %v7978 = vsel %vm346, %v7976, %v7977
    %v7979 = vrot.slane %v7814, 1
    %v7980 = vrot.slane %v7815, 1
    %v7981 = vsel %vm346, %v7979, %v7980
    %v7982 = vrot.slane %v7816, 1
    %v7983 = vrot.slane %v7817, 1
    %v7984 = vsel %vm346, %v7982, %v7983
    %v7985 = vrot.slane %v7818, 1
    %v7986 = vrot.slane %v7819, 1
    %v7987 = vsel %vm346, %v7985, %v7986
    %v7988 = vrot.slane %v7820, 1
    %v7989 = vrot.slane %v7821, 1
    %v7990 = vsel %vm346, %v7988, %v7989
    %v7991 = vrot.slane %v7822, 1
    %v7992 = vrot.slane %v7823, 1
    %v7993 = vsel %vm346, %v7991, %v7992
    %v7994 = vrot.slane %v7824, 1
    %v7995 = vrot.slane %v7825, 1
    %v7996 = vsel %vm346, %v7994, %v7995
    %v7997 = vrot.slane %v7826, 1
    %v7998 = vrot.slane %v7827, 1
    %v7999 = vsel %vm346, %v7997, %v7998
    %v8000 = vrot.slane %v7828, 1
    %v8001 = vrot.slane %v7829, 1
    %v8002 = vsel %vm346, %v8000, %v8001
    %v8003 = vrot.slane %v7830, 1
    %v8004 = vrot.slane %v7831, 1
    %v8005 = vsel %vm346, %v8003, %v8004
    %v8006 = vrot.slane %v7832, 1
    %v8007 = vrot.slane %v7833, 1
    %v8008 = vsel %vm346, %v8006, %v8007
    %v8009 = vrot.slane %v7834, 1
    %v8010 = vrot.slane %v7835, 1
    %v8011 = vsel %vm346, %v8009, %v8010
    %v8044 = vsel %vm346, %v7965, 0.0
    %v8045 = vsel %vm346, %v7968, 0.0
    %v8046 = vsel %vm346, %v7971, 0.0
    %v8047 = vsel %vm346, %v7974, 0.0
    %v8048 = vsel %vm346, %v7977, 0.0
    %v8049 = vsel %vm346, %v7980, 0.0
    %v8050 = vsel %vm346, %v7983, 0.0
    %v8051 = vsel %vm346, %v7986, 0.0
    %v8052 = vsel %vm346, %v7989, 0.0
    %v8053 = vsel %vm346, %v7992, 0.0
    %v8054 = vsel %vm346, %v7995, 0.0
    %v8055 = vsel %vm346, %v7998, 0.0
    %v8056 = vsel %vm346, %v8001, 0.0
    %v8057 = vsel %vm346, %v8004, 0.0
    %v8058 = vsel %vm346, %v8007, 0.0
    %v8059 = vsel %vm346, %v8010, 0.0
    %v8060 = vpack.c.bf16 %v7870, %v7948
    %v8061 = vpack.c.bf16 %v7873, %v7949
    %v8062 = vpack.c.bf16 %v7876, %v7950
    %v8063 = vpack.c.bf16 %v7879, %v7951
    %v8064 = vpack.c.bf16 %v7882, %v7952
    %v8065 = vpack.c.bf16 %v7885, %v7953
    %v8066 = vpack.c.bf16 %v7888, %v7954
    %v8067 = vpack.c.bf16 %v7891, %v7955
    %v8068 = vpack.c.bf16 %v7894, %v7956
    %v8069 = vpack.c.bf16 %v7897, %v7957
    %v8070 = vpack.c.bf16 %v7900, %v7958
    %v8071 = vpack.c.bf16 %v7903, %v7959
    %v8072 = vpack.c.bf16 %v7906, %v7960
    %v8073 = vpack.c.bf16 %v7909, %v7961
    %v8074 = vpack.c.bf16 %v7912, %v7962
    %v8075 = vpack.c.bf16 %v7915, %v7963
    %v8092 = vunpack.c.l.b16 %v8060
    %v8093 = vunpack.c.h.b16 %v8060
    %v8094 = vunpack.c.l.b16 %v8061
    %v8095 = vunpack.c.h.b16 %v8061
    %v8096 = vunpack.c.l.b16 %v8062
    %v8097 = vunpack.c.h.b16 %v8062
    %v8098 = vunpack.c.l.b16 %v8063
    %v8099 = vunpack.c.h.b16 %v8063
    %v8100 = vunpack.c.l.b16 %v8064
    %v8101 = vunpack.c.h.b16 %v8064
    %v8102 = vunpack.c.l.b16 %v8065
    %v8103 = vunpack.c.h.b16 %v8065
    %v8104 = vunpack.c.l.b16 %v8066
    %v8105 = vunpack.c.h.b16 %v8066
    %v8106 = vunpack.c.l.b16 %v8067
    %v8107 = vunpack.c.h.b16 %v8067
    %v8108 = vunpack.c.l.b16 %v8068
    %v8109 = vunpack.c.h.b16 %v8068
    %v8110 = vunpack.c.l.b16 %v8069
    %v8111 = vunpack.c.h.b16 %v8069
    %v8112 = vunpack.c.l.b16 %v8070
    %v8113 = vunpack.c.h.b16 %v8070
    %v8114 = vunpack.c.l.b16 %v8071
    %v8115 = vunpack.c.h.b16 %v8071
    %v8116 = vunpack.c.l.b16 %v8072
    %v8117 = vunpack.c.h.b16 %v8072
    %v8118 = vunpack.c.l.b16 %v8073
    %v8119 = vunpack.c.h.b16 %v8073
    %v8120 = vunpack.c.l.b16 %v8074
    %v8121 = vunpack.c.h.b16 %v8074
    %v8122 = vunpack.c.l.b16 %v8075
    %v8123 = vunpack.c.h.b16 %v8075
    %v8124 = vpack.c.b16 %v8092, %v8092
    %v8125 = vpack.c.b16 %v8093, %v8093
    %v8126 = vpack.c.b16 %v8094, %v8094
    %v8127 = vpack.c.b16 %v8095, %v8095
    %v8128 = vpack.c.b16 %v8096, %v8096
    %v8129 = vpack.c.b16 %v8097, %v8097
    %v8130 = vpack.c.b16 %v8098, %v8098
    %v8131 = vpack.c.b16 %v8099, %v8099
    %v8132 = vpack.c.b16 %v8100, %v8100
    %v8133 = vpack.c.b16 %v8101, %v8101
    %v8134 = vpack.c.b16 %v8102, %v8102
    %v8135 = vpack.c.b16 %v8103, %v8103
    %v8136 = vpack.c.b16 %v8104, %v8104
    %v8137 = vpack.c.b16 %v8105, %v8105
    %v8138 = vpack.c.b16 %v8106, %v8106
    %v8139 = vpack.c.b16 %v8107, %v8107
    %v8140 = vpack.c.b16 %v8108, %v8108
    %v8141 = vpack.c.b16 %v8109, %v8109
    %v8142 = vpack.c.b16 %v8110, %v8110
    %v8143 = vpack.c.b16 %v8111, %v8111
    %v8144 = vpack.c.b16 %v8112, %v8112
    %v8145 = vpack.c.b16 %v8113, %v8113
    %v8146 = vpack.c.b16 %v8114, %v8114
    %v8147 = vpack.c.b16 %v8115, %v8115
    %v8148 = vpack.c.b16 %v8116, %v8116
    %v8149 = vpack.c.b16 %v8117, %v8117
    %v8150 = vpack.c.b16 %v8118, %v8118
    %v8151 = vpack.c.b16 %v8119, %v8119
    %v8152 = vpack.c.b16 %v8120, %v8120
    %v8153 = vpack.c.b16 %v8121, %v8121
    %v8154 = vpack.c.b16 %v8122, %v8122
    %v8155 = vpack.c.b16 %v8123, %v8123
    %s8188 = scalar_lea.vmem [#allocation3], 216
    %8189 = vst [vmem:[%s8188] sm:$0xf] %v8124
    %8190 = vst [vmem:[%s8188 + $0xc] sm:$0xf] %v8125
    %8191 = vst [vmem:[%s8188 + $0x18] sm:$0xf] %v8126
    %8192 = vst [vmem:[%s8188 + $0x24] sm:$0xf] %v8127
    %8193 = vst [vmem:[%s8188 + $0x30] sm:$0xf] %v8128
    %8194 = vst [vmem:[%s8188 + $0x3c] sm:$0xf] %v8129
    %8195 = vst [vmem:[%s8188 + $0x48] sm:$0xf] %v8130
    %8196 = vst [vmem:[%s8188 + $0x54] sm:$0xf] %v8131
    %8197 = vst [vmem:[%s8188 + $0x60] sm:$0xf] %v8132
    %8198 = vst [vmem:[%s8188 + $0x6c] sm:$0xf] %v8133
    %8199 = vst [vmem:[%s8188 + $0x78] sm:$0xf] %v8134
    %8200 = vst [vmem:[%s8188 + $0x84] sm:$0xf] %v8135
    %8201 = vst [vmem:[%s8188 + $0x90] sm:$0xf] %v8136
    %8202 = vst [vmem:[%s8188 + $0x9c] sm:$0xf] %v8137
    %8203 = vst [vmem:[%s8188 + $0xa8] sm:$0xf] %v8138
    %8204 = vst [vmem:[%s8188 + $0xb4] sm:$0xf] %v8139
    %8205 = vst [vmem:[%s8188 + $0x1b0] sm:$0xf] %v8140
    %8206 = vst [vmem:[%s8188 + $0x1bc] sm:$0xf] %v8141
    %8207 = vst [vmem:[%s8188 + $0x1c8] sm:$0xf] %v8142
    %8208 = vst [vmem:[%s8188 + $0x1d4] sm:$0xf] %v8143
    %8209 = vst [vmem:[%s8188 + $0x1e0] sm:$0xf] %v8144
    %8210 = vst [vmem:[%s8188 + $0x1ec] sm:$0xf] %v8145
    %8211 = vst [vmem:[%s8188 + $0x1f8] sm:$0xf] %v8146
    %8212 = vst [vmem:[%s8188 + $0x204] sm:$0xf] %v8147
    %8213 = vst [vmem:[%s8188 + $0x210] sm:$0xf] %v8148
    %8214 = vst [vmem:[%s8188 + $0x21c] sm:$0xf] %v8149
    %8215 = vst [vmem:[%s8188 + $0x228] sm:$0xf] %v8150
    %8216 = vst [vmem:[%s8188 + $0x234] sm:$0xf] %v8151
    %8217 = vst [vmem:[%s8188 + $0x240] sm:$0xf] %v8152
    %8218 = vst [vmem:[%s8188 + $0x24c] sm:$0xf] %v8153
    %8219 = vst [vmem:[%s8188 + $0x258] sm:$0xf] %v8154
    %8220 = vst [vmem:[%s8188 + $0x264] sm:$0xf] %v8155
    %v8221 = vpack.c.bf16 %v7805, %v7804
    %v8222 = vpack.c.bf16 %v7807, %v7806
    %v8223 = vpack.c.bf16 %v7809, %v7808
    %v8224 = vpack.c.bf16 %v7811, %v7810
    %v8225 = vpack.c.bf16 %v7813, %v7812
    %v8226 = vpack.c.bf16 %v7815, %v7814
    %v8227 = vpack.c.bf16 %v7817, %v7816
    %v8228 = vpack.c.bf16 %v7819, %v7818
    %v8229 = vpack.c.bf16 %v7821, %v7820
    %v8230 = vpack.c.bf16 %v7823, %v7822
    %v8231 = vpack.c.bf16 %v7825, %v7824
    %v8232 = vpack.c.bf16 %v7827, %v7826
    %v8233 = vpack.c.bf16 %v7829, %v7828
    %v8234 = vpack.c.bf16 %v7831, %v7830
    %v8235 = vpack.c.bf16 %v7833, %v7832
    %v8236 = vpack.c.bf16 %v7835, %v7834
    %v8253 = vunpack.c.l.b16 %v8221
    %v8254 = vunpack.c.h.b16 %v8221
    %v8255 = vunpack.c.l.b16 %v8222
    %v8256 = vunpack.c.h.b16 %v8222
    %v8257 = vunpack.c.l.b16 %v8223
    %v8258 = vunpack.c.h.b16 %v8223
    %v8259 = vunpack.c.l.b16 %v8224
    %v8260 = vunpack.c.h.b16 %v8224
    %v8261 = vunpack.c.l.b16 %v8225
    %v8262 = vunpack.c.h.b16 %v8225
    %v8263 = vunpack.c.l.b16 %v8226
    %v8264 = vunpack.c.h.b16 %v8226
    %v8265 = vunpack.c.l.b16 %v8227
    %v8266 = vunpack.c.h.b16 %v8227
    %v8267 = vunpack.c.l.b16 %v8228
    %v8268 = vunpack.c.h.b16 %v8228
    %v8269 = vunpack.c.l.b16 %v8229
    %v8270 = vunpack.c.h.b16 %v8229
    %v8271 = vunpack.c.l.b16 %v8230
    %v8272 = vunpack.c.h.b16 %v8230
    %v8273 = vunpack.c.l.b16 %v8231
    %v8274 = vunpack.c.h.b16 %v8231
    %v8275 = vunpack.c.l.b16 %v8232
    %v8276 = vunpack.c.h.b16 %v8232
    %v8277 = vunpack.c.l.b16 %v8233
    %v8278 = vunpack.c.h.b16 %v8233
    %v8279 = vunpack.c.l.b16 %v8234
    %v8280 = vunpack.c.h.b16 %v8234
    %v8281 = vunpack.c.l.b16 %v8235
    %v8282 = vunpack.c.h.b16 %v8235
    %v8283 = vunpack.c.l.b16 %v8236
    %v8284 = vunpack.c.h.b16 %v8236
    %v8285 = vpack.c.b16 %v8253, %v8253
    %v8286 = vpack.c.b16 %v8254, %v8254
    %v8287 = vpack.c.b16 %v8255, %v8255
    %v8288 = vpack.c.b16 %v8256, %v8256
    %v8289 = vpack.c.b16 %v8257, %v8257
    %v8290 = vpack.c.b16 %v8258, %v8258
    %v8291 = vpack.c.b16 %v8259, %v8259
    %v8292 = vpack.c.b16 %v8260, %v8260
    %v8293 = vpack.c.b16 %v8261, %v8261
    %v8294 = vpack.c.b16 %v8262, %v8262
    %v8295 = vpack.c.b16 %v8263, %v8263
    %v8296 = vpack.c.b16 %v8264, %v8264
    %v8297 = vpack.c.b16 %v8265, %v8265
    %v8298 = vpack.c.b16 %v8266, %v8266
    %v8299 = vpack.c.b16 %v8267, %v8267
    %v8300 = vpack.c.b16 %v8268, %v8268
    %v8301 = vpack.c.b16 %v8269, %v8269
    %v8302 = vpack.c.b16 %v8270, %v8270
    %v8303 = vpack.c.b16 %v8271, %v8271
    %v8304 = vpack.c.b16 %v8272, %v8272
    %v8305 = vpack.c.b16 %v8273, %v8273
    %v8306 = vpack.c.b16 %v8274, %v8274
    %v8307 = vpack.c.b16 %v8275, %v8275
    %v8308 = vpack.c.b16 %v8276, %v8276
    %v8309 = vpack.c.b16 %v8277, %v8277
    %v8310 = vpack.c.b16 %v8278, %v8278
    %v8311 = vpack.c.b16 %v8279, %v8279
    %v8312 = vpack.c.b16 %v8280, %v8280
    %v8313 = vpack.c.b16 %v8281, %v8281
    %v8314 = vpack.c.b16 %v8282, %v8282
    %v8315 = vpack.c.b16 %v8283, %v8283
    %v8316 = vpack.c.b16 %v8284, %v8284
    %8349 = vst [vmem:[%s8188 + $0x4] sm:$0xf] %v8285
    %8350 = vst [vmem:[%s8188 + $0x10] sm:$0xf] %v8286
    %8351 = vst [vmem:[%s8188 + $0x1c] sm:$0xf] %v8287
    %8352 = vst [vmem:[%s8188 + $0x28] sm:$0xf] %v8288
    %8353 = vst [vmem:[%s8188 + $0x34] sm:$0xf] %v8289
    %8354 = vst [vmem:[%s8188 + $0x40] sm:$0xf] %v8290
    %8355 = vst [vmem:[%s8188 + $0x4c] sm:$0xf] %v8291
    %8356 = vst [vmem:[%s8188 + $0x58] sm:$0xf] %v8292
    %8357 = vst [vmem:[%s8188 + $0x64] sm:$0xf] %v8293
    %8358 = vst [vmem:[%s8188 + $0x70] sm:$0xf] %v8294
    %8359 = vst [vmem:[%s8188 + $0x7c] sm:$0xf] %v8295
    %8360 = vst [vmem:[%s8188 + $0x88] sm:$0xf] %v8296
    %8361 = vst [vmem:[%s8188 + $0x94] sm:$0xf] %v8297
    %8362 = vst [vmem:[%s8188 + $0xa0] sm:$0xf] %v8298
    %8363 = vst [vmem:[%s8188 + $0xac] sm:$0xf] %v8299
    %8364 = vst [vmem:[%s8188 + $0xb8] sm:$0xf] %v8300
    %8365 = vst [vmem:[%s8188 + $0x1b4] sm:$0xf] %v8301
    %8366 = vst [vmem:[%s8188 + $0x1c0] sm:$0xf] %v8302
    %8367 = vst [vmem:[%s8188 + $0x1cc] sm:$0xf] %v8303
    %8368 = vst [vmem:[%s8188 + $0x1d8] sm:$0xf] %v8304
    %8369 = vst [vmem:[%s8188 + $0x1e4] sm:$0xf] %v8305
    %8370 = vst [vmem:[%s8188 + $0x1f0] sm:$0xf] %v8306
    %8371 = vst [vmem:[%s8188 + $0x1fc] sm:$0xf] %v8307
    %8372 = vst [vmem:[%s8188 + $0x208] sm:$0xf] %v8308
    %8373 = vst [vmem:[%s8188 + $0x214] sm:$0xf] %v8309
    %8374 = vst [vmem:[%s8188 + $0x220] sm:$0xf] %v8310
    %8375 = vst [vmem:[%s8188 + $0x22c] sm:$0xf] %v8311
    %8376 = vst [vmem:[%s8188 + $0x238] sm:$0xf] %v8312
    %8377 = vst [vmem:[%s8188 + $0x244] sm:$0xf] %v8313
    %8378 = vst [vmem:[%s8188 + $0x250] sm:$0xf] %v8314
    %8379 = vst [vmem:[%s8188 + $0x25c] sm:$0xf] %v8315
    %8380 = vst [vmem:[%s8188 + $0x268] sm:$0xf] %v8316
    %v8381 = vpack.c.bf16 %v8044, %v7966
    %v8382 = vpack.c.bf16 %v8045, %v7969
    %v8383 = vpack.c.bf16 %v8046, %v7972
    %v8384 = vpack.c.bf16 %v8047, %v7975
    %v8385 = vpack.c.bf16 %v8048, %v7978
    %v8386 = vpack.c.bf16 %v8049, %v7981
    %v8387 = vpack.c.bf16 %v8050, %v7984
    %v8388 = vpack.c.bf16 %v8051, %v7987
    %v8389 = vpack.c.bf16 %v8052, %v7990
    %v8390 = vpack.c.bf16 %v8053, %v7993
    %v8391 = vpack.c.bf16 %v8054, %v7996
    %v8392 = vpack.c.bf16 %v8055, %v7999
    %v8393 = vpack.c.bf16 %v8056, %v8002
    %v8394 = vpack.c.bf16 %v8057, %v8005
    %v8395 = vpack.c.bf16 %v8058, %v8008
    %v8396 = vpack.c.bf16 %v8059, %v8011
    %v8413 = vunpack.c.l.b16 %v8381
    %v8414 = vunpack.c.h.b16 %v8381
    %v8415 = vunpack.c.l.b16 %v8382
    %v8416 = vunpack.c.h.b16 %v8382
    %v8417 = vunpack.c.l.b16 %v8383
    %v8418 = vunpack.c.h.b16 %v8383
    %v8419 = vunpack.c.l.b16 %v8384
    %v8420 = vunpack.c.h.b16 %v8384
    %v8421 = vunpack.c.l.b16 %v8385
    %v8422 = vunpack.c.h.b16 %v8385
    %v8423 = vunpack.c.l.b16 %v8386
    %v8424 = vunpack.c.h.b16 %v8386
    %v8425 = vunpack.c.l.b16 %v8387
    %v8426 = vunpack.c.h.b16 %v8387
    %v8427 = vunpack.c.l.b16 %v8388
    %v8428 = vunpack.c.h.b16 %v8388
    %v8429 = vunpack.c.l.b16 %v8389
    %v8430 = vunpack.c.h.b16 %v8389
    %v8431 = vunpack.c.l.b16 %v8390
    %v8432 = vunpack.c.h.b16 %v8390
    %v8433 = vunpack.c.l.b16 %v8391
    %v8434 = vunpack.c.h.b16 %v8391
    %v8435 = vunpack.c.l.b16 %v8392
    %v8436 = vunpack.c.h.b16 %v8392
    %v8437 = vunpack.c.l.b16 %v8393
    %v8438 = vunpack.c.h.b16 %v8393
    %v8439 = vunpack.c.l.b16 %v8394
    %v8440 = vunpack.c.h.b16 %v8394
    %v8441 = vunpack.c.l.b16 %v8395
    %v8442 = vunpack.c.h.b16 %v8395
    %v8443 = vunpack.c.l.b16 %v8396
    %v8444 = vunpack.c.h.b16 %v8396
    %v8445 = vpack.c.b16 %v8413, %v8413
    %v8446 = vpack.c.b16 %v8414, %v8414
    %v8447 = vpack.c.b16 %v8415, %v8415
    %v8448 = vpack.c.b16 %v8416, %v8416
    %v8449 = vpack.c.b16 %v8417, %v8417
    %v8450 = vpack.c.b16 %v8418, %v8418
    %v8451 = vpack.c.b16 %v8419, %v8419
    %v8452 = vpack.c.b16 %v8420, %v8420
    %v8453 = vpack.c.b16 %v8421, %v8421
    %v8454 = vpack.c.b16 %v8422, %v8422
    %v8455 = vpack.c.b16 %v8423, %v8423
    %v8456 = vpack.c.b16 %v8424, %v8424
    %v8457 = vpack.c.b16 %v8425, %v8425
    %v8458 = vpack.c.b16 %v8426, %v8426
    %v8459 = vpack.c.b16 %v8427, %v8427
    %v8460 = vpack.c.b16 %v8428, %v8428
    %v8461 = vpack.c.b16 %v8429, %v8429
    %v8462 = vpack.c.b16 %v8430, %v8430
    %v8463 = vpack.c.b16 %v8431, %v8431
    %v8464 = vpack.c.b16 %v8432, %v8432
    %v8465 = vpack.c.b16 %v8433, %v8433
    %v8466 = vpack.c.b16 %v8434, %v8434
    %v8467 = vpack.c.b16 %v8435, %v8435
    %v8468 = vpack.c.b16 %v8436, %v8436
    %v8469 = vpack.c.b16 %v8437, %v8437
    %v8470 = vpack.c.b16 %v8438, %v8438
    %v8471 = vpack.c.b16 %v8439, %v8439
    %v8472 = vpack.c.b16 %v8440, %v8440
    %v8473 = vpack.c.b16 %v8441, %v8441
    %v8474 = vpack.c.b16 %v8442, %v8442
    %v8475 = vpack.c.b16 %v8443, %v8443
    %v8476 = vpack.c.b16 %v8444, %v8444
    %8509 = vst [vmem:[%s8188 + $0x8] sm:$0xf] %v8445
    %8510 = vst [vmem:[%s8188 + $0x14] sm:$0xf] %v8446
    %8511 = vst [vmem:[%s8188 + $0x20] sm:$0xf] %v8447
    %8512 = vst [vmem:[%s8188 + $0x2c] sm:$0xf] %v8448
    %8513 = vst [vmem:[%s8188 + $0x38] sm:$0xf] %v8449
    %8514 = vst [vmem:[%s8188 + $0x44] sm:$0xf] %v8450
    %8515 = vst [vmem:[%s8188 + $0x50] sm:$0xf] %v8451
    %8516 = vst [vmem:[%s8188 + $0x5c] sm:$0xf] %v8452
    %8517 = vst [vmem:[%s8188 + $0x68] sm:$0xf] %v8453
    %8518 = vst [vmem:[%s8188 + $0x74] sm:$0xf] %v8454
    %8519 = vst [vmem:[%s8188 + $0x80] sm:$0xf] %v8455
    %8520 = vst [vmem:[%s8188 + $0x8c] sm:$0xf] %v8456
    %8521 = vst [vmem:[%s8188 + $0x98] sm:$0xf] %v8457
    %8522 = vst [vmem:[%s8188 + $0xa4] sm:$0xf] %v8458
    %8523 = vst [vmem:[%s8188 + $0xb0] sm:$0xf] %v8459
    %8524 = vst [vmem:[%s8188 + $0xbc] sm:$0xf] %v8460
    %8525 = vst [vmem:[%s8188 + $0x1b8] sm:$0xf] %v8461
    %8526 = vst [vmem:[%s8188 + $0x1c4] sm:$0xf] %v8462
    %8527 = vst [vmem:[%s8188 + $0x1d0] sm:$0xf] %v8463
    %8528 = vst [vmem:[%s8188 + $0x1dc] sm:$0xf] %v8464
    %8529 = vst [vmem:[%s8188 + $0x1e8] sm:$0xf] %v8465
    %8530 = vst [vmem:[%s8188 + $0x1f4] sm:$0xf] %v8466
    %8531 = vst [vmem:[%s8188 + $0x200] sm:$0xf] %v8467
    %8532 = vst [vmem:[%s8188 + $0x20c] sm:$0xf] %v8468
    %8533 = vst [vmem:[%s8188 + $0x218] sm:$0xf] %v8469
    %8534 = vst [vmem:[%s8188 + $0x224] sm:$0xf] %v8470
    %8535 = vst [vmem:[%s8188 + $0x230] sm:$0xf] %v8471
    %8536 = vst [vmem:[%s8188 + $0x23c] sm:$0xf] %v8472
    %8537 = vst [vmem:[%s8188 + $0x248] sm:$0xf] %v8473
    %8538 = vst [vmem:[%s8188 + $0x254] sm:$0xf] %v8474
    %8539 = vst [vmem:[%s8188 + $0x260] sm:$0xf] %v8475
    %8540 = vst [vmem:[%s8188 + $0x26c] sm:$0xf] %v8476
    %v8541 = vld [vmem:[#allocation3] sm:$0xff]
    %v8542 = vld [vmem:[#allocation3 + $0x8] sm:$0xf]
    %v8543 = vld [vmem:[#allocation3 + $0xc] sm:$0xff]
    %v8544 = vld [vmem:[#allocation3 + $0x14] sm:$0xf]
    %v8545 = vld [vmem:[#allocation3 + $0x18] sm:$0xff]
    %v8546 = vld [vmem:[#allocation3 + $0x20] sm:$0xf]
    %v8547 = vld [vmem:[#allocation3 + $0x24] sm:$0xff]
    %v8548 = vld [vmem:[#allocation3 + $0x2c] sm:$0xf]
    %v8549 = vld [vmem:[#allocation3 + $0x30] sm:$0xff]
    %v8550 = vld [vmem:[#allocation3 + $0x38] sm:$0xf]
    %v8551 = vld [vmem:[#allocation3 + $0x3c] sm:$0xff]
    %v8552 = vld [vmem:[#allocation3 + $0x44] sm:$0xf]
    %v8553 = vld [vmem:[#allocation3 + $0x48] sm:$0xff]
    %v8554 = vld [vmem:[#allocation3 + $0x50] sm:$0xf]
    %v8555 = vld [vmem:[#allocation3 + $0x54] sm:$0xff]
    %v8556 = vld [vmem:[#allocation3 + $0x5c] sm:$0xf]
    %v8557 = vld [vmem:[#allocation3 + $0x60] sm:$0xff]
    %v8558 = vld [vmem:[#allocation3 + $0x68] sm:$0xf]
    %v8559 = vld [vmem:[#allocation3 + $0x6c] sm:$0xff]
    %v8560 = vld [vmem:[#allocation3 + $0x74] sm:$0xf]
    %v8561 = vld [vmem:[#allocation3 + $0x78] sm:$0xff]
    %v8562 = vld [vmem:[#allocation3 + $0x80] sm:$0xf]
    %v8563 = vld [vmem:[#allocation3 + $0x84] sm:$0xff]
    %v8564 = vld [vmem:[#allocation3 + $0x8c] sm:$0xf]
    %v8565 = vld [vmem:[#allocation3 + $0x90] sm:$0xff]
    %v8566 = vld [vmem:[#allocation3 + $0x98] sm:$0xf]
    %v8567 = vld [vmem:[#allocation3 + $0x9c] sm:$0xff]
    %v8568 = vld [vmem:[#allocation3 + $0xa4] sm:$0xf]
    %v8569 = vld [vmem:[#allocation3 + $0xa8] sm:$0xff]
    %v8570 = vld [vmem:[#allocation3 + $0xb0] sm:$0xf]
    %v8571 = vld [vmem:[#allocation3 + $0xb4] sm:$0xff]
    %v8572 = vld [vmem:[#allocation3 + $0xbc] sm:$0xf]
    %v8573 = vld [vmem:[#allocation3 + $0x1b0] sm:$0xff]
    %v8574 = vld [vmem:[#allocation3 + $0x1b8] sm:$0xf]
    %v8575 = vld [vmem:[#allocation3 + $0x1bc] sm:$0xff]
    %v8576 = vld [vmem:[#allocation3 + $0x1c4] sm:$0xf]
    %v8577 = vld [vmem:[#allocation3 + $0x1c8] sm:$0xff]
    %v8578 = vld [vmem:[#allocation3 + $0x1d0] sm:$0xf]
    %v8579 = vld [vmem:[#allocation3 + $0x1d4] sm:$0xff]
    %v8580 = vld [vmem:[#allocation3 + $0x1dc] sm:$0xf]
    %v8581 = vld [vmem:[#allocation3 + $0x1e0] sm:$0xff]
    %v8582 = vld [vmem:[#allocation3 + $0x1e8] sm:$0xf]
    %v8583 = vld [vmem:[#allocation3 + $0x1ec] sm:$0xff]
    %v8584 = vld [vmem:[#allocation3 + $0x1f4] sm:$0xf]
    %v8585 = vld [vmem:[#allocation3 + $0x1f8] sm:$0xff]
    %v8586 = vld [vmem:[#allocation3 + $0x200] sm:$0xf]
    %v8587 = vld [vmem:[#allocation3 + $0x204] sm:$0xff]
    %v8588 = vld [vmem:[#allocation3 + $0x20c] sm:$0xf]
    %v8589 = vld [vmem:[#allocation3 + $0x210] sm:$0xff]
    %v8590 = vld [vmem:[#allocation3 + $0x218] sm:$0xf]
    %v8591 = vld [vmem:[#allocation3 + $0x21c] sm:$0xff]
    %v8592 = vld [vmem:[#allocation3 + $0x224] sm:$0xf]
    %v8593 = vld [vmem:[#allocation3 + $0x228] sm:$0xff]
    %v8594 = vld [vmem:[#allocation3 + $0x230] sm:$0xf]
    %v8595 = vld [vmem:[#allocation3 + $0x234] sm:$0xff]
    %v8596 = vld [vmem:[#allocation3 + $0x23c] sm:$0xf]
    %v8597 = vld [vmem:[#allocation3 + $0x240] sm:$0xff]
    %v8598 = vld [vmem:[#allocation3 + $0x248] sm:$0xf]
    %v8599 = vld [vmem:[#allocation3 + $0x24c] sm:$0xff]
    %v8600 = vld [vmem:[#allocation3 + $0x254] sm:$0xf]
    %v8601 = vld [vmem:[#allocation3 + $0x258] sm:$0xff]
    %v8602 = vld [vmem:[#allocation3 + $0x260] sm:$0xf]
    %v8603 = vld [vmem:[#allocation3 + $0x264] sm:$0xff]
    %v8604 = vld [vmem:[#allocation3 + $0x26c] sm:$0xf]
    %v8605 = vld [vmem:[#allocation10] sm:$0xf]
    %v8606 = vld [vmem:[#allocation10 + $0x4] sm:$0xf]
    %v8607 = vld [vmem:[#allocation10 + $0x8] sm:$0xf]
    %v8608 = vld [vmem:[#allocation10 + $0xc] sm:$0xf]
    %v8609 = vld [vmem:[#allocation10 + $0x10] sm:$0xf]
    %v8610 = vld [vmem:[#allocation10 + $0x14] sm:$0xf]
    %v8611 = vld [vmem:[#allocation10 + $0x18] sm:$0xf]
    %v8612 = vld [vmem:[#allocation10 + $0x1c] sm:$0xf]
    %v8613 = vld [vmem:[#allocation10 + $0x20] sm:$0xf]
    %v8614 = vld [vmem:[#allocation10 + $0x24] sm:$0xf]
    %v8615 = vld [vmem:[#allocation10 + $0x28] sm:$0xf]
    %v8616 = vld [vmem:[#allocation10 + $0x2c] sm:$0xf]
    %v8617 = vld [vmem:[#allocation10 + $0x30] sm:$0xf]
    %v8618 = vld [vmem:[#allocation10 + $0x34] sm:$0xf]
    %v8619 = vld [vmem:[#allocation10 + $0x38] sm:$0xf]
    %v8620 = vld [vmem:[#allocation10 + $0x3c] sm:$0xf]
    %v8621 = vld [vmem:[#allocation10 + $0x40] sm:$0xf]
    %v8622 = vld [vmem:[#allocation10 + $0x44] sm:$0xf]
    %v8623 = vld [vmem:[#allocation10 + $0x48] sm:$0xf]
    %v8624 = vld [vmem:[#allocation10 + $0x4c] sm:$0xf]
    %v8625 = vld [vmem:[#allocation10 + $0x50] sm:$0xf]
    %v8626 = vld [vmem:[#allocation10 + $0x54] sm:$0xf]
    %v8627 = vld [vmem:[#allocation10 + $0x58] sm:$0xf]
    %v8628 = vld [vmem:[#allocation10 + $0x5c] sm:$0xf]
    %v8629 = vld [vmem:[#allocation10 + $0x60] sm:$0xf]
    %v8630 = vld [vmem:[#allocation10 + $0x64] sm:$0xf]
    %v8631 = vld [vmem:[#allocation10 + $0x68] sm:$0xf]
    %v8632 = vld [vmem:[#allocation10 + $0x6c] sm:$0xf]
    %v8633 = vld [vmem:[#allocation10 + $0x70] sm:$0xf]
    %v8634 = vld [vmem:[#allocation10 + $0x74] sm:$0xf]
    %v8635 = vld [vmem:[#allocation10 + $0x78] sm:$0xf]
    %v8636 = vld [vmem:[#allocation10 + $0x7c] sm:$0xf]
    %v8637 = vld [vmem:[#allocation10 + $0x80] sm:$0xf]
    %v8638 = vld [vmem:[#allocation10 + $0x84] sm:$0xf]
    %v8639 = vld [vmem:[#allocation10 + $0x88] sm:$0xf]
    %v8640 = vld [vmem:[#allocation10 + $0x8c] sm:$0xf]
    %v8641 = vld [vmem:[#allocation10 + $0x90] sm:$0xf]
    %v8642 = vld [vmem:[#allocation10 + $0x94] sm:$0xf]
    %v8643 = vld [vmem:[#allocation10 + $0x98] sm:$0xf]
    %v8644 = vld [vmem:[#allocation10 + $0x9c] sm:$0xf]
    %v8645 = vld [vmem:[#allocation10 + $0xa0] sm:$0xf]
    %v8646 = vld [vmem:[#allocation10 + $0xa4] sm:$0xf]
    %v8647 = vld [vmem:[#allocation10 + $0xa8] sm:$0xf]
    %v8648 = vld [vmem:[#allocation10 + $0xac] sm:$0xf]
    %v8649 = vld [vmem:[#allocation10 + $0xb0] sm:$0xf]
    %v8650 = vld [vmem:[#allocation10 + $0xb4] sm:$0xf]
    %v8651 = vld [vmem:[#allocation10 + $0xb8] sm:$0xf]
    %v8652 = vld [vmem:[#allocation10 + $0xbc] sm:$0xf]
    %v8653 = vld [vmem:[%s4787] sm:$0xff]
    %v8654 = vld [vmem:[%s4787 + $0x8] sm:$0xf]
    %v8655 = vld [vmem:[%s4787 + $0xc] sm:$0xff]
    %v8656 = vld [vmem:[%s4787 + $0x14] sm:$0xf]
    %v8657 = vld [vmem:[%s4787 + $0x18] sm:$0xff]
    %v8658 = vld [vmem:[%s4787 + $0x20] sm:$0xf]
    %v8659 = vld [vmem:[%s4787 + $0x24] sm:$0xff]
    %v8660 = vld [vmem:[%s4787 + $0x2c] sm:$0xf]
    %v8661 = vld [vmem:[%s4787 + $0x30] sm:$0xff]
    %v8662 = vld [vmem:[%s4787 + $0x38] sm:$0xf]
    %v8663 = vld [vmem:[%s4787 + $0x3c] sm:$0xff]
    %v8664 = vld [vmem:[%s4787 + $0x44] sm:$0xf]
    %v8665 = vld [vmem:[%s4787 + $0x48] sm:$0xff]
    %v8666 = vld [vmem:[%s4787 + $0x50] sm:$0xf]
    %v8667 = vld [vmem:[%s4787 + $0x54] sm:$0xff]
    %v8668 = vld [vmem:[%s4787 + $0x5c] sm:$0xf]
    %v8669 = vld [vmem:[%s4787 + $0x60] sm:$0xff]
    %v8670 = vld [vmem:[%s4787 + $0x68] sm:$0xf]
    %v8671 = vld [vmem:[%s4787 + $0x6c] sm:$0xff]
    %v8672 = vld [vmem:[%s4787 + $0x74] sm:$0xf]
    %v8673 = vld [vmem:[%s4787 + $0x78] sm:$0xff]
    %v8674 = vld [vmem:[%s4787 + $0x80] sm:$0xf]
    %v8675 = vld [vmem:[%s4787 + $0x84] sm:$0xff]
    %v8676 = vld [vmem:[%s4787 + $0x8c] sm:$0xf]
    %v8677 = vld [vmem:[%s4787 + $0x90] sm:$0xff]
    %v8678 = vld [vmem:[%s4787 + $0x98] sm:$0xf]
    %v8679 = vld [vmem:[%s4787 + $0x9c] sm:$0xff]
    %v8680 = vld [vmem:[%s4787 + $0xa4] sm:$0xf]
    %v8681 = vld [vmem:[%s4787 + $0xa8] sm:$0xff]
    %v8682 = vld [vmem:[%s4787 + $0xb0] sm:$0xf]
    %v8683 = vld [vmem:[%s4787 + $0xb4] sm:$0xff]
    %v8684 = vld [vmem:[%s4787 + $0xbc] sm:$0xf]
    %v8685 = vld [vmem:[%s4787 + $0x1b0] sm:$0xff]
    %v8686 = vld [vmem:[%s4787 + $0x1b8] sm:$0xf]
    %v8687 = vld [vmem:[%s4787 + $0x1bc] sm:$0xff]
    %v8688 = vld [vmem:[%s4787 + $0x1c4] sm:$0xf]
    %v8689 = vld [vmem:[%s4787 + $0x1c8] sm:$0xff]
    %v8690 = vld [vmem:[%s4787 + $0x1d0] sm:$0xf]
    %v8691 = vld [vmem:[%s4787 + $0x1d4] sm:$0xff]
    %v8692 = vld [vmem:[%s4787 + $0x1dc] sm:$0xf]
    %v8693 = vld [vmem:[%s4787 + $0x1e0] sm:$0xff]
    %v8694 = vld [vmem:[%s4787 + $0x1e8] sm:$0xf]
    %v8695 = vld [vmem:[%s4787 + $0x1ec] sm:$0xff]
    %v8696 = vld [vmem:[%s4787 + $0x1f4] sm:$0xf]
    %v8697 = vld [vmem:[%s4787 + $0x1f8] sm:$0xff]
    %v8698 = vld [vmem:[%s4787 + $0x200] sm:$0xf]
    %v8699 = vld [vmem:[%s4787 + $0x204] sm:$0xff]
    %v8700 = vld [vmem:[%s4787 + $0x20c] sm:$0xf]
    %v8701 = vld [vmem:[%s4787 + $0x210] sm:$0xff]
    %v8702 = vld [vmem:[%s4787 + $0x218] sm:$0xf]
    %v8703 = vld [vmem:[%s4787 + $0x21c] sm:$0xff]
    %v8704 = vld [vmem:[%s4787 + $0x224] sm:$0xf]
    %v8705 = vld [vmem:[%s4787 + $0x228] sm:$0xff]
    %v8706 = vld [vmem:[%s4787 + $0x230] sm:$0xf]
    %v8707 = vld [vmem:[%s4787 + $0x234] sm:$0xff]
    %v8708 = vld [vmem:[%s4787 + $0x23c] sm:$0xf]
    %v8709 = vld [vmem:[%s4787 + $0x240] sm:$0xff]
    %v8710 = vld [vmem:[%s4787 + $0x248] sm:$0xf]
    %v8711 = vld [vmem:[%s4787 + $0x24c] sm:$0xff]
    %v8712 = vld [vmem:[%s4787 + $0x254] sm:$0xf]
    %v8713 = vld [vmem:[%s4787 + $0x258] sm:$0xff]
    %v8714 = vld [vmem:[%s4787 + $0x260] sm:$0xf]
    %v8715 = vld [vmem:[%s4787 + $0x264] sm:$0xff]
    %v8716 = vld [vmem:[%s4787 + $0x26c] sm:$0xf]
    %s8717 = scalar_lea.vmem [#allocation10], 192
    %v8718 = vld [vmem:[%s8717] sm:$0xf]
    %v8719 = vld [vmem:[%s8717 + $0x4] sm:$0xf]
    %v8720 = vld [vmem:[%s8717 + $0x8] sm:$0xf]
    %v8721 = vld [vmem:[%s8717 + $0xc] sm:$0xf]
    %v8722 = vld [vmem:[%s8717 + $0x10] sm:$0xf]
    %v8723 = vld [vmem:[%s8717 + $0x14] sm:$0xf]
    %v8724 = vld [vmem:[%s8717 + $0x18] sm:$0xf]
    %v8725 = vld [vmem:[%s8717 + $0x1c] sm:$0xf]
    %v8726 = vld [vmem:[%s8717 + $0x20] sm:$0xf]
    %v8727 = vld [vmem:[%s8717 + $0x24] sm:$0xf]
    %v8728 = vld [vmem:[%s8717 + $0x28] sm:$0xf]
    %v8729 = vld [vmem:[%s8717 + $0x2c] sm:$0xf]
    %v8730 = vld [vmem:[%s8717 + $0x30] sm:$0xf]
    %v8731 = vld [vmem:[%s8717 + $0x34] sm:$0xf]
    %v8732 = vld [vmem:[%s8717 + $0x38] sm:$0xf]
    %v8733 = vld [vmem:[%s8717 + $0x3c] sm:$0xf]
    %v8734 = vld [vmem:[%s8717 + $0x40] sm:$0xf]
    %v8735 = vld [vmem:[%s8717 + $0x44] sm:$0xf]
    %v8736 = vld [vmem:[%s8717 + $0x48] sm:$0xf]
    %v8737 = vld [vmem:[%s8717 + $0x4c] sm:$0xf]
    %v8738 = vld [vmem:[%s8717 + $0x50] sm:$0xf]
    %v8739 = vld [vmem:[%s8717 + $0x54] sm:$0xf]
    %v8740 = vld [vmem:[%s8717 + $0x58] sm:$0xf]
    %v8741 = vld [vmem:[%s8717 + $0x5c] sm:$0xf]
    %v8742 = vld [vmem:[%s8717 + $0x60] sm:$0xf]
    %v8743 = vld [vmem:[%s8717 + $0x64] sm:$0xf]
    %v8744 = vld [vmem:[%s8717 + $0x68] sm:$0xf]
    %v8745 = vld [vmem:[%s8717 + $0x6c] sm:$0xf]
    %v8746 = vld [vmem:[%s8717 + $0x70] sm:$0xf]
    %v8747 = vld [vmem:[%s8717 + $0x74] sm:$0xf]
    %v8748 = vld [vmem:[%s8717 + $0x78] sm:$0xf]
    %v8749 = vld [vmem:[%s8717 + $0x7c] sm:$0xf]
    %v8750 = vld [vmem:[%s8717 + $0x80] sm:$0xf]
    %v8751 = vld [vmem:[%s8717 + $0x84] sm:$0xf]
    %v8752 = vld [vmem:[%s8717 + $0x88] sm:$0xf]
    %v8753 = vld [vmem:[%s8717 + $0x8c] sm:$0xf]
    %v8754 = vld [vmem:[%s8717 + $0x90] sm:$0xf]
    %v8755 = vld [vmem:[%s8717 + $0x94] sm:$0xf]
    %v8756 = vld [vmem:[%s8717 + $0x98] sm:$0xf]
    %v8757 = vld [vmem:[%s8717 + $0x9c] sm:$0xf]
    %v8758 = vld [vmem:[%s8717 + $0xa0] sm:$0xf]
    %v8759 = vld [vmem:[%s8717 + $0xa4] sm:$0xf]
    %v8760 = vld [vmem:[%s8717 + $0xa8] sm:$0xf]
    %v8761 = vld [vmem:[%s8717 + $0xac] sm:$0xf]
    %v8762 = vld [vmem:[%s8717 + $0xb0] sm:$0xf]
    %v8763 = vld [vmem:[%s8717 + $0xb4] sm:$0xf]
    %v8764 = vld [vmem:[%s8717 + $0xb8] sm:$0xf]
    %v8765 = vld [vmem:[%s8717 + $0xbc] sm:$0xf]
    %v8830 = vunpack.c.l.b16 %v8653
    %v8831 = vunpack.c.h.b16 %v8653
    %v8832 = vunpack.c.l.b16 %v8654
    %v8833 = vunpack.c.l.b16 %v8655
    %v8834 = vunpack.c.h.b16 %v8655
    %v8835 = vunpack.c.l.b16 %v8656
    %v8836 = vunpack.c.l.b16 %v8657
    %v8837 = vunpack.c.h.b16 %v8657
    %v8838 = vunpack.c.l.b16 %v8658
    %v8839 = vunpack.c.l.b16 %v8659
    %v8840 = vunpack.c.h.b16 %v8659
    %v8841 = vunpack.c.l.b16 %v8660
    %v8842 = vunpack.c.l.b16 %v8661
    %v8843 = vunpack.c.h.b16 %v8661
    %v8844 = vunpack.c.l.b16 %v8662
    %v8845 = vunpack.c.l.b16 %v8663
    %v8846 = vunpack.c.h.b16 %v8663
    %v8847 = vunpack.c.l.b16 %v8664
    %v8848 = vunpack.c.l.b16 %v8665
    %v8849 = vunpack.c.h.b16 %v8665
    %v8850 = vunpack.c.l.b16 %v8666
    %v8851 = vunpack.c.l.b16 %v8667
    %v8852 = vunpack.c.h.b16 %v8667
    %v8853 = vunpack.c.l.b16 %v8668
    %v8854 = vunpack.c.l.b16 %v8669
    %v8855 = vunpack.c.h.b16 %v8669
    %v8856 = vunpack.c.l.b16 %v8670
    %v8857 = vunpack.c.l.b16 %v8671
    %v8858 = vunpack.c.h.b16 %v8671
    %v8859 = vunpack.c.l.b16 %v8672
    %v8860 = vunpack.c.l.b16 %v8673
    %v8861 = vunpack.c.h.b16 %v8673
    %v8862 = vunpack.c.l.b16 %v8674
    %v8863 = vunpack.c.l.b16 %v8675
    %v8864 = vunpack.c.h.b16 %v8675
    %v8865 = vunpack.c.l.b16 %v8676
    %v8866 = vunpack.c.l.b16 %v8677
    %v8867 = vunpack.c.h.b16 %v8677
    %v8868 = vunpack.c.l.b16 %v8678
    %v8869 = vunpack.c.l.b16 %v8679
    %v8870 = vunpack.c.h.b16 %v8679
    %v8871 = vunpack.c.l.b16 %v8680
    %v8872 = vunpack.c.l.b16 %v8681
    %v8873 = vunpack.c.h.b16 %v8681
    %v8874 = vunpack.c.l.b16 %v8682
    %v8875 = vunpack.c.l.b16 %v8683
    %v8876 = vunpack.c.h.b16 %v8683
    %v8877 = vunpack.c.l.b16 %v8684
    %v8878 = vunpack.c.l.b16 %v8685
    %v8879 = vunpack.c.h.b16 %v8685
    %v8880 = vunpack.c.l.b16 %v8686
    %v8881 = vunpack.c.l.b16 %v8687
    %v8882 = vunpack.c.h.b16 %v8687
    %v8883 = vunpack.c.l.b16 %v8688
    %v8884 = vunpack.c.l.b16 %v8689
    %v8885 = vunpack.c.h.b16 %v8689
    %v8886 = vunpack.c.l.b16 %v8690
    %v8887 = vunpack.c.l.b16 %v8691
    %v8888 = vunpack.c.h.b16 %v8691
    %v8889 = vunpack.c.l.b16 %v8692
    %v8890 = vunpack.c.l.b16 %v8693
    %v8891 = vunpack.c.h.b16 %v8693
    %v8892 = vunpack.c.l.b16 %v8694
    %v8893 = vunpack.c.l.b16 %v8695
    %v8894 = vunpack.c.h.b16 %v8695
    %v8895 = vunpack.c.l.b16 %v8696
    %v8896 = vunpack.c.l.b16 %v8697
    %v8897 = vunpack.c.h.b16 %v8697
    %v8898 = vunpack.c.l.b16 %v8698
    %v8899 = vunpack.c.l.b16 %v8699
    %v8900 = vunpack.c.h.b16 %v8699
    %v8901 = vunpack.c.l.b16 %v8700
    %v8902 = vunpack.c.l.b16 %v8701
    %v8903 = vunpack.c.h.b16 %v8701
    %v8904 = vunpack.c.l.b16 %v8702
    %v8905 = vunpack.c.l.b16 %v8703
    %v8906 = vunpack.c.h.b16 %v8703
    %v8907 = vunpack.c.l.b16 %v8704
    %v8908 = vunpack.c.l.b16 %v8705
    %v8909 = vunpack.c.h.b16 %v8705
    %v8910 = vunpack.c.l.b16 %v8706
    %v8911 = vunpack.c.l.b16 %v8707
    %v8912 = vunpack.c.h.b16 %v8707
    %v8913 = vunpack.c.l.b16 %v8708
    %v8914 = vunpack.c.l.b16 %v8709
    %v8915 = vunpack.c.h.b16 %v8709
    %v8916 = vunpack.c.l.b16 %v8710
    %v8917 = vunpack.c.l.b16 %v8711
    %v8918 = vunpack.c.h.b16 %v8711
    %v8919 = vunpack.c.l.b16 %v8712
    %v8920 = vunpack.c.l.b16 %v8713
    %v8921 = vunpack.c.h.b16 %v8713
    %v8922 = vunpack.c.l.b16 %v8714
    %v8923 = vunpack.c.l.b16 %v8715
    %v8924 = vunpack.c.h.b16 %v8715
    %v8925 = vunpack.c.l.b16 %v8716
    %v8926 = vpack.c.b16 %v8833, %v8830
    %v8927 = vpack.c.b16 %v8834, %v8831
    %v8928 = vpack.c.b16 %v8835, %v8832
    %v8929 = vpack.c.b16 %v8839, %v8836
    %v8930 = vpack.c.b16 %v8840, %v8837
    %v8931 = vpack.c.b16 %v8841, %v8838
    %v8932 = vpack.c.b16 %v8845, %v8842
    %v8933 = vpack.c.b16 %v8846, %v8843
    %v8934 = vpack.c.b16 %v8847, %v8844
    %v8935 = vpack.c.b16 %v8851, %v8848
    %v8936 = vpack.c.b16 %v8852, %v8849
    %v8937 = vpack.c.b16 %v8853, %v8850
    %v8938 = vpack.c.b16 %v8857, %v8854
    %v8939 = vpack.c.b16 %v8858, %v8855
    %v8940 = vpack.c.b16 %v8859, %v8856
    %v8941 = vpack.c.b16 %v8863, %v8860
    %v8942 = vpack.c.b16 %v8864, %v8861
    %v8943 = vpack.c.b16 %v8865, %v8862
    %v8944 = vpack.c.b16 %v8869, %v8866
    %v8945 = vpack.c.b16 %v8870, %v8867
    %v8946 = vpack.c.b16 %v8871, %v8868
    %v8947 = vpack.c.b16 %v8875, %v8872
    %v8948 = vpack.c.b16 %v8876, %v8873
    %v8949 = vpack.c.b16 %v8877, %v8874
    %v8950 = vpack.c.b16 %v8881, %v8878
    %v8951 = vpack.c.b16 %v8882, %v8879
    %v8952 = vpack.c.b16 %v8883, %v8880
    %v8953 = vpack.c.b16 %v8887, %v8884
    %v8954 = vpack.c.b16 %v8888, %v8885
    %v8955 = vpack.c.b16 %v8889, %v8886
    %v8956 = vpack.c.b16 %v8893, %v8890
    %v8957 = vpack.c.b16 %v8894, %v8891
    %v8958 = vpack.c.b16 %v8895, %v8892
    %v8959 = vpack.c.b16 %v8899, %v8896
    %v8960 = vpack.c.b16 %v8900, %v8897
    %v8961 = vpack.c.b16 %v8901, %v8898
    %v8962 = vpack.c.b16 %v8905, %v8902
    %v8963 = vpack.c.b16 %v8906, %v8903
    %v8964 = vpack.c.b16 %v8907, %v8904
    %v8965 = vpack.c.b16 %v8911, %v8908
    %v8966 = vpack.c.b16 %v8912, %v8909
    %v8967 = vpack.c.b16 %v8913, %v8910
    %v8968 = vpack.c.b16 %v8917, %v8914
    %v8969 = vpack.c.b16 %v8918, %v8915
    %v8970 = vpack.c.b16 %v8919, %v8916
    %v8971 = vpack.c.b16 %v8923, %v8920
    %v8972 = vpack.c.b16 %v8924, %v8921
    %v8973 = vpack.c.b16 %v8925, %v8922
    %v9070 = vunpack.c.l.b16 %v8718
    %v9071 = vunpack.c.l.b16 %v8719
    %v9072 = vunpack.c.l.b16 %v8720
    %v9073 = vunpack.c.l.b16 %v8721
    %v9074 = vunpack.c.l.b16 %v8722
    %v9075 = vunpack.c.l.b16 %v8723
    %v9076 = vunpack.c.l.b16 %v8724
    %v9077 = vunpack.c.l.b16 %v8725
    %v9078 = vunpack.c.l.b16 %v8726
    %v9079 = vunpack.c.l.b16 %v8727
    %v9080 = vunpack.c.l.b16 %v8728
    %v9081 = vunpack.c.l.b16 %v8729
    %v9082 = vunpack.c.l.b16 %v8730
    %v9083 = vunpack.c.l.b16 %v8731
    %v9084 = vunpack.c.l.b16 %v8732
    %v9085 = vunpack.c.l.b16 %v8733
    %v9086 = vunpack.c.l.b16 %v8734
    %v9087 = vunpack.c.l.b16 %v8735
    %v9088 = vunpack.c.l.b16 %v8736
    %v9089 = vunpack.c.l.b16 %v8737
    %v9090 = vunpack.c.l.b16 %v8738
    %v9091 = vunpack.c.l.b16 %v8739
    %v9092 = vunpack.c.l.b16 %v8740
    %v9093 = vunpack.c.l.b16 %v8741
    %v9094 = vunpack.c.l.b16 %v8742
    %v9095 = vunpack.c.l.b16 %v8743
    %v9096 = vunpack.c.l.b16 %v8744
    %v9097 = vunpack.c.l.b16 %v8745
    %v9098 = vunpack.c.l.b16 %v8746
    %v9099 = vunpack.c.l.b16 %v8747
    %v9100 = vunpack.c.l.b16 %v8748
    %v9101 = vunpack.c.l.b16 %v8749
    %v9102 = vunpack.c.l.b16 %v8750
    %v9103 = vunpack.c.l.b16 %v8751
    %v9104 = vunpack.c.l.b16 %v8752
    %v9105 = vunpack.c.l.b16 %v8753
    %v9106 = vunpack.c.l.b16 %v8754
    %v9107 = vunpack.c.l.b16 %v8755
    %v9108 = vunpack.c.l.b16 %v8756
    %v9109 = vunpack.c.l.b16 %v8757
    %v9110 = vunpack.c.l.b16 %v8758
    %v9111 = vunpack.c.l.b16 %v8759
    %v9112 = vunpack.c.l.b16 %v8760
    %v9113 = vunpack.c.l.b16 %v8761
    %v9114 = vunpack.c.l.b16 %v8762
    %v9115 = vunpack.c.l.b16 %v8763
    %v9116 = vunpack.c.l.b16 %v8764
    %v9117 = vunpack.c.l.b16 %v8765
    %v9118 = vpack.c.b16 %v9071, %v9070
    %v9119 = vpack.c.b16 %v9073, %v9072
    %v9120 = vpack.c.b16 %v9075, %v9074
    %v9121 = vpack.c.b16 %v9077, %v9076
    %v9122 = vpack.c.b16 %v9079, %v9078
    %v9123 = vpack.c.b16 %v9081, %v9080
    %v9124 = vpack.c.b16 %v9083, %v9082
    %v9125 = vpack.c.b16 %v9085, %v9084
    %v9126 = vpack.c.b16 %v9087, %v9086
    %v9127 = vpack.c.b16 %v9089, %v9088
    %v9128 = vpack.c.b16 %v9091, %v9090
    %v9129 = vpack.c.b16 %v9093, %v9092
    %v9130 = vpack.c.b16 %v9095, %v9094
    %v9131 = vpack.c.b16 %v9097, %v9096
    %v9132 = vpack.c.b16 %v9099, %v9098
    %v9133 = vpack.c.b16 %v9101, %v9100
    %v9134 = vpack.c.b16 %v9103, %v9102
    %v9135 = vpack.c.b16 %v9105, %v9104
    %v9136 = vpack.c.b16 %v9107, %v9106
    %v9137 = vpack.c.b16 %v9109, %v9108
    %v9138 = vpack.c.b16 %v9111, %v9110
    %v9139 = vpack.c.b16 %v9113, %v9112
    %v9140 = vpack.c.b16 %v9115, %v9114
    %v9141 = vpack.c.b16 %v9117, %v9116
    %9166 = vmatprep.subr.bf16.mxu0 0
    %9167 = vmatpush1.bf16.msra.mxu0 %v9125
    %9168 = vmatprep.subr.bf16.mxu0 0
    %9169 = vmatpush1.bf16.msra.mxu0 %v9124
    %9170 = vmatprep.subr.bf16.mxu0 0
    %9171 = vmatpush1.bf16.msra.mxu0 %v9123
    %9172 = vmatprep.subr.bf16.mxu0 0
    %9173 = vmatpush1.bf16.msra.mxu0 %v9122
    %9174 = vmatprep.subr.bf16.mxu0 0
    %9175 = vmatpush1.bf16.msra.mxu0 %v9121
    %9176 = vmatprep.subr.bf16.mxu0 0
    %9177 = vmatpush1.bf16.msra.mxu0 %v9120
    %9178 = vmatprep.subr.bf16.mxu0 0
    %9179 = vmatpush1.bf16.msra.mxu0 %v9119
    %9180 = vmatprep.subr.bf16.mxu0 0
    %9181 = vmatpush1.bf16.msra.mxu0 %v9118
    %9182 = vmatprep.subr.bf16.mxu0 0
    %9183 = vmatpush2.bf16.msra.mxu0 %v9133
    %9184 = vmatprep.subr.bf16.mxu0 0
    %9185 = vmatpush2.bf16.msra.mxu0 %v9132
    %9186 = vmatprep.subr.bf16.mxu0 0
    %9187 = vmatpush2.bf16.msra.mxu0 %v9131
    %9188 = vmatprep.subr.bf16.mxu0 0
    %9189 = vmatpush2.bf16.msra.mxu0 %v9130
    %9190 = vmatprep.subr.bf16.mxu0 0
    %9191 = vmatpush2.bf16.msra.mxu0 %v9129
    %9192 = vmatprep.subr.bf16.mxu0 0
    %9193 = vmatpush2.bf16.msra.mxu0 %v9128
    %9194 = vmatprep.subr.bf16.mxu0 0
    %9195 = vmatpush2.bf16.msra.mxu0 %v9127
    %9196 = vmatprep.subr.bf16.mxu0 0
    %9197 = vmatpush2.bf16.msra.mxu0 %v9126
    %9198 = vmatprep.mubr.bf16.mxu0 %v8927
    %9199 = vmatmul.mubr.bf16.gmra.mxu0 %v8926
    %v9200 = vpop.f32.mrf.mxu0
    %v9201 = vadd.f32 0.0, %v9200
    %v9202 = vpop.f32.mrf.mxu0
    %v9203 = vpop.f32.mrf.mxu0
    %v9204 = vadd.f32 0.0, %v9203
    %v9205 = vpop.f32.mrf.mxu0
    %9206 = vmatprep.mubr.bf16.mxu0 %v8930
    %9207 = vmatmul.mubr.bf16.gmra.mxu0 %v8929
    %v9208 = vpop.f32.mrf.mxu0
    %v9209 = vadd.f32 0.0, %v9208
    %v9210 = vpop.f32.mrf.mxu0
    %v9211 = vpop.f32.mrf.mxu0
    %v9212 = vadd.f32 0.0, %v9211
    %v9213 = vpop.f32.mrf.mxu0
    %9214 = vmatprep.mubr.bf16.mxu0 %v8933
    %9215 = vmatmul.mubr.bf16.gmra.mxu0 %v8932
    %v9216 = vpop.f32.mrf.mxu0
    %v9217 = vadd.f32 0.0, %v9216
    %v9218 = vpop.f32.mrf.mxu0
    %v9219 = vpop.f32.mrf.mxu0
    %v9220 = vadd.f32 0.0, %v9219
    %v9221 = vpop.f32.mrf.mxu0
    %9222 = vmatprep.mubr.bf16.mxu0 %v8936
    %9223 = vmatmul.mubr.bf16.gmra.mxu0 %v8935
    %v9224 = vpop.f32.mrf.mxu0
    %v9225 = vadd.f32 0.0, %v9224
    %v9226 = vpop.f32.mrf.mxu0
    %v9227 = vpop.f32.mrf.mxu0
    %v9228 = vadd.f32 0.0, %v9227
    %v9229 = vpop.f32.mrf.mxu0
    %9230 = vmatprep.mubr.bf16.mxu0 %v8939
    %9231 = vmatmul.mubr.bf16.gmra.mxu0 %v8938
    %v9232 = vpop.f32.mrf.mxu0
    %v9233 = vadd.f32 0.0, %v9232
    %v9234 = vpop.f32.mrf.mxu0
    %v9235 = vpop.f32.mrf.mxu0
    %v9236 = vadd.f32 0.0, %v9235
    %v9237 = vpop.f32.mrf.mxu0
    %9238 = vmatprep.mubr.bf16.mxu0 %v8942
    %9239 = vmatmul.mubr.bf16.gmra.mxu0 %v8941
    %v9240 = vpop.f32.mrf.mxu0
    %v9241 = vadd.f32 0.0, %v9240
    %v9242 = vpop.f32.mrf.mxu0
    %v9243 = vpop.f32.mrf.mxu0
    %v9244 = vadd.f32 0.0, %v9243
    %v9245 = vpop.f32.mrf.mxu0
    %9246 = vmatprep.mubr.bf16.mxu0 %v8945
    %9247 = vmatmul.mubr.bf16.gmra.mxu0 %v8944
    %v9248 = vpop.f32.mrf.mxu0
    %v9249 = vadd.f32 0.0, %v9248
    %v9250 = vpop.f32.mrf.mxu0
    %v9251 = vpop.f32.mrf.mxu0
    %v9252 = vadd.f32 0.0, %v9251
    %v9253 = vpop.f32.mrf.mxu0
    %9254 = vmatprep.mubr.bf16.mxu0 %v8948
    %9255 = vmatmul.mubr.bf16.gmra.mxu0 %v8947
    %v9256 = vpop.f32.mrf.mxu0
    %v9257 = vadd.f32 0.0, %v9256
    %v9258 = vpop.f32.mrf.mxu0
    %v9259 = vpop.f32.mrf.mxu0
    %v9260 = vadd.f32 0.0, %v9259
    %v9261 = vpop.f32.mrf.mxu0
    %9262 = vmatprep.mubr.bf16.mxu0 %v8951
    %9263 = vmatmul.mubr.bf16.gmra.mxu0 %v8950
    %v9264 = vpop.f32.mrf.mxu0
    %v9265 = vadd.f32 0.0, %v9264
    %v9266 = vpop.f32.mrf.mxu0
    %v9267 = vpop.f32.mrf.mxu0
    %v9268 = vadd.f32 0.0, %v9267
    %v9269 = vpop.f32.mrf.mxu0
    %9270 = vmatprep.mubr.bf16.mxu0 %v8954
    %9271 = vmatmul.mubr.bf16.gmra.mxu0 %v8953
    %v9272 = vpop.f32.mrf.mxu0
    %v9273 = vadd.f32 0.0, %v9272
    %v9274 = vpop.f32.mrf.mxu0
    %v9275 = vpop.f32.mrf.mxu0
    %v9276 = vadd.f32 0.0, %v9275
    %v9277 = vpop.f32.mrf.mxu0
    %9278 = vmatprep.mubr.bf16.mxu0 %v8957
    %9279 = vmatmul.mubr.bf16.gmra.mxu0 %v8956
    %v9280 = vpop.f32.mrf.mxu0
    %v9281 = vadd.f32 0.0, %v9280
    %v9282 = vpop.f32.mrf.mxu0
    %v9283 = vpop.f32.mrf.mxu0
    %v9284 = vadd.f32 0.0, %v9283
    %v9285 = vpop.f32.mrf.mxu0
    %9286 = vmatprep.mubr.bf16.mxu0 %v8960
    %9287 = vmatmul.mubr.bf16.gmra.mxu0 %v8959
    %v9288 = vpop.f32.mrf.mxu0
    %v9289 = vadd.f32 0.0, %v9288
    %v9290 = vpop.f32.mrf.mxu0
    %v9291 = vpop.f32.mrf.mxu0
    %v9292 = vadd.f32 0.0, %v9291
    %v9293 = vpop.f32.mrf.mxu0
    %9294 = vmatprep.mubr.bf16.mxu0 %v8963
    %9295 = vmatmul.mubr.bf16.gmra.mxu0 %v8962
    %v9296 = vpop.f32.mrf.mxu0
    %v9297 = vadd.f32 0.0, %v9296
    %v9298 = vpop.f32.mrf.mxu0
    %v9299 = vpop.f32.mrf.mxu0
    %v9300 = vadd.f32 0.0, %v9299
    %v9301 = vpop.f32.mrf.mxu0
    %9302 = vmatprep.mubr.bf16.mxu0 %v8966
    %9303 = vmatmul.mubr.bf16.gmra.mxu0 %v8965
    %v9304 = vpop.f32.mrf.mxu0
    %v9305 = vadd.f32 0.0, %v9304
    %v9306 = vpop.f32.mrf.mxu0
    %v9307 = vpop.f32.mrf.mxu0
    %v9308 = vadd.f32 0.0, %v9307
    %v9309 = vpop.f32.mrf.mxu0
    %9310 = vmatprep.mubr.bf16.mxu0 %v8969
    %9311 = vmatmul.mubr.bf16.gmra.mxu0 %v8968
    %v9312 = vpop.f32.mrf.mxu0
    %v9313 = vadd.f32 0.0, %v9312
    %v9314 = vpop.f32.mrf.mxu0
    %v9315 = vpop.f32.mrf.mxu0
    %v9316 = vadd.f32 0.0, %v9315
    %v9317 = vpop.f32.mrf.mxu0
    %9318 = vmatprep.mubr.bf16.mxu0 %v8972
    %9319 = vmatmul.mubr.bf16.gmra.mxu0 %v8971
    %v9320 = vpop.f32.mrf.mxu0
    %v9321 = vadd.f32 0.0, %v9320
    %v9322 = vpop.f32.mrf.mxu0
    %v9323 = vpop.f32.mrf.mxu0
    %v9324 = vadd.f32 0.0, %v9323
    %v9325 = vpop.f32.mrf.mxu0
    %9326 = vdwg.mxu0
    %9327 = vmatprep.subr.bf16.mxu0 0
    %9328 = vmatpush1.bf16.msra.mxu0 %v9141
    %9329 = vmatprep.subr.bf16.mxu0 0
    %9330 = vmatpush1.bf16.msra.mxu0 %v9140
    %9331 = vmatprep.subr.bf16.mxu0 0
    %9332 = vmatpush1.bf16.msra.mxu0 %v9139
    %9333 = vmatprep.subr.bf16.mxu0 0
    %9334 = vmatpush1.bf16.msra.mxu0 %v9138
    %9335 = vmatprep.subr.bf16.mxu0 0
    %9336 = vmatpush1.bf16.msra.mxu0 %v9137
    %9337 = vmatprep.subr.bf16.mxu0 0
    %9338 = vmatpush1.bf16.msra.mxu0 %v9136
    %9339 = vmatprep.subr.bf16.mxu0 0
    %9340 = vmatpush1.bf16.msra.mxu0 %v9135
    %9341 = vmatprep.subr.bf16.mxu0 0
    %9342 = vmatpush1.bf16.msra.mxu0 %v9134
    %9343 = vmatprep.subr.bf16.mxu0 0
    %9344 = vmatpush2.bf16.msra.mxu0 0
    %9345 = vmatprep.subr.bf16.mxu0 0
    %9346 = vmatpush2.bf16.msra.mxu0 0
    %9347 = vmatprep.subr.bf16.mxu0 0
    %9348 = vmatpush2.bf16.msra.mxu0 0
    %9349 = vmatprep.subr.bf16.mxu0 0
    %9350 = vmatpush2.bf16.msra.mxu0 0
    %9351 = vmatprep.subr.bf16.mxu0 0
    %9352 = vmatpush2.bf16.msra.mxu0 0
    %9353 = vmatprep.subr.bf16.mxu0 0
    %9354 = vmatpush2.bf16.msra.mxu0 0
    %9355 = vmatprep.subr.bf16.mxu0 0
    %9356 = vmatpush2.bf16.msra.mxu0 0
    %9357 = vmatprep.subr.bf16.mxu0 0
    %9358 = vmatpush2.bf16.msra.mxu0 0
    %9359 = vmatprep.mubr.bf16.mxu0 0
    %9360 = vmatmul.mubr.bf16.gmra.mxu0 %v8928
    %v9361 = vpop.f32.mrf.mxu0
    %v9362 = vadd.f32 %v9201, %v9361
    %v9363 = vpop.f32.mrf.mxu0
    %v9364 = vpop.f32.mrf.mxu0
    %v9365 = vadd.f32 %v9204, %v9364
    %v9366 = vpop.f32.mrf.mxu0
    %9367 = vmatprep.mubr.bf16.mxu0 0
    %9368 = vmatmul.mubr.bf16.gmra.mxu0 %v8931
    %v9369 = vpop.f32.mrf.mxu0
    %v9370 = vadd.f32 %v9209, %v9369
    %v9371 = vpop.f32.mrf.mxu0
    %v9372 = vpop.f32.mrf.mxu0
    %v9373 = vadd.f32 %v9212, %v9372
    %v9374 = vpop.f32.mrf.mxu0
    %9375 = vmatprep.mubr.bf16.mxu0 0
    %9376 = vmatmul.mubr.bf16.gmra.mxu0 %v8934
    %v9377 = vpop.f32.mrf.mxu0
    %v9378 = vadd.f32 %v9217, %v9377
    %v9379 = vpop.f32.mrf.mxu0
    %v9380 = vpop.f32.mrf.mxu0
    %v9381 = vadd.f32 %v9220, %v9380
    %v9382 = vpop.f32.mrf.mxu0
    %9383 = vmatprep.mubr.bf16.mxu0 0
    %9384 = vmatmul.mubr.bf16.gmra.mxu0 %v8937
    %v9385 = vpop.f32.mrf.mxu0
    %v9386 = vadd.f32 %v9225, %v9385
    %v9387 = vpop.f32.mrf.mxu0
    %v9388 = vpop.f32.mrf.mxu0
    %v9389 = vadd.f32 %v9228, %v9388
    %v9390 = vpop.f32.mrf.mxu0
    %9391 = vmatprep.mubr.bf16.mxu0 0
    %9392 = vmatmul.mubr.bf16.gmra.mxu0 %v8940
    %v9393 = vpop.f32.mrf.mxu0
    %v9394 = vadd.f32 %v9233, %v9393
    %v9395 = vpop.f32.mrf.mxu0
    %v9396 = vpop.f32.mrf.mxu0
    %v9397 = vadd.f32 %v9236, %v9396
    %v9398 = vpop.f32.mrf.mxu0
    %9399 = vmatprep.mubr.bf16.mxu0 0
    %9400 = vmatmul.mubr.bf16.gmra.mxu0 %v8943
    %v9401 = vpop.f32.mrf.mxu0
    %v9402 = vadd.f32 %v9241, %v9401
    %v9403 = vpop.f32.mrf.mxu0
    %v9404 = vpop.f32.mrf.mxu0
    %v9405 = vadd.f32 %v9244, %v9404
    %v9406 = vpop.f32.mrf.mxu0
    %9407 = vmatprep.mubr.bf16.mxu0 0
    %9408 = vmatmul.mubr.bf16.gmra.mxu0 %v8946
    %v9409 = vpop.f32.mrf.mxu0
    %v9410 = vadd.f32 %v9249, %v9409
    %v9411 = vpop.f32.mrf.mxu0
    %v9412 = vpop.f32.mrf.mxu0
    %v9413 = vadd.f32 %v9252, %v9412
    %v9414 = vpop.f32.mrf.mxu0
    %9415 = vmatprep.mubr.bf16.mxu0 0
    %9416 = vmatmul.mubr.bf16.gmra.mxu0 %v8949
    %v9417 = vpop.f32.mrf.mxu0
    %v9418 = vadd.f32 %v9257, %v9417
    %v9419 = vpop.f32.mrf.mxu0
    %v9420 = vpop.f32.mrf.mxu0
    %v9421 = vadd.f32 %v9260, %v9420
    %v9422 = vpop.f32.mrf.mxu0
    %9423 = vmatprep.mubr.bf16.mxu0 0
    %9424 = vmatmul.mubr.bf16.gmra.mxu0 %v8952
    %v9425 = vpop.f32.mrf.mxu0
    %v9426 = vadd.f32 %v9265, %v9425
    %v9427 = vpop.f32.mrf.mxu0
    %v9428 = vpop.f32.mrf.mxu0
    %v9429 = vadd.f32 %v9268, %v9428
    %v9430 = vpop.f32.mrf.mxu0
    %9431 = vmatprep.mubr.bf16.mxu0 0
    %9432 = vmatmul.mubr.bf16.gmra.mxu0 %v8955
    %v9433 = vpop.f32.mrf.mxu0
    %v9434 = vadd.f32 %v9273, %v9433
    %v9435 = vpop.f32.mrf.mxu0
    %v9436 = vpop.f32.mrf.mxu0
    %v9437 = vadd.f32 %v9276, %v9436
    %v9438 = vpop.f32.mrf.mxu0
    %9439 = vmatprep.mubr.bf16.mxu0 0
    %9440 = vmatmul.mubr.bf16.gmra.mxu0 %v8958
    %v9441 = vpop.f32.mrf.mxu0
    %v9442 = vadd.f32 %v9281, %v9441
    %v9443 = vpop.f32.mrf.mxu0
    %v9444 = vpop.f32.mrf.mxu0
    %v9445 = vadd.f32 %v9284, %v9444
    %v9446 = vpop.f32.mrf.mxu0
    %9447 = vmatprep.mubr.bf16.mxu0 0
    %9448 = vmatmul.mubr.bf16.gmra.mxu0 %v8961
    %v9449 = vpop.f32.mrf.mxu0
    %v9450 = vadd.f32 %v9289, %v9449
    %v9451 = vpop.f32.mrf.mxu0
    %v9452 = vpop.f32.mrf.mxu0
    %v9453 = vadd.f32 %v9292, %v9452
    %v9454 = vpop.f32.mrf.mxu0
    %9455 = vmatprep.mubr.bf16.mxu0 0
    %9456 = vmatmul.mubr.bf16.gmra.mxu0 %v8964
    %v9457 = vpop.f32.mrf.mxu0
    %v9458 = vadd.f32 %v9297, %v9457
    %v9459 = vpop.f32.mrf.mxu0
    %v9460 = vpop.f32.mrf.mxu0
    %v9461 = vadd.f32 %v9300, %v9460
    %v9462 = vpop.f32.mrf.mxu0
    %9463 = vmatprep.mubr.bf16.mxu0 0
    %9464 = vmatmul.mubr.bf16.gmra.mxu0 %v8967
    %v9465 = vpop.f32.mrf.mxu0
    %v9466 = vadd.f32 %v9305, %v9465
    %v9467 = vpop.f32.mrf.mxu0
    %v9468 = vpop.f32.mrf.mxu0
    %v9469 = vadd.f32 %v9308, %v9468
    %v9470 = vpop.f32.mrf.mxu0
    %9471 = vmatprep.mubr.bf16.mxu0 0
    %9472 = vmatmul.mubr.bf16.gmra.mxu0 %v8970
    %v9473 = vpop.f32.mrf.mxu0
    %v9474 = vadd.f32 %v9313, %v9473
    %v9475 = vpop.f32.mrf.mxu0
    %v9476 = vpop.f32.mrf.mxu0
    %v9477 = vadd.f32 %v9316, %v9476
    %v9478 = vpop.f32.mrf.mxu0
    %9479 = vmatprep.mubr.bf16.mxu0 0
    %9480 = vmatmul.mubr.bf16.gmra.mxu0 %v8973
    %v9481 = vpop.f32.mrf.mxu0
    %v9482 = vadd.f32 %v9321, %v9481
    %v9483 = vpop.f32.mrf.mxu0
    %v9484 = vpop.f32.mrf.mxu0
    %v9485 = vadd.f32 %v9324, %v9484
    %v9486 = vpop.f32.mrf.mxu0
    %9487 = vdwg.mxu0
    %v9552 = vunpack.c.l.b16 %v8541
    %v9553 = vunpack.c.h.b16 %v8541
    %v9554 = vunpack.c.l.b16 %v8542
    %v9555 = vunpack.c.l.b16 %v8543
    %v9556 = vunpack.c.h.b16 %v8543
    %v9557 = vunpack.c.l.b16 %v8544
    %v9558 = vunpack.c.l.b16 %v8545
    %v9559 = vunpack.c.h.b16 %v8545
    %v9560 = vunpack.c.l.b16 %v8546
    %v9561 = vunpack.c.l.b16 %v8547
    %v9562 = vunpack.c.h.b16 %v8547
    %v9563 = vunpack.c.l.b16 %v8548
    %v9564 = vunpack.c.l.b16 %v8549
    %v9565 = vunpack.c.h.b16 %v8549
    %v9566 = vunpack.c.l.b16 %v8550
    %v9567 = vunpack.c.l.b16 %v8551
    %v9568 = vunpack.c.h.b16 %v8551
    %v9569 = vunpack.c.l.b16 %v8552
    %v9570 = vunpack.c.l.b16 %v8553
    %v9571 = vunpack.c.h.b16 %v8553
    %v9572 = vunpack.c.l.b16 %v8554
    %v9573 = vunpack.c.l.b16 %v8555
    %v9574 = vunpack.c.h.b16 %v8555
    %v9575 = vunpack.c.l.b16 %v8556
    %v9576 = vunpack.c.l.b16 %v8557
    %v9577 = vunpack.c.h.b16 %v8557
    %v9578 = vunpack.c.l.b16 %v8558
    %v9579 = vunpack.c.l.b16 %v8559
    %v9580 = vunpack.c.h.b16 %v8559
    %v9581 = vunpack.c.l.b16 %v8560
    %v9582 = vunpack.c.l.b16 %v8561
    %v9583 = vunpack.c.h.b16 %v8561
    %v9584 = vunpack.c.l.b16 %v8562
    %v9585 = vunpack.c.l.b16 %v8563
    %v9586 = vunpack.c.h.b16 %v8563
    %v9587 = vunpack.c.l.b16 %v8564
    %v9588 = vunpack.c.l.b16 %v8565
    %v9589 = vunpack.c.h.b16 %v8565
    %v9590 = vunpack.c.l.b16 %v8566
    %v9591 = vunpack.c.l.b16 %v8567
    %v9592 = vunpack.c.h.b16 %v8567
    %v9593 = vunpack.c.l.b16 %v8568
    %v9594 = vunpack.c.l.b16 %v8569
    %v9595 = vunpack.c.h.b16 %v8569
    %v9596 = vunpack.c.l.b16 %v8570
    %v9597 = vunpack.c.l.b16 %v8571
    %v9598 = vunpack.c.h.b16 %v8571
    %v9599 = vunpack.c.l.b16 %v8572
    %v9600 = vunpack.c.l.b16 %v8573
    %v9601 = vunpack.c.h.b16 %v8573
    %v9602 = vunpack.c.l.b16 %v8574
    %v9603 = vunpack.c.l.b16 %v8575
    %v9604 = vunpack.c.h.b16 %v8575
    %v9605 = vunpack.c.l.b16 %v8576
    %v9606 = vunpack.c.l.b16 %v8577
    %v9607 = vunpack.c.h.b16 %v8577
    %v9608 = vunpack.c.l.b16 %v8578
    %v9609 = vunpack.c.l.b16 %v8579
    %v9610 = vunpack.c.h.b16 %v8579
    %v9611 = vunpack.c.l.b16 %v8580
    %v9612 = vunpack.c.l.b16 %v8581
    %v9613 = vunpack.c.h.b16 %v8581
    %v9614 = vunpack.c.l.b16 %v8582
    %v9615 = vunpack.c.l.b16 %v8583
    %v9616 = vunpack.c.h.b16 %v8583
    %v9617 = vunpack.c.l.b16 %v8584
    %v9618 = vunpack.c.l.b16 %v8585
    %v9619 = vunpack.c.h.b16 %v8585
    %v9620 = vunpack.c.l.b16 %v8586
    %v9621 = vunpack.c.l.b16 %v8587
    %v9622 = vunpack.c.h.b16 %v8587
    %v9623 = vunpack.c.l.b16 %v8588
    %v9624 = vunpack.c.l.b16 %v8589
    %v9625 = vunpack.c.h.b16 %v8589
    %v9626 = vunpack.c.l.b16 %v8590
    %v9627 = vunpack.c.l.b16 %v8591
    %v9628 = vunpack.c.h.b16 %v8591
    %v9629 = vunpack.c.l.b16 %v8592
    %v9630 = vunpack.c.l.b16 %v8593
    %v9631 = vunpack.c.h.b16 %v8593
    %v9632 = vunpack.c.l.b16 %v8594
    %v9633 = vunpack.c.l.b16 %v8595
    %v9634 = vunpack.c.h.b16 %v8595
    %v9635 = vunpack.c.l.b16 %v8596
    %v9636 = vunpack.c.l.b16 %v8597
    %v9637 = vunpack.c.h.b16 %v8597
    %v9638 = vunpack.c.l.b16 %v8598
    %v9639 = vunpack.c.l.b16 %v8599
    %v9640 = vunpack.c.h.b16 %v8599
    %v9641 = vunpack.c.l.b16 %v8600
    %v9642 = vunpack.c.l.b16 %v8601
    %v9643 = vunpack.c.h.b16 %v8601
    %v9644 = vunpack.c.l.b16 %v8602
    %v9645 = vunpack.c.l.b16 %v8603
    %v9646 = vunpack.c.h.b16 %v8603
    %v9647 = vunpack.c.l.b16 %v8604
    %v9648 = vpack.c.b16 %v9555, %v9552
    %v9649 = vpack.c.b16 %v9556, %v9553
    %v9650 = vpack.c.b16 %v9557, %v9554
    %v9651 = vpack.c.b16 %v9561, %v9558
    %v9652 = vpack.c.b16 %v9562, %v9559
    %v9653 = vpack.c.b16 %v9563, %v9560
    %v9654 = vpack.c.b16 %v9567, %v9564
    %v9655 = vpack.c.b16 %v9568, %v9565
    %v9656 = vpack.c.b16 %v9569, %v9566
    %v9657 = vpack.c.b16 %v9573, %v9570
    %v9658 = vpack.c.b16 %v9574, %v9571
    %v9659 = vpack.c.b16 %v9575, %v9572
    %v9660 = vpack.c.b16 %v9579, %v9576
    %v9661 = vpack.c.b16 %v9580, %v9577
    %v9662 = vpack.c.b16 %v9581, %v9578
    %v9663 = vpack.c.b16 %v9585, %v9582
    %v9664 = vpack.c.b16 %v9586, %v9583
    %v9665 = vpack.c.b16 %v9587, %v9584
    %v9666 = vpack.c.b16 %v9591, %v9588
    %v9667 = vpack.c.b16 %v9592, %v9589
    %v9668 = vpack.c.b16 %v9593, %v9590
    %v9669 = vpack.c.b16 %v9597, %v9594
    %v9670 = vpack.c.b16 %v9598, %v9595
    %v9671 = vpack.c.b16 %v9599, %v9596
    %v9672 = vpack.c.b16 %v9603, %v9600
    %v9673 = vpack.c.b16 %v9604, %v9601
    %v9674 = vpack.c.b16 %v9605, %v9602
    %v9675 = vpack.c.b16 %v9609, %v9606
    %v9676 = vpack.c.b16 %v9610, %v9607
    %v9677 = vpack.c.b16 %v9611, %v9608
    %v9678 = vpack.c.b16 %v9615, %v9612
    %v9679 = vpack.c.b16 %v9616, %v9613
    %v9680 = vpack.c.b16 %v9617, %v9614
    %v9681 = vpack.c.b16 %v9621, %v9618
    %v9682 = vpack.c.b16 %v9622, %v9619
    %v9683 = vpack.c.b16 %v9623, %v9620
    %v9684 = vpack.c.b16 %v9627, %v9624
    %v9685 = vpack.c.b16 %v9628, %v9625
    %v9686 = vpack.c.b16 %v9629, %v9626
    %v9687 = vpack.c.b16 %v9633, %v9630
    %v9688 = vpack.c.b16 %v9634, %v9631
    %v9689 = vpack.c.b16 %v9635, %v9632
    %v9690 = vpack.c.b16 %v9639, %v9636
    %v9691 = vpack.c.b16 %v9640, %v9637
    %v9692 = vpack.c.b16 %v9641, %v9638
    %v9693 = vpack.c.b16 %v9645, %v9642
    %v9694 = vpack.c.b16 %v9646, %v9643
    %v9695 = vpack.c.b16 %v9647, %v9644
    %v9792 = vunpack.c.l.b16 %v8605
    %v9793 = vunpack.c.l.b16 %v8606
    %v9794 = vunpack.c.l.b16 %v8607
    %v9795 = vunpack.c.l.b16 %v8608
    %v9796 = vunpack.c.l.b16 %v8609
    %v9797 = vunpack.c.l.b16 %v8610
    %v9798 = vunpack.c.l.b16 %v8611
    %v9799 = vunpack.c.l.b16 %v8612
    %v9800 = vunpack.c.l.b16 %v8613
    %v9801 = vunpack.c.l.b16 %v8614
    %v9802 = vunpack.c.l.b16 %v8615
    %v9803 = vunpack.c.l.b16 %v8616
    %v9804 = vunpack.c.l.b16 %v8617
    %v9805 = vunpack.c.l.b16 %v8618
    %v9806 = vunpack.c.l.b16 %v8619
    %v9807 = vunpack.c.l.b16 %v8620
    %v9808 = vunpack.c.l.b16 %v8621
    %v9809 = vunpack.c.l.b16 %v8622
    %v9810 = vunpack.c.l.b16 %v8623
    %v9811 = vunpack.c.l.b16 %v8624
    %v9812 = vunpack.c.l.b16 %v8625
    %v9813 = vunpack.c.l.b16 %v8626
    %v9814 = vunpack.c.l.b16 %v8627
    %v9815 = vunpack.c.l.b16 %v8628
    %v9816 = vunpack.c.l.b16 %v8629
    %v9817 = vunpack.c.l.b16 %v8630
    %v9818 = vunpack.c.l.b16 %v8631
    %v9819 = vunpack.c.l.b16 %v8632
    %v9820 = vunpack.c.l.b16 %v8633
    %v9821 = vunpack.c.l.b16 %v8634
    %v9822 = vunpack.c.l.b16 %v8635
    %v9823 = vunpack.c.l.b16 %v8636
    %v9824 = vunpack.c.l.b16 %v8637
    %v9825 = vunpack.c.l.b16 %v8638
    %v9826 = vunpack.c.l.b16 %v8639
    %v9827 = vunpack.c.l.b16 %v8640
    %v9828 = vunpack.c.l.b16 %v8641
    %v9829 = vunpack.c.l.b16 %v8642
    %v9830 = vunpack.c.l.b16 %v8643
    %v9831 = vunpack.c.l.b16 %v8644
    %v9832 = vunpack.c.l.b16 %v8645
    %v9833 = vunpack.c.l.b16 %v8646
    %v9834 = vunpack.c.l.b16 %v8647
    %v9835 = vunpack.c.l.b16 %v8648
    %v9836 = vunpack.c.l.b16 %v8649
    %v9837 = vunpack.c.l.b16 %v8650
    %v9838 = vunpack.c.l.b16 %v8651
    %v9839 = vunpack.c.l.b16 %v8652
    %v9840 = vpack.c.b16 %v9793, %v9792
    %v9841 = vpack.c.b16 %v9795, %v9794
    %v9842 = vpack.c.b16 %v9797, %v9796
    %v9843 = vpack.c.b16 %v9799, %v9798
    %v9844 = vpack.c.b16 %v9801, %v9800
    %v9845 = vpack.c.b16 %v9803, %v9802
    %v9846 = vpack.c.b16 %v9805, %v9804
    %v9847 = vpack.c.b16 %v9807, %v9806
    %v9848 = vpack.c.b16 %v9809, %v9808
    %v9849 = vpack.c.b16 %v9811, %v9810
    %v9850 = vpack.c.b16 %v9813, %v9812
    %v9851 = vpack.c.b16 %v9815, %v9814
    %v9852 = vpack.c.b16 %v9817, %v9816
    %v9853 = vpack.c.b16 %v9819, %v9818
    %v9854 = vpack.c.b16 %v9821, %v9820
    %v9855 = vpack.c.b16 %v9823, %v9822
    %v9856 = vpack.c.b16 %v9825, %v9824
    %v9857 = vpack.c.b16 %v9827, %v9826
    %v9858 = vpack.c.b16 %v9829, %v9828
    %v9859 = vpack.c.b16 %v9831, %v9830
    %v9860 = vpack.c.b16 %v9833, %v9832
    %v9861 = vpack.c.b16 %v9835, %v9834
    %v9862 = vpack.c.b16 %v9837, %v9836
    %v9863 = vpack.c.b16 %v9839, %v9838
    %9888 = vmatprep.subr.bf16.mxu0 0
    %9889 = vmatpush1.bf16.msra.mxu0 %v9847
    %9890 = vmatprep.subr.bf16.mxu0 0
    %9891 = vmatpush1.bf16.msra.mxu0 %v9846
    %9892 = vmatprep.subr.bf16.mxu0 0
    %9893 = vmatpush1.bf16.msra.mxu0 %v9845
    %9894 = vmatprep.subr.bf16.mxu0 0
    %9895 = vmatpush1.bf16.msra.mxu0 %v9844
    %9896 = vmatprep.subr.bf16.mxu0 0
    %9897 = vmatpush1.bf16.msra.mxu0 %v9843
    %9898 = vmatprep.subr.bf16.mxu0 0
    %9899 = vmatpush1.bf16.msra.mxu0 %v9842
    %9900 = vmatprep.subr.bf16.mxu0 0
    %9901 = vmatpush1.bf16.msra.mxu0 %v9841
    %9902 = vmatprep.subr.bf16.mxu0 0
    %9903 = vmatpush1.bf16.msra.mxu0 %v9840
    %9904 = vmatprep.subr.bf16.mxu0 0
    %9905 = vmatpush2.bf16.msra.mxu0 %v9855
    %9906 = vmatprep.subr.bf16.mxu0 0
    %9907 = vmatpush2.bf16.msra.mxu0 %v9854
    %9908 = vmatprep.subr.bf16.mxu0 0
    %9909 = vmatpush2.bf16.msra.mxu0 %v9853
    %9910 = vmatprep.subr.bf16.mxu0 0
    %9911 = vmatpush2.bf16.msra.mxu0 %v9852
    %9912 = vmatprep.subr.bf16.mxu0 0
    %9913 = vmatpush2.bf16.msra.mxu0 %v9851
    %9914 = vmatprep.subr.bf16.mxu0 0
    %9915 = vmatpush2.bf16.msra.mxu0 %v9850
    %9916 = vmatprep.subr.bf16.mxu0 0
    %9917 = vmatpush2.bf16.msra.mxu0 %v9849
    %9918 = vmatprep.subr.bf16.mxu0 0
    %9919 = vmatpush2.bf16.msra.mxu0 %v9848
    %9920 = vmatprep.mubr.bf16.mxu0 %v9649
    %9921 = vmatmul.mubr.bf16.gmra.mxu0 %v9648
    %v9922 = vpop.f32.mrf.mxu0
    %v9923 = vadd.f32 %v9362, %v9922
    %v9924 = vpop.f32.mrf.mxu0
    %v9925 = vpop.f32.mrf.mxu0
    %v9926 = vadd.f32 %v9365, %v9925
    %v9927 = vpop.f32.mrf.mxu0
    %9928 = vmatprep.mubr.bf16.mxu0 %v9652
    %9929 = vmatmul.mubr.bf16.gmra.mxu0 %v9651
    %v9930 = vpop.f32.mrf.mxu0
    %v9931 = vadd.f32 %v9370, %v9930
    %v9932 = vpop.f32.mrf.mxu0
    %v9933 = vpop.f32.mrf.mxu0
    %v9934 = vadd.f32 %v9373, %v9933
    %v9935 = vpop.f32.mrf.mxu0
    %9936 = vmatprep.mubr.bf16.mxu0 %v9655
    %9937 = vmatmul.mubr.bf16.gmra.mxu0 %v9654
    %v9938 = vpop.f32.mrf.mxu0
    %v9939 = vadd.f32 %v9378, %v9938
    %v9940 = vpop.f32.mrf.mxu0
    %v9941 = vpop.f32.mrf.mxu0
    %v9942 = vadd.f32 %v9381, %v9941
    %v9943 = vpop.f32.mrf.mxu0
    %9944 = vmatprep.mubr.bf16.mxu0 %v9658
    %9945 = vmatmul.mubr.bf16.gmra.mxu0 %v9657
    %v9946 = vpop.f32.mrf.mxu0
    %v9947 = vadd.f32 %v9386, %v9946
    %v9948 = vpop.f32.mrf.mxu0
    %v9949 = vpop.f32.mrf.mxu0
    %v9950 = vadd.f32 %v9389, %v9949
    %v9951 = vpop.f32.mrf.mxu0
    %9952 = vmatprep.mubr.bf16.mxu0 %v9661
    %9953 = vmatmul.mubr.bf16.gmra.mxu0 %v9660
    %v9954 = vpop.f32.mrf.mxu0
    %v9955 = vadd.f32 %v9394, %v9954
    %v9956 = vpop.f32.mrf.mxu0
    %v9957 = vpop.f32.mrf.mxu0
    %v9958 = vadd.f32 %v9397, %v9957
    %v9959 = vpop.f32.mrf.mxu0
    %9960 = vmatprep.mubr.bf16.mxu0 %v9664
    %9961 = vmatmul.mubr.bf16.gmra.mxu0 %v9663
    %v9962 = vpop.f32.mrf.mxu0
    %v9963 = vadd.f32 %v9402, %v9962
    %v9964 = vpop.f32.mrf.mxu0
    %v9965 = vpop.f32.mrf.mxu0
    %v9966 = vadd.f32 %v9405, %v9965
    %v9967 = vpop.f32.mrf.mxu0
    %9968 = vmatprep.mubr.bf16.mxu0 %v9667
    %9969 = vmatmul.mubr.bf16.gmra.mxu0 %v9666
    %v9970 = vpop.f32.mrf.mxu0
    %v9971 = vadd.f32 %v9410, %v9970
    %v9972 = vpop.f32.mrf.mxu0
    %v9973 = vpop.f32.mrf.mxu0
    %v9974 = vadd.f32 %v9413, %v9973
    %v9975 = vpop.f32.mrf.mxu0
    %9976 = vmatprep.mubr.bf16.mxu0 %v9670
    %9977 = vmatmul.mubr.bf16.gmra.mxu0 %v9669
    %v9978 = vpop.f32.mrf.mxu0
    %v9979 = vadd.f32 %v9418, %v9978
    %v9980 = vpop.f32.mrf.mxu0
    %v9981 = vpop.f32.mrf.mxu0
    %v9982 = vadd.f32 %v9421, %v9981
    %v9983 = vpop.f32.mrf.mxu0
    %9984 = vmatprep.mubr.bf16.mxu0 %v9673
    %9985 = vmatmul.mubr.bf16.gmra.mxu0 %v9672
    %v9986 = vpop.f32.mrf.mxu0
    %v9987 = vadd.f32 %v9426, %v9986
    %v9988 = vpop.f32.mrf.mxu0
    %v9989 = vpop.f32.mrf.mxu0
    %v9990 = vadd.f32 %v9429, %v9989
    %v9991 = vpop.f32.mrf.mxu0
    %9992 = vmatprep.mubr.bf16.mxu0 %v9676
    %9993 = vmatmul.mubr.bf16.gmra.mxu0 %v9675
    %v9994 = vpop.f32.mrf.mxu0
    %v9995 = vadd.f32 %v9434, %v9994
    %v9996 = vpop.f32.mrf.mxu0
    %v9997 = vpop.f32.mrf.mxu0
    %v9998 = vadd.f32 %v9437, %v9997
    %v9999 = vpop.f32.mrf.mxu0
    %10000 = vmatprep.mubr.bf16.mxu0 %v9679
    %10001 = vmatmul.mubr.bf16.gmra.mxu0 %v9678
    %v10002 = vpop.f32.mrf.mxu0
    %v10003 = vadd.f32 %v9442, %v10002
    %v10004 = vpop.f32.mrf.mxu0
    %v10005 = vpop.f32.mrf.mxu0
    %v10006 = vadd.f32 %v9445, %v10005
    %v10007 = vpop.f32.mrf.mxu0
    %10008 = vmatprep.mubr.bf16.mxu0 %v9682
    %10009 = vmatmul.mubr.bf16.gmra.mxu0 %v9681
    %v10010 = vpop.f32.mrf.mxu0
    %v10011 = vadd.f32 %v9450, %v10010
    %v10012 = vpop.f32.mrf.mxu0
    %v10013 = vpop.f32.mrf.mxu0
    %v10014 = vadd.f32 %v9453, %v10013
    %v10015 = vpop.f32.mrf.mxu0
    %10016 = vmatprep.mubr.bf16.mxu0 %v9685
    %10017 = vmatmul.mubr.bf16.gmra.mxu0 %v9684
    %v10018 = vpop.f32.mrf.mxu0
    %v10019 = vadd.f32 %v9458, %v10018
    %v10020 = vpop.f32.mrf.mxu0
    %v10021 = vpop.f32.mrf.mxu0
    %v10022 = vadd.f32 %v9461, %v10021
    %v10023 = vpop.f32.mrf.mxu0
    %10024 = vmatprep.mubr.bf16.mxu0 %v9688
    %10025 = vmatmul.mubr.bf16.gmra.mxu0 %v9687
    %v10026 = vpop.f32.mrf.mxu0
    %v10027 = vadd.f32 %v9466, %v10026
    %v10028 = vpop.f32.mrf.mxu0
    %v10029 = vpop.f32.mrf.mxu0
    %v10030 = vadd.f32 %v9469, %v10029
    %v10031 = vpop.f32.mrf.mxu0
    %10032 = vmatprep.mubr.bf16.mxu0 %v9691
    %10033 = vmatmul.mubr.bf16.gmra.mxu0 %v9690
    %v10034 = vpop.f32.mrf.mxu0
    %v10035 = vadd.f32 %v9474, %v10034
    %v10036 = vpop.f32.mrf.mxu0
    %v10037 = vpop.f32.mrf.mxu0
    %v10038 = vadd.f32 %v9477, %v10037
    %v10039 = vpop.f32.mrf.mxu0
    %10040 = vmatprep.mubr.bf16.mxu0 %v9694
    %10041 = vmatmul.mubr.bf16.gmra.mxu0 %v9693
    %v10042 = vpop.f32.mrf.mxu0
    %v10043 = vadd.f32 %v9482, %v10042
    %v10044 = vpop.f32.mrf.mxu0
    %v10045 = vpop.f32.mrf.mxu0
    %v10046 = vadd.f32 %v9485, %v10045
    %v10047 = vpop.f32.mrf.mxu0
    %10048 = vdwg.mxu0
    %10049 = vmatprep.subr.bf16.mxu0 0
    %10050 = vmatpush1.bf16.msra.mxu0 %v9863
    %10051 = vmatprep.subr.bf16.mxu0 0
    %10052 = vmatpush1.bf16.msra.mxu0 %v9862
    %10053 = vmatprep.subr.bf16.mxu0 0
    %10054 = vmatpush1.bf16.msra.mxu0 %v9861
    %10055 = vmatprep.subr.bf16.mxu0 0
    %10056 = vmatpush1.bf16.msra.mxu0 %v9860
    %10057 = vmatprep.subr.bf16.mxu0 0
    %10058 = vmatpush1.bf16.msra.mxu0 %v9859
    %10059 = vmatprep.subr.bf16.mxu0 0
    %10060 = vmatpush1.bf16.msra.mxu0 %v9858
    %10061 = vmatprep.subr.bf16.mxu0 0
    %10062 = vmatpush1.bf16.msra.mxu0 %v9857
    %10063 = vmatprep.subr.bf16.mxu0 0
    %10064 = vmatpush1.bf16.msra.mxu0 %v9856
    %10065 = vmatprep.subr.bf16.mxu0 0
    %10066 = vmatpush2.bf16.msra.mxu0 0
    %10067 = vmatprep.subr.bf16.mxu0 0
    %10068 = vmatpush2.bf16.msra.mxu0 0
    %10069 = vmatprep.subr.bf16.mxu0 0
    %10070 = vmatpush2.bf16.msra.mxu0 0
    %10071 = vmatprep.subr.bf16.mxu0 0
    %10072 = vmatpush2.bf16.msra.mxu0 0
    %10073 = vmatprep.subr.bf16.mxu0 0
    %10074 = vmatpush2.bf16.msra.mxu0 0
    %10075 = vmatprep.subr.bf16.mxu0 0
    %10076 = vmatpush2.bf16.msra.mxu0 0
    %10077 = vmatprep.subr.bf16.mxu0 0
    %10078 = vmatpush2.bf16.msra.mxu0 0
    %10079 = vmatprep.subr.bf16.mxu0 0
    %10080 = vmatpush2.bf16.msra.mxu0 0
    %10081 = vmatprep.mubr.bf16.mxu0 0
    %10082 = vmatmul.mubr.bf16.gmra.mxu0 %v9650
    %v10083 = vpop.f32.mrf.mxu0
    %v10084 = vadd.f32 %v9923, %v10083
    %v10085 = vpop.f32.mrf.mxu0
    %v10086 = vpop.f32.mrf.mxu0
    %v10087 = vadd.f32 %v9926, %v10086
    %v10088 = vpop.f32.mrf.mxu0
    %10089 = vmatprep.mubr.bf16.mxu0 0
    %10090 = vmatmul.mubr.bf16.gmra.mxu0 %v9653
    %v10091 = vpop.f32.mrf.mxu0
    %v10092 = vadd.f32 %v9931, %v10091
    %v10093 = vpop.f32.mrf.mxu0
    %v10094 = vpop.f32.mrf.mxu0
    %v10095 = vadd.f32 %v9934, %v10094
    %v10096 = vpop.f32.mrf.mxu0
    %10097 = vmatprep.mubr.bf16.mxu0 0
    %10098 = vmatmul.mubr.bf16.gmra.mxu0 %v9656
    %v10099 = vpop.f32.mrf.mxu0
    %v10100 = vadd.f32 %v9939, %v10099
    %v10101 = vpop.f32.mrf.mxu0
    %v10102 = vpop.f32.mrf.mxu0
    %v10103 = vadd.f32 %v9942, %v10102
    %v10104 = vpop.f32.mrf.mxu0
    %10105 = vmatprep.mubr.bf16.mxu0 0
    %10106 = vmatmul.mubr.bf16.gmra.mxu0 %v9659
    %v10107 = vpop.f32.mrf.mxu0
    %v10108 = vadd.f32 %v9947, %v10107
    %v10109 = vpop.f32.mrf.mxu0
    %v10110 = vpop.f32.mrf.mxu0
    %v10111 = vadd.f32 %v9950, %v10110
    %v10112 = vpop.f32.mrf.mxu0
    %10113 = vmatprep.mubr.bf16.mxu0 0
    %10114 = vmatmul.mubr.bf16.gmra.mxu0 %v9662
    %v10115 = vpop.f32.mrf.mxu0
    %v10116 = vadd.f32 %v9955, %v10115
    %v10117 = vpop.f32.mrf.mxu0
    %v10118 = vpop.f32.mrf.mxu0
    %v10119 = vadd.f32 %v9958, %v10118
    %v10120 = vpop.f32.mrf.mxu0
    %10121 = vmatprep.mubr.bf16.mxu0 0
    %10122 = vmatmul.mubr.bf16.gmra.mxu0 %v9665
    %v10123 = vpop.f32.mrf.mxu0
    %v10124 = vadd.f32 %v9963, %v10123
    %v10125 = vpop.f32.mrf.mxu0
    %v10126 = vpop.f32.mrf.mxu0
    %v10127 = vadd.f32 %v9966, %v10126
    %v10128 = vpop.f32.mrf.mxu0
    %10129 = vmatprep.mubr.bf16.mxu0 0
    %10130 = vmatmul.mubr.bf16.gmra.mxu0 %v9668
    %v10131 = vpop.f32.mrf.mxu0
    %v10132 = vadd.f32 %v9971, %v10131
    %v10133 = vpop.f32.mrf.mxu0
    %v10134 = vpop.f32.mrf.mxu0
    %v10135 = vadd.f32 %v9974, %v10134
    %v10136 = vpop.f32.mrf.mxu0
    %10137 = vmatprep.mubr.bf16.mxu0 0
    %10138 = vmatmul.mubr.bf16.gmra.mxu0 %v9671
    %v10139 = vpop.f32.mrf.mxu0
    %v10140 = vadd.f32 %v9979, %v10139
    %v10141 = vpop.f32.mrf.mxu0
    %v10142 = vpop.f32.mrf.mxu0
    %v10143 = vadd.f32 %v9982, %v10142
    %v10144 = vpop.f32.mrf.mxu0
    %10145 = vmatprep.mubr.bf16.mxu0 0
    %10146 = vmatmul.mubr.bf16.gmra.mxu0 %v9674
    %v10147 = vpop.f32.mrf.mxu0
    %v10148 = vadd.f32 %v9987, %v10147
    %v10149 = vpop.f32.mrf.mxu0
    %v10150 = vpop.f32.mrf.mxu0
    %v10151 = vadd.f32 %v9990, %v10150
    %v10152 = vpop.f32.mrf.mxu0
    %10153 = vmatprep.mubr.bf16.mxu0 0
    %10154 = vmatmul.mubr.bf16.gmra.mxu0 %v9677
    %v10155 = vpop.f32.mrf.mxu0
    %v10156 = vadd.f32 %v9995, %v10155
    %v10157 = vpop.f32.mrf.mxu0
    %v10158 = vpop.f32.mrf.mxu0
    %v10159 = vadd.f32 %v9998, %v10158
    %v10160 = vpop.f32.mrf.mxu0
    %10161 = vmatprep.mubr.bf16.mxu0 0
    %10162 = vmatmul.mubr.bf16.gmra.mxu0 %v9680
    %v10163 = vpop.f32.mrf.mxu0
    %v10164 = vadd.f32 %v10003, %v10163
    %v10165 = vpop.f32.mrf.mxu0
    %v10166 = vpop.f32.mrf.mxu0
    %v10167 = vadd.f32 %v10006, %v10166
    %v10168 = vpop.f32.mrf.mxu0
    %10169 = vmatprep.mubr.bf16.mxu0 0
    %10170 = vmatmul.mubr.bf16.gmra.mxu0 %v9683
    %v10171 = vpop.f32.mrf.mxu0
    %v10172 = vadd.f32 %v10011, %v10171
    %v10173 = vpop.f32.mrf.mxu0
    %v10174 = vpop.f32.mrf.mxu0
    %v10175 = vadd.f32 %v10014, %v10174
    %v10176 = vpop.f32.mrf.mxu0
    %10177 = vmatprep.mubr.bf16.mxu0 0
    %10178 = vmatmul.mubr.bf16.gmra.mxu0 %v9686
    %v10179 = vpop.f32.mrf.mxu0
    %v10180 = vadd.f32 %v10019, %v10179
    %v10181 = vpop.f32.mrf.mxu0
    %v10182 = vpop.f32.mrf.mxu0
    %v10183 = vadd.f32 %v10022, %v10182
    %v10184 = vpop.f32.mrf.mxu0
    %10185 = vmatprep.mubr.bf16.mxu0 0
    %10186 = vmatmul.mubr.bf16.gmra.mxu0 %v9689
    %v10187 = vpop.f32.mrf.mxu0
    %v10188 = vadd.f32 %v10027, %v10187
    %v10189 = vpop.f32.mrf.mxu0
    %v10190 = vpop.f32.mrf.mxu0
    %v10191 = vadd.f32 %v10030, %v10190
    %v10192 = vpop.f32.mrf.mxu0
    %10193 = vmatprep.mubr.bf16.mxu0 0
    %10194 = vmatmul.mubr.bf16.gmra.mxu0 %v9692
    %v10195 = vpop.f32.mrf.mxu0
    %v10196 = vadd.f32 %v10035, %v10195
    %v10197 = vpop.f32.mrf.mxu0
    %v10198 = vpop.f32.mrf.mxu0
    %v10199 = vadd.f32 %v10038, %v10198
    %v10200 = vpop.f32.mrf.mxu0
    %10201 = vmatprep.mubr.bf16.mxu0 0
    %10202 = vmatmul.mubr.bf16.gmra.mxu0 %v9695
    %v10203 = vpop.f32.mrf.mxu0
    %v10204 = vadd.f32 %v10043, %v10203
    %v10205 = vpop.f32.mrf.mxu0
    %v10206 = vpop.f32.mrf.mxu0
    %v10207 = vadd.f32 %v10046, %v10206
    %v10208 = vpop.f32.mrf.mxu0
    %10209 = vdwg.mxu0
    %s10210 = scalar_lea.vmem [#allocation3], 48
    %v10211 = vld [vmem:[%s10210] sm:$0xff]
    %v10212 = vld [vmem:[%s10210 + $0x8] sm:$0xf]
    %v10213 = vld [vmem:[%s10210 + $0xc] sm:$0xff]
    %v10214 = vld [vmem:[%s10210 + $0x14] sm:$0xf]
    %v10215 = vld [vmem:[%s10210 + $0x18] sm:$0xff]
    %v10216 = vld [vmem:[%s10210 + $0x20] sm:$0xf]
    %v10217 = vld [vmem:[%s10210 + $0x24] sm:$0xff]
    %v10218 = vld [vmem:[%s10210 + $0x2c] sm:$0xf]
    %v10219 = vld [vmem:[%s10210 + $0x30] sm:$0xff]
    %v10220 = vld [vmem:[%s10210 + $0x38] sm:$0xf]
    %v10221 = vld [vmem:[%s10210 + $0x3c] sm:$0xff]
    %v10222 = vld [vmem:[%s10210 + $0x44] sm:$0xf]
    %v10223 = vld [vmem:[%s10210 + $0x48] sm:$0xff]
    %v10224 = vld [vmem:[%s10210 + $0x50] sm:$0xf]
    %v10225 = vld [vmem:[%s10210 + $0x54] sm:$0xff]
    %v10226 = vld [vmem:[%s10210 + $0x5c] sm:$0xf]
    %v10227 = vld [vmem:[%s10210 + $0x60] sm:$0xff]
    %v10228 = vld [vmem:[%s10210 + $0x68] sm:$0xf]
    %v10229 = vld [vmem:[%s10210 + $0x6c] sm:$0xff]
    %v10230 = vld [vmem:[%s10210 + $0x74] sm:$0xf]
    %v10231 = vld [vmem:[%s10210 + $0x78] sm:$0xff]
    %v10232 = vld [vmem:[%s10210 + $0x80] sm:$0xf]
    %v10233 = vld [vmem:[%s10210 + $0x84] sm:$0xff]
    %v10234 = vld [vmem:[%s10210 + $0x8c] sm:$0xf]
    %v10235 = vld [vmem:[%s10210 + $0x90] sm:$0xff]
    %v10236 = vld [vmem:[%s10210 + $0x98] sm:$0xf]
    %v10237 = vld [vmem:[%s10210 + $0x9c] sm:$0xff]
    %v10238 = vld [vmem:[%s10210 + $0xa4] sm:$0xf]
    %v10239 = vld [vmem:[%s10210 + $0xa8] sm:$0xff]
    %v10240 = vld [vmem:[%s10210 + $0xb0] sm:$0xf]
    %v10241 = vld [vmem:[%s10210 + $0xb4] sm:$0xff]
    %v10242 = vld [vmem:[%s10210 + $0xbc] sm:$0xf]
    %v10243 = vld [vmem:[%s10210 + $0x1b0] sm:$0xff]
    %v10244 = vld [vmem:[%s10210 + $0x1b8] sm:$0xf]
    %v10245 = vld [vmem:[%s10210 + $0x1bc] sm:$0xff]
    %v10246 = vld [vmem:[%s10210 + $0x1c4] sm:$0xf]
    %v10247 = vld [vmem:[%s10210 + $0x1c8] sm:$0xff]
    %v10248 = vld [vmem:[%s10210 + $0x1d0] sm:$0xf]
    %v10249 = vld [vmem:[%s10210 + $0x1d4] sm:$0xff]
    %v10250 = vld [vmem:[%s10210 + $0x1dc] sm:$0xf]
    %v10251 = vld [vmem:[%s10210 + $0x1e0] sm:$0xff]
    %v10252 = vld [vmem:[%s10210 + $0x1e8] sm:$0xf]
    %v10253 = vld [vmem:[%s10210 + $0x1ec] sm:$0xff]
    %v10254 = vld [vmem:[%s10210 + $0x1f4] sm:$0xf]
    %v10255 = vld [vmem:[%s10210 + $0x1f8] sm:$0xff]
    %v10256 = vld [vmem:[%s10210 + $0x200] sm:$0xf]
    %v10257 = vld [vmem:[%s10210 + $0x204] sm:$0xff]
    %v10258 = vld [vmem:[%s10210 + $0x20c] sm:$0xf]
    %v10259 = vld [vmem:[%s10210 + $0x210] sm:$0xff]
    %v10260 = vld [vmem:[%s10210 + $0x218] sm:$0xf]
    %v10261 = vld [vmem:[%s10210 + $0x21c] sm:$0xff]
    %v10262 = vld [vmem:[%s10210 + $0x224] sm:$0xf]
    %v10263 = vld [vmem:[%s10210 + $0x228] sm:$0xff]
    %v10264 = vld [vmem:[%s10210 + $0x230] sm:$0xf]
    %v10265 = vld [vmem:[%s10210 + $0x234] sm:$0xff]
    %v10266 = vld [vmem:[%s10210 + $0x23c] sm:$0xf]
    %v10267 = vld [vmem:[%s10210 + $0x240] sm:$0xff]
    %v10268 = vld [vmem:[%s10210 + $0x248] sm:$0xf]
    %v10269 = vld [vmem:[%s10210 + $0x24c] sm:$0xff]
    %v10270 = vld [vmem:[%s10210 + $0x254] sm:$0xf]
    %v10271 = vld [vmem:[%s10210 + $0x258] sm:$0xff]
    %v10272 = vld [vmem:[%s10210 + $0x260] sm:$0xf]
    %v10273 = vld [vmem:[%s10210 + $0x264] sm:$0xff]
    %v10274 = vld [vmem:[%s10210 + $0x26c] sm:$0xf]
    %s10275 = scalar_lea.vmem [#allocation10], 384
    %v10276 = vld [vmem:[%s10275] sm:$0xf]
    %v10277 = vld [vmem:[%s10275 + $0x4] sm:$0xf]
    %v10278 = vld [vmem:[%s10275 + $0x8] sm:$0xf]
    %v10279 = vld [vmem:[%s10275 + $0xc] sm:$0xf]
    %v10280 = vld [vmem:[%s10275 + $0x10] sm:$0xf]
    %v10281 = vld [vmem:[%s10275 + $0x14] sm:$0xf]
    %v10282 = vld [vmem:[%s10275 + $0x18] sm:$0xf]
    %v10283 = vld [vmem:[%s10275 + $0x1c] sm:$0xf]
    %v10284 = vld [vmem:[%s10275 + $0x20] sm:$0xf]
    %v10285 = vld [vmem:[%s10275 + $0x24] sm:$0xf]
    %v10286 = vld [vmem:[%s10275 + $0x28] sm:$0xf]
    %v10287 = vld [vmem:[%s10275 + $0x2c] sm:$0xf]
    %v10288 = vld [vmem:[%s10275 + $0x30] sm:$0xf]
    %v10289 = vld [vmem:[%s10275 + $0x34] sm:$0xf]
    %v10290 = vld [vmem:[%s10275 + $0x38] sm:$0xf]
    %v10291 = vld [vmem:[%s10275 + $0x3c] sm:$0xf]
    %v10292 = vld [vmem:[%s10275 + $0x40] sm:$0xf]
    %v10293 = vld [vmem:[%s10275 + $0x44] sm:$0xf]
    %v10294 = vld [vmem:[%s10275 + $0x48] sm:$0xf]
    %v10295 = vld [vmem:[%s10275 + $0x4c] sm:$0xf]
    %v10296 = vld [vmem:[%s10275 + $0x50] sm:$0xf]
    %v10297 = vld [vmem:[%s10275 + $0x54] sm:$0xf]
    %v10298 = vld [vmem:[%s10275 + $0x58] sm:$0xf]
    %v10299 = vld [vmem:[%s10275 + $0x5c] sm:$0xf]
    %v10300 = vld [vmem:[%s10275 + $0x60] sm:$0xf]
    %v10301 = vld [vmem:[%s10275 + $0x64] sm:$0xf]
    %v10302 = vld [vmem:[%s10275 + $0x68] sm:$0xf]
    %v10303 = vld [vmem:[%s10275 + $0x6c] sm:$0xf]
    %v10304 = vld [vmem:[%s10275 + $0x70] sm:$0xf]
    %v10305 = vld [vmem:[%s10275 + $0x74] sm:$0xf]
    %v10306 = vld [vmem:[%s10275 + $0x78] sm:$0xf]
    %v10307 = vld [vmem:[%s10275 + $0x7c] sm:$0xf]
    %v10308 = vld [vmem:[%s10275 + $0x80] sm:$0xf]
    %v10309 = vld [vmem:[%s10275 + $0x84] sm:$0xf]
    %v10310 = vld [vmem:[%s10275 + $0x88] sm:$0xf]
    %v10311 = vld [vmem:[%s10275 + $0x8c] sm:$0xf]
    %v10312 = vld [vmem:[%s10275 + $0x90] sm:$0xf]
    %v10313 = vld [vmem:[%s10275 + $0x94] sm:$0xf]
    %v10314 = vld [vmem:[%s10275 + $0x98] sm:$0xf]
    %v10315 = vld [vmem:[%s10275 + $0x9c] sm:$0xf]
    %v10316 = vld [vmem:[%s10275 + $0xa0] sm:$0xf]
    %v10317 = vld [vmem:[%s10275 + $0xa4] sm:$0xf]
    %v10318 = vld [vmem:[%s10275 + $0xa8] sm:$0xf]
    %v10319 = vld [vmem:[%s10275 + $0xac] sm:$0xf]
    %v10320 = vld [vmem:[%s10275 + $0xb0] sm:$0xf]
    %v10321 = vld [vmem:[%s10275 + $0xb4] sm:$0xf]
    %v10322 = vld [vmem:[%s10275 + $0xb8] sm:$0xf]
    %v10323 = vld [vmem:[%s10275 + $0xbc] sm:$0xf]
    %v10388 = vunpack.c.l.b16 %v10211
    %v10389 = vunpack.c.h.b16 %v10211
    %v10390 = vunpack.c.l.b16 %v10212
    %v10391 = vunpack.c.l.b16 %v10213
    %v10392 = vunpack.c.h.b16 %v10213
    %v10393 = vunpack.c.l.b16 %v10214
    %v10394 = vunpack.c.l.b16 %v10215
    %v10395 = vunpack.c.h.b16 %v10215
    %v10396 = vunpack.c.l.b16 %v10216
    %v10397 = vunpack.c.l.b16 %v10217
    %v10398 = vunpack.c.h.b16 %v10217
    %v10399 = vunpack.c.l.b16 %v10218
    %v10400 = vunpack.c.l.b16 %v10219
    %v10401 = vunpack.c.h.b16 %v10219
    %v10402 = vunpack.c.l.b16 %v10220
    %v10403 = vunpack.c.l.b16 %v10221
    %v10404 = vunpack.c.h.b16 %v10221
    %v10405 = vunpack.c.l.b16 %v10222
    %v10406 = vunpack.c.l.b16 %v10223
    %v10407 = vunpack.c.h.b16 %v10223
    %v10408 = vunpack.c.l.b16 %v10224
    %v10409 = vunpack.c.l.b16 %v10225
    %v10410 = vunpack.c.h.b16 %v10225
    %v10411 = vunpack.c.l.b16 %v10226
    %v10412 = vunpack.c.l.b16 %v10227
    %v10413 = vunpack.c.h.b16 %v10227
    %v10414 = vunpack.c.l.b16 %v10228
    %v10415 = vunpack.c.l.b16 %v10229
    %v10416 = vunpack.c.h.b16 %v10229
    %v10417 = vunpack.c.l.b16 %v10230
    %v10418 = vunpack.c.l.b16 %v10231
    %v10419 = vunpack.c.h.b16 %v10231
    %v10420 = vunpack.c.l.b16 %v10232
    %v10421 = vunpack.c.l.b16 %v10233
    %v10422 = vunpack.c.h.b16 %v10233
    %v10423 = vunpack.c.l.b16 %v10234
    %v10424 = vunpack.c.l.b16 %v10235
    %v10425 = vunpack.c.h.b16 %v10235
    %v10426 = vunpack.c.l.b16 %v10236
    %v10427 = vunpack.c.l.b16 %v10237
    %v10428 = vunpack.c.h.b16 %v10237
    %v10429 = vunpack.c.l.b16 %v10238
    %v10430 = vunpack.c.l.b16 %v10239
    %v10431 = vunpack.c.h.b16 %v10239
    %v10432 = vunpack.c.l.b16 %v10240
    %v10433 = vunpack.c.l.b16 %v10241
    %v10434 = vunpack.c.h.b16 %v10241
    %v10435 = vunpack.c.l.b16 %v10242
    %v10436 = vunpack.c.l.b16 %v10243
    %v10437 = vunpack.c.h.b16 %v10243
    %v10438 = vunpack.c.l.b16 %v10244
    %v10439 = vunpack.c.l.b16 %v10245
    %v10440 = vunpack.c.h.b16 %v10245
    %v10441 = vunpack.c.l.b16 %v10246
    %v10442 = vunpack.c.l.b16 %v10247
    %v10443 = vunpack.c.h.b16 %v10247
    %v10444 = vunpack.c.l.b16 %v10248
    %v10445 = vunpack.c.l.b16 %v10249
    %v10446 = vunpack.c.h.b16 %v10249
    %v10447 = vunpack.c.l.b16 %v10250
    %v10448 = vunpack.c.l.b16 %v10251
    %v10449 = vunpack.c.h.b16 %v10251
    %v10450 = vunpack.c.l.b16 %v10252
    %v10451 = vunpack.c.l.b16 %v10253
    %v10452 = vunpack.c.h.b16 %v10253
    %v10453 = vunpack.c.l.b16 %v10254
    %v10454 = vunpack.c.l.b16 %v10255
    %v10455 = vunpack.c.h.b16 %v10255
    %v10456 = vunpack.c.l.b16 %v10256
    %v10457 = vunpack.c.l.b16 %v10257
    %v10458 = vunpack.c.h.b16 %v10257
    %v10459 = vunpack.c.l.b16 %v10258
    %v10460 = vunpack.c.l.b16 %v10259
    %v10461 = vunpack.c.h.b16 %v10259
    %v10462 = vunpack.c.l.b16 %v10260
    %v10463 = vunpack.c.l.b16 %v10261
    %v10464 = vunpack.c.h.b16 %v10261
    %v10465 = vunpack.c.l.b16 %v10262
    %v10466 = vunpack.c.l.b16 %v10263
    %v10467 = vunpack.c.h.b16 %v10263
    %v10468 = vunpack.c.l.b16 %v10264
    %v10469 = vunpack.c.l.b16 %v10265
    %v10470 = vunpack.c.h.b16 %v10265
    %v10471 = vunpack.c.l.b16 %v10266
    %v10472 = vunpack.c.l.b16 %v10267
    %v10473 = vunpack.c.h.b16 %v10267
    %v10474 = vunpack.c.l.b16 %v10268
    %v10475 = vunpack.c.l.b16 %v10269
    %v10476 = vunpack.c.h.b16 %v10269
    %v10477 = vunpack.c.l.b16 %v10270
    %v10478 = vunpack.c.l.b16 %v10271
    %v10479 = vunpack.c.h.b16 %v10271
    %v10480 = vunpack.c.l.b16 %v10272
    %v10481 = vunpack.c.l.b16 %v10273
    %v10482 = vunpack.c.h.b16 %v10273
    %v10483 = vunpack.c.l.b16 %v10274
    %v10484 = vpack.c.b16 %v10391, %v10388
    %v10485 = vpack.c.b16 %v10392, %v10389
    %v10486 = vpack.c.b16 %v10393, %v10390
    %v10487 = vpack.c.b16 %v10397, %v10394
    %v10488 = vpack.c.b16 %v10398, %v10395
    %v10489 = vpack.c.b16 %v10399, %v10396
    %v10490 = vpack.c.b16 %v10403, %v10400
    %v10491 = vpack.c.b16 %v10404, %v10401
    %v10492 = vpack.c.b16 %v10405, %v10402
    %v10493 = vpack.c.b16 %v10409, %v10406
    %v10494 = vpack.c.b16 %v10410, %v10407
    %v10495 = vpack.c.b16 %v10411, %v10408
    %v10496 = vpack.c.b16 %v10415, %v10412
    %v10497 = vpack.c.b16 %v10416, %v10413
    %v10498 = vpack.c.b16 %v10417, %v10414
    %v10499 = vpack.c.b16 %v10421, %v10418
    %v10500 = vpack.c.b16 %v10422, %v10419
    %v10501 = vpack.c.b16 %v10423, %v10420
    %v10502 = vpack.c.b16 %v10427, %v10424
    %v10503 = vpack.c.b16 %v10428, %v10425
    %v10504 = vpack.c.b16 %v10429, %v10426
    %v10505 = vpack.c.b16 %v10433, %v10430
    %v10506 = vpack.c.b16 %v10434, %v10431
    %v10507 = vpack.c.b16 %v10435, %v10432
    %v10508 = vpack.c.b16 %v10439, %v10436
    %v10509 = vpack.c.b16 %v10440, %v10437
    %v10510 = vpack.c.b16 %v10441, %v10438
    %v10511 = vpack.c.b16 %v10445, %v10442
    %v10512 = vpack.c.b16 %v10446, %v10443
    %v10513 = vpack.c.b16 %v10447, %v10444
    %v10514 = vpack.c.b16 %v10451, %v10448
    %v10515 = vpack.c.b16 %v10452, %v10449
    %v10516 = vpack.c.b16 %v10453, %v10450
    %v10517 = vpack.c.b16 %v10457, %v10454
    %v10518 = vpack.c.b16 %v10458, %v10455
    %v10519 = vpack.c.b16 %v10459, %v10456
    %v10520 = vpack.c.b16 %v10463, %v10460
    %v10521 = vpack.c.b16 %v10464, %v10461
    %v10522 = vpack.c.b16 %v10465, %v10462
    %v10523 = vpack.c.b16 %v10469, %v10466
    %v10524 = vpack.c.b16 %v10470, %v10467
    %v10525 = vpack.c.b16 %v10471, %v10468
    %v10526 = vpack.c.b16 %v10475, %v10472
    %v10527 = vpack.c.b16 %v10476, %v10473
    %v10528 = vpack.c.b16 %v10477, %v10474
    %v10529 = vpack.c.b16 %v10481, %v10478
    %v10530 = vpack.c.b16 %v10482, %v10479
    %v10531 = vpack.c.b16 %v10483, %v10480
    %v10628 = vunpack.c.l.b16 %v10276
    %v10629 = vunpack.c.l.b16 %v10277
    %v10630 = vunpack.c.l.b16 %v10278
    %v10631 = vunpack.c.l.b16 %v10279
    %v10632 = vunpack.c.l.b16 %v10280
    %v10633 = vunpack.c.l.b16 %v10281
    %v10634 = vunpack.c.l.b16 %v10282
    %v10635 = vunpack.c.l.b16 %v10283
    %v10636 = vunpack.c.l.b16 %v10284
    %v10637 = vunpack.c.l.b16 %v10285
    %v10638 = vunpack.c.l.b16 %v10286
    %v10639 = vunpack.c.l.b16 %v10287
    %v10640 = vunpack.c.l.b16 %v10288
    %v10641 = vunpack.c.l.b16 %v10289
    %v10642 = vunpack.c.l.b16 %v10290
    %v10643 = vunpack.c.l.b16 %v10291
    %v10644 = vunpack.c.l.b16 %v10292
    %v10645 = vunpack.c.l.b16 %v10293
    %v10646 = vunpack.c.l.b16 %v10294
    %v10647 = vunpack.c.l.b16 %v10295
    %v10648 = vunpack.c.l.b16 %v10296
    %v10649 = vunpack.c.l.b16 %v10297
    %v10650 = vunpack.c.l.b16 %v10298
    %v10651 = vunpack.c.l.b16 %v10299
    %v10652 = vunpack.c.l.b16 %v10300
    %v10653 = vunpack.c.l.b16 %v10301
    %v10654 = vunpack.c.l.b16 %v10302
    %v10655 = vunpack.c.l.b16 %v10303
    %v10656 = vunpack.c.l.b16 %v10304
    %v10657 = vunpack.c.l.b16 %v10305
    %v10658 = vunpack.c.l.b16 %v10306
    %v10659 = vunpack.c.l.b16 %v10307
    %v10660 = vunpack.c.l.b16 %v10308
    %v10661 = vunpack.c.l.b16 %v10309
    %v10662 = vunpack.c.l.b16 %v10310
    %v10663 = vunpack.c.l.b16 %v10311
    %v10664 = vunpack.c.l.b16 %v10312
    %v10665 = vunpack.c.l.b16 %v10313
    %v10666 = vunpack.c.l.b16 %v10314
    %v10667 = vunpack.c.l.b16 %v10315
    %v10668 = vunpack.c.l.b16 %v10316
    %v10669 = vunpack.c.l.b16 %v10317
    %v10670 = vunpack.c.l.b16 %v10318
    %v10671 = vunpack.c.l.b16 %v10319
    %v10672 = vunpack.c.l.b16 %v10320
    %v10673 = vunpack.c.l.b16 %v10321
    %v10674 = vunpack.c.l.b16 %v10322
    %v10675 = vunpack.c.l.b16 %v10323
    %v10676 = vpack.c.b16 %v10629, %v10628
    %v10677 = vpack.c.b16 %v10631, %v10630
    %v10678 = vpack.c.b16 %v10633, %v10632
    %v10679 = vpack.c.b16 %v10635, %v10634
    %v10680 = vpack.c.b16 %v10637, %v10636
    %v10681 = vpack.c.b16 %v10639, %v10638
    %v10682 = vpack.c.b16 %v10641, %v10640
    %v10683 = vpack.c.b16 %v10643, %v10642
    %v10684 = vpack.c.b16 %v10645, %v10644
    %v10685 = vpack.c.b16 %v10647, %v10646
    %v10686 = vpack.c.b16 %v10649, %v10648
    %v10687 = vpack.c.b16 %v10651, %v10650
    %v10688 = vpack.c.b16 %v10653, %v10652
    %v10689 = vpack.c.b16 %v10655, %v10654
    %v10690 = vpack.c.b16 %v10657, %v10656
    %v10691 = vpack.c.b16 %v10659, %v10658
    %v10692 = vpack.c.b16 %v10661, %v10660
    %v10693 = vpack.c.b16 %v10663, %v10662
    %v10694 = vpack.c.b16 %v10665, %v10664
    %v10695 = vpack.c.b16 %v10667, %v10666
    %v10696 = vpack.c.b16 %v10669, %v10668
    %v10697 = vpack.c.b16 %v10671, %v10670
    %v10698 = vpack.c.b16 %v10673, %v10672
    %v10699 = vpack.c.b16 %v10675, %v10674
    %10724 = vmatprep.subr.bf16.mxu0 0
    %10725 = vmatpush1.bf16.msra.mxu0 %v10683
    %10726 = vmatprep.subr.bf16.mxu0 0
    %10727 = vmatpush1.bf16.msra.mxu0 %v10682
    %10728 = vmatprep.subr.bf16.mxu0 0
    %10729 = vmatpush1.bf16.msra.mxu0 %v10681
    %10730 = vmatprep.subr.bf16.mxu0 0
    %10731 = vmatpush1.bf16.msra.mxu0 %v10680
    %10732 = vmatprep.subr.bf16.mxu0 0
    %10733 = vmatpush1.bf16.msra.mxu0 %v10679
    %10734 = vmatprep.subr.bf16.mxu0 0
    %10735 = vmatpush1.bf16.msra.mxu0 %v10678
    %10736 = vmatprep.subr.bf16.mxu0 0
    %10737 = vmatpush1.bf16.msra.mxu0 %v10677
    %10738 = vmatprep.subr.bf16.mxu0 0
    %10739 = vmatpush1.bf16.msra.mxu0 %v10676
    %10740 = vmatprep.subr.bf16.mxu0 0
    %10741 = vmatpush2.bf16.msra.mxu0 %v10691
    %10742 = vmatprep.subr.bf16.mxu0 0
    %10743 = vmatpush2.bf16.msra.mxu0 %v10690
    %10744 = vmatprep.subr.bf16.mxu0 0
    %10745 = vmatpush2.bf16.msra.mxu0 %v10689
    %10746 = vmatprep.subr.bf16.mxu0 0
    %10747 = vmatpush2.bf16.msra.mxu0 %v10688
    %10748 = vmatprep.subr.bf16.mxu0 0
    %10749 = vmatpush2.bf16.msra.mxu0 %v10687
    %10750 = vmatprep.subr.bf16.mxu0 0
    %10751 = vmatpush2.bf16.msra.mxu0 %v10686
    %10752 = vmatprep.subr.bf16.mxu0 0
    %10753 = vmatpush2.bf16.msra.mxu0 %v10685
    %10754 = vmatprep.subr.bf16.mxu0 0
    %10755 = vmatpush2.bf16.msra.mxu0 %v10684
    %10756 = vmatprep.mubr.bf16.mxu0 %v10485
    %10757 = vmatmul.mubr.bf16.gmra.mxu0 %v10484
    %v10758 = vpop.f32.mrf.mxu0
    %v10759 = vadd.f32 0.0, %v10758
    %v10760 = vpop.f32.mrf.mxu0
    %v10761 = vpop.f32.mrf.mxu0
    %v10762 = vadd.f32 0.0, %v10761
    %v10763 = vpop.f32.mrf.mxu0
    %10764 = vmatprep.mubr.bf16.mxu0 %v10488
    %10765 = vmatmul.mubr.bf16.gmra.mxu0 %v10487
    %v10766 = vpop.f32.mrf.mxu0
    %v10767 = vadd.f32 0.0, %v10766
    %v10768 = vpop.f32.mrf.mxu0
    %v10769 = vpop.f32.mrf.mxu0
    %v10770 = vadd.f32 0.0, %v10769
    %v10771 = vpop.f32.mrf.mxu0
    %10772 = vmatprep.mubr.bf16.mxu0 %v10491
    %10773 = vmatmul.mubr.bf16.gmra.mxu0 %v10490
    %v10774 = vpop.f32.mrf.mxu0
    %v10775 = vadd.f32 0.0, %v10774
    %v10776 = vpop.f32.mrf.mxu0
    %v10777 = vpop.f32.mrf.mxu0
    %v10778 = vadd.f32 0.0, %v10777
    %v10779 = vpop.f32.mrf.mxu0
    %10780 = vmatprep.mubr.bf16.mxu0 %v10494
    %10781 = vmatmul.mubr.bf16.gmra.mxu0 %v10493
    %v10782 = vpop.f32.mrf.mxu0
    %v10783 = vadd.f32 0.0, %v10782
    %v10784 = vpop.f32.mrf.mxu0
    %v10785 = vpop.f32.mrf.mxu0
    %v10786 = vadd.f32 0.0, %v10785
    %v10787 = vpop.f32.mrf.mxu0
    %10788 = vmatprep.mubr.bf16.mxu0 %v10497
    %10789 = vmatmul.mubr.bf16.gmra.mxu0 %v10496
    %v10790 = vpop.f32.mrf.mxu0
    %v10791 = vadd.f32 0.0, %v10790
    %v10792 = vpop.f32.mrf.mxu0
    %v10793 = vpop.f32.mrf.mxu0
    %v10794 = vadd.f32 0.0, %v10793
    %v10795 = vpop.f32.mrf.mxu0
    %10796 = vmatprep.mubr.bf16.mxu0 %v10500
    %10797 = vmatmul.mubr.bf16.gmra.mxu0 %v10499
    %v10798 = vpop.f32.mrf.mxu0
    %v10799 = vadd.f32 0.0, %v10798
    %v10800 = vpop.f32.mrf.mxu0
    %v10801 = vpop.f32.mrf.mxu0
    %v10802 = vadd.f32 0.0, %v10801
    %v10803 = vpop.f32.mrf.mxu0
    %10804 = vmatprep.mubr.bf16.mxu0 %v10503
    %10805 = vmatmul.mubr.bf16.gmra.mxu0 %v10502
    %v10806 = vpop.f32.mrf.mxu0
    %v10807 = vadd.f32 0.0, %v10806
    %v10808 = vpop.f32.mrf.mxu0
    %v10809 = vpop.f32.mrf.mxu0
    %v10810 = vadd.f32 0.0, %v10809
    %v10811 = vpop.f32.mrf.mxu0
    %10812 = vmatprep.mubr.bf16.mxu0 %v10506
    %10813 = vmatmul.mubr.bf16.gmra.mxu0 %v10505
    %v10814 = vpop.f32.mrf.mxu0
    %v10815 = vadd.f32 0.0, %v10814
    %v10816 = vpop.f32.mrf.mxu0
    %v10817 = vpop.f32.mrf.mxu0
    %v10818 = vadd.f32 0.0, %v10817
    %v10819 = vpop.f32.mrf.mxu0
    %10820 = vmatprep.mubr.bf16.mxu0 %v10509
    %10821 = vmatmul.mubr.bf16.gmra.mxu0 %v10508
    %v10822 = vpop.f32.mrf.mxu0
    %v10823 = vadd.f32 0.0, %v10822
    %v10824 = vpop.f32.mrf.mxu0
    %v10825 = vpop.f32.mrf.mxu0
    %v10826 = vadd.f32 0.0, %v10825
    %v10827 = vpop.f32.mrf.mxu0
    %10828 = vmatprep.mubr.bf16.mxu0 %v10512
    %10829 = vmatmul.mubr.bf16.gmra.mxu0 %v10511
    %v10830 = vpop.f32.mrf.mxu0
    %v10831 = vadd.f32 0.0, %v10830
    %v10832 = vpop.f32.mrf.mxu0
    %v10833 = vpop.f32.mrf.mxu0
    %v10834 = vadd.f32 0.0, %v10833
    %v10835 = vpop.f32.mrf.mxu0
    %10836 = vmatprep.mubr.bf16.mxu0 %v10515
    %10837 = vmatmul.mubr.bf16.gmra.mxu0 %v10514
    %v10838 = vpop.f32.mrf.mxu0
    %v10839 = vadd.f32 0.0, %v10838
    %v10840 = vpop.f32.mrf.mxu0
    %v10841 = vpop.f32.mrf.mxu0
    %v10842 = vadd.f32 0.0, %v10841
    %v10843 = vpop.f32.mrf.mxu0
    %10844 = vmatprep.mubr.bf16.mxu0 %v10518
    %10845 = vmatmul.mubr.bf16.gmra.mxu0 %v10517
    %v10846 = vpop.f32.mrf.mxu0
    %v10847 = vadd.f32 0.0, %v10846
    %v10848 = vpop.f32.mrf.mxu0
    %v10849 = vpop.f32.mrf.mxu0
    %v10850 = vadd.f32 0.0, %v10849
    %v10851 = vpop.f32.mrf.mxu0
    %10852 = vmatprep.mubr.bf16.mxu0 %v10521
    %10853 = vmatmul.mubr.bf16.gmra.mxu0 %v10520
    %v10854 = vpop.f32.mrf.mxu0
    %v10855 = vadd.f32 0.0, %v10854
    %v10856 = vpop.f32.mrf.mxu0
    %v10857 = vpop.f32.mrf.mxu0
    %v10858 = vadd.f32 0.0, %v10857
    %v10859 = vpop.f32.mrf.mxu0
    %10860 = vmatprep.mubr.bf16.mxu0 %v10524
    %10861 = vmatmul.mubr.bf16.gmra.mxu0 %v10523
    %v10862 = vpop.f32.mrf.mxu0
    %v10863 = vadd.f32 0.0, %v10862
    %v10864 = vpop.f32.mrf.mxu0
    %v10865 = vpop.f32.mrf.mxu0
    %v10866 = vadd.f32 0.0, %v10865
    %v10867 = vpop.f32.mrf.mxu0
    %10868 = vmatprep.mubr.bf16.mxu0 %v10527
    %10869 = vmatmul.mubr.bf16.gmra.mxu0 %v10526
    %v10870 = vpop.f32.mrf.mxu0
    %v10871 = vadd.f32 0.0, %v10870
    %v10872 = vpop.f32.mrf.mxu0
    %v10873 = vpop.f32.mrf.mxu0
    %v10874 = vadd.f32 0.0, %v10873
    %v10875 = vpop.f32.mrf.mxu0
    %10876 = vmatprep.mubr.bf16.mxu0 %v10530
    %10877 = vmatmul.mubr.bf16.gmra.mxu0 %v10529
    %v10878 = vpop.f32.mrf.mxu0
    %v10879 = vadd.f32 0.0, %v10878
    %v10880 = vpop.f32.mrf.mxu0
    %v10881 = vpop.f32.mrf.mxu0
    %v10882 = vadd.f32 0.0, %v10881
    %v10883 = vpop.f32.mrf.mxu0
    %10884 = vdwg.mxu0
    %10885 = vmatprep.subr.bf16.mxu0 0
    %10886 = vmatpush1.bf16.msra.mxu0 %v10699
    %10887 = vmatprep.subr.bf16.mxu0 0
    %10888 = vmatpush1.bf16.msra.mxu0 %v10698
    %10889 = vmatprep.subr.bf16.mxu0 0
    %10890 = vmatpush1.bf16.msra.mxu0 %v10697
    %10891 = vmatprep.subr.bf16.mxu0 0
    %10892 = vmatpush1.bf16.msra.mxu0 %v10696
    %10893 = vmatprep.subr.bf16.mxu0 0
    %10894 = vmatpush1.bf16.msra.mxu0 %v10695
    %10895 = vmatprep.subr.bf16.mxu0 0
    %10896 = vmatpush1.bf16.msra.mxu0 %v10694
    %10897 = vmatprep.subr.bf16.mxu0 0
    %10898 = vmatpush1.bf16.msra.mxu0 %v10693
    %10899 = vmatprep.subr.bf16.mxu0 0
    %10900 = vmatpush1.bf16.msra.mxu0 %v10692
    %10901 = vmatprep.subr.bf16.mxu0 0
    %10902 = vmatpush2.bf16.msra.mxu0 0
    %10903 = vmatprep.subr.bf16.mxu0 0
    %10904 = vmatpush2.bf16.msra.mxu0 0
    %10905 = vmatprep.subr.bf16.mxu0 0
    %10906 = vmatpush2.bf16.msra.mxu0 0
    %10907 = vmatprep.subr.bf16.mxu0 0
    %10908 = vmatpush2.bf16.msra.mxu0 0
    %10909 = vmatprep.subr.bf16.mxu0 0
    %10910 = vmatpush2.bf16.msra.mxu0 0
    %10911 = vmatprep.subr.bf16.mxu0 0
    %10912 = vmatpush2.bf16.msra.mxu0 0
    %10913 = vmatprep.subr.bf16.mxu0 0
    %10914 = vmatpush2.bf16.msra.mxu0 0
    %10915 = vmatprep.subr.bf16.mxu0 0
    %10916 = vmatpush2.bf16.msra.mxu0 0
    %10917 = vmatprep.mubr.bf16.mxu0 0
    %10918 = vmatmul.mubr.bf16.gmra.mxu0 %v10486
    %v10919 = vpop.f32.mrf.mxu0
    %v10920 = vadd.f32 %v10759, %v10919
    %v10921 = vpop.f32.mrf.mxu0
    %v10922 = vpop.f32.mrf.mxu0
    %v10923 = vadd.f32 %v10762, %v10922
    %v10924 = vpop.f32.mrf.mxu0
    %10925 = vmatprep.mubr.bf16.mxu0 0
    %10926 = vmatmul.mubr.bf16.gmra.mxu0 %v10489
    %v10927 = vpop.f32.mrf.mxu0
    %v10928 = vadd.f32 %v10767, %v10927
    %v10929 = vpop.f32.mrf.mxu0
    %v10930 = vpop.f32.mrf.mxu0
    %v10931 = vadd.f32 %v10770, %v10930
    %v10932 = vpop.f32.mrf.mxu0
    %10933 = vmatprep.mubr.bf16.mxu0 0
    %10934 = vmatmul.mubr.bf16.gmra.mxu0 %v10492
    %v10935 = vpop.f32.mrf.mxu0
    %v10936 = vadd.f32 %v10775, %v10935
    %v10937 = vpop.f32.mrf.mxu0
    %v10938 = vpop.f32.mrf.mxu0
    %v10939 = vadd.f32 %v10778, %v10938
    %v10940 = vpop.f32.mrf.mxu0
    %10941 = vmatprep.mubr.bf16.mxu0 0
    %10942 = vmatmul.mubr.bf16.gmra.mxu0 %v10495
    %v10943 = vpop.f32.mrf.mxu0
    %v10944 = vadd.f32 %v10783, %v10943
    %v10945 = vpop.f32.mrf.mxu0
    %v10946 = vpop.f32.mrf.mxu0
    %v10947 = vadd.f32 %v10786, %v10946
    %v10948 = vpop.f32.mrf.mxu0
    %10949 = vmatprep.mubr.bf16.mxu0 0
    %10950 = vmatmul.mubr.bf16.gmra.mxu0 %v10498
    %v10951 = vpop.f32.mrf.mxu0
    %v10952 = vadd.f32 %v10791, %v10951
    %v10953 = vpop.f32.mrf.mxu0
    %v10954 = vpop.f32.mrf.mxu0
    %v10955 = vadd.f32 %v10794, %v10954
    %v10956 = vpop.f32.mrf.mxu0
    %10957 = vmatprep.mubr.bf16.mxu0 0
    %10958 = vmatmul.mubr.bf16.gmra.mxu0 %v10501
    %v10959 = vpop.f32.mrf.mxu0
    %v10960 = vadd.f32 %v10799, %v10959
    %v10961 = vpop.f32.mrf.mxu0
    %v10962 = vpop.f32.mrf.mxu0
    %v10963 = vadd.f32 %v10802, %v10962
    %v10964 = vpop.f32.mrf.mxu0
    %10965 = vmatprep.mubr.bf16.mxu0 0
    %10966 = vmatmul.mubr.bf16.gmra.mxu0 %v10504
    %v10967 = vpop.f32.mrf.mxu0
    %v10968 = vadd.f32 %v10807, %v10967
    %v10969 = vpop.f32.mrf.mxu0
    %v10970 = vpop.f32.mrf.mxu0
    %v10971 = vadd.f32 %v10810, %v10970
    %v10972 = vpop.f32.mrf.mxu0
    %10973 = vmatprep.mubr.bf16.mxu0 0
    %10974 = vmatmul.mubr.bf16.gmra.mxu0 %v10507
    %v10975 = vpop.f32.mrf.mxu0
    %v10976 = vadd.f32 %v10815, %v10975
    %v10977 = vpop.f32.mrf.mxu0
    %v10978 = vpop.f32.mrf.mxu0
    %v10979 = vadd.f32 %v10818, %v10978
    %v10980 = vpop.f32.mrf.mxu0
    %10981 = vmatprep.mubr.bf16.mxu0 0
    %10982 = vmatmul.mubr.bf16.gmra.mxu0 %v10510
    %v10983 = vpop.f32.mrf.mxu0
    %v10984 = vadd.f32 %v10823, %v10983
    %v10985 = vpop.f32.mrf.mxu0
    %v10986 = vpop.f32.mrf.mxu0
    %v10987 = vadd.f32 %v10826, %v10986
    %v10988 = vpop.f32.mrf.mxu0
    %10989 = vmatprep.mubr.bf16.mxu0 0
    %10990 = vmatmul.mubr.bf16.gmra.mxu0 %v10513
    %v10991 = vpop.f32.mrf.mxu0
    %v10992 = vadd.f32 %v10831, %v10991
    %v10993 = vpop.f32.mrf.mxu0
    %v10994 = vpop.f32.mrf.mxu0
    %v10995 = vadd.f32 %v10834, %v10994
    %v10996 = vpop.f32.mrf.mxu0
    %10997 = vmatprep.mubr.bf16.mxu0 0
    %10998 = vmatmul.mubr.bf16.gmra.mxu0 %v10516
    %v10999 = vpop.f32.mrf.mxu0
    %v11000 = vadd.f32 %v10839, %v10999
    %v11001 = vpop.f32.mrf.mxu0
    %v11002 = vpop.f32.mrf.mxu0
    %v11003 = vadd.f32 %v10842, %v11002
    %v11004 = vpop.f32.mrf.mxu0
    %11005 = vmatprep.mubr.bf16.mxu0 0
    %11006 = vmatmul.mubr.bf16.gmra.mxu0 %v10519
    %v11007 = vpop.f32.mrf.mxu0
    %v11008 = vadd.f32 %v10847, %v11007
    %v11009 = vpop.f32.mrf.mxu0
    %v11010 = vpop.f32.mrf.mxu0
    %v11011 = vadd.f32 %v10850, %v11010
    %v11012 = vpop.f32.mrf.mxu0
    %11013 = vmatprep.mubr.bf16.mxu0 0
    %11014 = vmatmul.mubr.bf16.gmra.mxu0 %v10522
    %v11015 = vpop.f32.mrf.mxu0
    %v11016 = vadd.f32 %v10855, %v11015
    %v11017 = vpop.f32.mrf.mxu0
    %v11018 = vpop.f32.mrf.mxu0
    %v11019 = vadd.f32 %v10858, %v11018
    %v11020 = vpop.f32.mrf.mxu0
    %11021 = vmatprep.mubr.bf16.mxu0 0
    %11022 = vmatmul.mubr.bf16.gmra.mxu0 %v10525
    %v11023 = vpop.f32.mrf.mxu0
    %v11024 = vadd.f32 %v10863, %v11023
    %v11025 = vpop.f32.mrf.mxu0
    %v11026 = vpop.f32.mrf.mxu0
    %v11027 = vadd.f32 %v10866, %v11026
    %v11028 = vpop.f32.mrf.mxu0
    %11029 = vmatprep.mubr.bf16.mxu0 0
    %11030 = vmatmul.mubr.bf16.gmra.mxu0 %v10528
    %v11031 = vpop.f32.mrf.mxu0
    %v11032 = vadd.f32 %v10871, %v11031
    %v11033 = vpop.f32.mrf.mxu0
    %v11034 = vpop.f32.mrf.mxu0
    %v11035 = vadd.f32 %v10874, %v11034
    %v11036 = vpop.f32.mrf.mxu0
    %11037 = vmatprep.mubr.bf16.mxu0 0
    %11038 = vmatmul.mubr.bf16.gmra.mxu0 %v10531
    %v11039 = vpop.f32.mrf.mxu0
    %v11040 = vadd.f32 %v10879, %v11039
    %v11041 = vpop.f32.mrf.mxu0
    %v11042 = vpop.f32.mrf.mxu0
    %v11043 = vadd.f32 %v10882, %v11042
    %v11044 = vpop.f32.mrf.mxu0
    %11045 = vdwg.mxu0
    %v11046 = vadd.f32 %v10084, %v10920
    %v11047 = vadd.f32 %v10087, %v10923
    %v11048 = vadd.f32 %v10092, %v10928
    %v11049 = vadd.f32 %v10095, %v10931
    %v11050 = vadd.f32 %v10100, %v10936
    %v11051 = vadd.f32 %v10103, %v10939
    %v11052 = vadd.f32 %v10108, %v10944
    %v11053 = vadd.f32 %v10111, %v10947
    %v11054 = vadd.f32 %v10116, %v10952
    %v11055 = vadd.f32 %v10119, %v10955
    %v11056 = vadd.f32 %v10124, %v10960
    %v11057 = vadd.f32 %v10127, %v10963
    %v11058 = vadd.f32 %v10132, %v10968
    %v11059 = vadd.f32 %v10135, %v10971
    %v11060 = vadd.f32 %v10140, %v10976
    %v11061 = vadd.f32 %v10143, %v10979
    %v11062 = vadd.f32 %v10148, %v10984
    %v11063 = vadd.f32 %v10151, %v10987
    %v11064 = vadd.f32 %v10156, %v10992
    %v11065 = vadd.f32 %v10159, %v10995
    %v11066 = vadd.f32 %v10164, %v11000
    %v11067 = vadd.f32 %v10167, %v11003
    %v11068 = vadd.f32 %v10172, %v11008
    %v11069 = vadd.f32 %v10175, %v11011
    %v11070 = vadd.f32 %v10180, %v11016
    %v11071 = vadd.f32 %v10183, %v11019
    %v11072 = vadd.f32 %v10188, %v11024
    %v11073 = vadd.f32 %v10191, %v11027
    %v11074 = vadd.f32 %v10196, %v11032
    %v11075 = vadd.f32 %v10199, %v11035
    %v11076 = vadd.f32 %v10204, %v11040
    %v11077 = vadd.f32 %v10207, %v11043
    %v11078 = vlaneseq
    %v11079 = vshrl.u32 %v11078, 7
    %v11080 = vsub.s32 0, %v11079
    %v11081 = vrot.slane %v77, %v11080
    %v11082 = vmul.f32 %v11046, %v11081
    %v11083 = vmul.f32 %v11047, %v11081
    %v11084 = vmul.f32 %v11048, %v11081
    %v11085 = vmul.f32 %v11049, %v11081
    %v11086 = vmul.f32 %v11050, %v11081
    %v11087 = vmul.f32 %v11051, %v11081
    %v11088 = vmul.f32 %v11052, %v11081
    %v11089 = vmul.f32 %v11053, %v11081
    %v11090 = vmul.f32 %v11054, %v11081
    %v11091 = vmul.f32 %v11055, %v11081
    %v11092 = vmul.f32 %v11056, %v11081
    %v11093 = vmul.f32 %v11057, %v11081
    %v11094 = vmul.f32 %v11058, %v11081
    %v11095 = vmul.f32 %v11059, %v11081
    %v11096 = vmul.f32 %v11060, %v11081
    %v11097 = vmul.f32 %v11061, %v11081
    %v11098 = vmul.f32 %v11062, %v11081
    %v11099 = vmul.f32 %v11063, %v11081
    %v11100 = vmul.f32 %v11064, %v11081
    %v11101 = vmul.f32 %v11065, %v11081
    %v11102 = vmul.f32 %v11066, %v11081
    %v11103 = vmul.f32 %v11067, %v11081
    %v11104 = vmul.f32 %v11068, %v11081
    %v11105 = vmul.f32 %v11069, %v11081
    %v11106 = vmul.f32 %v11070, %v11081
    %v11107 = vmul.f32 %v11071, %v11081
    %v11108 = vmul.f32 %v11072, %v11081
    %v11109 = vmul.f32 %v11073, %v11081
    %v11110 = vmul.f32 %v11074, %v11081
    %v11111 = vmul.f32 %v11075, %v11081
    %v11112 = vmul.f32 %v11076, %v11081
    %v11113 = vmul.f32 %v11077, %v11081
    %v11114 = vlaneseq
    %v11115 = vshrl.u32 %v11114, 7
    %v11116 = vsub.s32 0, %v11115
    %v11117 = vrot.slane %v78, %v11116
    %v11118 = vadd.f32 %v11082, %v11117
    %v11119 = vadd.f32 %v11083, %v11117
    %v11120 = vadd.f32 %v11084, %v11117
    %v11121 = vadd.f32 %v11085, %v11117
    %v11122 = vadd.f32 %v11086, %v11117
    %v11123 = vadd.f32 %v11087, %v11117
    %v11124 = vadd.f32 %v11088, %v11117
    %v11125 = vadd.f32 %v11089, %v11117
    %v11126 = vadd.f32 %v11090, %v11117
    %v11127 = vadd.f32 %v11091, %v11117
    %v11128 = vadd.f32 %v11092, %v11117
    %v11129 = vadd.f32 %v11093, %v11117
    %v11130 = vadd.f32 %v11094, %v11117
    %v11131 = vadd.f32 %v11095, %v11117
    %v11132 = vadd.f32 %v11096, %v11117
    %v11133 = vadd.f32 %v11097, %v11117
    %v11134 = vadd.f32 %v11098, %v11117
    %v11135 = vadd.f32 %v11099, %v11117
    %v11136 = vadd.f32 %v11100, %v11117
    %v11137 = vadd.f32 %v11101, %v11117
    %v11138 = vadd.f32 %v11102, %v11117
    %v11139 = vadd.f32 %v11103, %v11117
    %v11140 = vadd.f32 %v11104, %v11117
    %v11141 = vadd.f32 %v11105, %v11117
    %v11142 = vadd.f32 %v11106, %v11117
    %v11143 = vadd.f32 %v11107, %v11117
    %v11144 = vadd.f32 %v11108, %v11117
    %v11145 = vadd.f32 %v11109, %v11117
    %v11146 = vadd.f32 %v11110, %v11117
    %v11147 = vadd.f32 %v11111, %v11117
    %v11148 = vadd.f32 %v11112, %v11117
    %v11149 = vadd.f32 %v11113, %v11117
    %v11150 = vld [vmem:[#allocation4] sm:$0xff]
    %v11151 = vld [vmem:[#allocation4 + $0x8] sm:$0xff]
    %v11152 = vld [vmem:[#allocation4 + $0x10] sm:$0xff]
    %v11153 = vld [vmem:[#allocation4 + $0x18] sm:$0xff]
    %v11154 = vld [vmem:[#allocation4 + $0x20] sm:$0xff]
    %v11155 = vld [vmem:[#allocation4 + $0x28] sm:$0xff]
    %v11156 = vld [vmem:[#allocation4 + $0x30] sm:$0xff]
    %v11157 = vld [vmem:[#allocation4 + $0x38] sm:$0xff]
    %v11158 = vld [vmem:[#allocation4 + $0x40] sm:$0xff]
    %v11159 = vld [vmem:[#allocation4 + $0x48] sm:$0xff]
    %v11160 = vld [vmem:[#allocation4 + $0x50] sm:$0xff]
    %v11161 = vld [vmem:[#allocation4 + $0x58] sm:$0xff]
    %v11162 = vld [vmem:[#allocation4 + $0x60] sm:$0xff]
    %v11163 = vld [vmem:[#allocation4 + $0x68] sm:$0xff]
    %v11164 = vld [vmem:[#allocation4 + $0x70] sm:$0xff]
    %v11165 = vld [vmem:[#allocation4 + $0x78] sm:$0xff]
    %v11166 = vld [vmem:[#allocation4 + $0x100] sm:$0xff]
    %v11167 = vld [vmem:[#allocation4 + $0x108] sm:$0xff]
    %v11168 = vld [vmem:[#allocation4 + $0x110] sm:$0xff]
    %v11169 = vld [vmem:[#allocation4 + $0x118] sm:$0xff]
    %v11170 = vld [vmem:[#allocation4 + $0x120] sm:$0xff]
    %v11171 = vld [vmem:[#allocation4 + $0x128] sm:$0xff]
    %v11172 = vld [vmem:[#allocation4 + $0x130] sm:$0xff]
    %v11173 = vld [vmem:[#allocation4 + $0x138] sm:$0xff]
    %v11174 = vld [vmem:[#allocation4 + $0x140] sm:$0xff]
    %v11175 = vld [vmem:[#allocation4 + $0x148] sm:$0xff]
    %v11176 = vld [vmem:[#allocation4 + $0x150] sm:$0xff]
    %v11177 = vld [vmem:[#allocation4 + $0x158] sm:$0xff]
    %v11178 = vld [vmem:[#allocation4 + $0x160] sm:$0xff]
    %v11179 = vld [vmem:[#allocation4 + $0x168] sm:$0xff]
    %v11180 = vld [vmem:[#allocation4 + $0x170] sm:$0xff]
    %v11181 = vld [vmem:[#allocation4 + $0x178] sm:$0xff]
    %v11182 = vadd.f32 %v11118, %v11150
    %v11183 = vadd.f32 %v11119, %v11151
    %v11184 = vadd.f32 %v11120, %v11152
    %v11185 = vadd.f32 %v11121, %v11153
    %v11186 = vadd.f32 %v11122, %v11154
    %v11187 = vadd.f32 %v11123, %v11155
    %v11188 = vadd.f32 %v11124, %v11156
    %v11189 = vadd.f32 %v11125, %v11157
    %v11190 = vadd.f32 %v11126, %v11158
    %v11191 = vadd.f32 %v11127, %v11159
    %v11192 = vadd.f32 %v11128, %v11160
    %v11193 = vadd.f32 %v11129, %v11161
    %v11194 = vadd.f32 %v11130, %v11162
    %v11195 = vadd.f32 %v11131, %v11163
    %v11196 = vadd.f32 %v11132, %v11164
    %v11197 = vadd.f32 %v11133, %v11165
    %v11198 = vadd.f32 %v11134, %v11166
    %v11199 = vadd.f32 %v11135, %v11167
    %v11200 = vadd.f32 %v11136, %v11168
    %v11201 = vadd.f32 %v11137, %v11169
    %v11202 = vadd.f32 %v11138, %v11170
    %v11203 = vadd.f32 %v11139, %v11171
    %v11204 = vadd.f32 %v11140, %v11172
    %v11205 = vadd.f32 %v11141, %v11173
    %v11206 = vadd.f32 %v11142, %v11174
    %v11207 = vadd.f32 %v11143, %v11175
    %v11208 = vadd.f32 %v11144, %v11176
    %v11209 = vadd.f32 %v11145, %v11177
    %v11210 = vadd.f32 %v11146, %v11178
    %v11211 = vadd.f32 %v11147, %v11179
    %v11212 = vadd.f32 %v11148, %v11180
    %v11213 = vadd.f32 %v11149, %v11181
    %11214 = vst [vmem:[#allocation12] sm:$0xff] %v11182
    %11215 = vst [vmem:[#allocation12 + $0x8] sm:$0xff] %v11183
    %11216 = vst [vmem:[#allocation12 + $0x10] sm:$0xff] %v11184
    %11217 = vst [vmem:[#allocation12 + $0x18] sm:$0xff] %v11185
    %11218 = vst [vmem:[#allocation12 + $0x20] sm:$0xff] %v11186
    %11219 = vst [vmem:[#allocation12 + $0x28] sm:$0xff] %v11187
    %11220 = vst [vmem:[#allocation12 + $0x30] sm:$0xff] %v11188
    %11221 = vst [vmem:[#allocation12 + $0x38] sm:$0xff] %v11189
    %11222 = vst [vmem:[#allocation12 + $0x40] sm:$0xff] %v11190
    %11223 = vst [vmem:[#allocation12 + $0x48] sm:$0xff] %v11191
    %11224 = vst [vmem:[#allocation12 + $0x50] sm:$0xff] %v11192
    %11225 = vst [vmem:[#allocation12 + $0x58] sm:$0xff] %v11193
    %11226 = vst [vmem:[#allocation12 + $0x60] sm:$0xff] %v11194
    %11227 = vst [vmem:[#allocation12 + $0x68] sm:$0xff] %v11195
    %11228 = vst [vmem:[#allocation12 + $0x70] sm:$0xff] %v11196
    %11229 = vst [vmem:[#allocation12 + $0x78] sm:$0xff] %v11197
    %11230 = vst [vmem:[#allocation12 + $0x100] sm:$0xff] %v11198
    %11231 = vst [vmem:[#allocation12 + $0x108] sm:$0xff] %v11199
    %11232 = vst [vmem:[#allocation12 + $0x110] sm:$0xff] %v11200
    %11233 = vst [vmem:[#allocation12 + $0x118] sm:$0xff] %v11201
    %11234 = vst [vmem:[#allocation12 + $0x120] sm:$0xff] %v11202
    %11235 = vst [vmem:[#allocation12 + $0x128] sm:$0xff] %v11203
    %11236 = vst [vmem:[#allocation12 + $0x130] sm:$0xff] %v11204
    %11237 = vst [vmem:[#allocation12 + $0x138] sm:$0xff] %v11205
    %11238 = vst [vmem:[#allocation12 + $0x140] sm:$0xff] %v11206
    %11239 = vst [vmem:[#allocation12 + $0x148] sm:$0xff] %v11207
    %11240 = vst [vmem:[#allocation12 + $0x150] sm:$0xff] %v11208
    %11241 = vst [vmem:[#allocation12 + $0x158] sm:$0xff] %v11209
    %11242 = vst [vmem:[#allocation12 + $0x160] sm:$0xff] %v11210
    %11243 = vst [vmem:[#allocation12 + $0x168] sm:$0xff] %v11211
    %11244 = vst [vmem:[#allocation12 + $0x170] sm:$0xff] %v11212
    %11245 = vst [vmem:[#allocation12 + $0x178] sm:$0xff] %v11213
    %s11246 = scalar_lea.vmem [#allocation3], 192
    %v11247 = vld [vmem:[%s11246] sm:$0xff]
    %v11248 = vld [vmem:[%s11246 + $0x8] sm:$0xf]
    %v11249 = vld [vmem:[%s11246 + $0xc] sm:$0xff]
    %v11250 = vld [vmem:[%s11246 + $0x14] sm:$0xf]
    %v11251 = vld [vmem:[%s11246 + $0x18] sm:$0xff]
    %v11252 = vld [vmem:[%s11246 + $0x20] sm:$0xf]
    %v11253 = vld [vmem:[%s11246 + $0x24] sm:$0xff]
    %v11254 = vld [vmem:[%s11246 + $0x2c] sm:$0xf]
    %v11255 = vld [vmem:[%s11246 + $0x30] sm:$0xff]
    %v11256 = vld [vmem:[%s11246 + $0x38] sm:$0xf]
    %v11257 = vld [vmem:[%s11246 + $0x3c] sm:$0xff]
    %v11258 = vld [vmem:[%s11246 + $0x44] sm:$0xf]
    %v11259 = vld [vmem:[%s11246 + $0x48] sm:$0xff]
    %v11260 = vld [vmem:[%s11246 + $0x50] sm:$0xf]
    %v11261 = vld [vmem:[%s11246 + $0x54] sm:$0xff]
    %v11262 = vld [vmem:[%s11246 + $0x5c] sm:$0xf]
    %v11263 = vld [vmem:[%s11246 + $0x60] sm:$0xff]
    %v11264 = vld [vmem:[%s11246 + $0x68] sm:$0xf]
    %v11265 = vld [vmem:[%s11246 + $0x6c] sm:$0xff]
    %v11266 = vld [vmem:[%s11246 + $0x74] sm:$0xf]
    %v11267 = vld [vmem:[%s11246 + $0x78] sm:$0xff]
    %v11268 = vld [vmem:[%s11246 + $0x80] sm:$0xf]
    %v11269 = vld [vmem:[%s11246 + $0x84] sm:$0xff]
    %v11270 = vld [vmem:[%s11246 + $0x8c] sm:$0xf]
    %v11271 = vld [vmem:[%s11246 + $0x90] sm:$0xff]
    %v11272 = vld [vmem:[%s11246 + $0x98] sm:$0xf]
    %v11273 = vld [vmem:[%s11246 + $0x9c] sm:$0xff]
    %v11274 = vld [vmem:[%s11246 + $0xa4] sm:$0xf]
    %v11275 = vld [vmem:[%s11246 + $0xa8] sm:$0xff]
    %v11276 = vld [vmem:[%s11246 + $0xb0] sm:$0xf]
    %v11277 = vld [vmem:[%s11246 + $0xb4] sm:$0xff]
    %v11278 = vld [vmem:[%s11246 + $0xbc] sm:$0xf]
    %v11279 = vld [vmem:[%s11246 + $0x1b0] sm:$0xff]
    %v11280 = vld [vmem:[%s11246 + $0x1b8] sm:$0xf]
    %v11281 = vld [vmem:[%s11246 + $0x1bc] sm:$0xff]
    %v11282 = vld [vmem:[%s11246 + $0x1c4] sm:$0xf]
    %v11283 = vld [vmem:[%s11246 + $0x1c8] sm:$0xff]
    %v11284 = vld [vmem:[%s11246 + $0x1d0] sm:$0xf]
    %v11285 = vld [vmem:[%s11246 + $0x1d4] sm:$0xff]
    %v11286 = vld [vmem:[%s11246 + $0x1dc] sm:$0xf]
    %v11287 = vld [vmem:[%s11246 + $0x1e0] sm:$0xff]
    %v11288 = vld [vmem:[%s11246 + $0x1e8] sm:$0xf]
    %v11289 = vld [vmem:[%s11246 + $0x1ec] sm:$0xff]
    %v11290 = vld [vmem:[%s11246 + $0x1f4] sm:$0xf]
    %v11291 = vld [vmem:[%s11246 + $0x1f8] sm:$0xff]
    %v11292 = vld [vmem:[%s11246 + $0x200] sm:$0xf]
    %v11293 = vld [vmem:[%s11246 + $0x204] sm:$0xff]
    %v11294 = vld [vmem:[%s11246 + $0x20c] sm:$0xf]
    %v11295 = vld [vmem:[%s11246 + $0x210] sm:$0xff]
    %v11296 = vld [vmem:[%s11246 + $0x218] sm:$0xf]
    %v11297 = vld [vmem:[%s11246 + $0x21c] sm:$0xff]
    %v11298 = vld [vmem:[%s11246 + $0x224] sm:$0xf]
    %v11299 = vld [vmem:[%s11246 + $0x228] sm:$0xff]
    %v11300 = vld [vmem:[%s11246 + $0x230] sm:$0xf]
    %v11301 = vld [vmem:[%s11246 + $0x234] sm:$0xff]
    %v11302 = vld [vmem:[%s11246 + $0x23c] sm:$0xf]
    %v11303 = vld [vmem:[%s11246 + $0x240] sm:$0xff]
    %v11304 = vld [vmem:[%s11246 + $0x248] sm:$0xf]
    %v11305 = vld [vmem:[%s11246 + $0x24c] sm:$0xff]
    %v11306 = vld [vmem:[%s11246 + $0x254] sm:$0xf]
    %v11307 = vld [vmem:[%s11246 + $0x258] sm:$0xff]
    %v11308 = vld [vmem:[%s11246 + $0x260] sm:$0xf]
    %v11309 = vld [vmem:[%s11246 + $0x264] sm:$0xff]
    %v11310 = vld [vmem:[%s11246 + $0x26c] sm:$0xf]
    %v11311 = vld [vmem:[#allocation10] sm:$0xf]
    %v11312 = vld [vmem:[#allocation10 + $0x4] sm:$0xf]
    %v11313 = vld [vmem:[#allocation10 + $0x8] sm:$0xf]
    %v11314 = vld [vmem:[#allocation10 + $0xc] sm:$0xf]
    %v11315 = vld [vmem:[#allocation10 + $0x10] sm:$0xf]
    %v11316 = vld [vmem:[#allocation10 + $0x14] sm:$0xf]
    %v11317 = vld [vmem:[#allocation10 + $0x18] sm:$0xf]
    %v11318 = vld [vmem:[#allocation10 + $0x1c] sm:$0xf]
    %v11319 = vld [vmem:[#allocation10 + $0x20] sm:$0xf]
    %v11320 = vld [vmem:[#allocation10 + $0x24] sm:$0xf]
    %v11321 = vld [vmem:[#allocation10 + $0x28] sm:$0xf]
    %v11322 = vld [vmem:[#allocation10 + $0x2c] sm:$0xf]
    %v11323 = vld [vmem:[#allocation10 + $0x30] sm:$0xf]
    %v11324 = vld [vmem:[#allocation10 + $0x34] sm:$0xf]
    %v11325 = vld [vmem:[#allocation10 + $0x38] sm:$0xf]
    %v11326 = vld [vmem:[#allocation10 + $0x3c] sm:$0xf]
    %v11327 = vld [vmem:[#allocation10 + $0x40] sm:$0xf]
    %v11328 = vld [vmem:[#allocation10 + $0x44] sm:$0xf]
    %v11329 = vld [vmem:[#allocation10 + $0x48] sm:$0xf]
    %v11330 = vld [vmem:[#allocation10 + $0x4c] sm:$0xf]
    %v11331 = vld [vmem:[#allocation10 + $0x50] sm:$0xf]
    %v11332 = vld [vmem:[#allocation10 + $0x54] sm:$0xf]
    %v11333 = vld [vmem:[#allocation10 + $0x58] sm:$0xf]
    %v11334 = vld [vmem:[#allocation10 + $0x5c] sm:$0xf]
    %v11335 = vld [vmem:[#allocation10 + $0x60] sm:$0xf]
    %v11336 = vld [vmem:[#allocation10 + $0x64] sm:$0xf]
    %v11337 = vld [vmem:[#allocation10 + $0x68] sm:$0xf]
    %v11338 = vld [vmem:[#allocation10 + $0x6c] sm:$0xf]
    %v11339 = vld [vmem:[#allocation10 + $0x70] sm:$0xf]
    %v11340 = vld [vmem:[#allocation10 + $0x74] sm:$0xf]
    %v11341 = vld [vmem:[#allocation10 + $0x78] sm:$0xf]
    %v11342 = vld [vmem:[#allocation10 + $0x7c] sm:$0xf]
    %v11343 = vld [vmem:[#allocation10 + $0x80] sm:$0xf]
    %v11344 = vld [vmem:[#allocation10 + $0x84] sm:$0xf]
    %v11345 = vld [vmem:[#allocation10 + $0x88] sm:$0xf]
    %v11346 = vld [vmem:[#allocation10 + $0x8c] sm:$0xf]
    %v11347 = vld [vmem:[#allocation10 + $0x90] sm:$0xf]
    %v11348 = vld [vmem:[#allocation10 + $0x94] sm:$0xf]
    %v11349 = vld [vmem:[#allocation10 + $0x98] sm:$0xf]
    %v11350 = vld [vmem:[#allocation10 + $0x9c] sm:$0xf]
    %v11351 = vld [vmem:[#allocation10 + $0xa0] sm:$0xf]
    %v11352 = vld [vmem:[#allocation10 + $0xa4] sm:$0xf]
    %v11353 = vld [vmem:[#allocation10 + $0xa8] sm:$0xf]
    %v11354 = vld [vmem:[#allocation10 + $0xac] sm:$0xf]
    %v11355 = vld [vmem:[#allocation10 + $0xb0] sm:$0xf]
    %v11356 = vld [vmem:[#allocation10 + $0xb4] sm:$0xf]
    %v11357 = vld [vmem:[#allocation10 + $0xb8] sm:$0xf]
    %v11358 = vld [vmem:[#allocation10 + $0xbc] sm:$0xf]
    %v11359 = vld [vmem:[%s8188] sm:$0xff]
    %v11360 = vld [vmem:[%s8188 + $0x8] sm:$0xf]
    %v11361 = vld [vmem:[%s8188 + $0xc] sm:$0xff]
    %v11362 = vld [vmem:[%s8188 + $0x14] sm:$0xf]
    %v11363 = vld [vmem:[%s8188 + $0x18] sm:$0xff]
    %v11364 = vld [vmem:[%s8188 + $0x20] sm:$0xf]
    %v11365 = vld [vmem:[%s8188 + $0x24] sm:$0xff]
    %v11366 = vld [vmem:[%s8188 + $0x2c] sm:$0xf]
    %v11367 = vld [vmem:[%s8188 + $0x30] sm:$0xff]
    %v11368 = vld [vmem:[%s8188 + $0x38] sm:$0xf]
    %v11369 = vld [vmem:[%s8188 + $0x3c] sm:$0xff]
    %v11370 = vld [vmem:[%s8188 + $0x44] sm:$0xf]
    %v11371 = vld [vmem:[%s8188 + $0x48] sm:$0xff]
    %v11372 = vld [vmem:[%s8188 + $0x50] sm:$0xf]
    %v11373 = vld [vmem:[%s8188 + $0x54] sm:$0xff]
    %v11374 = vld [vmem:[%s8188 + $0x5c] sm:$0xf]
    %v11375 = vld [vmem:[%s8188 + $0x60] sm:$0xff]
    %v11376 = vld [vmem:[%s8188 + $0x68] sm:$0xf]
    %v11377 = vld [vmem:[%s8188 + $0x6c] sm:$0xff]
    %v11378 = vld [vmem:[%s8188 + $0x74] sm:$0xf]
    %v11379 = vld [vmem:[%s8188 + $0x78] sm:$0xff]
    %v11380 = vld [vmem:[%s8188 + $0x80] sm:$0xf]
    %v11381 = vld [vmem:[%s8188 + $0x84] sm:$0xff]
    %v11382 = vld [vmem:[%s8188 + $0x8c] sm:$0xf]
    %v11383 = vld [vmem:[%s8188 + $0x90] sm:$0xff]
    %v11384 = vld [vmem:[%s8188 + $0x98] sm:$0xf]
    %v11385 = vld [vmem:[%s8188 + $0x9c] sm:$0xff]
    %v11386 = vld [vmem:[%s8188 + $0xa4] sm:$0xf]
    %v11387 = vld [vmem:[%s8188 + $0xa8] sm:$0xff]
    %v11388 = vld [vmem:[%s8188 + $0xb0] sm:$0xf]
    %v11389 = vld [vmem:[%s8188 + $0xb4] sm:$0xff]
    %v11390 = vld [vmem:[%s8188 + $0xbc] sm:$0xf]
    %v11391 = vld [vmem:[%s8188 + $0x1b0] sm:$0xff]
    %v11392 = vld [vmem:[%s8188 + $0x1b8] sm:$0xf]
    %v11393 = vld [vmem:[%s8188 + $0x1bc] sm:$0xff]
    %v11394 = vld [vmem:[%s8188 + $0x1c4] sm:$0xf]
    %v11395 = vld [vmem:[%s8188 + $0x1c8] sm:$0xff]
    %v11396 = vld [vmem:[%s8188 + $0x1d0] sm:$0xf]
    %v11397 = vld [vmem:[%s8188 + $0x1d4] sm:$0xff]
    %v11398 = vld [vmem:[%s8188 + $0x1dc] sm:$0xf]
    %v11399 = vld [vmem:[%s8188 + $0x1e0] sm:$0xff]
    %v11400 = vld [vmem:[%s8188 + $0x1e8] sm:$0xf]
    %v11401 = vld [vmem:[%s8188 + $0x1ec] sm:$0xff]
    %v11402 = vld [vmem:[%s8188 + $0x1f4] sm:$0xf]
    %v11403 = vld [vmem:[%s8188 + $0x1f8] sm:$0xff]
    %v11404 = vld [vmem:[%s8188 + $0x200] sm:$0xf]
    %v11405 = vld [vmem:[%s8188 + $0x204] sm:$0xff]
    %v11406 = vld [vmem:[%s8188 + $0x20c] sm:$0xf]
    %v11407 = vld [vmem:[%s8188 + $0x210] sm:$0xff]
    %v11408 = vld [vmem:[%s8188 + $0x218] sm:$0xf]
    %v11409 = vld [vmem:[%s8188 + $0x21c] sm:$0xff]
    %v11410 = vld [vmem:[%s8188 + $0x224] sm:$0xf]
    %v11411 = vld [vmem:[%s8188 + $0x228] sm:$0xff]
    %v11412 = vld [vmem:[%s8188 + $0x230] sm:$0xf]
    %v11413 = vld [vmem:[%s8188 + $0x234] sm:$0xff]
    %v11414 = vld [vmem:[%s8188 + $0x23c] sm:$0xf]
    %v11415 = vld [vmem:[%s8188 + $0x240] sm:$0xff]
    %v11416 = vld [vmem:[%s8188 + $0x248] sm:$0xf]
    %v11417 = vld [vmem:[%s8188 + $0x24c] sm:$0xff]
    %v11418 = vld [vmem:[%s8188 + $0x254] sm:$0xf]
    %v11419 = vld [vmem:[%s8188 + $0x258] sm:$0xff]
    %v11420 = vld [vmem:[%s8188 + $0x260] sm:$0xf]
    %v11421 = vld [vmem:[%s8188 + $0x264] sm:$0xff]
    %v11422 = vld [vmem:[%s8188 + $0x26c] sm:$0xf]
    %v11423 = vld [vmem:[%s8717] sm:$0xf]
    %v11424 = vld [vmem:[%s8717 + $0x4] sm:$0xf]
    %v11425 = vld [vmem:[%s8717 + $0x8] sm:$0xf]
    %v11426 = vld [vmem:[%s8717 + $0xc] sm:$0xf]
    %v11427 = vld [vmem:[%s8717 + $0x10] sm:$0xf]
    %v11428 = vld [vmem:[%s8717 + $0x14] sm:$0xf]
    %v11429 = vld [vmem:[%s8717 + $0x18] sm:$0xf]
    %v11430 = vld [vmem:[%s8717 + $0x1c] sm:$0xf]
    %v11431 = vld [vmem:[%s8717 + $0x20] sm:$0xf]
    %v11432 = vld [vmem:[%s8717 + $0x24] sm:$0xf]
    %v11433 = vld [vmem:[%s8717 + $0x28] sm:$0xf]
    %v11434 = vld [vmem:[%s8717 + $0x2c] sm:$0xf]
    %v11435 = vld [vmem:[%s8717 + $0x30] sm:$0xf]
    %v11436 = vld [vmem:[%s8717 + $0x34] sm:$0xf]
    %v11437 = vld [vmem:[%s8717 + $0x38] sm:$0xf]
    %v11438 = vld [vmem:[%s8717 + $0x3c] sm:$0xf]
    %v11439 = vld [vmem:[%s8717 + $0x40] sm:$0xf]
    %v11440 = vld [vmem:[%s8717 + $0x44] sm:$0xf]
    %v11441 = vld [vmem:[%s8717 + $0x48] sm:$0xf]
    %v11442 = vld [vmem:[%s8717 + $0x4c] sm:$0xf]
    %v11443 = vld [vmem:[%s8717 + $0x50] sm:$0xf]
    %v11444 = vld [vmem:[%s8717 + $0x54] sm:$0xf]
    %v11445 = vld [vmem:[%s8717 + $0x58] sm:$0xf]
    %v11446 = vld [vmem:[%s8717 + $0x5c] sm:$0xf]
    %v11447 = vld [vmem:[%s8717 + $0x60] sm:$0xf]
    %v11448 = vld [vmem:[%s8717 + $0x64] sm:$0xf]
    %v11449 = vld [vmem:[%s8717 + $0x68] sm:$0xf]
    %v11450 = vld [vmem:[%s8717 + $0x6c] sm:$0xf]
    %v11451 = vld [vmem:[%s8717 + $0x70] sm:$0xf]
    %v11452 = vld [vmem:[%s8717 + $0x74] sm:$0xf]
    %v11453 = vld [vmem:[%s8717 + $0x78] sm:$0xf]
    %v11454 = vld [vmem:[%s8717 + $0x7c] sm:$0xf]
    %v11455 = vld [vmem:[%s8717 + $0x80] sm:$0xf]
    %v11456 = vld [vmem:[%s8717 + $0x84] sm:$0xf]
    %v11457 = vld [vmem:[%s8717 + $0x88] sm:$0xf]
    %v11458 = vld [vmem:[%s8717 + $0x8c] sm:$0xf]
    %v11459 = vld [vmem:[%s8717 + $0x90] sm:$0xf]
    %v11460 = vld [vmem:[%s8717 + $0x94] sm:$0xf]
    %v11461 = vld [vmem:[%s8717 + $0x98] sm:$0xf]
    %v11462 = vld [vmem:[%s8717 + $0x9c] sm:$0xf]
    %v11463 = vld [vmem:[%s8717 + $0xa0] sm:$0xf]
    %v11464 = vld [vmem:[%s8717 + $0xa4] sm:$0xf]
    %v11465 = vld [vmem:[%s8717 + $0xa8] sm:$0xf]
    %v11466 = vld [vmem:[%s8717 + $0xac] sm:$0xf]
    %v11467 = vld [vmem:[%s8717 + $0xb0] sm:$0xf]
    %v11468 = vld [vmem:[%s8717 + $0xb4] sm:$0xf]
    %v11469 = vld [vmem:[%s8717 + $0xb8] sm:$0xf]
    %v11470 = vld [vmem:[%s8717 + $0xbc] sm:$0xf]
    %v11535 = vunpack.c.l.b16 %v11359
    %v11536 = vunpack.c.h.b16 %v11359
    %v11537 = vunpack.c.l.b16 %v11360
    %v11538 = vunpack.c.l.b16 %v11361
    %v11539 = vunpack.c.h.b16 %v11361
    %v11540 = vunpack.c.l.b16 %v11362
    %v11541 = vunpack.c.l.b16 %v11363
    %v11542 = vunpack.c.h.b16 %v11363
    %v11543 = vunpack.c.l.b16 %v11364
    %v11544 = vunpack.c.l.b16 %v11365
    %v11545 = vunpack.c.h.b16 %v11365
    %v11546 = vunpack.c.l.b16 %v11366
    %v11547 = vunpack.c.l.b16 %v11367
    %v11548 = vunpack.c.h.b16 %v11367
    %v11549 = vunpack.c.l.b16 %v11368
    %v11550 = vunpack.c.l.b16 %v11369
    %v11551 = vunpack.c.h.b16 %v11369
    %v11552 = vunpack.c.l.b16 %v11370
    %v11553 = vunpack.c.l.b16 %v11371
    %v11554 = vunpack.c.h.b16 %v11371
    %v11555 = vunpack.c.l.b16 %v11372
    %v11556 = vunpack.c.l.b16 %v11373
    %v11557 = vunpack.c.h.b16 %v11373
    %v11558 = vunpack.c.l.b16 %v11374
    %v11559 = vunpack.c.l.b16 %v11375
    %v11560 = vunpack.c.h.b16 %v11375
    %v11561 = vunpack.c.l.b16 %v11376
    %v11562 = vunpack.c.l.b16 %v11377
    %v11563 = vunpack.c.h.b16 %v11377
    %v11564 = vunpack.c.l.b16 %v11378
    %v11565 = vunpack.c.l.b16 %v11379
    %v11566 = vunpack.c.h.b16 %v11379
    %v11567 = vunpack.c.l.b16 %v11380
    %v11568 = vunpack.c.l.b16 %v11381
    %v11569 = vunpack.c.h.b16 %v11381
    %v11570 = vunpack.c.l.b16 %v11382
    %v11571 = vunpack.c.l.b16 %v11383
    %v11572 = vunpack.c.h.b16 %v11383
    %v11573 = vunpack.c.l.b16 %v11384
    %v11574 = vunpack.c.l.b16 %v11385
    %v11575 = vunpack.c.h.b16 %v11385
    %v11576 = vunpack.c.l.b16 %v11386
    %v11577 = vunpack.c.l.b16 %v11387
    %v11578 = vunpack.c.h.b16 %v11387
    %v11579 = vunpack.c.l.b16 %v11388
    %v11580 = vunpack.c.l.b16 %v11389
    %v11581 = vunpack.c.h.b16 %v11389
    %v11582 = vunpack.c.l.b16 %v11390
    %v11583 = vunpack.c.l.b16 %v11391
    %v11584 = vunpack.c.h.b16 %v11391
    %v11585 = vunpack.c.l.b16 %v11392
    %v11586 = vunpack.c.l.b16 %v11393
    %v11587 = vunpack.c.h.b16 %v11393
    %v11588 = vunpack.c.l.b16 %v11394
    %v11589 = vunpack.c.l.b16 %v11395
    %v11590 = vunpack.c.h.b16 %v11395
    %v11591 = vunpack.c.l.b16 %v11396
    %v11592 = vunpack.c.l.b16 %v11397
    %v11593 = vunpack.c.h.b16 %v11397
    %v11594 = vunpack.c.l.b16 %v11398
    %v11595 = vunpack.c.l.b16 %v11399
    %v11596 = vunpack.c.h.b16 %v11399
    %v11597 = vunpack.c.l.b16 %v11400
    %v11598 = vunpack.c.l.b16 %v11401
    %v11599 = vunpack.c.h.b16 %v11401
    %v11600 = vunpack.c.l.b16 %v11402
    %v11601 = vunpack.c.l.b16 %v11403
    %v11602 = vunpack.c.h.b16 %v11403
    %v11603 = vunpack.c.l.b16 %v11404
    %v11604 = vunpack.c.l.b16 %v11405
    %v11605 = vunpack.c.h.b16 %v11405
    %v11606 = vunpack.c.l.b16 %v11406
    %v11607 = vunpack.c.l.b16 %v11407
    %v11608 = vunpack.c.h.b16 %v11407
    %v11609 = vunpack.c.l.b16 %v11408
    %v11610 = vunpack.c.l.b16 %v11409
    %v11611 = vunpack.c.h.b16 %v11409
    %v11612 = vunpack.c.l.b16 %v11410
    %v11613 = vunpack.c.l.b16 %v11411
    %v11614 = vunpack.c.h.b16 %v11411
    %v11615 = vunpack.c.l.b16 %v11412
    %v11616 = vunpack.c.l.b16 %v11413
    %v11617 = vunpack.c.h.b16 %v11413
    %v11618 = vunpack.c.l.b16 %v11414
    %v11619 = vunpack.c.l.b16 %v11415
    %v11620 = vunpack.c.h.b16 %v11415
    %v11621 = vunpack.c.l.b16 %v11416
    %v11622 = vunpack.c.l.b16 %v11417
    %v11623 = vunpack.c.h.b16 %v11417
    %v11624 = vunpack.c.l.b16 %v11418
    %v11625 = vunpack.c.l.b16 %v11419
    %v11626 = vunpack.c.h.b16 %v11419
    %v11627 = vunpack.c.l.b16 %v11420
    %v11628 = vunpack.c.l.b16 %v11421
    %v11629 = vunpack.c.h.b16 %v11421
    %v11630 = vunpack.c.l.b16 %v11422
    %v11631 = vpack.c.b16 %v11538, %v11535
    %v11632 = vpack.c.b16 %v11539, %v11536
    %v11633 = vpack.c.b16 %v11540, %v11537
    %v11634 = vpack.c.b16 %v11544, %v11541
    %v11635 = vpack.c.b16 %v11545, %v11542
    %v11636 = vpack.c.b16 %v11546, %v11543
    %v11637 = vpack.c.b16 %v11550, %v11547
    %v11638 = vpack.c.b16 %v11551, %v11548
    %v11639 = vpack.c.b16 %v11552, %v11549
    %v11640 = vpack.c.b16 %v11556, %v11553
    %v11641 = vpack.c.b16 %v11557, %v11554
    %v11642 = vpack.c.b16 %v11558, %v11555
    %v11643 = vpack.c.b16 %v11562, %v11559
    %v11644 = vpack.c.b16 %v11563, %v11560
    %v11645 = vpack.c.b16 %v11564, %v11561
    %v11646 = vpack.c.b16 %v11568, %v11565
    %v11647 = vpack.c.b16 %v11569, %v11566
    %v11648 = vpack.c.b16 %v11570, %v11567
    %v11649 = vpack.c.b16 %v11574, %v11571
    %v11650 = vpack.c.b16 %v11575, %v11572
    %v11651 = vpack.c.b16 %v11576, %v11573
    %v11652 = vpack.c.b16 %v11580, %v11577
    %v11653 = vpack.c.b16 %v11581, %v11578
    %v11654 = vpack.c.b16 %v11582, %v11579
    %v11655 = vpack.c.b16 %v11586, %v11583
    %v11656 = vpack.c.b16 %v11587, %v11584
    %v11657 = vpack.c.b16 %v11588, %v11585
    %v11658 = vpack.c.b16 %v11592, %v11589
    %v11659 = vpack.c.b16 %v11593, %v11590
    %v11660 = vpack.c.b16 %v11594, %v11591
    %v11661 = vpack.c.b16 %v11598, %v11595
    %v11662 = vpack.c.b16 %v11599, %v11596
    %v11663 = vpack.c.b16 %v11600, %v11597
    %v11664 = vpack.c.b16 %v11604, %v11601
    %v11665 = vpack.c.b16 %v11605, %v11602
    %v11666 = vpack.c.b16 %v11606, %v11603
    %v11667 = vpack.c.b16 %v11610, %v11607
    %v11668 = vpack.c.b16 %v11611, %v11608
    %v11669 = vpack.c.b16 %v11612, %v11609
    %v11670 = vpack.c.b16 %v11616, %v11613
    %v11671 = vpack.c.b16 %v11617, %v11614
    %v11672 = vpack.c.b16 %v11618, %v11615
    %v11673 = vpack.c.b16 %v11622, %v11619
    %v11674 = vpack.c.b16 %v11623, %v11620
    %v11675 = vpack.c.b16 %v11624, %v11621
    %v11676 = vpack.c.b16 %v11628, %v11625
    %v11677 = vpack.c.b16 %v11629, %v11626
    %v11678 = vpack.c.b16 %v11630, %v11627
    %v11775 = vunpack.c.l.b16 %v11423
    %v11776 = vunpack.c.l.b16 %v11424
    %v11777 = vunpack.c.l.b16 %v11425
    %v11778 = vunpack.c.l.b16 %v11426
    %v11779 = vunpack.c.l.b16 %v11427
    %v11780 = vunpack.c.l.b16 %v11428
    %v11781 = vunpack.c.l.b16 %v11429
    %v11782 = vunpack.c.l.b16 %v11430
    %v11783 = vunpack.c.l.b16 %v11431
    %v11784 = vunpack.c.l.b16 %v11432
    %v11785 = vunpack.c.l.b16 %v11433
    %v11786 = vunpack.c.l.b16 %v11434
    %v11787 = vunpack.c.l.b16 %v11435
    %v11788 = vunpack.c.l.b16 %v11436
    %v11789 = vunpack.c.l.b16 %v11437
    %v11790 = vunpack.c.l.b16 %v11438
    %v11791 = vunpack.c.l.b16 %v11439
    %v11792 = vunpack.c.l.b16 %v11440
    %v11793 = vunpack.c.l.b16 %v11441
    %v11794 = vunpack.c.l.b16 %v11442
    %v11795 = vunpack.c.l.b16 %v11443
    %v11796 = vunpack.c.l.b16 %v11444
    %v11797 = vunpack.c.l.b16 %v11445
    %v11798 = vunpack.c.l.b16 %v11446
    %v11799 = vunpack.c.l.b16 %v11447
    %v11800 = vunpack.c.l.b16 %v11448
    %v11801 = vunpack.c.l.b16 %v11449
    %v11802 = vunpack.c.l.b16 %v11450
    %v11803 = vunpack.c.l.b16 %v11451
    %v11804 = vunpack.c.l.b16 %v11452
    %v11805 = vunpack.c.l.b16 %v11453
    %v11806 = vunpack.c.l.b16 %v11454
    %v11807 = vunpack.c.l.b16 %v11455
    %v11808 = vunpack.c.l.b16 %v11456
    %v11809 = vunpack.c.l.b16 %v11457
    %v11810 = vunpack.c.l.b16 %v11458
    %v11811 = vunpack.c.l.b16 %v11459
    %v11812 = vunpack.c.l.b16 %v11460
    %v11813 = vunpack.c.l.b16 %v11461
    %v11814 = vunpack.c.l.b16 %v11462
    %v11815 = vunpack.c.l.b16 %v11463
    %v11816 = vunpack.c.l.b16 %v11464
    %v11817 = vunpack.c.l.b16 %v11465
    %v11818 = vunpack.c.l.b16 %v11466
    %v11819 = vunpack.c.l.b16 %v11467
    %v11820 = vunpack.c.l.b16 %v11468
    %v11821 = vunpack.c.l.b16 %v11469
    %v11822 = vunpack.c.l.b16 %v11470
    %v11823 = vpack.c.b16 %v11776, %v11775
    %v11824 = vpack.c.b16 %v11778, %v11777
    %v11825 = vpack.c.b16 %v11780, %v11779
    %v11826 = vpack.c.b16 %v11782, %v11781
    %v11827 = vpack.c.b16 %v11784, %v11783
    %v11828 = vpack.c.b16 %v11786, %v11785
    %v11829 = vpack.c.b16 %v11788, %v11787
    %v11830 = vpack.c.b16 %v11790, %v11789
    %v11831 = vpack.c.b16 %v11792, %v11791
    %v11832 = vpack.c.b16 %v11794, %v11793
    %v11833 = vpack.c.b16 %v11796, %v11795
    %v11834 = vpack.c.b16 %v11798, %v11797
    %v11835 = vpack.c.b16 %v11800, %v11799
    %v11836 = vpack.c.b16 %v11802, %v11801
    %v11837 = vpack.c.b16 %v11804, %v11803
    %v11838 = vpack.c.b16 %v11806, %v11805
    %v11839 = vpack.c.b16 %v11808, %v11807
    %v11840 = vpack.c.b16 %v11810, %v11809
    %v11841 = vpack.c.b16 %v11812, %v11811
    %v11842 = vpack.c.b16 %v11814, %v11813
    %v11843 = vpack.c.b16 %v11816, %v11815
    %v11844 = vpack.c.b16 %v11818, %v11817
    %v11845 = vpack.c.b16 %v11820, %v11819
    %v11846 = vpack.c.b16 %v11822, %v11821
    %11871 = vmatprep.subr.bf16.mxu0 0
    %11872 = vmatpush1.bf16.msra.mxu0 %v11830
    %11873 = vmatprep.subr.bf16.mxu0 0
    %11874 = vmatpush1.bf16.msra.mxu0 %v11829
    %11875 = vmatprep.subr.bf16.mxu0 0
    %11876 = vmatpush1.bf16.msra.mxu0 %v11828
    %11877 = vmatprep.subr.bf16.mxu0 0
    %11878 = vmatpush1.bf16.msra.mxu0 %v11827
    %11879 = vmatprep.subr.bf16.mxu0 0
    %11880 = vmatpush1.bf16.msra.mxu0 %v11826
    %11881 = vmatprep.subr.bf16.mxu0 0
    %11882 = vmatpush1.bf16.msra.mxu0 %v11825
    %11883 = vmatprep.subr.bf16.mxu0 0
    %11884 = vmatpush1.bf16.msra.mxu0 %v11824
    %11885 = vmatprep.subr.bf16.mxu0 0
    %11886 = vmatpush1.bf16.msra.mxu0 %v11823
    %11887 = vmatprep.subr.bf16.mxu0 0
    %11888 = vmatpush2.bf16.msra.mxu0 %v11838
    %11889 = vmatprep.subr.bf16.mxu0 0
    %11890 = vmatpush2.bf16.msra.mxu0 %v11837
    %11891 = vmatprep.subr.bf16.mxu0 0
    %11892 = vmatpush2.bf16.msra.mxu0 %v11836
    %11893 = vmatprep.subr.bf16.mxu0 0
    %11894 = vmatpush2.bf16.msra.mxu0 %v11835
    %11895 = vmatprep.subr.bf16.mxu0 0
    %11896 = vmatpush2.bf16.msra.mxu0 %v11834
    %11897 = vmatprep.subr.bf16.mxu0 0
    %11898 = vmatpush2.bf16.msra.mxu0 %v11833
    %11899 = vmatprep.subr.bf16.mxu0 0
    %11900 = vmatpush2.bf16.msra.mxu0 %v11832
    %11901 = vmatprep.subr.bf16.mxu0 0
    %11902 = vmatpush2.bf16.msra.mxu0 %v11831
    %11903 = vmatprep.mubr.bf16.mxu0 %v11632
    %11904 = vmatmul.mubr.bf16.gmra.mxu0 %v11631
    %v11905 = vpop.f32.mrf.mxu0
    %v11906 = vadd.f32 0.0, %v11905
    %v11907 = vpop.f32.mrf.mxu0
    %v11908 = vpop.f32.mrf.mxu0
    %v11909 = vadd.f32 0.0, %v11908
    %v11910 = vpop.f32.mrf.mxu0
    %11911 = vmatprep.mubr.bf16.mxu0 %v11635
    %11912 = vmatmul.mubr.bf16.gmra.mxu0 %v11634
    %v11913 = vpop.f32.mrf.mxu0
    %v11914 = vadd.f32 0.0, %v11913
    %v11915 = vpop.f32.mrf.mxu0
    %v11916 = vpop.f32.mrf.mxu0
    %v11917 = vadd.f32 0.0, %v11916
    %v11918 = vpop.f32.mrf.mxu0
    %11919 = vmatprep.mubr.bf16.mxu0 %v11638
    %11920 = vmatmul.mubr.bf16.gmra.mxu0 %v11637
    %v11921 = vpop.f32.mrf.mxu0
    %v11922 = vadd.f32 0.0, %v11921
    %v11923 = vpop.f32.mrf.mxu0
    %v11924 = vpop.f32.mrf.mxu0
    %v11925 = vadd.f32 0.0, %v11924
    %v11926 = vpop.f32.mrf.mxu0
    %11927 = vmatprep.mubr.bf16.mxu0 %v11641
    %11928 = vmatmul.mubr.bf16.gmra.mxu0 %v11640
    %v11929 = vpop.f32.mrf.mxu0
    %v11930 = vadd.f32 0.0, %v11929
    %v11931 = vpop.f32.mrf.mxu0
    %v11932 = vpop.f32.mrf.mxu0
    %v11933 = vadd.f32 0.0, %v11932
    %v11934 = vpop.f32.mrf.mxu0
    %11935 = vmatprep.mubr.bf16.mxu0 %v11644
    %11936 = vmatmul.mubr.bf16.gmra.mxu0 %v11643
    %v11937 = vpop.f32.mrf.mxu0
    %v11938 = vadd.f32 0.0, %v11937
    %v11939 = vpop.f32.mrf.mxu0
    %v11940 = vpop.f32.mrf.mxu0
    %v11941 = vadd.f32 0.0, %v11940
    %v11942 = vpop.f32.mrf.mxu0
    %11943 = vmatprep.mubr.bf16.mxu0 %v11647
    %11944 = vmatmul.mubr.bf16.gmra.mxu0 %v11646
    %v11945 = vpop.f32.mrf.mxu0
    %v11946 = vadd.f32 0.0, %v11945
    %v11947 = vpop.f32.mrf.mxu0
    %v11948 = vpop.f32.mrf.mxu0
    %v11949 = vadd.f32 0.0, %v11948
    %v11950 = vpop.f32.mrf.mxu0
    %11951 = vmatprep.mubr.bf16.mxu0 %v11650
    %11952 = vmatmul.mubr.bf16.gmra.mxu0 %v11649
    %v11953 = vpop.f32.mrf.mxu0
    %v11954 = vadd.f32 0.0, %v11953
    %v11955 = vpop.f32.mrf.mxu0
    %v11956 = vpop.f32.mrf.mxu0
    %v11957 = vadd.f32 0.0, %v11956
    %v11958 = vpop.f32.mrf.mxu0
    %11959 = vmatprep.mubr.bf16.mxu0 %v11653
    %11960 = vmatmul.mubr.bf16.gmra.mxu0 %v11652
    %v11961 = vpop.f32.mrf.mxu0
    %v11962 = vadd.f32 0.0, %v11961
    %v11963 = vpop.f32.mrf.mxu0
    %v11964 = vpop.f32.mrf.mxu0
    %v11965 = vadd.f32 0.0, %v11964
    %v11966 = vpop.f32.mrf.mxu0
    %11967 = vmatprep.mubr.bf16.mxu0 %v11656
    %11968 = vmatmul.mubr.bf16.gmra.mxu0 %v11655
    %v11969 = vpop.f32.mrf.mxu0
    %v11970 = vadd.f32 0.0, %v11969
    %v11971 = vpop.f32.mrf.mxu0
    %v11972 = vpop.f32.mrf.mxu0
    %v11973 = vadd.f32 0.0, %v11972
    %v11974 = vpop.f32.mrf.mxu0
    %11975 = vmatprep.mubr.bf16.mxu0 %v11659
    %11976 = vmatmul.mubr.bf16.gmra.mxu0 %v11658
    %v11977 = vpop.f32.mrf.mxu0
    %v11978 = vadd.f32 0.0, %v11977
    %v11979 = vpop.f32.mrf.mxu0
    %v11980 = vpop.f32.mrf.mxu0
    %v11981 = vadd.f32 0.0, %v11980
    %v11982 = vpop.f32.mrf.mxu0
    %11983 = vmatprep.mubr.bf16.mxu0 %v11662
    %11984 = vmatmul.mubr.bf16.gmra.mxu0 %v11661
    %v11985 = vpop.f32.mrf.mxu0
    %v11986 = vadd.f32 0.0, %v11985
    %v11987 = vpop.f32.mrf.mxu0
    %v11988 = vpop.f32.mrf.mxu0
    %v11989 = vadd.f32 0.0, %v11988
    %v11990 = vpop.f32.mrf.mxu0
    %11991 = vmatprep.mubr.bf16.mxu0 %v11665
    %11992 = vmatmul.mubr.bf16.gmra.mxu0 %v11664
    %v11993 = vpop.f32.mrf.mxu0
    %v11994 = vadd.f32 0.0, %v11993
    %v11995 = vpop.f32.mrf.mxu0
    %v11996 = vpop.f32.mrf.mxu0
    %v11997 = vadd.f32 0.0, %v11996
    %v11998 = vpop.f32.mrf.mxu0
    %11999 = vmatprep.mubr.bf16.mxu0 %v11668
    %12000 = vmatmul.mubr.bf16.gmra.mxu0 %v11667
    %v12001 = vpop.f32.mrf.mxu0
    %v12002 = vadd.f32 0.0, %v12001
    %v12003 = vpop.f32.mrf.mxu0
    %v12004 = vpop.f32.mrf.mxu0
    %v12005 = vadd.f32 0.0, %v12004
    %v12006 = vpop.f32.mrf.mxu0
    %12007 = vmatprep.mubr.bf16.mxu0 %v11671
    %12008 = vmatmul.mubr.bf16.gmra.mxu0 %v11670
    %v12009 = vpop.f32.mrf.mxu0
    %v12010 = vadd.f32 0.0, %v12009
    %v12011 = vpop.f32.mrf.mxu0
    %v12012 = vpop.f32.mrf.mxu0
    %v12013 = vadd.f32 0.0, %v12012
    %v12014 = vpop.f32.mrf.mxu0
    %12015 = vmatprep.mubr.bf16.mxu0 %v11674
    %12016 = vmatmul.mubr.bf16.gmra.mxu0 %v11673
    %v12017 = vpop.f32.mrf.mxu0
    %v12018 = vadd.f32 0.0, %v12017
    %v12019 = vpop.f32.mrf.mxu0
    %v12020 = vpop.f32.mrf.mxu0
    %v12021 = vadd.f32 0.0, %v12020
    %v12022 = vpop.f32.mrf.mxu0
    %12023 = vmatprep.mubr.bf16.mxu0 %v11677
    %12024 = vmatmul.mubr.bf16.gmra.mxu0 %v11676
    %v12025 = vpop.f32.mrf.mxu0
    %v12026 = vadd.f32 0.0, %v12025
    %v12027 = vpop.f32.mrf.mxu0
    %v12028 = vpop.f32.mrf.mxu0
    %v12029 = vadd.f32 0.0, %v12028
    %v12030 = vpop.f32.mrf.mxu0
    %12031 = vdwg.mxu0
    %12032 = vmatprep.subr.bf16.mxu0 0
    %12033 = vmatpush1.bf16.msra.mxu0 %v11846
    %12034 = vmatprep.subr.bf16.mxu0 0
    %12035 = vmatpush1.bf16.msra.mxu0 %v11845
    %12036 = vmatprep.subr.bf16.mxu0 0
    %12037 = vmatpush1.bf16.msra.mxu0 %v11844
    %12038 = vmatprep.subr.bf16.mxu0 0
    %12039 = vmatpush1.bf16.msra.mxu0 %v11843
    %12040 = vmatprep.subr.bf16.mxu0 0
    %12041 = vmatpush1.bf16.msra.mxu0 %v11842
    %12042 = vmatprep.subr.bf16.mxu0 0
    %12043 = vmatpush1.bf16.msra.mxu0 %v11841
    %12044 = vmatprep.subr.bf16.mxu0 0
    %12045 = vmatpush1.bf16.msra.mxu0 %v11840
    %12046 = vmatprep.subr.bf16.mxu0 0
    %12047 = vmatpush1.bf16.msra.mxu0 %v11839
    %12048 = vmatprep.subr.bf16.mxu0 0
    %12049 = vmatpush2.bf16.msra.mxu0 0
    %12050 = vmatprep.subr.bf16.mxu0 0
    %12051 = vmatpush2.bf16.msra.mxu0 0
    %12052 = vmatprep.subr.bf16.mxu0 0
    %12053 = vmatpush2.bf16.msra.mxu0 0
    %12054 = vmatprep.subr.bf16.mxu0 0
    %12055 = vmatpush2.bf16.msra.mxu0 0
    %12056 = vmatprep.subr.bf16.mxu0 0
    %12057 = vmatpush2.bf16.msra.mxu0 0
    %12058 = vmatprep.subr.bf16.mxu0 0
    %12059 = vmatpush2.bf16.msra.mxu0 0
    %12060 = vmatprep.subr.bf16.mxu0 0
    %12061 = vmatpush2.bf16.msra.mxu0 0
    %12062 = vmatprep.subr.bf16.mxu0 0
    %12063 = vmatpush2.bf16.msra.mxu0 0
    %12064 = vmatprep.mubr.bf16.mxu0 0
    %12065 = vmatmul.mubr.bf16.gmra.mxu0 %v11633
    %v12066 = vpop.f32.mrf.mxu0
    %v12067 = vadd.f32 %v11906, %v12066
    %v12068 = vpop.f32.mrf.mxu0
    %v12069 = vpop.f32.mrf.mxu0
    %v12070 = vadd.f32 %v11909, %v12069
    %v12071 = vpop.f32.mrf.mxu0
    %12072 = vmatprep.mubr.bf16.mxu0 0
    %12073 = vmatmul.mubr.bf16.gmra.mxu0 %v11636
    %v12074 = vpop.f32.mrf.mxu0
    %v12075 = vadd.f32 %v11914, %v12074
    %v12076 = vpop.f32.mrf.mxu0
    %v12077 = vpop.f32.mrf.mxu0
    %v12078 = vadd.f32 %v11917, %v12077
    %v12079 = vpop.f32.mrf.mxu0
    %12080 = vmatprep.mubr.bf16.mxu0 0
    %12081 = vmatmul.mubr.bf16.gmra.mxu0 %v11639
    %v12082 = vpop.f32.mrf.mxu0
    %v12083 = vadd.f32 %v11922, %v12082
    %v12084 = vpop.f32.mrf.mxu0
    %v12085 = vpop.f32.mrf.mxu0
    %v12086 = vadd.f32 %v11925, %v12085
    %v12087 = vpop.f32.mrf.mxu0
    %12088 = vmatprep.mubr.bf16.mxu0 0
    %12089 = vmatmul.mubr.bf16.gmra.mxu0 %v11642
    %v12090 = vpop.f32.mrf.mxu0
    %v12091 = vadd.f32 %v11930, %v12090
    %v12092 = vpop.f32.mrf.mxu0
    %v12093 = vpop.f32.mrf.mxu0
    %v12094 = vadd.f32 %v11933, %v12093
    %v12095 = vpop.f32.mrf.mxu0
    %12096 = vmatprep.mubr.bf16.mxu0 0
    %12097 = vmatmul.mubr.bf16.gmra.mxu0 %v11645
    %v12098 = vpop.f32.mrf.mxu0
    %v12099 = vadd.f32 %v11938, %v12098
    %v12100 = vpop.f32.mrf.mxu0
    %v12101 = vpop.f32.mrf.mxu0
    %v12102 = vadd.f32 %v11941, %v12101
    %v12103 = vpop.f32.mrf.mxu0
    %12104 = vmatprep.mubr.bf16.mxu0 0
    %12105 = vmatmul.mubr.bf16.gmra.mxu0 %v11648
    %v12106 = vpop.f32.mrf.mxu0
    %v12107 = vadd.f32 %v11946, %v12106
    %v12108 = vpop.f32.mrf.mxu0
    %v12109 = vpop.f32.mrf.mxu0
    %v12110 = vadd.f32 %v11949, %v12109
    %v12111 = vpop.f32.mrf.mxu0
    %12112 = vmatprep.mubr.bf16.mxu0 0
    %12113 = vmatmul.mubr.bf16.gmra.mxu0 %v11651
    %v12114 = vpop.f32.mrf.mxu0
    %v12115 = vadd.f32 %v11954, %v12114
    %v12116 = vpop.f32.mrf.mxu0
    %v12117 = vpop.f32.mrf.mxu0
    %v12118 = vadd.f32 %v11957, %v12117
    %v12119 = vpop.f32.mrf.mxu0
    %12120 = vmatprep.mubr.bf16.mxu0 0
    %12121 = vmatmul.mubr.bf16.gmra.mxu0 %v11654
    %v12122 = vpop.f32.mrf.mxu0
    %v12123 = vadd.f32 %v11962, %v12122
    %v12124 = vpop.f32.mrf.mxu0
    %v12125 = vpop.f32.mrf.mxu0
    %v12126 = vadd.f32 %v11965, %v12125
    %v12127 = vpop.f32.mrf.mxu0
    %12128 = vmatprep.mubr.bf16.mxu0 0
    %12129 = vmatmul.mubr.bf16.gmra.mxu0 %v11657
    %v12130 = vpop.f32.mrf.mxu0
    %v12131 = vadd.f32 %v11970, %v12130
    %v12132 = vpop.f32.mrf.mxu0
    %v12133 = vpop.f32.mrf.mxu0
    %v12134 = vadd.f32 %v11973, %v12133
    %v12135 = vpop.f32.mrf.mxu0
    %12136 = vmatprep.mubr.bf16.mxu0 0
    %12137 = vmatmul.mubr.bf16.gmra.mxu0 %v11660
    %v12138 = vpop.f32.mrf.mxu0
    %v12139 = vadd.f32 %v11978, %v12138
    %v12140 = vpop.f32.mrf.mxu0
    %v12141 = vpop.f32.mrf.mxu0
    %v12142 = vadd.f32 %v11981, %v12141
    %v12143 = vpop.f32.mrf.mxu0
    %12144 = vmatprep.mubr.bf16.mxu0 0
    %12145 = vmatmul.mubr.bf16.gmra.mxu0 %v11663
    %v12146 = vpop.f32.mrf.mxu0
    %v12147 = vadd.f32 %v11986, %v12146
    %v12148 = vpop.f32.mrf.mxu0
    %v12149 = vpop.f32.mrf.mxu0
    %v12150 = vadd.f32 %v11989, %v12149
    %v12151 = vpop.f32.mrf.mxu0
    %12152 = vmatprep.mubr.bf16.mxu0 0
    %12153 = vmatmul.mubr.bf16.gmra.mxu0 %v11666
    %v12154 = vpop.f32.mrf.mxu0
    %v12155 = vadd.f32 %v11994, %v12154
    %v12156 = vpop.f32.mrf.mxu0
    %v12157 = vpop.f32.mrf.mxu0
    %v12158 = vadd.f32 %v11997, %v12157
    %v12159 = vpop.f32.mrf.mxu0
    %12160 = vmatprep.mubr.bf16.mxu0 0
    %12161 = vmatmul.mubr.bf16.gmra.mxu0 %v11669
    %v12162 = vpop.f32.mrf.mxu0
    %v12163 = vadd.f32 %v12002, %v12162
    %v12164 = vpop.f32.mrf.mxu0
    %v12165 = vpop.f32.mrf.mxu0
    %v12166 = vadd.f32 %v12005, %v12165
    %v12167 = vpop.f32.mrf.mxu0
    %12168 = vmatprep.mubr.bf16.mxu0 0
    %12169 = vmatmul.mubr.bf16.gmra.mxu0 %v11672
    %v12170 = vpop.f32.mrf.mxu0
    %v12171 = vadd.f32 %v12010, %v12170
    %v12172 = vpop.f32.mrf.mxu0
    %v12173 = vpop.f32.mrf.mxu0
    %v12174 = vadd.f32 %v12013, %v12173
    %v12175 = vpop.f32.mrf.mxu0
    %12176 = vmatprep.mubr.bf16.mxu0 0
    %12177 = vmatmul.mubr.bf16.gmra.mxu0 %v11675
    %v12178 = vpop.f32.mrf.mxu0
    %v12179 = vadd.f32 %v12018, %v12178
    %v12180 = vpop.f32.mrf.mxu0
    %v12181 = vpop.f32.mrf.mxu0
    %v12182 = vadd.f32 %v12021, %v12181
    %v12183 = vpop.f32.mrf.mxu0
    %12184 = vmatprep.mubr.bf16.mxu0 0
    %12185 = vmatmul.mubr.bf16.gmra.mxu0 %v11678
    %v12186 = vpop.f32.mrf.mxu0
    %v12187 = vadd.f32 %v12026, %v12186
    %v12188 = vpop.f32.mrf.mxu0
    %v12189 = vpop.f32.mrf.mxu0
    %v12190 = vadd.f32 %v12029, %v12189
    %v12191 = vpop.f32.mrf.mxu0
    %12192 = vdwg.mxu0
    %v12257 = vunpack.c.l.b16 %v11247
    %v12258 = vunpack.c.h.b16 %v11247
    %v12259 = vunpack.c.l.b16 %v11248
    %v12260 = vunpack.c.l.b16 %v11249
    %v12261 = vunpack.c.h.b16 %v11249
    %v12262 = vunpack.c.l.b16 %v11250
    %v12263 = vunpack.c.l.b16 %v11251
    %v12264 = vunpack.c.h.b16 %v11251
    %v12265 = vunpack.c.l.b16 %v11252
    %v12266 = vunpack.c.l.b16 %v11253
    %v12267 = vunpack.c.h.b16 %v11253
    %v12268 = vunpack.c.l.b16 %v11254
    %v12269 = vunpack.c.l.b16 %v11255
    %v12270 = vunpack.c.h.b16 %v11255
    %v12271 = vunpack.c.l.b16 %v11256
    %v12272 = vunpack.c.l.b16 %v11257
    %v12273 = vunpack.c.h.b16 %v11257
    %v12274 = vunpack.c.l.b16 %v11258
    %v12275 = vunpack.c.l.b16 %v11259
    %v12276 = vunpack.c.h.b16 %v11259
    %v12277 = vunpack.c.l.b16 %v11260
    %v12278 = vunpack.c.l.b16 %v11261
    %v12279 = vunpack.c.h.b16 %v11261
    %v12280 = vunpack.c.l.b16 %v11262
    %v12281 = vunpack.c.l.b16 %v11263
    %v12282 = vunpack.c.h.b16 %v11263
    %v12283 = vunpack.c.l.b16 %v11264
    %v12284 = vunpack.c.l.b16 %v11265
    %v12285 = vunpack.c.h.b16 %v11265
    %v12286 = vunpack.c.l.b16 %v11266
    %v12287 = vunpack.c.l.b16 %v11267
    %v12288 = vunpack.c.h.b16 %v11267
    %v12289 = vunpack.c.l.b16 %v11268
    %v12290 = vunpack.c.l.b16 %v11269
    %v12291 = vunpack.c.h.b16 %v11269
    %v12292 = vunpack.c.l.b16 %v11270
    %v12293 = vunpack.c.l.b16 %v11271
    %v12294 = vunpack.c.h.b16 %v11271
    %v12295 = vunpack.c.l.b16 %v11272
    %v12296 = vunpack.c.l.b16 %v11273
    %v12297 = vunpack.c.h.b16 %v11273
    %v12298 = vunpack.c.l.b16 %v11274
    %v12299 = vunpack.c.l.b16 %v11275
    %v12300 = vunpack.c.h.b16 %v11275
    %v12301 = vunpack.c.l.b16 %v11276
    %v12302 = vunpack.c.l.b16 %v11277
    %v12303 = vunpack.c.h.b16 %v11277
    %v12304 = vunpack.c.l.b16 %v11278
    %v12305 = vunpack.c.l.b16 %v11279
    %v12306 = vunpack.c.h.b16 %v11279
    %v12307 = vunpack.c.l.b16 %v11280
    %v12308 = vunpack.c.l.b16 %v11281
    %v12309 = vunpack.c.h.b16 %v11281
    %v12310 = vunpack.c.l.b16 %v11282
    %v12311 = vunpack.c.l.b16 %v11283
    %v12312 = vunpack.c.h.b16 %v11283
    %v12313 = vunpack.c.l.b16 %v11284
    %v12314 = vunpack.c.l.b16 %v11285
    %v12315 = vunpack.c.h.b16 %v11285
    %v12316 = vunpack.c.l.b16 %v11286
    %v12317 = vunpack.c.l.b16 %v11287
    %v12318 = vunpack.c.h.b16 %v11287
    %v12319 = vunpack.c.l.b16 %v11288
    %v12320 = vunpack.c.l.b16 %v11289
    %v12321 = vunpack.c.h.b16 %v11289
    %v12322 = vunpack.c.l.b16 %v11290
    %v12323 = vunpack.c.l.b16 %v11291
    %v12324 = vunpack.c.h.b16 %v11291
    %v12325 = vunpack.c.l.b16 %v11292
    %v12326 = vunpack.c.l.b16 %v11293
    %v12327 = vunpack.c.h.b16 %v11293
    %v12328 = vunpack.c.l.b16 %v11294
    %v12329 = vunpack.c.l.b16 %v11295
    %v12330 = vunpack.c.h.b16 %v11295
    %v12331 = vunpack.c.l.b16 %v11296
    %v12332 = vunpack.c.l.b16 %v11297
    %v12333 = vunpack.c.h.b16 %v11297
    %v12334 = vunpack.c.l.b16 %v11298
    %v12335 = vunpack.c.l.b16 %v11299
    %v12336 = vunpack.c.h.b16 %v11299
    %v12337 = vunpack.c.l.b16 %v11300
    %v12338 = vunpack.c.l.b16 %v11301
    %v12339 = vunpack.c.h.b16 %v11301
    %v12340 = vunpack.c.l.b16 %v11302
    %v12341 = vunpack.c.l.b16 %v11303
    %v12342 = vunpack.c.h.b16 %v11303
    %v12343 = vunpack.c.l.b16 %v11304
    %v12344 = vunpack.c.l.b16 %v11305
    %v12345 = vunpack.c.h.b16 %v11305
    %v12346 = vunpack.c.l.b16 %v11306
    %v12347 = vunpack.c.l.b16 %v11307
    %v12348 = vunpack.c.h.b16 %v11307
    %v12349 = vunpack.c.l.b16 %v11308
    %v12350 = vunpack.c.l.b16 %v11309
    %v12351 = vunpack.c.h.b16 %v11309
    %v12352 = vunpack.c.l.b16 %v11310
    %v12353 = vpack.c.b16 %v12260, %v12257
    %v12354 = vpack.c.b16 %v12261, %v12258
    %v12355 = vpack.c.b16 %v12262, %v12259
    %v12356 = vpack.c.b16 %v12266, %v12263
    %v12357 = vpack.c.b16 %v12267, %v12264
    %v12358 = vpack.c.b16 %v12268, %v12265
    %v12359 = vpack.c.b16 %v12272, %v12269
    %v12360 = vpack.c.b16 %v12273, %v12270
    %v12361 = vpack.c.b16 %v12274, %v12271
    %v12362 = vpack.c.b16 %v12278, %v12275
    %v12363 = vpack.c.b16 %v12279, %v12276
    %v12364 = vpack.c.b16 %v12280, %v12277
    %v12365 = vpack.c.b16 %v12284, %v12281
    %v12366 = vpack.c.b16 %v12285, %v12282
    %v12367 = vpack.c.b16 %v12286, %v12283
    %v12368 = vpack.c.b16 %v12290, %v12287
    %v12369 = vpack.c.b16 %v12291, %v12288
    %v12370 = vpack.c.b16 %v12292, %v12289
    %v12371 = vpack.c.b16 %v12296, %v12293
    %v12372 = vpack.c.b16 %v12297, %v12294
    %v12373 = vpack.c.b16 %v12298, %v12295
    %v12374 = vpack.c.b16 %v12302, %v12299
    %v12375 = vpack.c.b16 %v12303, %v12300
    %v12376 = vpack.c.b16 %v12304, %v12301
    %v12377 = vpack.c.b16 %v12308, %v12305
    %v12378 = vpack.c.b16 %v12309, %v12306
    %v12379 = vpack.c.b16 %v12310, %v12307
    %v12380 = vpack.c.b16 %v12314, %v12311
    %v12381 = vpack.c.b16 %v12315, %v12312
    %v12382 = vpack.c.b16 %v12316, %v12313
    %v12383 = vpack.c.b16 %v12320, %v12317
    %v12384 = vpack.c.b16 %v12321, %v12318
    %v12385 = vpack.c.b16 %v12322, %v12319
    %v12386 = vpack.c.b16 %v12326, %v12323
    %v12387 = vpack.c.b16 %v12327, %v12324
    %v12388 = vpack.c.b16 %v12328, %v12325
    %v12389 = vpack.c.b16 %v12332, %v12329
    %v12390 = vpack.c.b16 %v12333, %v12330
    %v12391 = vpack.c.b16 %v12334, %v12331
    %v12392 = vpack.c.b16 %v12338, %v12335
    %v12393 = vpack.c.b16 %v12339, %v12336
    %v12394 = vpack.c.b16 %v12340, %v12337
    %v12395 = vpack.c.b16 %v12344, %v12341
    %v12396 = vpack.c.b16 %v12345, %v12342
    %v12397 = vpack.c.b16 %v12346, %v12343
    %v12398 = vpack.c.b16 %v12350, %v12347
    %v12399 = vpack.c.b16 %v12351, %v12348
    %v12400 = vpack.c.b16 %v12352, %v12349
    %v12497 = vunpack.c.l.b16 %v11311
    %v12498 = vunpack.c.l.b16 %v11312
    %v12499 = vunpack.c.l.b16 %v11313
    %v12500 = vunpack.c.l.b16 %v11314
    %v12501 = vunpack.c.l.b16 %v11315
    %v12502 = vunpack.c.l.b16 %v11316
    %v12503 = vunpack.c.l.b16 %v11317
    %v12504 = vunpack.c.l.b16 %v11318
    %v12505 = vunpack.c.l.b16 %v11319
    %v12506 = vunpack.c.l.b16 %v11320
    %v12507 = vunpack.c.l.b16 %v11321
    %v12508 = vunpack.c.l.b16 %v11322
    %v12509 = vunpack.c.l.b16 %v11323
    %v12510 = vunpack.c.l.b16 %v11324
    %v12511 = vunpack.c.l.b16 %v11325
    %v12512 = vunpack.c.l.b16 %v11326
    %v12513 = vunpack.c.l.b16 %v11327
    %v12514 = vunpack.c.l.b16 %v11328
    %v12515 = vunpack.c.l.b16 %v11329
    %v12516 = vunpack.c.l.b16 %v11330
    %v12517 = vunpack.c.l.b16 %v11331
    %v12518 = vunpack.c.l.b16 %v11332
    %v12519 = vunpack.c.l.b16 %v11333
    %v12520 = vunpack.c.l.b16 %v11334
    %v12521 = vunpack.c.l.b16 %v11335
    %v12522 = vunpack.c.l.b16 %v11336
    %v12523 = vunpack.c.l.b16 %v11337
    %v12524 = vunpack.c.l.b16 %v11338
    %v12525 = vunpack.c.l.b16 %v11339
    %v12526 = vunpack.c.l.b16 %v11340
    %v12527 = vunpack.c.l.b16 %v11341
    %v12528 = vunpack.c.l.b16 %v11342
    %v12529 = vunpack.c.l.b16 %v11343
    %v12530 = vunpack.c.l.b16 %v11344
    %v12531 = vunpack.c.l.b16 %v11345
    %v12532 = vunpack.c.l.b16 %v11346
    %v12533 = vunpack.c.l.b16 %v11347
    %v12534 = vunpack.c.l.b16 %v11348
    %v12535 = vunpack.c.l.b16 %v11349
    %v12536 = vunpack.c.l.b16 %v11350
    %v12537 = vunpack.c.l.b16 %v11351
    %v12538 = vunpack.c.l.b16 %v11352
    %v12539 = vunpack.c.l.b16 %v11353
    %v12540 = vunpack.c.l.b16 %v11354
    %v12541 = vunpack.c.l.b16 %v11355
    %v12542 = vunpack.c.l.b16 %v11356
    %v12543 = vunpack.c.l.b16 %v11357
    %v12544 = vunpack.c.l.b16 %v11358
    %v12545 = vpack.c.b16 %v12498, %v12497
    %v12546 = vpack.c.b16 %v12500, %v12499
    %v12547 = vpack.c.b16 %v12502, %v12501
    %v12548 = vpack.c.b16 %v12504, %v12503
    %v12549 = vpack.c.b16 %v12506, %v12505
    %v12550 = vpack.c.b16 %v12508, %v12507
    %v12551 = vpack.c.b16 %v12510, %v12509
    %v12552 = vpack.c.b16 %v12512, %v12511
    %v12553 = vpack.c.b16 %v12514, %v12513
    %v12554 = vpack.c.b16 %v12516, %v12515
    %v12555 = vpack.c.b16 %v12518, %v12517
    %v12556 = vpack.c.b16 %v12520, %v12519
    %v12557 = vpack.c.b16 %v12522, %v12521
    %v12558 = vpack.c.b16 %v12524, %v12523
    %v12559 = vpack.c.b16 %v12526, %v12525
    %v12560 = vpack.c.b16 %v12528, %v12527
    %v12561 = vpack.c.b16 %v12530, %v12529
    %v12562 = vpack.c.b16 %v12532, %v12531
    %v12563 = vpack.c.b16 %v12534, %v12533
    %v12564 = vpack.c.b16 %v12536, %v12535
    %v12565 = vpack.c.b16 %v12538, %v12537
    %v12566 = vpack.c.b16 %v12540, %v12539
    %v12567 = vpack.c.b16 %v12542, %v12541
    %v12568 = vpack.c.b16 %v12544, %v12543
    %12593 = vmatprep.subr.bf16.mxu0 0
    %12594 = vmatpush1.bf16.msra.mxu0 %v12552
    %12595 = vmatprep.subr.bf16.mxu0 0
    %12596 = vmatpush1.bf16.msra.mxu0 %v12551
    %12597 = vmatprep.subr.bf16.mxu0 0
    %12598 = vmatpush1.bf16.msra.mxu0 %v12550
    %12599 = vmatprep.subr.bf16.mxu0 0
    %12600 = vmatpush1.bf16.msra.mxu0 %v12549
    %12601 = vmatprep.subr.bf16.mxu0 0
    %12602 = vmatpush1.bf16.msra.mxu0 %v12548
    %12603 = vmatprep.subr.bf16.mxu0 0
    %12604 = vmatpush1.bf16.msra.mxu0 %v12547
    %12605 = vmatprep.subr.bf16.mxu0 0
    %12606 = vmatpush1.bf16.msra.mxu0 %v12546
    %12607 = vmatprep.subr.bf16.mxu0 0
    %12608 = vmatpush1.bf16.msra.mxu0 %v12545
    %12609 = vmatprep.subr.bf16.mxu0 0
    %12610 = vmatpush2.bf16.msra.mxu0 %v12560
    %12611 = vmatprep.subr.bf16.mxu0 0
    %12612 = vmatpush2.bf16.msra.mxu0 %v12559
    %12613 = vmatprep.subr.bf16.mxu0 0
    %12614 = vmatpush2.bf16.msra.mxu0 %v12558
    %12615 = vmatprep.subr.bf16.mxu0 0
    %12616 = vmatpush2.bf16.msra.mxu0 %v12557
    %12617 = vmatprep.subr.bf16.mxu0 0
    %12618 = vmatpush2.bf16.msra.mxu0 %v12556
    %12619 = vmatprep.subr.bf16.mxu0 0
    %12620 = vmatpush2.bf16.msra.mxu0 %v12555
    %12621 = vmatprep.subr.bf16.mxu0 0
    %12622 = vmatpush2.bf16.msra.mxu0 %v12554
    %12623 = vmatprep.subr.bf16.mxu0 0
    %12624 = vmatpush2.bf16.msra.mxu0 %v12553
    %12625 = vmatprep.mubr.bf16.mxu0 %v12354
    %12626 = vmatmul.mubr.bf16.gmra.mxu0 %v12353
    %v12627 = vpop.f32.mrf.mxu0
    %v12628 = vadd.f32 %v12067, %v12627
    %v12629 = vpop.f32.mrf.mxu0
    %v12630 = vpop.f32.mrf.mxu0
    %v12631 = vadd.f32 %v12070, %v12630
    %v12632 = vpop.f32.mrf.mxu0
    %12633 = vmatprep.mubr.bf16.mxu0 %v12357
    %12634 = vmatmul.mubr.bf16.gmra.mxu0 %v12356
    %v12635 = vpop.f32.mrf.mxu0
    %v12636 = vadd.f32 %v12075, %v12635
    %v12637 = vpop.f32.mrf.mxu0
    %v12638 = vpop.f32.mrf.mxu0
    %v12639 = vadd.f32 %v12078, %v12638
    %v12640 = vpop.f32.mrf.mxu0
    %12641 = vmatprep.mubr.bf16.mxu0 %v12360
    %12642 = vmatmul.mubr.bf16.gmra.mxu0 %v12359
    %v12643 = vpop.f32.mrf.mxu0
    %v12644 = vadd.f32 %v12083, %v12643
    %v12645 = vpop.f32.mrf.mxu0
    %v12646 = vpop.f32.mrf.mxu0
    %v12647 = vadd.f32 %v12086, %v12646
    %v12648 = vpop.f32.mrf.mxu0
    %12649 = vmatprep.mubr.bf16.mxu0 %v12363
    %12650 = vmatmul.mubr.bf16.gmra.mxu0 %v12362
    %v12651 = vpop.f32.mrf.mxu0
    %v12652 = vadd.f32 %v12091, %v12651
    %v12653 = vpop.f32.mrf.mxu0
    %v12654 = vpop.f32.mrf.mxu0
    %v12655 = vadd.f32 %v12094, %v12654
    %v12656 = vpop.f32.mrf.mxu0
    %12657 = vmatprep.mubr.bf16.mxu0 %v12366
    %12658 = vmatmul.mubr.bf16.gmra.mxu0 %v12365
    %v12659 = vpop.f32.mrf.mxu0
    %v12660 = vadd.f32 %v12099, %v12659
    %v12661 = vpop.f32.mrf.mxu0
    %v12662 = vpop.f32.mrf.mxu0
    %v12663 = vadd.f32 %v12102, %v12662
    %v12664 = vpop.f32.mrf.mxu0
    %12665 = vmatprep.mubr.bf16.mxu0 %v12369
    %12666 = vmatmul.mubr.bf16.gmra.mxu0 %v12368
    %v12667 = vpop.f32.mrf.mxu0
    %v12668 = vadd.f32 %v12107, %v12667
    %v12669 = vpop.f32.mrf.mxu0
    %v12670 = vpop.f32.mrf.mxu0
    %v12671 = vadd.f32 %v12110, %v12670
    %v12672 = vpop.f32.mrf.mxu0
    %12673 = vmatprep.mubr.bf16.mxu0 %v12372
    %12674 = vmatmul.mubr.bf16.gmra.mxu0 %v12371
    %v12675 = vpop.f32.mrf.mxu0
    %v12676 = vadd.f32 %v12115, %v12675
    %v12677 = vpop.f32.mrf.mxu0
    %v12678 = vpop.f32.mrf.mxu0
    %v12679 = vadd.f32 %v12118, %v12678
    %v12680 = vpop.f32.mrf.mxu0
    %12681 = vmatprep.mubr.bf16.mxu0 %v12375
    %12682 = vmatmul.mubr.bf16.gmra.mxu0 %v12374
    %v12683 = vpop.f32.mrf.mxu0
    %v12684 = vadd.f32 %v12123, %v12683
    %v12685 = vpop.f32.mrf.mxu0
    %v12686 = vpop.f32.mrf.mxu0
    %v12687 = vadd.f32 %v12126, %v12686
    %v12688 = vpop.f32.mrf.mxu0
    %12689 = vmatprep.mubr.bf16.mxu0 %v12378
    %12690 = vmatmul.mubr.bf16.gmra.mxu0 %v12377
    %v12691 = vpop.f32.mrf.mxu0
    %v12692 = vadd.f32 %v12131, %v12691
    %v12693 = vpop.f32.mrf.mxu0
    %v12694 = vpop.f32.mrf.mxu0
    %v12695 = vadd.f32 %v12134, %v12694
    %v12696 = vpop.f32.mrf.mxu0
    %12697 = vmatprep.mubr.bf16.mxu0 %v12381
    %12698 = vmatmul.mubr.bf16.gmra.mxu0 %v12380
    %v12699 = vpop.f32.mrf.mxu0
    %v12700 = vadd.f32 %v12139, %v12699
    %v12701 = vpop.f32.mrf.mxu0
    %v12702 = vpop.f32.mrf.mxu0
    %v12703 = vadd.f32 %v12142, %v12702
    %v12704 = vpop.f32.mrf.mxu0
    %12705 = vmatprep.mubr.bf16.mxu0 %v12384
    %12706 = vmatmul.mubr.bf16.gmra.mxu0 %v12383
    %v12707 = vpop.f32.mrf.mxu0
    %v12708 = vadd.f32 %v12147, %v12707
    %v12709 = vpop.f32.mrf.mxu0
    %v12710 = vpop.f32.mrf.mxu0
    %v12711 = vadd.f32 %v12150, %v12710
    %v12712 = vpop.f32.mrf.mxu0
    %12713 = vmatprep.mubr.bf16.mxu0 %v12387
    %12714 = vmatmul.mubr.bf16.gmra.mxu0 %v12386
    %v12715 = vpop.f32.mrf.mxu0
    %v12716 = vadd.f32 %v12155, %v12715
    %v12717 = vpop.f32.mrf.mxu0
    %v12718 = vpop.f32.mrf.mxu0
    %v12719 = vadd.f32 %v12158, %v12718
    %v12720 = vpop.f32.mrf.mxu0
    %12721 = vmatprep.mubr.bf16.mxu0 %v12390
    %12722 = vmatmul.mubr.bf16.gmra.mxu0 %v12389
    %v12723 = vpop.f32.mrf.mxu0
    %v12724 = vadd.f32 %v12163, %v12723
    %v12725 = vpop.f32.mrf.mxu0
    %v12726 = vpop.f32.mrf.mxu0
    %v12727 = vadd.f32 %v12166, %v12726
    %v12728 = vpop.f32.mrf.mxu0
    %12729 = vmatprep.mubr.bf16.mxu0 %v12393
    %12730 = vmatmul.mubr.bf16.gmra.mxu0 %v12392
    %v12731 = vpop.f32.mrf.mxu0
    %v12732 = vadd.f32 %v12171, %v12731
    %v12733 = vpop.f32.mrf.mxu0
    %v12734 = vpop.f32.mrf.mxu0
    %v12735 = vadd.f32 %v12174, %v12734
    %v12736 = vpop.f32.mrf.mxu0
    %12737 = vmatprep.mubr.bf16.mxu0 %v12396
    %12738 = vmatmul.mubr.bf16.gmra.mxu0 %v12395
    %v12739 = vpop.f32.mrf.mxu0
    %v12740 = vadd.f32 %v12179, %v12739
    %v12741 = vpop.f32.mrf.mxu0
    %v12742 = vpop.f32.mrf.mxu0
    %v12743 = vadd.f32 %v12182, %v12742
    %v12744 = vpop.f32.mrf.mxu0
    %12745 = vmatprep.mubr.bf16.mxu0 %v12399
    %12746 = vmatmul.mubr.bf16.gmra.mxu0 %v12398
    %v12747 = vpop.f32.mrf.mxu0
    %v12748 = vadd.f32 %v12187, %v12747
    %v12749 = vpop.f32.mrf.mxu0
    %v12750 = vpop.f32.mrf.mxu0
    %v12751 = vadd.f32 %v12190, %v12750
    %v12752 = vpop.f32.mrf.mxu0
    %12753 = vdwg.mxu0
    %12754 = vmatprep.subr.bf16.mxu0 0
    %12755 = vmatpush1.bf16.msra.mxu0 %v12568
    %12756 = vmatprep.subr.bf16.mxu0 0
    %12757 = vmatpush1.bf16.msra.mxu0 %v12567
    %12758 = vmatprep.subr.bf16.mxu0 0
    %12759 = vmatpush1.bf16.msra.mxu0 %v12566
    %12760 = vmatprep.subr.bf16.mxu0 0
    %12761 = vmatpush1.bf16.msra.mxu0 %v12565
    %12762 = vmatprep.subr.bf16.mxu0 0
    %12763 = vmatpush1.bf16.msra.mxu0 %v12564
    %12764 = vmatprep.subr.bf16.mxu0 0
    %12765 = vmatpush1.bf16.msra.mxu0 %v12563
    %12766 = vmatprep.subr.bf16.mxu0 0
    %12767 = vmatpush1.bf16.msra.mxu0 %v12562
    %12768 = vmatprep.subr.bf16.mxu0 0
    %12769 = vmatpush1.bf16.msra.mxu0 %v12561
    %12770 = vmatprep.subr.bf16.mxu0 0
    %12771 = vmatpush2.bf16.msra.mxu0 0
    %12772 = vmatprep.subr.bf16.mxu0 0
    %12773 = vmatpush2.bf16.msra.mxu0 0
    %12774 = vmatprep.subr.bf16.mxu0 0
    %12775 = vmatpush2.bf16.msra.mxu0 0
    %12776 = vmatprep.subr.bf16.mxu0 0
    %12777 = vmatpush2.bf16.msra.mxu0 0
    %12778 = vmatprep.subr.bf16.mxu0 0
    %12779 = vmatpush2.bf16.msra.mxu0 0
    %12780 = vmatprep.subr.bf16.mxu0 0
    %12781 = vmatpush2.bf16.msra.mxu0 0
    %12782 = vmatprep.subr.bf16.mxu0 0
    %12783 = vmatpush2.bf16.msra.mxu0 0
    %12784 = vmatprep.subr.bf16.mxu0 0
    %12785 = vmatpush2.bf16.msra.mxu0 0
    %12786 = vmatprep.mubr.bf16.mxu0 0
    %12787 = vmatmul.mubr.bf16.gmra.mxu0 %v12355
    %v12788 = vpop.f32.mrf.mxu0
    %v12789 = vadd.f32 %v12628, %v12788
    %v12790 = vpop.f32.mrf.mxu0
    %v12791 = vpop.f32.mrf.mxu0
    %v12792 = vadd.f32 %v12631, %v12791
    %v12793 = vpop.f32.mrf.mxu0
    %12794 = vmatprep.mubr.bf16.mxu0 0
    %12795 = vmatmul.mubr.bf16.gmra.mxu0 %v12358
    %v12796 = vpop.f32.mrf.mxu0
    %v12797 = vadd.f32 %v12636, %v12796
    %v12798 = vpop.f32.mrf.mxu0
    %v12799 = vpop.f32.mrf.mxu0
    %v12800 = vadd.f32 %v12639, %v12799
    %v12801 = vpop.f32.mrf.mxu0
    %12802 = vmatprep.mubr.bf16.mxu0 0
    %12803 = vmatmul.mubr.bf16.gmra.mxu0 %v12361
    %v12804 = vpop.f32.mrf.mxu0
    %v12805 = vadd.f32 %v12644, %v12804
    %v12806 = vpop.f32.mrf.mxu0
    %v12807 = vpop.f32.mrf.mxu0
    %v12808 = vadd.f32 %v12647, %v12807
    %v12809 = vpop.f32.mrf.mxu0
    %12810 = vmatprep.mubr.bf16.mxu0 0
    %12811 = vmatmul.mubr.bf16.gmra.mxu0 %v12364
    %v12812 = vpop.f32.mrf.mxu0
    %v12813 = vadd.f32 %v12652, %v12812
    %v12814 = vpop.f32.mrf.mxu0
    %v12815 = vpop.f32.mrf.mxu0
    %v12816 = vadd.f32 %v12655, %v12815
    %v12817 = vpop.f32.mrf.mxu0
    %12818 = vmatprep.mubr.bf16.mxu0 0
    %12819 = vmatmul.mubr.bf16.gmra.mxu0 %v12367
    %v12820 = vpop.f32.mrf.mxu0
    %v12821 = vadd.f32 %v12660, %v12820
    %v12822 = vpop.f32.mrf.mxu0
    %v12823 = vpop.f32.mrf.mxu0
    %v12824 = vadd.f32 %v12663, %v12823
    %v12825 = vpop.f32.mrf.mxu0
    %12826 = vmatprep.mubr.bf16.mxu0 0
    %12827 = vmatmul.mubr.bf16.gmra.mxu0 %v12370
    %v12828 = vpop.f32.mrf.mxu0
    %v12829 = vadd.f32 %v12668, %v12828
    %v12830 = vpop.f32.mrf.mxu0
    %v12831 = vpop.f32.mrf.mxu0
    %v12832 = vadd.f32 %v12671, %v12831
    %v12833 = vpop.f32.mrf.mxu0
    %12834 = vmatprep.mubr.bf16.mxu0 0
    %12835 = vmatmul.mubr.bf16.gmra.mxu0 %v12373
    %v12836 = vpop.f32.mrf.mxu0
    %v12837 = vadd.f32 %v12676, %v12836
    %v12838 = vpop.f32.mrf.mxu0
    %v12839 = vpop.f32.mrf.mxu0
    %v12840 = vadd.f32 %v12679, %v12839
    %v12841 = vpop.f32.mrf.mxu0
    %12842 = vmatprep.mubr.bf16.mxu0 0
    %12843 = vmatmul.mubr.bf16.gmra.mxu0 %v12376
    %v12844 = vpop.f32.mrf.mxu0
    %v12845 = vadd.f32 %v12684, %v12844
    %v12846 = vpop.f32.mrf.mxu0
    %v12847 = vpop.f32.mrf.mxu0
    %v12848 = vadd.f32 %v12687, %v12847
    %v12849 = vpop.f32.mrf.mxu0
    %12850 = vmatprep.mubr.bf16.mxu0 0
    %12851 = vmatmul.mubr.bf16.gmra.mxu0 %v12379
    %v12852 = vpop.f32.mrf.mxu0
    %v12853 = vadd.f32 %v12692, %v12852
    %v12854 = vpop.f32.mrf.mxu0
    %v12855 = vpop.f32.mrf.mxu0
    %v12856 = vadd.f32 %v12695, %v12855
    %v12857 = vpop.f32.mrf.mxu0
    %12858 = vmatprep.mubr.bf16.mxu0 0
    %12859 = vmatmul.mubr.bf16.gmra.mxu0 %v12382
    %v12860 = vpop.f32.mrf.mxu0
    %v12861 = vadd.f32 %v12700, %v12860
    %v12862 = vpop.f32.mrf.mxu0
    %v12863 = vpop.f32.mrf.mxu0
    %v12864 = vadd.f32 %v12703, %v12863
    %v12865 = vpop.f32.mrf.mxu0
    %12866 = vmatprep.mubr.bf16.mxu0 0
    %12867 = vmatmul.mubr.bf16.gmra.mxu0 %v12385
    %v12868 = vpop.f32.mrf.mxu0
    %v12869 = vadd.f32 %v12708, %v12868
    %v12870 = vpop.f32.mrf.mxu0
    %v12871 = vpop.f32.mrf.mxu0
    %v12872 = vadd.f32 %v12711, %v12871
    %v12873 = vpop.f32.mrf.mxu0
    %12874 = vmatprep.mubr.bf16.mxu0 0
    %12875 = vmatmul.mubr.bf16.gmra.mxu0 %v12388
    %v12876 = vpop.f32.mrf.mxu0
    %v12877 = vadd.f32 %v12716, %v12876
    %v12878 = vpop.f32.mrf.mxu0
    %v12879 = vpop.f32.mrf.mxu0
    %v12880 = vadd.f32 %v12719, %v12879
    %v12881 = vpop.f32.mrf.mxu0
    %12882 = vmatprep.mubr.bf16.mxu0 0
    %12883 = vmatmul.mubr.bf16.gmra.mxu0 %v12391
    %v12884 = vpop.f32.mrf.mxu0
    %v12885 = vadd.f32 %v12724, %v12884
    %v12886 = vpop.f32.mrf.mxu0
    %v12887 = vpop.f32.mrf.mxu0
    %v12888 = vadd.f32 %v12727, %v12887
    %v12889 = vpop.f32.mrf.mxu0
    %12890 = vmatprep.mubr.bf16.mxu0 0
    %12891 = vmatmul.mubr.bf16.gmra.mxu0 %v12394
    %v12892 = vpop.f32.mrf.mxu0
    %v12893 = vadd.f32 %v12732, %v12892
    %v12894 = vpop.f32.mrf.mxu0
    %v12895 = vpop.f32.mrf.mxu0
    %v12896 = vadd.f32 %v12735, %v12895
    %v12897 = vpop.f32.mrf.mxu0
    %12898 = vmatprep.mubr.bf16.mxu0 0
    %12899 = vmatmul.mubr.bf16.gmra.mxu0 %v12397
    %v12900 = vpop.f32.mrf.mxu0
    %v12901 = vadd.f32 %v12740, %v12900
    %v12902 = vpop.f32.mrf.mxu0
    %v12903 = vpop.f32.mrf.mxu0
    %v12904 = vadd.f32 %v12743, %v12903
    %v12905 = vpop.f32.mrf.mxu0
    %12906 = vmatprep.mubr.bf16.mxu0 0
    %12907 = vmatmul.mubr.bf16.gmra.mxu0 %v12400
    %v12908 = vpop.f32.mrf.mxu0
    %v12909 = vadd.f32 %v12748, %v12908
    %v12910 = vpop.f32.mrf.mxu0
    %v12911 = vpop.f32.mrf.mxu0
    %v12912 = vadd.f32 %v12751, %v12911
    %v12913 = vpop.f32.mrf.mxu0
    %12914 = vdwg.mxu0
    %s12915 = scalar_lea.vmem [#allocation3], 240
    %v12916 = vld [vmem:[%s12915] sm:$0xff]
    %v12917 = vld [vmem:[%s12915 + $0x8] sm:$0xf]
    %v12918 = vld [vmem:[%s12915 + $0xc] sm:$0xff]
    %v12919 = vld [vmem:[%s12915 + $0x14] sm:$0xf]
    %v12920 = vld [vmem:[%s12915 + $0x18] sm:$0xff]
    %v12921 = vld [vmem:[%s12915 + $0x20] sm:$0xf]
    %v12922 = vld [vmem:[%s12915 + $0x24] sm:$0xff]
    %v12923 = vld [vmem:[%s12915 + $0x2c] sm:$0xf]
    %v12924 = vld [vmem:[%s12915 + $0x30] sm:$0xff]
    %v12925 = vld [vmem:[%s12915 + $0x38] sm:$0xf]
    %v12926 = vld [vmem:[%s12915 + $0x3c] sm:$0xff]
    %v12927 = vld [vmem:[%s12915 + $0x44] sm:$0xf]
    %v12928 = vld [vmem:[%s12915 + $0x48] sm:$0xff]
    %v12929 = vld [vmem:[%s12915 + $0x50] sm:$0xf]
    %v12930 = vld [vmem:[%s12915 + $0x54] sm:$0xff]
    %v12931 = vld [vmem:[%s12915 + $0x5c] sm:$0xf]
    %v12932 = vld [vmem:[%s12915 + $0x60] sm:$0xff]
    %v12933 = vld [vmem:[%s12915 + $0x68] sm:$0xf]
    %v12934 = vld [vmem:[%s12915 + $0x6c] sm:$0xff]
    %v12935 = vld [vmem:[%s12915 + $0x74] sm:$0xf]
    %v12936 = vld [vmem:[%s12915 + $0x78] sm:$0xff]
    %v12937 = vld [vmem:[%s12915 + $0x80] sm:$0xf]
    %v12938 = vld [vmem:[%s12915 + $0x84] sm:$0xff]
    %v12939 = vld [vmem:[%s12915 + $0x8c] sm:$0xf]
    %v12940 = vld [vmem:[%s12915 + $0x90] sm:$0xff]
    %v12941 = vld [vmem:[%s12915 + $0x98] sm:$0xf]
    %v12942 = vld [vmem:[%s12915 + $0x9c] sm:$0xff]
    %v12943 = vld [vmem:[%s12915 + $0xa4] sm:$0xf]
    %v12944 = vld [vmem:[%s12915 + $0xa8] sm:$0xff]
    %v12945 = vld [vmem:[%s12915 + $0xb0] sm:$0xf]
    %v12946 = vld [vmem:[%s12915 + $0xb4] sm:$0xff]
    %v12947 = vld [vmem:[%s12915 + $0xbc] sm:$0xf]
    %v12948 = vld [vmem:[%s12915 + $0x1b0] sm:$0xff]
    %v12949 = vld [vmem:[%s12915 + $0x1b8] sm:$0xf]
    %v12950 = vld [vmem:[%s12915 + $0x1bc] sm:$0xff]
    %v12951 = vld [vmem:[%s12915 + $0x1c4] sm:$0xf]
    %v12952 = vld [vmem:[%s12915 + $0x1c8] sm:$0xff]
    %v12953 = vld [vmem:[%s12915 + $0x1d0] sm:$0xf]
    %v12954 = vld [vmem:[%s12915 + $0x1d4] sm:$0xff]
    %v12955 = vld [vmem:[%s12915 + $0x1dc] sm:$0xf]
    %v12956 = vld [vmem:[%s12915 + $0x1e0] sm:$0xff]
    %v12957 = vld [vmem:[%s12915 + $0x1e8] sm:$0xf]
    %v12958 = vld [vmem:[%s12915 + $0x1ec] sm:$0xff]
    %v12959 = vld [vmem:[%s12915 + $0x1f4] sm:$0xf]
    %v12960 = vld [vmem:[%s12915 + $0x1f8] sm:$0xff]
    %v12961 = vld [vmem:[%s12915 + $0x200] sm:$0xf]
    %v12962 = vld [vmem:[%s12915 + $0x204] sm:$0xff]
    %v12963 = vld [vmem:[%s12915 + $0x20c] sm:$0xf]
    %v12964 = vld [vmem:[%s12915 + $0x210] sm:$0xff]
    %v12965 = vld [vmem:[%s12915 + $0x218] sm:$0xf]
    %v12966 = vld [vmem:[%s12915 + $0x21c] sm:$0xff]
    %v12967 = vld [vmem:[%s12915 + $0x224] sm:$0xf]
    %v12968 = vld [vmem:[%s12915 + $0x228] sm:$0xff]
    %v12969 = vld [vmem:[%s12915 + $0x230] sm:$0xf]
    %v12970 = vld [vmem:[%s12915 + $0x234] sm:$0xff]
    %v12971 = vld [vmem:[%s12915 + $0x23c] sm:$0xf]
    %v12972 = vld [vmem:[%s12915 + $0x240] sm:$0xff]
    %v12973 = vld [vmem:[%s12915 + $0x248] sm:$0xf]
    %v12974 = vld [vmem:[%s12915 + $0x24c] sm:$0xff]
    %v12975 = vld [vmem:[%s12915 + $0x254] sm:$0xf]
    %v12976 = vld [vmem:[%s12915 + $0x258] sm:$0xff]
    %v12977 = vld [vmem:[%s12915 + $0x260] sm:$0xf]
    %v12978 = vld [vmem:[%s12915 + $0x264] sm:$0xff]
    %v12979 = vld [vmem:[%s12915 + $0x26c] sm:$0xf]
    %v12980 = vld [vmem:[%s10275] sm:$0xf]
    %v12981 = vld [vmem:[%s10275 + $0x4] sm:$0xf]
    %v12982 = vld [vmem:[%s10275 + $0x8] sm:$0xf]
    %v12983 = vld [vmem:[%s10275 + $0xc] sm:$0xf]
    %v12984 = vld [vmem:[%s10275 + $0x10] sm:$0xf]
    %v12985 = vld [vmem:[%s10275 + $0x14] sm:$0xf]
    %v12986 = vld [vmem:[%s10275 + $0x18] sm:$0xf]
    %v12987 = vld [vmem:[%s10275 + $0x1c] sm:$0xf]
    %v12988 = vld [vmem:[%s10275 + $0x20] sm:$0xf]
    %v12989 = vld [vmem:[%s10275 + $0x24] sm:$0xf]
    %v12990 = vld [vmem:[%s10275 + $0x28] sm:$0xf]
    %v12991 = vld [vmem:[%s10275 + $0x2c] sm:$0xf]
    %v12992 = vld [vmem:[%s10275 + $0x30] sm:$0xf]
    %v12993 = vld [vmem:[%s10275 + $0x34] sm:$0xf]
    %v12994 = vld [vmem:[%s10275 + $0x38] sm:$0xf]
    %v12995 = vld [vmem:[%s10275 + $0x3c] sm:$0xf]
    %v12996 = vld [vmem:[%s10275 + $0x40] sm:$0xf]
    %v12997 = vld [vmem:[%s10275 + $0x44] sm:$0xf]
    %v12998 = vld [vmem:[%s10275 + $0x48] sm:$0xf]
    %v12999 = vld [vmem:[%s10275 + $0x4c] sm:$0xf]
    %v13000 = vld [vmem:[%s10275 + $0x50] sm:$0xf]
    %v13001 = vld [vmem:[%s10275 + $0x54] sm:$0xf]
    %v13002 = vld [vmem:[%s10275 + $0x58] sm:$0xf]
    %v13003 = vld [vmem:[%s10275 + $0x5c] sm:$0xf]
    %v13004 = vld [vmem:[%s10275 + $0x60] sm:$0xf]
    %v13005 = vld [vmem:[%s10275 + $0x64] sm:$0xf]
    %v13006 = vld [vmem:[%s10275 + $0x68] sm:$0xf]
    %v13007 = vld [vmem:[%s10275 + $0x6c] sm:$0xf]
    %v13008 = vld [vmem:[%s10275 + $0x70] sm:$0xf]
    %v13009 = vld [vmem:[%s10275 + $0x74] sm:$0xf]
    %v13010 = vld [vmem:[%s10275 + $0x78] sm:$0xf]
    %v13011 = vld [vmem:[%s10275 + $0x7c] sm:$0xf]
    %v13012 = vld [vmem:[%s10275 + $0x80] sm:$0xf]
    %v13013 = vld [vmem:[%s10275 + $0x84] sm:$0xf]
    %v13014 = vld [vmem:[%s10275 + $0x88] sm:$0xf]
    %v13015 = vld [vmem:[%s10275 + $0x8c] sm:$0xf]
    %v13016 = vld [vmem:[%s10275 + $0x90] sm:$0xf]
    %v13017 = vld [vmem:[%s10275 + $0x94] sm:$0xf]
    %v13018 = vld [vmem:[%s10275 + $0x98] sm:$0xf]
    %v13019 = vld [vmem:[%s10275 + $0x9c] sm:$0xf]
    %v13020 = vld [vmem:[%s10275 + $0xa0] sm:$0xf]
    %v13021 = vld [vmem:[%s10275 + $0xa4] sm:$0xf]
    %v13022 = vld [vmem:[%s10275 + $0xa8] sm:$0xf]
    %v13023 = vld [vmem:[%s10275 + $0xac] sm:$0xf]
    %v13024 = vld [vmem:[%s10275 + $0xb0] sm:$0xf]
    %v13025 = vld [vmem:[%s10275 + $0xb4] sm:$0xf]
    %v13026 = vld [vmem:[%s10275 + $0xb8] sm:$0xf]
    %v13027 = vld [vmem:[%s10275 + $0xbc] sm:$0xf]
    %v13092 = vunpack.c.l.b16 %v12916
    %v13093 = vunpack.c.h.b16 %v12916
    %v13094 = vunpack.c.l.b16 %v12917
    %v13095 = vunpack.c.l.b16 %v12918
    %v13096 = vunpack.c.h.b16 %v12918
    %v13097 = vunpack.c.l.b16 %v12919
    %v13098 = vunpack.c.l.b16 %v12920
    %v13099 = vunpack.c.h.b16 %v12920
    %v13100 = vunpack.c.l.b16 %v12921
    %v13101 = vunpack.c.l.b16 %v12922
    %v13102 = vunpack.c.h.b16 %v12922
    %v13103 = vunpack.c.l.b16 %v12923
    %v13104 = vunpack.c.l.b16 %v12924
    %v13105 = vunpack.c.h.b16 %v12924
    %v13106 = vunpack.c.l.b16 %v12925
    %v13107 = vunpack.c.l.b16 %v12926
    %v13108 = vunpack.c.h.b16 %v12926
    %v13109 = vunpack.c.l.b16 %v12927
    %v13110 = vunpack.c.l.b16 %v12928
    %v13111 = vunpack.c.h.b16 %v12928
    %v13112 = vunpack.c.l.b16 %v12929
    %v13113 = vunpack.c.l.b16 %v12930
    %v13114 = vunpack.c.h.b16 %v12930
    %v13115 = vunpack.c.l.b16 %v12931
    %v13116 = vunpack.c.l.b16 %v12932
    %v13117 = vunpack.c.h.b16 %v12932
    %v13118 = vunpack.c.l.b16 %v12933
    %v13119 = vunpack.c.l.b16 %v12934
    %v13120 = vunpack.c.h.b16 %v12934
    %v13121 = vunpack.c.l.b16 %v12935
    %v13122 = vunpack.c.l.b16 %v12936
    %v13123 = vunpack.c.h.b16 %v12936
    %v13124 = vunpack.c.l.b16 %v12937
    %v13125 = vunpack.c.l.b16 %v12938
    %v13126 = vunpack.c.h.b16 %v12938
    %v13127 = vunpack.c.l.b16 %v12939
    %v13128 = vunpack.c.l.b16 %v12940
    %v13129 = vunpack.c.h.b16 %v12940
    %v13130 = vunpack.c.l.b16 %v12941
    %v13131 = vunpack.c.l.b16 %v12942
    %v13132 = vunpack.c.h.b16 %v12942
    %v13133 = vunpack.c.l.b16 %v12943
    %v13134 = vunpack.c.l.b16 %v12944
    %v13135 = vunpack.c.h.b16 %v12944
    %v13136 = vunpack.c.l.b16 %v12945
    %v13137 = vunpack.c.l.b16 %v12946
    %v13138 = vunpack.c.h.b16 %v12946
    %v13139 = vunpack.c.l.b16 %v12947
    %v13140 = vunpack.c.l.b16 %v12948
    %v13141 = vunpack.c.h.b16 %v12948
    %v13142 = vunpack.c.l.b16 %v12949
    %v13143 = vunpack.c.l.b16 %v12950
    %v13144 = vunpack.c.h.b16 %v12950
    %v13145 = vunpack.c.l.b16 %v12951
    %v13146 = vunpack.c.l.b16 %v12952
    %v13147 = vunpack.c.h.b16 %v12952
    %v13148 = vunpack.c.l.b16 %v12953
    %v13149 = vunpack.c.l.b16 %v12954
    %v13150 = vunpack.c.h.b16 %v12954
    %v13151 = vunpack.c.l.b16 %v12955
    %v13152 = vunpack.c.l.b16 %v12956
    %v13153 = vunpack.c.h.b16 %v12956
    %v13154 = vunpack.c.l.b16 %v12957
    %v13155 = vunpack.c.l.b16 %v12958
    %v13156 = vunpack.c.h.b16 %v12958
    %v13157 = vunpack.c.l.b16 %v12959
    %v13158 = vunpack.c.l.b16 %v12960
    %v13159 = vunpack.c.h.b16 %v12960
    %v13160 = vunpack.c.l.b16 %v12961
    %v13161 = vunpack.c.l.b16 %v12962
    %v13162 = vunpack.c.h.b16 %v12962
    %v13163 = vunpack.c.l.b16 %v12963
    %v13164 = vunpack.c.l.b16 %v12964
    %v13165 = vunpack.c.h.b16 %v12964
    %v13166 = vunpack.c.l.b16 %v12965
    %v13167 = vunpack.c.l.b16 %v12966
    %v13168 = vunpack.c.h.b16 %v12966
    %v13169 = vunpack.c.l.b16 %v12967
    %v13170 = vunpack.c.l.b16 %v12968
    %v13171 = vunpack.c.h.b16 %v12968
    %v13172 = vunpack.c.l.b16 %v12969
    %v13173 = vunpack.c.l.b16 %v12970
    %v13174 = vunpack.c.h.b16 %v12970
    %v13175 = vunpack.c.l.b16 %v12971
    %v13176 = vunpack.c.l.b16 %v12972
    %v13177 = vunpack.c.h.b16 %v12972
    %v13178 = vunpack.c.l.b16 %v12973
    %v13179 = vunpack.c.l.b16 %v12974
    %v13180 = vunpack.c.h.b16 %v12974
    %v13181 = vunpack.c.l.b16 %v12975
    %v13182 = vunpack.c.l.b16 %v12976
    %v13183 = vunpack.c.h.b16 %v12976
    %v13184 = vunpack.c.l.b16 %v12977
    %v13185 = vunpack.c.l.b16 %v12978
    %v13186 = vunpack.c.h.b16 %v12978
    %v13187 = vunpack.c.l.b16 %v12979
    %v13188 = vpack.c.b16 %v13095, %v13092
    %v13189 = vpack.c.b16 %v13096, %v13093
    %v13190 = vpack.c.b16 %v13097, %v13094
    %v13191 = vpack.c.b16 %v13101, %v13098
    %v13192 = vpack.c.b16 %v13102, %v13099
    %v13193 = vpack.c.b16 %v13103, %v13100
    %v13194 = vpack.c.b16 %v13107, %v13104
    %v13195 = vpack.c.b16 %v13108, %v13105
    %v13196 = vpack.c.b16 %v13109, %v13106
    %v13197 = vpack.c.b16 %v13113, %v13110
    %v13198 = vpack.c.b16 %v13114, %v13111
    %v13199 = vpack.c.b16 %v13115, %v13112
    %v13200 = vpack.c.b16 %v13119, %v13116
    %v13201 = vpack.c.b16 %v13120, %v13117
    %v13202 = vpack.c.b16 %v13121, %v13118
    %v13203 = vpack.c.b16 %v13125, %v13122
    %v13204 = vpack.c.b16 %v13126, %v13123
    %v13205 = vpack.c.b16 %v13127, %v13124
    %v13206 = vpack.c.b16 %v13131, %v13128
    %v13207 = vpack.c.b16 %v13132, %v13129
    %v13208 = vpack.c.b16 %v13133, %v13130
    %v13209 = vpack.c.b16 %v13137, %v13134
    %v13210 = vpack.c.b16 %v13138, %v13135
    %v13211 = vpack.c.b16 %v13139, %v13136
    %v13212 = vpack.c.b16 %v13143, %v13140
    %v13213 = vpack.c.b16 %v13144, %v13141
    %v13214 = vpack.c.b16 %v13145, %v13142
    %v13215 = vpack.c.b16 %v13149, %v13146
    %v13216 = vpack.c.b16 %v13150, %v13147
    %v13217 = vpack.c.b16 %v13151, %v13148
    %v13218 = vpack.c.b16 %v13155, %v13152
    %v13219 = vpack.c.b16 %v13156, %v13153
    %v13220 = vpack.c.b16 %v13157, %v13154
    %v13221 = vpack.c.b16 %v13161, %v13158
    %v13222 = vpack.c.b16 %v13162, %v13159
    %v13223 = vpack.c.b16 %v13163, %v13160
    %v13224 = vpack.c.b16 %v13167, %v13164
    %v13225 = vpack.c.b16 %v13168, %v13165
    %v13226 = vpack.c.b16 %v13169, %v13166
    %v13227 = vpack.c.b16 %v13173, %v13170
    %v13228 = vpack.c.b16 %v13174, %v13171
    %v13229 = vpack.c.b16 %v13175, %v13172
    %v13230 = vpack.c.b16 %v13179, %v13176
    %v13231 = vpack.c.b16 %v13180, %v13177
    %v13232 = vpack.c.b16 %v13181, %v13178
    %v13233 = vpack.c.b16 %v13185, %v13182
    %v13234 = vpack.c.b16 %v13186, %v13183
    %v13235 = vpack.c.b16 %v13187, %v13184
    %v13332 = vunpack.c.l.b16 %v12980
    %v13333 = vunpack.c.l.b16 %v12981
    %v13334 = vunpack.c.l.b16 %v12982
    %v13335 = vunpack.c.l.b16 %v12983
    %v13336 = vunpack.c.l.b16 %v12984
    %v13337 = vunpack.c.l.b16 %v12985
    %v13338 = vunpack.c.l.b16 %v12986
    %v13339 = vunpack.c.l.b16 %v12987
    %v13340 = vunpack.c.l.b16 %v12988
    %v13341 = vunpack.c.l.b16 %v12989
    %v13342 = vunpack.c.l.b16 %v12990
    %v13343 = vunpack.c.l.b16 %v12991
    %v13344 = vunpack.c.l.b16 %v12992
    %v13345 = vunpack.c.l.b16 %v12993
    %v13346 = vunpack.c.l.b16 %v12994
    %v13347 = vunpack.c.l.b16 %v12995
    %v13348 = vunpack.c.l.b16 %v12996
    %v13349 = vunpack.c.l.b16 %v12997
    %v13350 = vunpack.c.l.b16 %v12998
    %v13351 = vunpack.c.l.b16 %v12999
    %v13352 = vunpack.c.l.b16 %v13000
    %v13353 = vunpack.c.l.b16 %v13001
    %v13354 = vunpack.c.l.b16 %v13002
    %v13355 = vunpack.c.l.b16 %v13003
    %v13356 = vunpack.c.l.b16 %v13004
    %v13357 = vunpack.c.l.b16 %v13005
    %v13358 = vunpack.c.l.b16 %v13006
    %v13359 = vunpack.c.l.b16 %v13007
    %v13360 = vunpack.c.l.b16 %v13008
    %v13361 = vunpack.c.l.b16 %v13009
    %v13362 = vunpack.c.l.b16 %v13010
    %v13363 = vunpack.c.l.b16 %v13011
    %v13364 = vunpack.c.l.b16 %v13012
    %v13365 = vunpack.c.l.b16 %v13013
    %v13366 = vunpack.c.l.b16 %v13014
    %v13367 = vunpack.c.l.b16 %v13015
    %v13368 = vunpack.c.l.b16 %v13016
    %v13369 = vunpack.c.l.b16 %v13017
    %v13370 = vunpack.c.l.b16 %v13018
    %v13371 = vunpack.c.l.b16 %v13019
    %v13372 = vunpack.c.l.b16 %v13020
    %v13373 = vunpack.c.l.b16 %v13021
    %v13374 = vunpack.c.l.b16 %v13022
    %v13375 = vunpack.c.l.b16 %v13023
    %v13376 = vunpack.c.l.b16 %v13024
    %v13377 = vunpack.c.l.b16 %v13025
    %v13378 = vunpack.c.l.b16 %v13026
    %v13379 = vunpack.c.l.b16 %v13027
    %v13380 = vpack.c.b16 %v13333, %v13332
    %v13381 = vpack.c.b16 %v13335, %v13334
    %v13382 = vpack.c.b16 %v13337, %v13336
    %v13383 = vpack.c.b16 %v13339, %v13338
    %v13384 = vpack.c.b16 %v13341, %v13340
    %v13385 = vpack.c.b16 %v13343, %v13342
    %v13386 = vpack.c.b16 %v13345, %v13344
    %v13387 = vpack.c.b16 %v13347, %v13346
    %v13388 = vpack.c.b16 %v13349, %v13348
    %v13389 = vpack.c.b16 %v13351, %v13350
    %v13390 = vpack.c.b16 %v13353, %v13352
    %v13391 = vpack.c.b16 %v13355, %v13354
    %v13392 = vpack.c.b16 %v13357, %v13356
    %v13393 = vpack.c.b16 %v13359, %v13358
    %v13394 = vpack.c.b16 %v13361, %v13360
    %v13395 = vpack.c.b16 %v13363, %v13362
    %v13396 = vpack.c.b16 %v13365, %v13364
    %v13397 = vpack.c.b16 %v13367, %v13366
    %v13398 = vpack.c.b16 %v13369, %v13368
    %v13399 = vpack.c.b16 %v13371, %v13370
    %v13400 = vpack.c.b16 %v13373, %v13372
    %v13401 = vpack.c.b16 %v13375, %v13374
    %v13402 = vpack.c.b16 %v13377, %v13376
    %v13403 = vpack.c.b16 %v13379, %v13378
    %13428 = vmatprep.subr.bf16.mxu0 0
    %13429 = vmatpush1.bf16.msra.mxu0 %v13387
    %13430 = vmatprep.subr.bf16.mxu0 0
    %13431 = vmatpush1.bf16.msra.mxu0 %v13386
    %13432 = vmatprep.subr.bf16.mxu0 0
    %13433 = vmatpush1.bf16.msra.mxu0 %v13385
    %13434 = vmatprep.subr.bf16.mxu0 0
    %13435 = vmatpush1.bf16.msra.mxu0 %v13384
    %13436 = vmatprep.subr.bf16.mxu0 0
    %13437 = vmatpush1.bf16.msra.mxu0 %v13383
    %13438 = vmatprep.subr.bf16.mxu0 0
    %13439 = vmatpush1.bf16.msra.mxu0 %v13382
    %13440 = vmatprep.subr.bf16.mxu0 0
    %13441 = vmatpush1.bf16.msra.mxu0 %v13381
    %13442 = vmatprep.subr.bf16.mxu0 0
    %13443 = vmatpush1.bf16.msra.mxu0 %v13380
    %13444 = vmatprep.subr.bf16.mxu0 0
    %13445 = vmatpush2.bf16.msra.mxu0 %v13395
    %13446 = vmatprep.subr.bf16.mxu0 0
    %13447 = vmatpush2.bf16.msra.mxu0 %v13394
    %13448 = vmatprep.subr.bf16.mxu0 0
    %13449 = vmatpush2.bf16.msra.mxu0 %v13393
    %13450 = vmatprep.subr.bf16.mxu0 0
    %13451 = vmatpush2.bf16.msra.mxu0 %v13392
    %13452 = vmatprep.subr.bf16.mxu0 0
    %13453 = vmatpush2.bf16.msra.mxu0 %v13391
    %13454 = vmatprep.subr.bf16.mxu0 0
    %13455 = vmatpush2.bf16.msra.mxu0 %v13390
    %13456 = vmatprep.subr.bf16.mxu0 0
    %13457 = vmatpush2.bf16.msra.mxu0 %v13389
    %13458 = vmatprep.subr.bf16.mxu0 0
    %13459 = vmatpush2.bf16.msra.mxu0 %v13388
    %13460 = vmatprep.mubr.bf16.mxu0 %v13189
    %13461 = vmatmul.mubr.bf16.gmra.mxu0 %v13188
    %v13462 = vpop.f32.mrf.mxu0
    %v13463 = vadd.f32 0.0, %v13462
    %v13464 = vpop.f32.mrf.mxu0
    %v13465 = vpop.f32.mrf.mxu0
    %v13466 = vadd.f32 0.0, %v13465
    %v13467 = vpop.f32.mrf.mxu0
    %13468 = vmatprep.mubr.bf16.mxu0 %v13192
    %13469 = vmatmul.mubr.bf16.gmra.mxu0 %v13191
    %v13470 = vpop.f32.mrf.mxu0
    %v13471 = vadd.f32 0.0, %v13470
    %v13472 = vpop.f32.mrf.mxu0
    %v13473 = vpop.f32.mrf.mxu0
    %v13474 = vadd.f32 0.0, %v13473
    %v13475 = vpop.f32.mrf.mxu0
    %13476 = vmatprep.mubr.bf16.mxu0 %v13195
    %13477 = vmatmul.mubr.bf16.gmra.mxu0 %v13194
    %v13478 = vpop.f32.mrf.mxu0
    %v13479 = vadd.f32 0.0, %v13478
    %v13480 = vpop.f32.mrf.mxu0
    %v13481 = vpop.f32.mrf.mxu0
    %v13482 = vadd.f32 0.0, %v13481
    %v13483 = vpop.f32.mrf.mxu0
    %13484 = vmatprep.mubr.bf16.mxu0 %v13198
    %13485 = vmatmul.mubr.bf16.gmra.mxu0 %v13197
    %v13486 = vpop.f32.mrf.mxu0
    %v13487 = vadd.f32 0.0, %v13486
    %v13488 = vpop.f32.mrf.mxu0
    %v13489 = vpop.f32.mrf.mxu0
    %v13490 = vadd.f32 0.0, %v13489
    %v13491 = vpop.f32.mrf.mxu0
    %13492 = vmatprep.mubr.bf16.mxu0 %v13201
    %13493 = vmatmul.mubr.bf16.gmra.mxu0 %v13200
    %v13494 = vpop.f32.mrf.mxu0
    %v13495 = vadd.f32 0.0, %v13494
    %v13496 = vpop.f32.mrf.mxu0
    %v13497 = vpop.f32.mrf.mxu0
    %v13498 = vadd.f32 0.0, %v13497
    %v13499 = vpop.f32.mrf.mxu0
    %13500 = vmatprep.mubr.bf16.mxu0 %v13204
    %13501 = vmatmul.mubr.bf16.gmra.mxu0 %v13203
    %v13502 = vpop.f32.mrf.mxu0
    %v13503 = vadd.f32 0.0, %v13502
    %v13504 = vpop.f32.mrf.mxu0
    %v13505 = vpop.f32.mrf.mxu0
    %v13506 = vadd.f32 0.0, %v13505
    %v13507 = vpop.f32.mrf.mxu0
    %13508 = vmatprep.mubr.bf16.mxu0 %v13207
    %13509 = vmatmul.mubr.bf16.gmra.mxu0 %v13206
    %v13510 = vpop.f32.mrf.mxu0
    %v13511 = vadd.f32 0.0, %v13510
    %v13512 = vpop.f32.mrf.mxu0
    %v13513 = vpop.f32.mrf.mxu0
    %v13514 = vadd.f32 0.0, %v13513
    %v13515 = vpop.f32.mrf.mxu0
    %13516 = vmatprep.mubr.bf16.mxu0 %v13210
    %13517 = vmatmul.mubr.bf16.gmra.mxu0 %v13209
    %v13518 = vpop.f32.mrf.mxu0
    %v13519 = vadd.f32 0.0, %v13518
    %v13520 = vpop.f32.mrf.mxu0
    %v13521 = vpop.f32.mrf.mxu0
    %v13522 = vadd.f32 0.0, %v13521
    %v13523 = vpop.f32.mrf.mxu0
    %13524 = vmatprep.mubr.bf16.mxu0 %v13213
    %13525 = vmatmul.mubr.bf16.gmra.mxu0 %v13212
    %v13526 = vpop.f32.mrf.mxu0
    %v13527 = vadd.f32 0.0, %v13526
    %v13528 = vpop.f32.mrf.mxu0
    %v13529 = vpop.f32.mrf.mxu0
    %v13530 = vadd.f32 0.0, %v13529
    %v13531 = vpop.f32.mrf.mxu0
    %13532 = vmatprep.mubr.bf16.mxu0 %v13216
    %13533 = vmatmul.mubr.bf16.gmra.mxu0 %v13215
    %v13534 = vpop.f32.mrf.mxu0
    %v13535 = vadd.f32 0.0, %v13534
    %v13536 = vpop.f32.mrf.mxu0
    %v13537 = vpop.f32.mrf.mxu0
    %v13538 = vadd.f32 0.0, %v13537
    %v13539 = vpop.f32.mrf.mxu0
    %13540 = vmatprep.mubr.bf16.mxu0 %v13219
    %13541 = vmatmul.mubr.bf16.gmra.mxu0 %v13218
    %v13542 = vpop.f32.mrf.mxu0
    %v13543 = vadd.f32 0.0, %v13542
    %v13544 = vpop.f32.mrf.mxu0
    %v13545 = vpop.f32.mrf.mxu0
    %v13546 = vadd.f32 0.0, %v13545
    %v13547 = vpop.f32.mrf.mxu0
    %13548 = vmatprep.mubr.bf16.mxu0 %v13222
    %13549 = vmatmul.mubr.bf16.gmra.mxu0 %v13221
    %v13550 = vpop.f32.mrf.mxu0
    %v13551 = vadd.f32 0.0, %v13550
    %v13552 = vpop.f32.mrf.mxu0
    %v13553 = vpop.f32.mrf.mxu0
    %v13554 = vadd.f32 0.0, %v13553
    %v13555 = vpop.f32.mrf.mxu0
    %13556 = vmatprep.mubr.bf16.mxu0 %v13225
    %13557 = vmatmul.mubr.bf16.gmra.mxu0 %v13224
    %v13558 = vpop.f32.mrf.mxu0
    %v13559 = vadd.f32 0.0, %v13558
    %v13560 = vpop.f32.mrf.mxu0
    %v13561 = vpop.f32.mrf.mxu0
    %v13562 = vadd.f32 0.0, %v13561
    %v13563 = vpop.f32.mrf.mxu0
    %13564 = vmatprep.mubr.bf16.mxu0 %v13228
    %13565 = vmatmul.mubr.bf16.gmra.mxu0 %v13227
    %v13566 = vpop.f32.mrf.mxu0
    %v13567 = vadd.f32 0.0, %v13566
    %v13568 = vpop.f32.mrf.mxu0
    %v13569 = vpop.f32.mrf.mxu0
    %v13570 = vadd.f32 0.0, %v13569
    %v13571 = vpop.f32.mrf.mxu0
    %13572 = vmatprep.mubr.bf16.mxu0 %v13231
    %13573 = vmatmul.mubr.bf16.gmra.mxu0 %v13230
    %v13574 = vpop.f32.mrf.mxu0
    %v13575 = vadd.f32 0.0, %v13574
    %v13576 = vpop.f32.mrf.mxu0
    %v13577 = vpop.f32.mrf.mxu0
    %v13578 = vadd.f32 0.0, %v13577
    %v13579 = vpop.f32.mrf.mxu0
    %13580 = vmatprep.mubr.bf16.mxu0 %v13234
    %13581 = vmatmul.mubr.bf16.gmra.mxu0 %v13233
    %v13582 = vpop.f32.mrf.mxu0
    %v13583 = vadd.f32 0.0, %v13582
    %v13584 = vpop.f32.mrf.mxu0
    %v13585 = vpop.f32.mrf.mxu0
    %v13586 = vadd.f32 0.0, %v13585
    %v13587 = vpop.f32.mrf.mxu0
    %13588 = vdwg.mxu0
    %13589 = vmatprep.subr.bf16.mxu0 0
    %13590 = vmatpush1.bf16.msra.mxu0 %v13403
    %13591 = vmatprep.subr.bf16.mxu0 0
    %13592 = vmatpush1.bf16.msra.mxu0 %v13402
    %13593 = vmatprep.subr.bf16.mxu0 0
    %13594 = vmatpush1.bf16.msra.mxu0 %v13401
    %13595 = vmatprep.subr.bf16.mxu0 0
    %13596 = vmatpush1.bf16.msra.mxu0 %v13400
    %13597 = vmatprep.subr.bf16.mxu0 0
    %13598 = vmatpush1.bf16.msra.mxu0 %v13399
    %13599 = vmatprep.subr.bf16.mxu0 0
    %13600 = vmatpush1.bf16.msra.mxu0 %v13398
    %13601 = vmatprep.subr.bf16.mxu0 0
    %13602 = vmatpush1.bf16.msra.mxu0 %v13397
    %13603 = vmatprep.subr.bf16.mxu0 0
    %13604 = vmatpush1.bf16.msra.mxu0 %v13396
    %13605 = vmatprep.subr.bf16.mxu0 0
    %13606 = vmatpush2.bf16.msra.mxu0 0
    %13607 = vmatprep.subr.bf16.mxu0 0
    %13608 = vmatpush2.bf16.msra.mxu0 0
    %13609 = vmatprep.subr.bf16.mxu0 0
    %13610 = vmatpush2.bf16.msra.mxu0 0
    %13611 = vmatprep.subr.bf16.mxu0 0
    %13612 = vmatpush2.bf16.msra.mxu0 0
    %13613 = vmatprep.subr.bf16.mxu0 0
    %13614 = vmatpush2.bf16.msra.mxu0 0
    %13615 = vmatprep.subr.bf16.mxu0 0
    %13616 = vmatpush2.bf16.msra.mxu0 0
    %13617 = vmatprep.subr.bf16.mxu0 0
    %13618 = vmatpush2.bf16.msra.mxu0 0
    %13619 = vmatprep.subr.bf16.mxu0 0
    %13620 = vmatpush2.bf16.msra.mxu0 0
    %13621 = vmatprep.mubr.bf16.mxu0 0
    %13622 = vmatmul.mubr.bf16.gmra.mxu0 %v13190
    %v13623 = vpop.f32.mrf.mxu0
    %v13624 = vadd.f32 %v13463, %v13623
    %v13625 = vpop.f32.mrf.mxu0
    %v13626 = vpop.f32.mrf.mxu0
    %v13627 = vadd.f32 %v13466, %v13626
    %v13628 = vpop.f32.mrf.mxu0
    %13629 = vmatprep.mubr.bf16.mxu0 0
    %13630 = vmatmul.mubr.bf16.gmra.mxu0 %v13193
    %v13631 = vpop.f32.mrf.mxu0
    %v13632 = vadd.f32 %v13471, %v13631
    %v13633 = vpop.f32.mrf.mxu0
    %v13634 = vpop.f32.mrf.mxu0
    %v13635 = vadd.f32 %v13474, %v13634
    %v13636 = vpop.f32.mrf.mxu0
    %13637 = vmatprep.mubr.bf16.mxu0 0
    %13638 = vmatmul.mubr.bf16.gmra.mxu0 %v13196
    %v13639 = vpop.f32.mrf.mxu0
    %v13640 = vadd.f32 %v13479, %v13639
    %v13641 = vpop.f32.mrf.mxu0
    %v13642 = vpop.f32.mrf.mxu0
    %v13643 = vadd.f32 %v13482, %v13642
    %v13644 = vpop.f32.mrf.mxu0
    %13645 = vmatprep.mubr.bf16.mxu0 0
    %13646 = vmatmul.mubr.bf16.gmra.mxu0 %v13199
    %v13647 = vpop.f32.mrf.mxu0
    %v13648 = vadd.f32 %v13487, %v13647
    %v13649 = vpop.f32.mrf.mxu0
    %v13650 = vpop.f32.mrf.mxu0
    %v13651 = vadd.f32 %v13490, %v13650
    %v13652 = vpop.f32.mrf.mxu0
    %13653 = vmatprep.mubr.bf16.mxu0 0
    %13654 = vmatmul.mubr.bf16.gmra.mxu0 %v13202
    %v13655 = vpop.f32.mrf.mxu0
    %v13656 = vadd.f32 %v13495, %v13655
    %v13657 = vpop.f32.mrf.mxu0
    %v13658 = vpop.f32.mrf.mxu0
    %v13659 = vadd.f32 %v13498, %v13658
    %v13660 = vpop.f32.mrf.mxu0
    %13661 = vmatprep.mubr.bf16.mxu0 0
    %13662 = vmatmul.mubr.bf16.gmra.mxu0 %v13205
    %v13663 = vpop.f32.mrf.mxu0
    %v13664 = vadd.f32 %v13503, %v13663
    %v13665 = vpop.f32.mrf.mxu0
    %v13666 = vpop.f32.mrf.mxu0
    %v13667 = vadd.f32 %v13506, %v13666
    %v13668 = vpop.f32.mrf.mxu0
    %13669 = vmatprep.mubr.bf16.mxu0 0
    %13670 = vmatmul.mubr.bf16.gmra.mxu0 %v13208
    %v13671 = vpop.f32.mrf.mxu0
    %v13672 = vadd.f32 %v13511, %v13671
    %v13673 = vpop.f32.mrf.mxu0
    %v13674 = vpop.f32.mrf.mxu0
    %v13675 = vadd.f32 %v13514, %v13674
    %v13676 = vpop.f32.mrf.mxu0
    %13677 = vmatprep.mubr.bf16.mxu0 0
    %13678 = vmatmul.mubr.bf16.gmra.mxu0 %v13211
    %v13679 = vpop.f32.mrf.mxu0
    %v13680 = vadd.f32 %v13519, %v13679
    %v13681 = vpop.f32.mrf.mxu0
    %v13682 = vpop.f32.mrf.mxu0
    %v13683 = vadd.f32 %v13522, %v13682
    %v13684 = vpop.f32.mrf.mxu0
    %13685 = vmatprep.mubr.bf16.mxu0 0
    %13686 = vmatmul.mubr.bf16.gmra.mxu0 %v13214
    %v13687 = vpop.f32.mrf.mxu0
    %v13688 = vadd.f32 %v13527, %v13687
    %v13689 = vpop.f32.mrf.mxu0
    %v13690 = vpop.f32.mrf.mxu0
    %v13691 = vadd.f32 %v13530, %v13690
    %v13692 = vpop.f32.mrf.mxu0
    %13693 = vmatprep.mubr.bf16.mxu0 0
    %13694 = vmatmul.mubr.bf16.gmra.mxu0 %v13217
    %v13695 = vpop.f32.mrf.mxu0
    %v13696 = vadd.f32 %v13535, %v13695
    %v13697 = vpop.f32.mrf.mxu0
    %v13698 = vpop.f32.mrf.mxu0
    %v13699 = vadd.f32 %v13538, %v13698
    %v13700 = vpop.f32.mrf.mxu0
    %13701 = vmatprep.mubr.bf16.mxu0 0
    %13702 = vmatmul.mubr.bf16.gmra.mxu0 %v13220
    %v13703 = vpop.f32.mrf.mxu0
    %v13704 = vadd.f32 %v13543, %v13703
    %v13705 = vpop.f32.mrf.mxu0
    %v13706 = vpop.f32.mrf.mxu0
    %v13707 = vadd.f32 %v13546, %v13706
    %v13708 = vpop.f32.mrf.mxu0
    %13709 = vmatprep.mubr.bf16.mxu0 0
    %13710 = vmatmul.mubr.bf16.gmra.mxu0 %v13223
    %v13711 = vpop.f32.mrf.mxu0
    %v13712 = vadd.f32 %v13551, %v13711
    %v13713 = vpop.f32.mrf.mxu0
    %v13714 = vpop.f32.mrf.mxu0
    %v13715 = vadd.f32 %v13554, %v13714
    %v13716 = vpop.f32.mrf.mxu0
    %13717 = vmatprep.mubr.bf16.mxu0 0
    %13718 = vmatmul.mubr.bf16.gmra.mxu0 %v13226
    %v13719 = vpop.f32.mrf.mxu0
    %v13720 = vadd.f32 %v13559, %v13719
    %v13721 = vpop.f32.mrf.mxu0
    %v13722 = vpop.f32.mrf.mxu0
    %v13723 = vadd.f32 %v13562, %v13722
    %v13724 = vpop.f32.mrf.mxu0
    %13725 = vmatprep.mubr.bf16.mxu0 0
    %13726 = vmatmul.mubr.bf16.gmra.mxu0 %v13229
    %v13727 = vpop.f32.mrf.mxu0
    %v13728 = vadd.f32 %v13567, %v13727
    %v13729 = vpop.f32.mrf.mxu0
    %v13730 = vpop.f32.mrf.mxu0
    %v13731 = vadd.f32 %v13570, %v13730
    %v13732 = vpop.f32.mrf.mxu0
    %13733 = vmatprep.mubr.bf16.mxu0 0
    %13734 = vmatmul.mubr.bf16.gmra.mxu0 %v13232
    %v13735 = vpop.f32.mrf.mxu0
    %v13736 = vadd.f32 %v13575, %v13735
    %v13737 = vpop.f32.mrf.mxu0
    %v13738 = vpop.f32.mrf.mxu0
    %v13739 = vadd.f32 %v13578, %v13738
    %v13740 = vpop.f32.mrf.mxu0
    %13741 = vmatprep.mubr.bf16.mxu0 0
    %13742 = vmatmul.mubr.bf16.gmra.mxu0 %v13235
    %v13743 = vpop.f32.mrf.mxu0
    %v13744 = vadd.f32 %v13583, %v13743
    %v13745 = vpop.f32.mrf.mxu0
    %v13746 = vpop.f32.mrf.mxu0
    %v13747 = vadd.f32 %v13586, %v13746
    %v13748 = vpop.f32.mrf.mxu0
    %13749 = vdwg.mxu0
    %v13750 = vadd.f32 %v12789, %v13624
    %v13751 = vadd.f32 %v12792, %v13627
    %v13752 = vadd.f32 %v12797, %v13632
    %v13753 = vadd.f32 %v12800, %v13635
    %v13754 = vadd.f32 %v12805, %v13640
    %v13755 = vadd.f32 %v12808, %v13643
    %v13756 = vadd.f32 %v12813, %v13648
    %v13757 = vadd.f32 %v12816, %v13651
    %v13758 = vadd.f32 %v12821, %v13656
    %v13759 = vadd.f32 %v12824, %v13659
    %v13760 = vadd.f32 %v12829, %v13664
    %v13761 = vadd.f32 %v12832, %v13667
    %v13762 = vadd.f32 %v12837, %v13672
    %v13763 = vadd.f32 %v12840, %v13675
    %v13764 = vadd.f32 %v12845, %v13680
    %v13765 = vadd.f32 %v12848, %v13683
    %v13766 = vadd.f32 %v12853, %v13688
    %v13767 = vadd.f32 %v12856, %v13691
    %v13768 = vadd.f32 %v12861, %v13696
    %v13769 = vadd.f32 %v12864, %v13699
    %v13770 = vadd.f32 %v12869, %v13704
    %v13771 = vadd.f32 %v12872, %v13707
    %v13772 = vadd.f32 %v12877, %v13712
    %v13773 = vadd.f32 %v12880, %v13715
    %v13774 = vadd.f32 %v12885, %v13720
    %v13775 = vadd.f32 %v12888, %v13723
    %v13776 = vadd.f32 %v12893, %v13728
    %v13777 = vadd.f32 %v12896, %v13731
    %v13778 = vadd.f32 %v12901, %v13736
    %v13779 = vadd.f32 %v12904, %v13739
    %v13780 = vadd.f32 %v12909, %v13744
    %v13781 = vadd.f32 %v12912, %v13747
    %v13782 = vmul.f32 %v13750, %v11081
    %v13783 = vmul.f32 %v13751, %v11081
    %v13784 = vmul.f32 %v13752, %v11081
    %v13785 = vmul.f32 %v13753, %v11081
    %v13786 = vmul.f32 %v13754, %v11081
    %v13787 = vmul.f32 %v13755, %v11081
    %v13788 = vmul.f32 %v13756, %v11081
    %v13789 = vmul.f32 %v13757, %v11081
    %v13790 = vmul.f32 %v13758, %v11081
    %v13791 = vmul.f32 %v13759, %v11081
    %v13792 = vmul.f32 %v13760, %v11081
    %v13793 = vmul.f32 %v13761, %v11081
    %v13794 = vmul.f32 %v13762, %v11081
    %v13795 = vmul.f32 %v13763, %v11081
    %v13796 = vmul.f32 %v13764, %v11081
    %v13797 = vmul.f32 %v13765, %v11081
    %v13798 = vmul.f32 %v13766, %v11081
    %v13799 = vmul.f32 %v13767, %v11081
    %v13800 = vmul.f32 %v13768, %v11081
    %v13801 = vmul.f32 %v13769, %v11081
    %v13802 = vmul.f32 %v13770, %v11081
    %v13803 = vmul.f32 %v13771, %v11081
    %v13804 = vmul.f32 %v13772, %v11081
    %v13805 = vmul.f32 %v13773, %v11081
    %v13806 = vmul.f32 %v13774, %v11081
    %v13807 = vmul.f32 %v13775, %v11081
    %v13808 = vmul.f32 %v13776, %v11081
    %v13809 = vmul.f32 %v13777, %v11081
    %v13810 = vmul.f32 %v13778, %v11081
    %v13811 = vmul.f32 %v13779, %v11081
    %v13812 = vmul.f32 %v13780, %v11081
    %v13813 = vmul.f32 %v13781, %v11081
    %v13814 = vadd.f32 %v13782, %v11117
    %v13815 = vadd.f32 %v13783, %v11117
    %v13816 = vadd.f32 %v13784, %v11117
    %v13817 = vadd.f32 %v13785, %v11117
    %v13818 = vadd.f32 %v13786, %v11117
    %v13819 = vadd.f32 %v13787, %v11117
    %v13820 = vadd.f32 %v13788, %v11117
    %v13821 = vadd.f32 %v13789, %v11117
    %v13822 = vadd.f32 %v13790, %v11117
    %v13823 = vadd.f32 %v13791, %v11117
    %v13824 = vadd.f32 %v13792, %v11117
    %v13825 = vadd.f32 %v13793, %v11117
    %v13826 = vadd.f32 %v13794, %v11117
    %v13827 = vadd.f32 %v13795, %v11117
    %v13828 = vadd.f32 %v13796, %v11117
    %v13829 = vadd.f32 %v13797, %v11117
    %v13830 = vadd.f32 %v13798, %v11117
    %v13831 = vadd.f32 %v13799, %v11117
    %v13832 = vadd.f32 %v13800, %v11117
    %v13833 = vadd.f32 %v13801, %v11117
    %v13834 = vadd.f32 %v13802, %v11117
    %v13835 = vadd.f32 %v13803, %v11117
    %v13836 = vadd.f32 %v13804, %v11117
    %v13837 = vadd.f32 %v13805, %v11117
    %v13838 = vadd.f32 %v13806, %v11117
    %v13839 = vadd.f32 %v13807, %v11117
    %v13840 = vadd.f32 %v13808, %v11117
    %v13841 = vadd.f32 %v13809, %v11117
    %v13842 = vadd.f32 %v13810, %v11117
    %v13843 = vadd.f32 %v13811, %v11117
    %v13844 = vadd.f32 %v13812, %v11117
    %v13845 = vadd.f32 %v13813, %v11117
    %v13846 = vld [vmem:[%s924] sm:$0xff]
    %v13847 = vld [vmem:[%s924 + $0x8] sm:$0xff]
    %v13848 = vld [vmem:[%s924 + $0x10] sm:$0xff]
    %v13849 = vld [vmem:[%s924 + $0x18] sm:$0xff]
    %v13850 = vld [vmem:[%s924 + $0x20] sm:$0xff]
    %v13851 = vld [vmem:[%s924 + $0x28] sm:$0xff]
    %v13852 = vld [vmem:[%s924 + $0x30] sm:$0xff]
    %v13853 = vld [vmem:[%s924 + $0x38] sm:$0xff]
    %v13854 = vld [vmem:[%s924 + $0x40] sm:$0xff]
    %v13855 = vld [vmem:[%s924 + $0x48] sm:$0xff]
    %v13856 = vld [vmem:[%s924 + $0x50] sm:$0xff]
    %v13857 = vld [vmem:[%s924 + $0x58] sm:$0xff]
    %v13858 = vld [vmem:[%s924 + $0x60] sm:$0xff]
    %v13859 = vld [vmem:[%s924 + $0x68] sm:$0xff]
    %v13860 = vld [vmem:[%s924 + $0x70] sm:$0xff]
    %v13861 = vld [vmem:[%s924 + $0x78] sm:$0xff]
    %v13862 = vld [vmem:[%s924 + $0x100] sm:$0xff]
    %v13863 = vld [vmem:[%s924 + $0x108] sm:$0xff]
    %v13864 = vld [vmem:[%s924 + $0x110] sm:$0xff]
    %v13865 = vld [vmem:[%s924 + $0x118] sm:$0xff]
    %v13866 = vld [vmem:[%s924 + $0x120] sm:$0xff]
    %v13867 = vld [vmem:[%s924 + $0x128] sm:$0xff]
    %v13868 = vld [vmem:[%s924 + $0x130] sm:$0xff]
    %v13869 = vld [vmem:[%s924 + $0x138] sm:$0xff]
    %v13870 = vld [vmem:[%s924 + $0x140] sm:$0xff]
    %v13871 = vld [vmem:[%s924 + $0x148] sm:$0xff]
    %v13872 = vld [vmem:[%s924 + $0x150] sm:$0xff]
    %v13873 = vld [vmem:[%s924 + $0x158] sm:$0xff]
    %v13874 = vld [vmem:[%s924 + $0x160] sm:$0xff]
    %v13875 = vld [vmem:[%s924 + $0x168] sm:$0xff]
    %v13876 = vld [vmem:[%s924 + $0x170] sm:$0xff]
    %v13877 = vld [vmem:[%s924 + $0x178] sm:$0xff]
    %v13878 = vadd.f32 %v13814, %v13846
    %v13879 = vadd.f32 %v13815, %v13847
    %v13880 = vadd.f32 %v13816, %v13848
    %v13881 = vadd.f32 %v13817, %v13849
    %v13882 = vadd.f32 %v13818, %v13850
    %v13883 = vadd.f32 %v13819, %v13851
    %v13884 = vadd.f32 %v13820, %v13852
    %v13885 = vadd.f32 %v13821, %v13853
    %v13886 = vadd.f32 %v13822, %v13854
    %v13887 = vadd.f32 %v13823, %v13855
    %v13888 = vadd.f32 %v13824, %v13856
    %v13889 = vadd.f32 %v13825, %v13857
    %v13890 = vadd.f32 %v13826, %v13858
    %v13891 = vadd.f32 %v13827, %v13859
    %v13892 = vadd.f32 %v13828, %v13860
    %v13893 = vadd.f32 %v13829, %v13861
    %v13894 = vadd.f32 %v13830, %v13862
    %v13895 = vadd.f32 %v13831, %v13863
    %v13896 = vadd.f32 %v13832, %v13864
    %v13897 = vadd.f32 %v13833, %v13865
    %v13898 = vadd.f32 %v13834, %v13866
    %v13899 = vadd.f32 %v13835, %v13867
    %v13900 = vadd.f32 %v13836, %v13868
    %v13901 = vadd.f32 %v13837, %v13869
    %v13902 = vadd.f32 %v13838, %v13870
    %v13903 = vadd.f32 %v13839, %v13871
    %v13904 = vadd.f32 %v13840, %v13872
    %v13905 = vadd.f32 %v13841, %v13873
    %v13906 = vadd.f32 %v13842, %v13874
    %v13907 = vadd.f32 %v13843, %v13875
    %v13908 = vadd.f32 %v13844, %v13876
    %v13909 = vadd.f32 %v13845, %v13877
    %s13910 = scalar_lea.vmem [#allocation12], 128
    %13911 = vst [vmem:[%s13910] sm:$0xff] %v13878
    %13912 = vst [vmem:[%s13910 + $0x8] sm:$0xff] %v13879
    %13913 = vst [vmem:[%s13910 + $0x10] sm:$0xff] %v13880
    %13914 = vst [vmem:[%s13910 + $0x18] sm:$0xff] %v13881
    %13915 = vst [vmem:[%s13910 + $0x20] sm:$0xff] %v13882
    %13916 = vst [vmem:[%s13910 + $0x28] sm:$0xff] %v13883
    %13917 = vst [vmem:[%s13910 + $0x30] sm:$0xff] %v13884
    %13918 = vst [vmem:[%s13910 + $0x38] sm:$0xff] %v13885
    %13919 = vst [vmem:[%s13910 + $0x40] sm:$0xff] %v13886
    %13920 = vst [vmem:[%s13910 + $0x48] sm:$0xff] %v13887
    %13921 = vst [vmem:[%s13910 + $0x50] sm:$0xff] %v13888
    %13922 = vst [vmem:[%s13910 + $0x58] sm:$0xff] %v13889
    %13923 = vst [vmem:[%s13910 + $0x60] sm:$0xff] %v13890
    %13924 = vst [vmem:[%s13910 + $0x68] sm:$0xff] %v13891
    %13925 = vst [vmem:[%s13910 + $0x70] sm:$0xff] %v13892
    %13926 = vst [vmem:[%s13910 + $0x78] sm:$0xff] %v13893
    %13927 = vst [vmem:[%s13910 + $0x100] sm:$0xff] %v13894
    %13928 = vst [vmem:[%s13910 + $0x108] sm:$0xff] %v13895
    %13929 = vst [vmem:[%s13910 + $0x110] sm:$0xff] %v13896
    %13930 = vst [vmem:[%s13910 + $0x118] sm:$0xff] %v13897
    %13931 = vst [vmem:[%s13910 + $0x120] sm:$0xff] %v13898
    %13932 = vst [vmem:[%s13910 + $0x128] sm:$0xff] %v13899
    %13933 = vst [vmem:[%s13910 + $0x130] sm:$0xff] %v13900
    %13934 = vst [vmem:[%s13910 + $0x138] sm:$0xff] %v13901
    %13935 = vst [vmem:[%s13910 + $0x140] sm:$0xff] %v13902
    %13936 = vst [vmem:[%s13910 + $0x148] sm:$0xff] %v13903
    %13937 = vst [vmem:[%s13910 + $0x150] sm:$0xff] %v13904
    %13938 = vst [vmem:[%s13910 + $0x158] sm:$0xff] %v13905
    %13939 = vst [vmem:[%s13910 + $0x160] sm:$0xff] %v13906
    %13940 = vst [vmem:[%s13910 + $0x168] sm:$0xff] %v13907
    %13941 = vst [vmem:[%s13910 + $0x170] sm:$0xff] %v13908
    %13942 = vst [vmem:[%s13910 + $0x178] sm:$0xff] %v13909
    // Predicated region
    $region34: #{tpu_custom_call.1} parent=1 // pred_check
      _
    $region35: #{tpu_custom_call.1} parent=1 // pred_check_branch
      %13944 = sbr.rel (0) target = $region37
    $region36: #{tpu_custom_call.1} parent=1 // pred_region
      %s13946 = ssub.s32 8192, 8192
      %13947 = vsyncadd [#allocation6], %s13946
      %s13948 = sshll.u32 [#allocation12], 4
      %s13949 = int_to_ptr.vmem [resolvable:$true] %s13948
      %13954 = dma.vmem_to_hbm [thread:$0]  %s13949, 8192, %s4, [#allocation6], 128, 128, 8
    $region37: #{tpu_custom_call.1} parent=1 // pred_fallthru
      _
    // Predicated region
    $region38: #{tpu_custom_call.1} parent=1 // pred_check
      _
    $region39: #{tpu_custom_call.1} parent=1 // pred_check_branch
      %13956 = sbr.rel (0) target = $region41
    $region40: #{tpu_custom_call.1} parent=1 // pred_region
      %13957 = dma.done [#allocation6], 8192
    $region41: #{tpu_custom_call.1} parent=1 // pred_fallthru
      _
    %13958 = vsyncpa [#allocation5], 1
    %13959 = vsyncpa [#allocation8], 1
    %13960 = vsyncpa [#allocation11], 1
    %13961 = vsyncpa [#allocation6], 1

</llo_original>
